<compile_context>
chip_gen: v5e
topology: v5e:2x2
jax: 0.10.0
libtpu: 0.0.40
codegen_flags: <defaults>
</compile_context>

<pallas_src>
import jax
import jax.numpy as jnp
from jax.experimental import pallas as pl
from jax.experimental.pallas import tpu as pltpu


# -----------------------------------------------------------------------------
# Kernel
# -----------------------------------------------------------------------------
def _shape_encoder_pc_kernel(x_ref, w1_ref, b1_ref, w2_ref, b2_ref,
                             w3_ref, b3_ref, o_ref):
    """One (sample-group, point-tile) grid step.

    x_ref : (3, L) f32    channels-major slab, L = spt * lanes_per_sample
    w1    : (64, 3) f32,   b1: (64, 1) f32      (BN folded)
    w2    : (128, 64) bf16, b2: (128, 1) f32    (BN folded)
    w3    : (Dp, 128) bf16, b3: (Dp, 1) f32     (BN folded, Dp = padded feature_dim)
    o_ref : (1, spt, Dp)   resident output block = running per-sample max
    """
    j = pl.program_id(1)

    x = x_ref[...]                                   # (3, L) f32
    w1 = w1_ref[...]                                 # (64, 3) f32

    # Layer 1 (Conv1d(3,64,1)+BN+ReLU) on the VPU: three broadcast FMAs in f32.
    h = (w1[:, 0:1] * x[0:1, :]
         + w1[:, 1:2] * x[1:2, :]
         + w1[:, 2:3] * x[2:3, :]
         + b1_ref[...])                              # (64, L) f32
    h = jnp.maximum(h, 0.0).astype(jnp.bfloat16)     # (64, L) bf16

    # Layer 2 on the MXU: bf16 operands, f32 accumulation.
    h = jnp.dot(w2_ref[...], h, preferred_element_type=jnp.float32) + b2_ref[...]
    h = jnp.maximum(h, 0.0).astype(jnp.bfloat16)     # (128, L) bf16

    # Layer 3 on the MXU (no ReLU after bn3).
    h = jnp.dot(w3_ref[...], h, preferred_element_type=jnp.float32) + b3_ref[...]
    # h: (Dp, L) f32

    # Segmented per-sample max over 128-aligned lane ranges.
    spt = o_ref.shape[1]
    lps = h.shape[1] // spt
    cur = jnp.stack(
        [jnp.max(h[:, s * lps:(s + 1) * lps], axis=1) for s in range(spt)],
        axis=0)                                      # (spt, Dp)

    @pl.when(j == 0)
    def _():
        o_ref[0] = cur

    @pl.when(j > 0)
    def _():
        o_ref[0] = jnp.maximum(o_ref[0], cur)


# -----------------------------------------------------------------------------
# Wrapper
# -----------------------------------------------------------------------------
def shape_encoder_pc(shapes, params, *, vmem_budget_bytes=9 << 20):
    """shapes: (N, 3, P) float32 point clouds (PyTorch Conv1d layout).

    Returns (N, feature_dim) float32, matching ShapeEncoderPC.forward in eval mode.
    """
    N, C, P = shapes.shape
    assert C == 3, "point cloud must have 3 input channels"

    w1 = params["w1"].astype(jnp.float32)            # (64, 3)
    b1 = params["b1"].astype(jnp.float32)            # (64, 1)
    w2 = params["w2"].astype(jnp.bfloat16)           # (128, 64)
    b2 = params["b2"].astype(jnp.float32)            # (128, 1)
    w3 = params["w3"]
    b3 = params["b3"]
    ds = w3.shape[0]

    # Lane-dense output channels: pad feature_dim to a multiple of 128.
    dp = ((ds + 127) // 128) * 128
    if dp != ds:
        w3 = jnp.pad(w3, ((0, dp - ds), (0, 0)))
        b3 = jnp.pad(b3, ((0, dp - ds), (0, 0)))
    w3 = w3.astype(jnp.bfloat16)
    b3 = b3.astype(jnp.float32)

    # Pad the point dim to a multiple of 128 by repeating the last point
    # (max over duplicated points is unchanged).
    p_pad = ((P + 127) // 128) * 128
    if p_pad != P:
        shapes = jnp.pad(shapes, ((0, 0), (0, 0), (0, p_pad - P)), mode="edge")

    # --- tile selection -------------------------------------------------------
    # Per merged lane: input (double-buffered) + f32/bf16 h1 + f32/bf16 h2 + f32 h3.
    bytes_per_lane = 24 + 64 * 6 + 128 * 6 + dp * 4
    budget_lanes = max(128, (vmem_budget_bytes // bytes_per_lane) // 128 * 128)

    if p_pad <= budget_lanes:
        # Whole samples per grid step; keep >= 2 parallel steps when N >= 2
        # so both v7x TensorCores get work.
        spt_cap = budget_lanes // p_pad
        target = (N + 1) // 2 if N >= 2 else 1
        spt = max(1, min(spt_cap, target))
        inner = 1
        lane_tile = spt * p_pad
    else:
        # One sample split over several point tiles; max accumulated across them.
        spt = 1
        lane_tile = budget_lanes
        while p_pad % lane_tile != 0:
            lane_tile -= 128
        inner = p_pad // lane_tile

    outer = (N + spt - 1) // spt
    n_pad = outer * spt
    if n_pad != N:
        shapes = jnp.pad(shapes, ((0, n_pad - N), (0, 0), (0, 0)), mode="edge")

    # One HBM transpose: channels-major, (samples, points) merged on the lane axis.
    x2d = jnp.transpose(shapes, (1, 0, 2)).reshape(3, n_pad * p_pad)

    out = pl.pallas_call(
        _shape_encoder_pc_kernel,
        out_shape=jax.ShapeDtypeStruct((outer, spt, dp), jnp.float32),
        grid=(outer, inner),
        in_specs=[
            pl.BlockSpec((3, lane_tile), lambda i, j: (0, i * inner + j)),
            pl.BlockSpec((64, 3), lambda i, j: (0, 0)),
            pl.BlockSpec((64, 1), lambda i, j: (0, 0)),
            pl.BlockSpec((128, 64), lambda i, j: (0, 0)),
            pl.BlockSpec((128, 1), lambda i, j: (0, 0)),
            pl.BlockSpec((dp, 128), lambda i, j: (0, 0)),
            pl.BlockSpec((dp, 1), lambda i, j: (0, 0)),
        ],
        out_specs=pl.BlockSpec((1, spt, dp), lambda i, j: (i, 0, 0)),
        compiler_params=pltpu.CompilerParams(
            dimension_semantics=("parallel", "arbitrary")),
    )(x2d, w1, b1, w2, b2, w3, b3)

    return out.reshape(n_pad, dp)[:N, :ds]


# -----------------------------------------------------------------------------
# Parameter construction (deterministic, synthetic) + inference-mode BN folding
# -----------------------------------------------------------------------------
def _fold_bn(w, b, gamma, beta, mean, var, eps=1e-5):
    """Fold eval-mode BatchNorm1d into the preceding 1x1 Conv1d."""
    s = gamma / jnp.sqrt(var + eps)
    return w * s[:, None], (b - mean) * s + beta


def _conv_init(key, c_in, c_out, scale=0.05):
    kw, kb = jax.random.split(key)
    w = scale * jax.random.normal(kw, (c_out, c_in), jnp.float32)
    b = 0.01 * jax.random.normal(kb, (c_out,), jnp.float32)
    return w, b


def _bn_init(key, dim):
    k1, k2, k3, k4 = jax.random.split(key, 4)
    gamma = 0.5 + jax.random.uniform(k1, (dim,), jnp.float32)
    beta = 0.1 * jax.random.normal(k2, (dim,), jnp.float32)
    mean = 0.1 * jax.random.normal(k3, (dim,), jnp.float32)
    var = 0.5 + jax.random.uniform(k4, (dim,), jnp.float32)
    return gamma, beta, mean, var


def make_params(key, *, feature_dim=128):
    k = jax.random.split(key, 6)
    p = {}
    w, b = _conv_init(k[0], 3, 64)
    w, b = _fold_bn(w, b, *_bn_init(k[1], 64))
    p["w1"], p["b1"] = w, b[:, None]
    w, b = _conv_init(k[2], 64, 128)
    w, b = _fold_bn(w, b, *_bn_init(k[3], 128))
    p["w2"], p["b2"] = w, b[:, None]
    w, b = _conv_init(k[4], 128, feature_dim)
    w, b = _fold_bn(w, b, *_bn_init(k[5], feature_dim))
    p["w3"], p["b3"] = w, b[:, None]
    return p


# -----------------------------------------------------------------------------
# Pure-JAX f32 reference (mirrors the PyTorch forward with folded BN)
# -----------------------------------------------------------------------------
def shape_encoder_pc_reference(shapes, params):
    h = jnp.einsum("oc,ncp->nop", params["w1"], shapes) + params["b1"][None]
    h = jnp.maximum(h, 0.0)
    h = jnp.einsum("oc,ncp->nop", params["w2"], h) + params["b2"][None]
    h = jnp.maximum(h, 0.0)
    h = jnp.einsum("oc,ncp->nop", params["w3"], h) + params["b3"][None]
    return jnp.max(h, axis=2)


if __name__ == "__main__":
    key = jax.random.PRNGKey(0)
    k_x, k_p = jax.random.split(key)

    N, P, feature_dim = 8, 1024, 128          # small, tile-friendly shapes
    shapes = jax.random.normal(k_x, (N, 3, P), jnp.float32)
    params = make_params(k_p, feature_dim=feature_dim)

    fwd = jax.jit(shape_encoder_pc)
    out = jax.block_until_ready(fwd(shapes, params))

    ref = shape_encoder_pc_reference(shapes, params)
    assert out.shape == (N, feature_dim), out.shape
    assert out.dtype == jnp.float32
    # Tolerance loosened vs. the pure-f32 version because layer-2/3 MXU operands
    # are bf16 (f32 accumulation).
    assert bool(jnp.allclose(out, ref, atol=2e-2, rtol=2e-2)), "mismatch vs reference"

    print("KERNEL_OK")
</pallas_src>

<mosaic_0001>
module attributes {stable_mosaic.version = 11 : i64} {
  func.func @_shape_encoder_pc_kernel(%arg0: i32, %arg1: i32, %arg2: memref<3x4096xf32, #tpu.memory_space<vmem>>, %arg3: memref<64x3xf32, #tpu.memory_space<vmem>>, %arg4: memref<64x1xf32, #tpu.memory_space<vmem>>, %arg5: memref<128x64xbf16, #tpu.memory_space<vmem>>, %arg6: memref<128x1xf32, #tpu.memory_space<vmem>>, %arg7: memref<128x128xbf16, #tpu.memory_space<vmem>>, %arg8: memref<128x1xf32, #tpu.memory_space<vmem>>, %arg9: memref<1x4x128xf32, #tpu.memory_space<vmem>>) attributes {dimension_semantics = [#tpu.dimension_semantics<parallel>, #tpu.dimension_semantics<arbitrary>], iteration_bounds = array<i64: 2, 1>, scalar_prefetch = 0 : i64, scratch_operands = 0 : i64, tpu.core_type = #tpu.core_type<tc>, window_params = [{transform_indices = @transform_0, window_bounds = array<i64: 3, 4096>}, {pipeline_mode = #tpu.pipeline_mode<synchronous>, transform_indices = @transform_1, window_bounds = array<i64: 64, 3>}, {pipeline_mode = #tpu.pipeline_mode<synchronous>, transform_indices = @transform_2, window_bounds = array<i64: 64, 1>}, {pipeline_mode = #tpu.pipeline_mode<synchronous>, transform_indices = @transform_3, window_bounds = array<i64: 128, 64>}, {pipeline_mode = #tpu.pipeline_mode<synchronous>, transform_indices = @transform_4, window_bounds = array<i64: 128, 1>}, {pipeline_mode = #tpu.pipeline_mode<synchronous>, transform_indices = @transform_5, window_bounds = array<i64: 128, 128>}, {pipeline_mode = #tpu.pipeline_mode<synchronous>, transform_indices = @transform_6, window_bounds = array<i64: 128, 1>}, {transform_indices = @transform_7, window_bounds = array<i64: 1, 4, 128>}]} {
    %c0 = arith.constant 0 : index
    %c0_0 = arith.constant 0 : index
    %0 = vector.load %arg2[%c0, %c0_0] : memref<3x4096xf32, #tpu.memory_space<vmem>>, vector<3x4096xf32>
    %c0_1 = arith.constant 0 : index
    %c0_2 = arith.constant 0 : index
    %1 = vector.load %arg3[%c0_1, %c0_2] : memref<64x3xf32, #tpu.memory_space<vmem>>, vector<64x3xf32>
    %2 = vector.extract_strided_slice %1 {offsets = [0, 0], sizes = [64, 1], strides = [1, 1]} : vector<64x3xf32> to vector<64x1xf32>
    %3 = vector.extract_strided_slice %0 {offsets = [0, 0], sizes = [1, 4096], strides = [1, 1]} : vector<3x4096xf32> to vector<1x4096xf32>
    %4 = vector.broadcast %2 : vector<64x1xf32> to vector<64x4096xf32>
    %5 = vector.broadcast %3 : vector<1x4096xf32> to vector<64x4096xf32>
    %6 = arith.mulf %4, %5 : vector<64x4096xf32>
    %7 = vector.extract_strided_slice %1 {offsets = [0, 1], sizes = [64, 1], strides = [1, 1]} : vector<64x3xf32> to vector<64x1xf32>
    %8 = vector.extract_strided_slice %0 {offsets = [1, 0], sizes = [1, 4096], strides = [1, 1]} : vector<3x4096xf32> to vector<1x4096xf32>
    %9 = vector.broadcast %7 : vector<64x1xf32> to vector<64x4096xf32>
    %10 = vector.broadcast %8 : vector<1x4096xf32> to vector<64x4096xf32>
    %11 = arith.mulf %9, %10 : vector<64x4096xf32>
    %12 = arith.addf %6, %11 : vector<64x4096xf32>
    %13 = vector.extract_strided_slice %1 {offsets = [0, 2], sizes = [64, 1], strides = [1, 1]} : vector<64x3xf32> to vector<64x1xf32>
    %14 = vector.extract_strided_slice %0 {offsets = [2, 0], sizes = [1, 4096], strides = [1, 1]} : vector<3x4096xf32> to vector<1x4096xf32>
    %15 = vector.broadcast %13 : vector<64x1xf32> to vector<64x4096xf32>
    %16 = vector.broadcast %14 : vector<1x4096xf32> to vector<64x4096xf32>
    %17 = arith.mulf %15, %16 : vector<64x4096xf32>
    %18 = arith.addf %12, %17 : vector<64x4096xf32>
    %c0_3 = arith.constant 0 : index
    %c0_4 = arith.constant 0 : index
    %19 = vector.load %arg4[%c0_3, %c0_4] : memref<64x1xf32, #tpu.memory_space<vmem>>, vector<64x1xf32>
    %20 = vector.broadcast %19 : vector<64x1xf32> to vector<64x4096xf32>
    %21 = arith.addf %18, %20 : vector<64x4096xf32>
    %cst = arith.constant 0.000000e+00 : f32
    %22 = vector.broadcast %cst : f32 to vector<64x4096xf32>
    %23 = arith.maximumf %21, %22 : vector<64x4096xf32>
    %24 = arith.truncf %23 : vector<64x4096xf32> to vector<64x4096xbf16>
    %c0_5 = arith.constant 0 : index
    %c0_6 = arith.constant 0 : index
    %25 = vector.load %arg5[%c0_5, %c0_6] : memref<128x64xbf16, #tpu.memory_space<vmem>>, vector<128x64xbf16>
    %cst_7 = arith.constant dense<0.000000e+00> : vector<128x4096xf32>
    %26 = tpu.matmul %25, %24, %cst_7 {dimension_numbers = #tpu.dot_dimension_numbers<[1], [0], [0], [1], [0, 0, 1, 1], [], []>} : vector<128x64xbf16>, vector<64x4096xbf16>, vector<128x4096xf32> -> vector<128x4096xf32>
    %c0_8 = arith.constant 0 : index
    %c0_9 = arith.constant 0 : index
    %27 = vector.load %arg6[%c0_8, %c0_9] : memref<128x1xf32, #tpu.memory_space<vmem>>, vector<128x1xf32>
    %28 = vector.broadcast %27 : vector<128x1xf32> to vector<128x4096xf32>
    %29 = arith.addf %26, %28 : vector<128x4096xf32>
    %cst_10 = arith.constant 0.000000e+00 : f32
    %30 = vector.broadcast %cst_10 : f32 to vector<128x4096xf32>
    %31 = arith.maximumf %29, %30 : vector<128x4096xf32>
    %32 = arith.truncf %31 : vector<128x4096xf32> to vector<128x4096xbf16>
    %c0_11 = arith.constant 0 : index
    %c0_12 = arith.constant 0 : index
    %33 = vector.load %arg7[%c0_11, %c0_12] : memref<128x128xbf16, #tpu.memory_space<vmem>>, vector<128x128xbf16>
    %cst_13 = arith.constant dense<0.000000e+00> : vector<128x4096xf32>
    %34 = tpu.matmul %33, %32, %cst_13 {dimension_numbers = #tpu.dot_dimension_numbers<[1], [0], [0], [1], [0, 0, 1, 1], [], []>} : vector<128x128xbf16>, vector<128x4096xbf16>, vector<128x4096xf32> -> vector<128x4096xf32>
    %c0_14 = arith.constant 0 : index
    %c0_15 = arith.constant 0 : index
    %35 = vector.load %arg8[%c0_14, %c0_15] : memref<128x1xf32, #tpu.memory_space<vmem>>, vector<128x1xf32>
    %36 = vector.broadcast %35 : vector<128x1xf32> to vector<128x4096xf32>
    %37 = arith.addf %34, %36 : vector<128x4096xf32>
    %38 = vector.extract_strided_slice %37 {offsets = [0, 0], sizes = [128, 1024], strides = [1, 1]} : vector<128x4096xf32> to vector<128x1024xf32>
    %cst_16 = arith.constant dense<0xFF800000> : vector<128xf32>
    %39 = vector.multi_reduction <maximumf>, %38, %cst_16 [1] : vector<128x1024xf32> to vector<128xf32>
    %40 = vector.extract_strided_slice %37 {offsets = [0, 1024], sizes = [128, 1024], strides = [1, 1]} : vector<128x4096xf32> to vector<128x1024xf32>
    %cst_17 = arith.constant dense<0xFF800000> : vector<128xf32>
    %41 = vector.multi_reduction <maximumf>, %40, %cst_17 [1] : vector<128x1024xf32> to vector<128xf32>
    %42 = vector.extract_strided_slice %37 {offsets = [0, 2048], sizes = [128, 1024], strides = [1, 1]} : vector<128x4096xf32> to vector<128x1024xf32>
    %cst_18 = arith.constant dense<0xFF800000> : vector<128xf32>
    %43 = vector.multi_reduction <maximumf>, %42, %cst_18 [1] : vector<128x1024xf32> to vector<128xf32>
    %44 = vector.extract_strided_slice %37 {offsets = [0, 3072], sizes = [128, 1024], strides = [1, 1]} : vector<128x4096xf32> to vector<128x1024xf32>
    %cst_19 = arith.constant dense<0xFF800000> : vector<128xf32>
    %45 = vector.multi_reduction <maximumf>, %44, %cst_19 [1] : vector<128x1024xf32> to vector<128xf32>
    %46 = vector.shape_cast %39 : vector<128xf32> to vector<1x128xf32>
    %47 = vector.shape_cast %41 : vector<128xf32> to vector<1x128xf32>
    %48 = vector.shape_cast %43 : vector<128xf32> to vector<1x128xf32>
    %49 = vector.shape_cast %45 : vector<128xf32> to vector<1x128xf32>
    %50 = tpu.concatenate %46, %47, %48, %49 in 0 : vector<1x128xf32>, vector<1x128xf32>, vector<1x128xf32>, vector<1x128xf32> -> vector<4x128xf32>
    %c0_i32 = arith.constant 0 : i32
    %51 = arith.cmpi eq, %arg1, %c0_i32 : i32
    %52 = arith.extui %51 : i1 to i32
    %c0_i32_20 = arith.constant 0 : i32
    %53 = arith.cmpi ne, %52, %c0_i32_20 : i32
    scf.if %53 {
      %c0_23 = arith.constant 0 : index
      %c0_24 = arith.constant 0 : index
      %c0_25 = arith.constant 0 : index
      %57 = vector.load %arg9[%c0_23, %c0_24, %c0_25] : memref<1x4x128xf32, #tpu.memory_space<vmem>>, vector<1x4x128xf32>
      %58 = vector.shape_cast %57 : vector<1x4x128xf32> to vector<4x128xf32>
      %59 = vector.shape_cast %50 : vector<4x128xf32> to vector<1x4x128xf32>
      tpu.vector_store %arg9[%c0_23, %c0_24, %c0_25], %59 {strides = array<i32>} : memref<1x4x128xf32, #tpu.memory_space<vmem>>, vector<1x4x128xf32>,
    } else {
    }
    %c0_i32_21 = arith.constant 0 : i32
    %54 = arith.cmpi sgt, %arg1, %c0_i32_21 : i32
    %55 = arith.extui %54 : i1 to i32
    %c0_i32_22 = arith.constant 0 : i32
    %56 = arith.cmpi ne, %55, %c0_i32_22 : i32
    scf.if %56 {
      %c0_23 = arith.constant 0 : index
      %c0_24 = arith.constant 0 : index
      %c0_25 = arith.constant 0 : index
      %57 = vector.load %arg9[%c0_23, %c0_24, %c0_25] : memref<1x4x128xf32, #tpu.memory_space<vmem>>, vector<1x4x128xf32>
      %58 = vector.shape_cast %57 : vector<1x4x128xf32> to vector<4x128xf32>
      %59 = arith.maximumf %58, %50 : vector<4x128xf32>
      %c0_26 = arith.constant 0 : index
      %c0_27 = arith.constant 0 : index
      %c0_28 = arith.constant 0 : index
      %60 = vector.load %arg9[%c0_26, %c0_27, %c0_28] : memref<1x4x128xf32, #tpu.memory_space<vmem>>, vector<1x4x128xf32>
      %61 = vector.shape_cast %60 : vector<1x4x128xf32> to vector<4x128xf32>
      %62 = vector.shape_cast %59 : vector<4x128xf32> to vector<1x4x128xf32>
      tpu.vector_store %arg9[%c0_26, %c0_27, %c0_28], %62 {strides = array<i32>} : memref<1x4x128xf32, #tpu.memory_space<vmem>>, vector<1x4x128xf32>,
    } else {
    }
    return
  }
  func.func @transform_0(%arg0: i32, %arg1: i32) -> (i32, i32) {
    %c1_i32 = arith.constant 1 : i32
    %0 = arith.muli %arg0, %c1_i32 : i32
    %1 = arith.addi %0, %arg1 : i32
    %c0_i32 = arith.constant 0 : i32
    %c0_i32_0 = arith.constant 0 : i32
    return %c0_i32, %1 : i32, i32
  }
  func.func @transform_1(%arg0: i32, %arg1: i32) -> (i32, i32) {
    %c0_i32 = arith.constant 0 : i32
    %c0_i32_0 = arith.constant 0 : i32
    %c0_i32_1 = arith.constant 0 : i32
    return %c0_i32, %c0_i32_0 : i32, i32
  }
  func.func @transform_2(%arg0: i32, %arg1: i32) -> (i32, i32) {
    %c0_i32 = arith.constant 0 : i32
    %c0_i32_0 = arith.constant 0 : i32
    %c0_i32_1 = arith.constant 0 : i32
    return %c0_i32, %c0_i32_0 : i32, i32
  }
  func.func @transform_3(%arg0: i32, %arg1: i32) -> (i32, i32) {
    %c0_i32 = arith.constant 0 : i32
    %c0_i32_0 = arith.constant 0 : i32
    %c0_i32_1 = arith.constant 0 : i32
    return %c0_i32, %c0_i32_0 : i32, i32
  }
  func.func @transform_4(%arg0: i32, %arg1: i32) -> (i32, i32) {
    %c0_i32 = arith.constant 0 : i32
    %c0_i32_0 = arith.constant 0 : i32
    %c0_i32_1 = arith.constant 0 : i32
    return %c0_i32, %c0_i32_0 : i32, i32
  }
  func.func @transform_5(%arg0: i32, %arg1: i32) -> (i32, i32) {
    %c0_i32 = arith.constant 0 : i32
    %c0_i32_0 = arith.constant 0 : i32
    %c0_i32_1 = arith.constant 0 : i32
    return %c0_i32, %c0_i32_0 : i32, i32
  }
  func.func @transform_6(%arg0: i32, %arg1: i32) -> (i32, i32) {
    %c0_i32 = arith.constant 0 : i32
    %c0_i32_0 = arith.constant 0 : i32
    %c0_i32_1 = arith.constant 0 : i32
    return %c0_i32, %c0_i32_0 : i32, i32
  }
  func.func @transform_7(%arg0: i32, %arg1: i32) -> (i32, i32, i32) {
    %c0_i32 = arith.constant 0 : i32
    %c0_i32_0 = arith.constant 0 : i32
    %c0_i32_1 = arith.constant 0 : i32
    return %arg0, %c0_i32, %c0_i32_0 : i32, i32, i32
  }
}

</mosaic_0001>

<llo_original>
// kernel: shape_encoder_pc.1
$region0: #{shape_encoder_pc.1}
  #allocation0 [shape = 'u32[]', space=smem, size = 0x4, offset = 0x4, fixed_abs, tag = 'smem constant byte address 0x4 - core index']
  #allocation1 [shape = 'u32[72,128]{1,0:T(1,128)}', space=vmem, size = 0x9000, scoped, tag = 'internal scratch']
  %s0 = inlined_call_operand.vmem [shape: f32[3,8192], index: 0, kind: input, shape index: {}]
  %s1 = inlined_call_operand.vmem [shape: f32[64,3], index: 1, kind: input, shape index: {}]
  %s2 = inlined_call_operand.vmem [shape: f32[64,1], index: 2, kind: input, shape index: {}]
  %s3 = inlined_call_operand.vmem [shape: bf16[128,64], index: 3, kind: input, shape index: {}]
  %s4 = inlined_call_operand.vmem [shape: f32[128,1], index: 4, kind: input, shape index: {}]
  %s5 = inlined_call_operand.vmem [shape: bf16[128,128], index: 5, kind: input, shape index: {}]
  %s6 = inlined_call_operand.vmem [shape: f32[128,1], index: 6, kind: input, shape index: {}]
  %s7 = inlined_call_operand.hbm [shape: f32[2,4,128], index: 7, kind: output, shape index: {}]
  %s8 = sld [smem:[#allocation0]]
  $region69: #{shape_encoder_pc.1} parent=0
    _
  %s10 = ssub.s32 1, %s8
  %s11 = scalar_select 0, %s10, %s8
  $region1: #{shape_encoder_pc.1} parent=0
    #allocation2 [shape = 'u8[4096]{0}', space=vmem, size = 0x1000, scoped, tag = 'output window, operand 0']
    #allocation3 [shape = 's32[2]{0}', space=sflag, size = 0x8, scoped, tag = 'scoped memory for shape_encoder_pc.1']
    %12 = vsyncpa [#allocation3], 0
    %s13 = scalar_lea.sflag [#allocation3], 1
    %14 = vsyncpa %s13, 0
    loop: start=0, step=1, limit=4
    $region2: #{shape_encoder_pc.1} parent=1 // loop_pre_header
      _
    $region3: #{shape_encoder_pc.1} parent=1 // loop_header
      %s16 = sphi 0, %s20
      %p17 = scmp.ge.s32.totalorder %s16, 4
      %s23 = sphi 0, %s35
      %s24 = sphi 0, %s31
      %s25 = sphi 0, %s23
      %s26 = sphi 0, %s24
      %s27 = sphi 0, %s25
      %s28 = sphi 0, %s26
      %s40 = sphi 0, %s42
      %s43 = sphi 0, %s40
      %s44 = sphi 0, %s43
      %s60 = sphi 0, %s44
      %s64 = sphi 0, %s64
      %s66 = sphi 0, %s64
      %s67 = sphi 0, %s66
      %s81 = sphi 0, %s67
      %s85 = sphi 0, %s85
      %s87 = sphi 0, %s85
      %s88 = sphi 0, %s87
      %s102 = sphi 0, %s88
      %s106 = sphi 0, %s106
      %s108 = sphi 0, %s106
      %s109 = sphi 0, %s108
      %s123 = sphi 0, %s109
      %s127 = sphi 0, %s127
      %s129 = sphi 0, %s127
      %s130 = sphi 0, %s129
      %s144 = sphi 0, %s130
      %s148 = sphi 0, %s148
      %s150 = sphi 0, %s148
      %s151 = sphi 0, %s150
      %s165 = sphi 0, %s151
      %s169 = sphi 0, %s169
      %s171 = sphi 0, %s169
      %s172 = sphi 0, %s171
      %s186 = sphi 0, %s172
      %s192 = sphi 0, %s194
      %s195 = sphi 0, %s192
      %s196 = sphi 0, %s195
      %s212 = sphi 0, %s196
    $region4: #{shape_encoder_pc.1} parent=1 // loop_header_branch
      %19 = sbr.rel (%p17) target = $region8
    $region5: #{shape_encoder_pc.1} parent=1 // loop_body
      %s21 = ssub.s32 %s16, 1
      %s22 = ssub.s32 %s16, 2
      %s29 = sadd.s32 1, %s24
      %p30 = scmp.ge.s32.totalorder %s29, 1
      %s31 = scalar_select %p30, 0, %s29
      %s32 = sadd.s32 1, %s23
      %s33 = scalar_select %p30, %s32, %s23
      %p34 = scmp.ge.s32.totalorder %s33, 2
      %s35 = scalar_select %p34, 0, %s33
      %s36 = sadd.s32 %s23, %s24
      %s37 = sadd.s32 %s35, %s31
      %s38 = ssub.s32 %s36, %s37
      %p39 = scmp.eq.s32.totalorder %s38, 0
      %s41 = sadd.s32 %s40, 1
      %s42 = scalar_select %p39, %s40, %s41
      %p45 = pneg %p39
      %p46 = scmp.eq.s32.totalorder %s16, 1
      %p47 = por %p45, %p46
      %p48 = scmp.ne.s32.totalorder %s40, %s43
      %p49 = scmp.eq.s32.totalorder %s16, 0
      %p50 = por %p48, %p49
      %p51 = scmp.ne.s32.totalorder %s40, %s43
      %p52 = scmp.eq.s32.totalorder %s21, 1
      %p53 = por %p51, %p52
      %p54 = scmp.ne.s32.totalorder %s43, %s44
      %p55 = scmp.eq.s32.totalorder %s21, 0
      %p56 = por %p54, %p55
      %p57 = scmp.ne.s32.totalorder %s43, %s44
      %p58 = scmp.eq.s32.totalorder %s22, 1
      %p59 = por %p57, %p58
      %p61 = scmp.ne.s32.totalorder %s44, %s60
      %p62 = scmp.eq.s32.totalorder %s22, 0
      %p63 = por %p61, %p62
      %s65 = sadd.s32 %s64, 1
      %p68 = scmp.eq.s32.totalorder %s16, 1
      %p69 = scmp.ne.s32.totalorder %s64, %s66
      %p70 = scmp.eq.s32.totalorder %s16, 0
      %p71 = por %p69, %p70
      %p72 = scmp.ne.s32.totalorder %s64, %s66
      %p73 = scmp.eq.s32.totalorder %s21, 1
      %p74 = por %p72, %p73
      %p75 = scmp.ne.s32.totalorder %s66, %s67
      %p76 = scmp.eq.s32.totalorder %s21, 0
      %p77 = por %p75, %p76
      %p78 = scmp.ne.s32.totalorder %s66, %s67
      %p79 = scmp.eq.s32.totalorder %s22, 1
      %p80 = por %p78, %p79
      %p82 = scmp.ne.s32.totalorder %s67, %s81
      %p83 = scmp.eq.s32.totalorder %s22, 0
      %p84 = por %p82, %p83
      %s86 = sadd.s32 %s85, 1
      %p89 = scmp.eq.s32.totalorder %s16, 1
      %p90 = scmp.ne.s32.totalorder %s85, %s87
      %p91 = scmp.eq.s32.totalorder %s16, 0
      %p92 = por %p90, %p91
      %p93 = scmp.ne.s32.totalorder %s85, %s87
      %p94 = scmp.eq.s32.totalorder %s21, 1
      %p95 = por %p93, %p94
      %p96 = scmp.ne.s32.totalorder %s87, %s88
      %p97 = scmp.eq.s32.totalorder %s21, 0
      %p98 = por %p96, %p97
      %p99 = scmp.ne.s32.totalorder %s87, %s88
      %p100 = scmp.eq.s32.totalorder %s22, 1
      %p101 = por %p99, %p100
      %p103 = scmp.ne.s32.totalorder %s88, %s102
      %p104 = scmp.eq.s32.totalorder %s22, 0
      %p105 = por %p103, %p104
      %s107 = sadd.s32 %s106, 1
      %p110 = scmp.eq.s32.totalorder %s16, 1
      %p111 = scmp.ne.s32.totalorder %s106, %s108
      %p112 = scmp.eq.s32.totalorder %s16, 0
      %p113 = por %p111, %p112
      %p114 = scmp.ne.s32.totalorder %s106, %s108
      %p115 = scmp.eq.s32.totalorder %s21, 1
      %p116 = por %p114, %p115
      %p117 = scmp.ne.s32.totalorder %s108, %s109
      %p118 = scmp.eq.s32.totalorder %s21, 0
      %p119 = por %p117, %p118
      %p120 = scmp.ne.s32.totalorder %s108, %s109
      %p121 = scmp.eq.s32.totalorder %s22, 1
      %p122 = por %p120, %p121
      %p124 = scmp.ne.s32.totalorder %s109, %s123
      %p125 = scmp.eq.s32.totalorder %s22, 0
      %p126 = por %p124, %p125
      %s128 = sadd.s32 %s127, 1
      %p131 = scmp.eq.s32.totalorder %s16, 1
      %p132 = scmp.ne.s32.totalorder %s127, %s129
      %p133 = scmp.eq.s32.totalorder %s16, 0
      %p134 = por %p132, %p133
      %p135 = scmp.ne.s32.totalorder %s127, %s129
      %p136 = scmp.eq.s32.totalorder %s21, 1
      %p137 = por %p135, %p136
      %p138 = scmp.ne.s32.totalorder %s129, %s130
      %p139 = scmp.eq.s32.totalorder %s21, 0
      %p140 = por %p138, %p139
      %p141 = scmp.ne.s32.totalorder %s129, %s130
      %p142 = scmp.eq.s32.totalorder %s22, 1
      %p143 = por %p141, %p142
      %p145 = scmp.ne.s32.totalorder %s130, %s144
      %p146 = scmp.eq.s32.totalorder %s22, 0
      %p147 = por %p145, %p146
      %s149 = sadd.s32 %s148, 1
      %p152 = scmp.eq.s32.totalorder %s16, 1
      %p153 = scmp.ne.s32.totalorder %s148, %s150
      %p154 = scmp.eq.s32.totalorder %s16, 0
      %p155 = por %p153, %p154
      %p156 = scmp.ne.s32.totalorder %s148, %s150
      %p157 = scmp.eq.s32.totalorder %s21, 1
      %p158 = por %p156, %p157
      %p159 = scmp.ne.s32.totalorder %s150, %s151
      %p160 = scmp.eq.s32.totalorder %s21, 0
      %p161 = por %p159, %p160
      %p162 = scmp.ne.s32.totalorder %s150, %s151
      %p163 = scmp.eq.s32.totalorder %s22, 1
      %p164 = por %p162, %p163
      %p166 = scmp.ne.s32.totalorder %s151, %s165
      %p167 = scmp.eq.s32.totalorder %s22, 0
      %p168 = por %p166, %p167
      %s170 = sadd.s32 %s169, 1
      %p173 = scmp.eq.s32.totalorder %s16, 1
      %p174 = scmp.ne.s32.totalorder %s169, %s171
      %p175 = scmp.eq.s32.totalorder %s16, 0
      %p176 = por %p174, %p175
      %p177 = scmp.ne.s32.totalorder %s169, %s171
      %p178 = scmp.eq.s32.totalorder %s21, 1
      %p179 = por %p177, %p178
      %p180 = scmp.ne.s32.totalorder %s171, %s172
      %p181 = scmp.eq.s32.totalorder %s21, 0
      %p182 = por %p180, %p181
      %p183 = scmp.ne.s32.totalorder %s171, %s172
      %p184 = scmp.eq.s32.totalorder %s22, 1
      %p185 = por %p183, %p184
      %p187 = scmp.ne.s32.totalorder %s172, %s186
      %p188 = scmp.eq.s32.totalorder %s22, 0
      %p189 = por %p187, %p188
      %s190 = ssub.s32 %s23, %s35
      %p191 = scmp.eq.s32.totalorder %s190, 0
      %s193 = sadd.s32 %s192, 1
      %s194 = scalar_select %p191, %s192, %s193
      %p197 = pneg %p191
      %p198 = scmp.eq.s32.totalorder %s16, 1
      %p199 = por %p197, %p198
      %p200 = scmp.ne.s32.totalorder %s192, %s195
      %p201 = scmp.eq.s32.totalorder %s16, 0
      %p202 = por %p200, %p201
      %p203 = scmp.ne.s32.totalorder %s192, %s195
      %p204 = scmp.eq.s32.totalorder %s21, 1
      %p205 = por %p203, %p204
      %p206 = scmp.ne.s32.totalorder %s195, %s196
      %p207 = scmp.eq.s32.totalorder %s21, 0
      %p208 = por %p206, %p207
      %p209 = scmp.ne.s32.totalorder %s195, %s196
      %p210 = scmp.eq.s32.totalorder %s22, 1
      %p211 = por %p209, %p210
      %p213 = scmp.ne.s32.totalorder %s196, %s212
      %p214 = scmp.eq.s32.totalorder %s22, 0
      %p215 = por %p213, %p214
      %p216 = scmp.le.s32.totalorder 1, %s16
      %p217 = scmp.lt.s32.totalorder %s16, 3
      %p218 = pnand %p216, %p217
      %p219 = pneg %p218
      // Predicated region
      $region9: #{shape_encoder_pc.1} parent=5 // pred_check
        _
      $region10: #{shape_encoder_pc.1} parent=5 // pred_check_branch
        %221 = sbr.rel (%p218) target = $region12
      $region11: #{shape_encoder_pc.1} parent=5 // pred_region
        %s222 = ssub.s32 %s16, 1
        // Predicated region
        $region13: #{shape_encoder_pc.1} parent=11 // pred_check
          %p223 = pneg %p77
        $region14: #{shape_encoder_pc.1} parent=11 // pred_check_branch
          %225 = sbr.rel (%p223) target = $region16
        $region15: #{shape_encoder_pc.1} parent=11 // pred_region
          _
        $region16: #{shape_encoder_pc.1} parent=11 // pred_fallthru
          _
        // Predicated region
        $region17: #{shape_encoder_pc.1} parent=11 // pred_check
          %p226 = pneg %p98
        $region18: #{shape_encoder_pc.1} parent=11 // pred_check_branch
          %228 = sbr.rel (%p226) target = $region20
        $region19: #{shape_encoder_pc.1} parent=11 // pred_region
          _
        $region20: #{shape_encoder_pc.1} parent=11 // pred_fallthru
          _
        // Predicated region
        $region21: #{shape_encoder_pc.1} parent=11 // pred_check
          %p229 = pneg %p119
        $region22: #{shape_encoder_pc.1} parent=11 // pred_check_branch
          %231 = sbr.rel (%p229) target = $region24
        $region23: #{shape_encoder_pc.1} parent=11 // pred_region
          _
        $region24: #{shape_encoder_pc.1} parent=11 // pred_fallthru
          _
        // Predicated region
        $region25: #{shape_encoder_pc.1} parent=11 // pred_check
          %p232 = pneg %p140
        $region26: #{shape_encoder_pc.1} parent=11 // pred_check_branch
          %234 = sbr.rel (%p232) target = $region28
        $region27: #{shape_encoder_pc.1} parent=11 // pred_region
          _
        $region28: #{shape_encoder_pc.1} parent=11 // pred_fallthru
          _
        // Predicated region
        $region29: #{shape_encoder_pc.1} parent=11 // pred_check
          %p235 = pneg %p161
        $region30: #{shape_encoder_pc.1} parent=11 // pred_check_branch
          %237 = sbr.rel (%p235) target = $region32
        $region31: #{shape_encoder_pc.1} parent=11 // pred_region
          _
        $region32: #{shape_encoder_pc.1} parent=11 // pred_fallthru
          _
        // Predicated region
        $region33: #{shape_encoder_pc.1} parent=11 // pred_check
          %p238 = pneg %p182
        $region34: #{shape_encoder_pc.1} parent=11 // pred_check_branch
          %240 = sbr.rel (%p238) target = $region36
        $region35: #{shape_encoder_pc.1} parent=11 // pred_region
          _
        $region36: #{shape_encoder_pc.1} parent=11 // pred_fallthru
          _
      $region12: #{shape_encoder_pc.1} parent=5 // pred_fallthru
        _
      %p241 = scmp.lt.s32.totalorder %s16, 2
      // Predicated region
      $region37: #{shape_encoder_pc.1} parent=5 // pred_check
        %p242 = pneg %p241
      $region38: #{shape_encoder_pc.1} parent=5 // pred_check_branch
        %244 = sbr.rel (%p242) target = $region40
      $region39: #{shape_encoder_pc.1} parent=5 // pred_region
        // Predicated region
        $region41: #{shape_encoder_pc.1} parent=39 // pred_check
          %p245 = pneg %p50
        $region42: #{shape_encoder_pc.1} parent=39 // pred_check_branch
          %247 = sbr.rel (%p245) target = $region44
        $region43: #{shape_encoder_pc.1} parent=39 // pred_region
          %s248 = sadd.s32 %s23, %s24
          %s249 = smul.u32 32, %s248
          %p250 = scmp.lt.s32.totalorder %s249, 63
          %s251 = scalar_select %p250, %s249, 63
          %s252 = smul.addr %s251, 4
          %s253 = scalar_lea.vmem %s0, %s252
          %s254 = sadd.s32 %s23, %s24
          %s255 = smul.u32 32, %s254
        $region44: #{shape_encoder_pc.1} parent=39 // pred_fallthru
          _
      $region40: #{shape_encoder_pc.1} parent=5 // pred_fallthru
        _
      %p256 = scmp.le.s32.totalorder 1, %s16
      %p257 = scmp.lt.s32.totalorder %s16, 3
      %p258 = pnand %p256, %p257
      %p259 = pneg %p258
      // Predicated region
      $region45: #{shape_encoder_pc.1} parent=5 // pred_check
        _
      $region46: #{shape_encoder_pc.1} parent=5 // pred_check_branch
        %261 = sbr.rel (%p258) target = $region48
      $region47: #{shape_encoder_pc.1} parent=5 // pred_region
        %s262 = ssub.s32 %s16, 1
        %s263 = sadd.s32 %s25, %s26
        %s264 = smul.u32 32, %s263
        %p265 = scmp.lt.s32.totalorder %s264, 63
        %s266 = scalar_select %p265, %s264, 63
        %s267 = smul.addr %s266, 4
        %s268 = scalar_lea.vmem %s0, %s267
        %p269 = pneg %p56
        %p270 = pneg %p53
        %p271 = pneg %p77
        %p272 = pneg %p74
        %p273 = pneg %p98
        %p274 = pneg %p95
        %p275 = pneg %p119
        %p276 = pneg %p116
        %p277 = pneg %p140
        %p278 = pneg %p137
        %p279 = pneg %p161
        %p280 = pneg %p158
        %p281 = pneg %p182
        %p282 = pneg %p179
        %p283 = pneg %p208
        %p284 = pneg %p205
        %s285 = sand.u32 %s195, 1
        %s286 = scalar_lea.sflag [#allocation3], %s285
        %s287 = sand.u32 %s195, 1
        %s288 = smul.addr %s287, 4
        %s289 = scalar_lea.vmem [#allocation2], %s288
        %s290 = sadd.s32 %s25, %s26
        %s291 = smul.u32 32, %s290
        %p292 = scmp.lt.s32.totalorder %s291, 63
        %s293 = scalar_select %p292, %s291, 63
        %s294 = smul.addr %s293, 4
        %s295 = scalar_lea.vmem %s0, %s294
        %s296 = sadd.s32 %s25, %s26
        %s297 = smul.u32 32, %s296
        %v299 = vld [vmem:[%s295] sm:$0x77]
        %v300 = vld [vmem:[%s295 + $0x8] sm:$0x77]
        %v301 = vld [vmem:[%s295 + $0x10] sm:$0x77]
        %v302 = vld [vmem:[%s295 + $0x18] sm:$0x77]
        %v303 = vld [vmem:[%s295 + $0x20] sm:$0x77]
        %v304 = vld [vmem:[%s295 + $0x28] sm:$0x77]
        %v305 = vld [vmem:[%s295 + $0x30] sm:$0x77]
        %v306 = vld [vmem:[%s295 + $0x38] sm:$0x77]
        %v307 = vld [vmem:[%s295 + $0x40] sm:$0x77]
        %v308 = vld [vmem:[%s295 + $0x48] sm:$0x77]
        %v309 = vld [vmem:[%s295 + $0x50] sm:$0x77]
        %v310 = vld [vmem:[%s295 + $0x58] sm:$0x77]
        %v311 = vld [vmem:[%s295 + $0x60] sm:$0x77]
        %v312 = vld [vmem:[%s295 + $0x68] sm:$0x77]
        %v313 = vld [vmem:[%s295 + $0x70] sm:$0x77]
        %v314 = vld [vmem:[%s295 + $0x78] sm:$0x77]
        %v315 = vld [vmem:[%s1] sm:$0xff]
        %v316 = vld [vmem:[%s1 + $0x8] sm:$0xff]
        %v317 = vld [vmem:[%s1 + $0x10] sm:$0xff]
        %v318 = vld [vmem:[%s1 + $0x18] sm:$0xff]
        %v319 = vld [vmem:[%s1 + $0x20] sm:$0xff]
        %v320 = vld [vmem:[%s1 + $0x28] sm:$0xff]
        %v321 = vld [vmem:[%s1 + $0x30] sm:$0xff]
        %v322 = vld [vmem:[%s1 + $0x38] sm:$0xff]
        %324 = vset.pattern.permute.xlu0 0
        %325 = vperm.xlu0 %324, %v315
        %v326 = vpop.permute.xlu0 %325
        %329 = vset.pattern.permute.xlu0 0
        %330 = vperm.xlu0 %329, %v316
        %v331 = vpop.permute.xlu0 %330
        %334 = vset.pattern.permute.xlu0 0
        %335 = vperm.xlu0 %334, %v317
        %v336 = vpop.permute.xlu0 %335
        %339 = vset.pattern.permute.xlu0 0
        %340 = vperm.xlu0 %339, %v318
        %v341 = vpop.permute.xlu0 %340
        %344 = vset.pattern.permute.xlu0 0
        %345 = vperm.xlu0 %344, %v319
        %v346 = vpop.permute.xlu0 %345
        %349 = vset.pattern.permute.xlu0 0
        %350 = vperm.xlu0 %349, %v320
        %v351 = vpop.permute.xlu0 %350
        %354 = vset.pattern.permute.xlu0 0
        %355 = vperm.xlu0 %354, %v321
        %v356 = vpop.permute.xlu0 %355
        %359 = vset.pattern.permute.xlu0 0
        %360 = vperm.xlu0 %359, %v322
        %v361 = vpop.permute.xlu0 %360
        %v379 = vperm.slane %v299, 0
        %v380 = vperm.slane %v299, 4
        %v381 = vperm.slane %v300, 0
        %v382 = vperm.slane %v300, 4
        %v383 = vperm.slane %v301, 0
        %v384 = vperm.slane %v301, 4
        %v385 = vperm.slane %v302, 0
        %v386 = vperm.slane %v302, 4
        %v387 = vperm.slane %v303, 0
        %v388 = vperm.slane %v303, 4
        %v389 = vperm.slane %v304, 0
        %v390 = vperm.slane %v304, 4
        %v391 = vperm.slane %v305, 0
        %v392 = vperm.slane %v305, 4
        %v393 = vperm.slane %v306, 0
        %v394 = vperm.slane %v306, 4
        %v395 = vperm.slane %v307, 0
        %v396 = vperm.slane %v307, 4
        %v397 = vperm.slane %v308, 0
        %v398 = vperm.slane %v308, 4
        %v399 = vperm.slane %v309, 0
        %v400 = vperm.slane %v309, 4
        %v401 = vperm.slane %v310, 0
        %v402 = vperm.slane %v310, 4
        %v403 = vperm.slane %v311, 0
        %v404 = vperm.slane %v311, 4
        %v405 = vperm.slane %v312, 0
        %v406 = vperm.slane %v312, 4
        %v407 = vperm.slane %v313, 0
        %v408 = vperm.slane %v313, 4
        %v409 = vperm.slane %v314, 0
        %v410 = vperm.slane %v314, 4
        %v443 = vperm.slane %v379, 0
        %v444 = vperm.slane %v380, 0
        %v445 = vperm.slane %v381, 0
        %v446 = vperm.slane %v382, 0
        %v447 = vperm.slane %v383, 0
        %v448 = vperm.slane %v384, 0
        %v449 = vperm.slane %v385, 0
        %v450 = vperm.slane %v386, 0
        %v451 = vperm.slane %v387, 0
        %v452 = vperm.slane %v388, 0
        %v453 = vperm.slane %v389, 0
        %v454 = vperm.slane %v390, 0
        %v455 = vperm.slane %v391, 0
        %v456 = vperm.slane %v392, 0
        %v457 = vperm.slane %v393, 0
        %v458 = vperm.slane %v394, 0
        %v459 = vperm.slane %v395, 0
        %v460 = vperm.slane %v396, 0
        %v461 = vperm.slane %v397, 0
        %v462 = vperm.slane %v398, 0
        %v463 = vperm.slane %v399, 0
        %v464 = vperm.slane %v400, 0
        %v465 = vperm.slane %v401, 0
        %v466 = vperm.slane %v402, 0
        %v467 = vperm.slane %v403, 0
        %v468 = vperm.slane %v404, 0
        %v469 = vperm.slane %v405, 0
        %v470 = vperm.slane %v406, 0
        %v471 = vperm.slane %v407, 0
        %v472 = vperm.slane %v408, 0
        %v473 = vperm.slane %v409, 0
        %v474 = vperm.slane %v410, 0
        %v475 = vmul.f32 %v326, %v443
        %v476 = vmul.f32 %v326, %v444
        %v477 = vmul.f32 %v326, %v445
        %v478 = vmul.f32 %v326, %v446
        %v479 = vmul.f32 %v326, %v447
        %v480 = vmul.f32 %v326, %v448
        %v481 = vmul.f32 %v326, %v449
        %v482 = vmul.f32 %v326, %v450
        %v483 = vmul.f32 %v326, %v451
        %v484 = vmul.f32 %v326, %v452
        %v485 = vmul.f32 %v326, %v453
        %v486 = vmul.f32 %v326, %v454
        %v487 = vmul.f32 %v326, %v455
        %v488 = vmul.f32 %v326, %v456
        %v489 = vmul.f32 %v326, %v457
        %v490 = vmul.f32 %v326, %v458
        %v491 = vmul.f32 %v326, %v459
        %v492 = vmul.f32 %v326, %v460
        %v493 = vmul.f32 %v326, %v461
        %v494 = vmul.f32 %v326, %v462
        %v495 = vmul.f32 %v326, %v463
        %v496 = vmul.f32 %v326, %v464
        %v497 = vmul.f32 %v326, %v465
        %v498 = vmul.f32 %v326, %v466
        %v499 = vmul.f32 %v326, %v467
        %v500 = vmul.f32 %v326, %v468
        %v501 = vmul.f32 %v326, %v469
        %v502 = vmul.f32 %v326, %v470
        %v503 = vmul.f32 %v326, %v471
        %v504 = vmul.f32 %v326, %v472
        %v505 = vmul.f32 %v326, %v473
        %v506 = vmul.f32 %v326, %v474
        %v507 = vmul.f32 %v331, %v443
        %v508 = vmul.f32 %v331, %v444
        %v509 = vmul.f32 %v331, %v445
        %v510 = vmul.f32 %v331, %v446
        %v511 = vmul.f32 %v331, %v447
        %v512 = vmul.f32 %v331, %v448
        %v513 = vmul.f32 %v331, %v449
        %v514 = vmul.f32 %v331, %v450
        %v515 = vmul.f32 %v331, %v451
        %v516 = vmul.f32 %v331, %v452
        %v517 = vmul.f32 %v331, %v453
        %v518 = vmul.f32 %v331, %v454
        %v519 = vmul.f32 %v331, %v455
        %v520 = vmul.f32 %v331, %v456
        %v521 = vmul.f32 %v331, %v457
        %v522 = vmul.f32 %v331, %v458
        %v523 = vmul.f32 %v331, %v459
        %v524 = vmul.f32 %v331, %v460
        %v525 = vmul.f32 %v331, %v461
        %v526 = vmul.f32 %v331, %v462
        %v527 = vmul.f32 %v331, %v463
        %v528 = vmul.f32 %v331, %v464
        %v529 = vmul.f32 %v331, %v465
        %v530 = vmul.f32 %v331, %v466
        %v531 = vmul.f32 %v331, %v467
        %v532 = vmul.f32 %v331, %v468
        %v533 = vmul.f32 %v331, %v469
        %v534 = vmul.f32 %v331, %v470
        %v535 = vmul.f32 %v331, %v471
        %v536 = vmul.f32 %v331, %v472
        %v537 = vmul.f32 %v331, %v473
        %v538 = vmul.f32 %v331, %v474
        %v539 = vmul.f32 %v336, %v443
        %v540 = vmul.f32 %v336, %v444
        %v541 = vmul.f32 %v336, %v445
        %v542 = vmul.f32 %v336, %v446
        %v543 = vmul.f32 %v336, %v447
        %v544 = vmul.f32 %v336, %v448
        %v545 = vmul.f32 %v336, %v449
        %v546 = vmul.f32 %v336, %v450
        %v547 = vmul.f32 %v336, %v451
        %v548 = vmul.f32 %v336, %v452
        %v549 = vmul.f32 %v336, %v453
        %v550 = vmul.f32 %v336, %v454
        %v551 = vmul.f32 %v336, %v455
        %v552 = vmul.f32 %v336, %v456
        %v553 = vmul.f32 %v336, %v457
        %v554 = vmul.f32 %v336, %v458
        %v555 = vmul.f32 %v336, %v459
        %v556 = vmul.f32 %v336, %v460
        %v557 = vmul.f32 %v336, %v461
        %v558 = vmul.f32 %v336, %v462
        %v559 = vmul.f32 %v336, %v463
        %v560 = vmul.f32 %v336, %v464
        %v561 = vmul.f32 %v336, %v465
        %v562 = vmul.f32 %v336, %v466
        %v563 = vmul.f32 %v336, %v467
        %v564 = vmul.f32 %v336, %v468
        %v565 = vmul.f32 %v336, %v469
        %v566 = vmul.f32 %v336, %v470
        %v567 = vmul.f32 %v336, %v471
        %v568 = vmul.f32 %v336, %v472
        %v569 = vmul.f32 %v336, %v473
        %v570 = vmul.f32 %v336, %v474
        %v571 = vmul.f32 %v341, %v443
        %v572 = vmul.f32 %v341, %v444
        %v573 = vmul.f32 %v341, %v445
        %v574 = vmul.f32 %v341, %v446
        %v575 = vmul.f32 %v341, %v447
        %v576 = vmul.f32 %v341, %v448
        %v577 = vmul.f32 %v341, %v449
        %v578 = vmul.f32 %v341, %v450
        %v579 = vmul.f32 %v341, %v451
        %v580 = vmul.f32 %v341, %v452
        %v581 = vmul.f32 %v341, %v453
        %v582 = vmul.f32 %v341, %v454
        %v583 = vmul.f32 %v341, %v455
        %v584 = vmul.f32 %v341, %v456
        %v585 = vmul.f32 %v341, %v457
        %v586 = vmul.f32 %v341, %v458
        %v587 = vmul.f32 %v341, %v459
        %v588 = vmul.f32 %v341, %v460
        %v589 = vmul.f32 %v341, %v461
        %v590 = vmul.f32 %v341, %v462
        %v591 = vmul.f32 %v341, %v463
        %v592 = vmul.f32 %v341, %v464
        %v593 = vmul.f32 %v341, %v465
        %v594 = vmul.f32 %v341, %v466
        %v595 = vmul.f32 %v341, %v467
        %v596 = vmul.f32 %v341, %v468
        %v597 = vmul.f32 %v341, %v469
        %v598 = vmul.f32 %v341, %v470
        %v599 = vmul.f32 %v341, %v471
        %v600 = vmul.f32 %v341, %v472
        %v601 = vmul.f32 %v341, %v473
        %v602 = vmul.f32 %v341, %v474
        %v603 = vmul.f32 %v346, %v443
        %v604 = vmul.f32 %v346, %v444
        %v605 = vmul.f32 %v346, %v445
        %v606 = vmul.f32 %v346, %v446
        %v607 = vmul.f32 %v346, %v447
        %v608 = vmul.f32 %v346, %v448
        %v609 = vmul.f32 %v346, %v449
        %v610 = vmul.f32 %v346, %v450
        %v611 = vmul.f32 %v346, %v451
        %v612 = vmul.f32 %v346, %v452
        %v613 = vmul.f32 %v346, %v453
        %v614 = vmul.f32 %v346, %v454
        %v615 = vmul.f32 %v346, %v455
        %v616 = vmul.f32 %v346, %v456
        %v617 = vmul.f32 %v346, %v457
        %v618 = vmul.f32 %v346, %v458
        %v619 = vmul.f32 %v346, %v459
        %v620 = vmul.f32 %v346, %v460
        %v621 = vmul.f32 %v346, %v461
        %v622 = vmul.f32 %v346, %v462
        %v623 = vmul.f32 %v346, %v463
        %v624 = vmul.f32 %v346, %v464
        %v625 = vmul.f32 %v346, %v465
        %v626 = vmul.f32 %v346, %v466
        %v627 = vmul.f32 %v346, %v467
        %v628 = vmul.f32 %v346, %v468
        %v629 = vmul.f32 %v346, %v469
        %v630 = vmul.f32 %v346, %v470
        %v631 = vmul.f32 %v346, %v471
        %v632 = vmul.f32 %v346, %v472
        %v633 = vmul.f32 %v346, %v473
        %v634 = vmul.f32 %v346, %v474
        %v635 = vmul.f32 %v351, %v443
        %v636 = vmul.f32 %v351, %v444
        %v637 = vmul.f32 %v351, %v445
        %v638 = vmul.f32 %v351, %v446
        %v639 = vmul.f32 %v351, %v447
        %v640 = vmul.f32 %v351, %v448
        %v641 = vmul.f32 %v351, %v449
        %v642 = vmul.f32 %v351, %v450
        %v643 = vmul.f32 %v351, %v451
        %v644 = vmul.f32 %v351, %v452
        %v645 = vmul.f32 %v351, %v453
        %v646 = vmul.f32 %v351, %v454
        %v647 = vmul.f32 %v351, %v455
        %v648 = vmul.f32 %v351, %v456
        %v649 = vmul.f32 %v351, %v457
        %v650 = vmul.f32 %v351, %v458
        %v651 = vmul.f32 %v351, %v459
        %v652 = vmul.f32 %v351, %v460
        %v653 = vmul.f32 %v351, %v461
        %v654 = vmul.f32 %v351, %v462
        %v655 = vmul.f32 %v351, %v463
        %v656 = vmul.f32 %v351, %v464
        %v657 = vmul.f32 %v351, %v465
        %v658 = vmul.f32 %v351, %v466
        %v659 = vmul.f32 %v351, %v467
        %v660 = vmul.f32 %v351, %v468
        %v661 = vmul.f32 %v351, %v469
        %v662 = vmul.f32 %v351, %v470
        %v663 = vmul.f32 %v351, %v471
        %v664 = vmul.f32 %v351, %v472
        %v665 = vmul.f32 %v351, %v473
        %v666 = vmul.f32 %v351, %v474
        %v667 = vmul.f32 %v356, %v443
        %v668 = vmul.f32 %v356, %v444
        %v669 = vmul.f32 %v356, %v445
        %v670 = vmul.f32 %v356, %v446
        %v671 = vmul.f32 %v356, %v447
        %v672 = vmul.f32 %v356, %v448
        %v673 = vmul.f32 %v356, %v449
        %v674 = vmul.f32 %v356, %v450
        %v675 = vmul.f32 %v356, %v451
        %v676 = vmul.f32 %v356, %v452
        %v677 = vmul.f32 %v356, %v453
        %v678 = vmul.f32 %v356, %v454
        %v679 = vmul.f32 %v356, %v455
        %v680 = vmul.f32 %v356, %v456
        %v681 = vmul.f32 %v356, %v457
        %v682 = vmul.f32 %v356, %v458
        %v683 = vmul.f32 %v356, %v459
        %v684 = vmul.f32 %v356, %v460
        %v685 = vmul.f32 %v356, %v461
        %v686 = vmul.f32 %v356, %v462
        %v687 = vmul.f32 %v356, %v463
        %v688 = vmul.f32 %v356, %v464
        %v689 = vmul.f32 %v356, %v465
        %v690 = vmul.f32 %v356, %v466
        %v691 = vmul.f32 %v356, %v467
        %v692 = vmul.f32 %v356, %v468
        %v693 = vmul.f32 %v356, %v469
        %v694 = vmul.f32 %v356, %v470
        %v695 = vmul.f32 %v356, %v471
        %v696 = vmul.f32 %v356, %v472
        %v697 = vmul.f32 %v356, %v473
        %v698 = vmul.f32 %v356, %v474
        %v699 = vmul.f32 %v361, %v443
        %v700 = vmul.f32 %v361, %v444
        %v701 = vmul.f32 %v361, %v445
        %v702 = vmul.f32 %v361, %v446
        %v703 = vmul.f32 %v361, %v447
        %v704 = vmul.f32 %v361, %v448
        %v705 = vmul.f32 %v361, %v449
        %v706 = vmul.f32 %v361, %v450
        %v707 = vmul.f32 %v361, %v451
        %v708 = vmul.f32 %v361, %v452
        %v709 = vmul.f32 %v361, %v453
        %v710 = vmul.f32 %v361, %v454
        %v711 = vmul.f32 %v361, %v455
        %v712 = vmul.f32 %v361, %v456
        %v713 = vmul.f32 %v361, %v457
        %v714 = vmul.f32 %v361, %v458
        %v715 = vmul.f32 %v361, %v459
        %v716 = vmul.f32 %v361, %v460
        %v717 = vmul.f32 %v361, %v461
        %v718 = vmul.f32 %v361, %v462
        %v719 = vmul.f32 %v361, %v463
        %v720 = vmul.f32 %v361, %v464
        %v721 = vmul.f32 %v361, %v465
        %v722 = vmul.f32 %v361, %v466
        %v723 = vmul.f32 %v361, %v467
        %v724 = vmul.f32 %v361, %v468
        %v725 = vmul.f32 %v361, %v469
        %v726 = vmul.f32 %v361, %v470
        %v727 = vmul.f32 %v361, %v471
        %v728 = vmul.f32 %v361, %v472
        %v729 = vmul.f32 %v361, %v473
        %v730 = vmul.f32 %v361, %v474
        %731 = vset.pattern.permute.xlu0 1
        %732 = vperm.xlu0 %731, %v315
        %v733 = vpop.permute.xlu0 %732
        %735 = vset.pattern.permute.xlu0 1
        %736 = vperm.xlu0 %735, %v316
        %v737 = vpop.permute.xlu0 %736
        %739 = vset.pattern.permute.xlu0 1
        %740 = vperm.xlu0 %739, %v317
        %v741 = vpop.permute.xlu0 %740
        %743 = vset.pattern.permute.xlu0 1
        %744 = vperm.xlu0 %743, %v318
        %v745 = vpop.permute.xlu0 %744
        %747 = vset.pattern.permute.xlu0 1
        %748 = vperm.xlu0 %747, %v319
        %v749 = vpop.permute.xlu0 %748
        %751 = vset.pattern.permute.xlu0 1
        %752 = vperm.xlu0 %751, %v320
        %v753 = vpop.permute.xlu0 %752
        %755 = vset.pattern.permute.xlu0 1
        %756 = vperm.xlu0 %755, %v321
        %v757 = vpop.permute.xlu0 %756
        %759 = vset.pattern.permute.xlu0 1
        %760 = vperm.xlu0 %759, %v322
        %v761 = vpop.permute.xlu0 %760
        %v763 = vperm.slane %v299, 1
        %v764 = vperm.slane %v299, 5
        %v765 = vperm.slane %v300, 1
        %v766 = vperm.slane %v300, 5
        %v767 = vperm.slane %v301, 1
        %v768 = vperm.slane %v301, 5
        %v769 = vperm.slane %v302, 1
        %v770 = vperm.slane %v302, 5
        %v771 = vperm.slane %v303, 1
        %v772 = vperm.slane %v303, 5
        %v773 = vperm.slane %v304, 1
        %v774 = vperm.slane %v304, 5
        %v775 = vperm.slane %v305, 1
        %v776 = vperm.slane %v305, 5
        %v777 = vperm.slane %v306, 1
        %v778 = vperm.slane %v306, 5
        %v779 = vperm.slane %v307, 1
        %v780 = vperm.slane %v307, 5
        %v781 = vperm.slane %v308, 1
        %v782 = vperm.slane %v308, 5
        %v783 = vperm.slane %v309, 1
        %v784 = vperm.slane %v309, 5
        %v785 = vperm.slane %v310, 1
        %v786 = vperm.slane %v310, 5
        %v787 = vperm.slane %v311, 1
        %v788 = vperm.slane %v311, 5
        %v789 = vperm.slane %v312, 1
        %v790 = vperm.slane %v312, 5
        %v791 = vperm.slane %v313, 1
        %v792 = vperm.slane %v313, 5
        %v793 = vperm.slane %v314, 1
        %v794 = vperm.slane %v314, 5
        %v827 = vperm.slane %v763, 1
        %v828 = vperm.slane %v764, 1
        %v829 = vperm.slane %v765, 1
        %v830 = vperm.slane %v766, 1
        %v831 = vperm.slane %v767, 1
        %v832 = vperm.slane %v768, 1
        %v833 = vperm.slane %v769, 1
        %v834 = vperm.slane %v770, 1
        %v835 = vperm.slane %v771, 1
        %v836 = vperm.slane %v772, 1
        %v837 = vperm.slane %v773, 1
        %v838 = vperm.slane %v774, 1
        %v839 = vperm.slane %v775, 1
        %v840 = vperm.slane %v776, 1
        %v841 = vperm.slane %v777, 1
        %v842 = vperm.slane %v778, 1
        %v843 = vperm.slane %v779, 1
        %v844 = vperm.slane %v780, 1
        %v845 = vperm.slane %v781, 1
        %v846 = vperm.slane %v782, 1
        %v847 = vperm.slane %v783, 1
        %v848 = vperm.slane %v784, 1
        %v849 = vperm.slane %v785, 1
        %v850 = vperm.slane %v786, 1
        %v851 = vperm.slane %v787, 1
        %v852 = vperm.slane %v788, 1
        %v853 = vperm.slane %v789, 1
        %v854 = vperm.slane %v790, 1
        %v855 = vperm.slane %v791, 1
        %v856 = vperm.slane %v792, 1
        %v857 = vperm.slane %v793, 1
        %v858 = vperm.slane %v794, 1
        %v859 = vmul.f32 %v733, %v827
        %v860 = vmul.f32 %v733, %v828
        %v861 = vmul.f32 %v733, %v829
        %v862 = vmul.f32 %v733, %v830
        %v863 = vmul.f32 %v733, %v831
        %v864 = vmul.f32 %v733, %v832
        %v865 = vmul.f32 %v733, %v833
        %v866 = vmul.f32 %v733, %v834
        %v867 = vmul.f32 %v733, %v835
        %v868 = vmul.f32 %v733, %v836
        %v869 = vmul.f32 %v733, %v837
        %v870 = vmul.f32 %v733, %v838
        %v871 = vmul.f32 %v733, %v839
        %v872 = vmul.f32 %v733, %v840
        %v873 = vmul.f32 %v733, %v841
        %v874 = vmul.f32 %v733, %v842
        %v875 = vmul.f32 %v733, %v843
        %v876 = vmul.f32 %v733, %v844
        %v877 = vmul.f32 %v733, %v845
        %v878 = vmul.f32 %v733, %v846
        %v879 = vmul.f32 %v733, %v847
        %v880 = vmul.f32 %v733, %v848
        %v881 = vmul.f32 %v733, %v849
        %v882 = vmul.f32 %v733, %v850
        %v883 = vmul.f32 %v733, %v851
        %v884 = vmul.f32 %v733, %v852
        %v885 = vmul.f32 %v733, %v853
        %v886 = vmul.f32 %v733, %v854
        %v887 = vmul.f32 %v733, %v855
        %v888 = vmul.f32 %v733, %v856
        %v889 = vmul.f32 %v733, %v857
        %v890 = vmul.f32 %v733, %v858
        %v891 = vmul.f32 %v737, %v827
        %v892 = vmul.f32 %v737, %v828
        %v893 = vmul.f32 %v737, %v829
        %v894 = vmul.f32 %v737, %v830
        %v895 = vmul.f32 %v737, %v831
        %v896 = vmul.f32 %v737, %v832
        %v897 = vmul.f32 %v737, %v833
        %v898 = vmul.f32 %v737, %v834
        %v899 = vmul.f32 %v737, %v835
        %v900 = vmul.f32 %v737, %v836
        %v901 = vmul.f32 %v737, %v837
        %v902 = vmul.f32 %v737, %v838
        %v903 = vmul.f32 %v737, %v839
        %v904 = vmul.f32 %v737, %v840
        %v905 = vmul.f32 %v737, %v841
        %v906 = vmul.f32 %v737, %v842
        %v907 = vmul.f32 %v737, %v843
        %v908 = vmul.f32 %v737, %v844
        %v909 = vmul.f32 %v737, %v845
        %v910 = vmul.f32 %v737, %v846
        %v911 = vmul.f32 %v737, %v847
        %v912 = vmul.f32 %v737, %v848
        %v913 = vmul.f32 %v737, %v849
        %v914 = vmul.f32 %v737, %v850
        %v915 = vmul.f32 %v737, %v851
        %v916 = vmul.f32 %v737, %v852
        %v917 = vmul.f32 %v737, %v853
        %v918 = vmul.f32 %v737, %v854
        %v919 = vmul.f32 %v737, %v855
        %v920 = vmul.f32 %v737, %v856
        %v921 = vmul.f32 %v737, %v857
        %v922 = vmul.f32 %v737, %v858
        %v923 = vmul.f32 %v741, %v827
        %v924 = vmul.f32 %v741, %v828
        %v925 = vmul.f32 %v741, %v829
        %v926 = vmul.f32 %v741, %v830
        %v927 = vmul.f32 %v741, %v831
        %v928 = vmul.f32 %v741, %v832
        %v929 = vmul.f32 %v741, %v833
        %v930 = vmul.f32 %v741, %v834
        %v931 = vmul.f32 %v741, %v835
        %v932 = vmul.f32 %v741, %v836
        %v933 = vmul.f32 %v741, %v837
        %v934 = vmul.f32 %v741, %v838
        %v935 = vmul.f32 %v741, %v839
        %v936 = vmul.f32 %v741, %v840
        %v937 = vmul.f32 %v741, %v841
        %v938 = vmul.f32 %v741, %v842
        %v939 = vmul.f32 %v741, %v843
        %v940 = vmul.f32 %v741, %v844
        %v941 = vmul.f32 %v741, %v845
        %v942 = vmul.f32 %v741, %v846
        %v943 = vmul.f32 %v741, %v847
        %v944 = vmul.f32 %v741, %v848
        %v945 = vmul.f32 %v741, %v849
        %v946 = vmul.f32 %v741, %v850
        %v947 = vmul.f32 %v741, %v851
        %v948 = vmul.f32 %v741, %v852
        %v949 = vmul.f32 %v741, %v853
        %v950 = vmul.f32 %v741, %v854
        %v951 = vmul.f32 %v741, %v855
        %v952 = vmul.f32 %v741, %v856
        %v953 = vmul.f32 %v741, %v857
        %v954 = vmul.f32 %v741, %v858
        %v955 = vmul.f32 %v745, %v827
        %v956 = vmul.f32 %v745, %v828
        %v957 = vmul.f32 %v745, %v829
        %v958 = vmul.f32 %v745, %v830
        %v959 = vmul.f32 %v745, %v831
        %v960 = vmul.f32 %v745, %v832
        %v961 = vmul.f32 %v745, %v833
        %v962 = vmul.f32 %v745, %v834
        %v963 = vmul.f32 %v745, %v835
        %v964 = vmul.f32 %v745, %v836
        %v965 = vmul.f32 %v745, %v837
        %v966 = vmul.f32 %v745, %v838
        %v967 = vmul.f32 %v745, %v839
        %v968 = vmul.f32 %v745, %v840
        %v969 = vmul.f32 %v745, %v841
        %v970 = vmul.f32 %v745, %v842
        %v971 = vmul.f32 %v745, %v843
        %v972 = vmul.f32 %v745, %v844
        %v973 = vmul.f32 %v745, %v845
        %v974 = vmul.f32 %v745, %v846
        %v975 = vmul.f32 %v745, %v847
        %v976 = vmul.f32 %v745, %v848
        %v977 = vmul.f32 %v745, %v849
        %v978 = vmul.f32 %v745, %v850
        %v979 = vmul.f32 %v745, %v851
        %v980 = vmul.f32 %v745, %v852
        %v981 = vmul.f32 %v745, %v853
        %v982 = vmul.f32 %v745, %v854
        %v983 = vmul.f32 %v745, %v855
        %v984 = vmul.f32 %v745, %v856
        %v985 = vmul.f32 %v745, %v857
        %v986 = vmul.f32 %v745, %v858
        %v987 = vmul.f32 %v749, %v827
        %v988 = vmul.f32 %v749, %v828
        %v989 = vmul.f32 %v749, %v829
        %v990 = vmul.f32 %v749, %v830
        %v991 = vmul.f32 %v749, %v831
        %v992 = vmul.f32 %v749, %v832
        %v993 = vmul.f32 %v749, %v833
        %v994 = vmul.f32 %v749, %v834
        %v995 = vmul.f32 %v749, %v835
        %v996 = vmul.f32 %v749, %v836
        %v997 = vmul.f32 %v749, %v837
        %v998 = vmul.f32 %v749, %v838
        %v999 = vmul.f32 %v749, %v839
        %v1000 = vmul.f32 %v749, %v840
        %v1001 = vmul.f32 %v749, %v841
        %v1002 = vmul.f32 %v749, %v842
        %v1003 = vmul.f32 %v749, %v843
        %v1004 = vmul.f32 %v749, %v844
        %v1005 = vmul.f32 %v749, %v845
        %v1006 = vmul.f32 %v749, %v846
        %v1007 = vmul.f32 %v749, %v847
        %v1008 = vmul.f32 %v749, %v848
        %v1009 = vmul.f32 %v749, %v849
        %v1010 = vmul.f32 %v749, %v850
        %v1011 = vmul.f32 %v749, %v851
        %v1012 = vmul.f32 %v749, %v852
        %v1013 = vmul.f32 %v749, %v853
        %v1014 = vmul.f32 %v749, %v854
        %v1015 = vmul.f32 %v749, %v855
        %v1016 = vmul.f32 %v749, %v856
        %v1017 = vmul.f32 %v749, %v857
        %v1018 = vmul.f32 %v749, %v858
        %v1019 = vmul.f32 %v753, %v827
        %v1020 = vmul.f32 %v753, %v828
        %v1021 = vmul.f32 %v753, %v829
        %v1022 = vmul.f32 %v753, %v830
        %v1023 = vmul.f32 %v753, %v831
        %v1024 = vmul.f32 %v753, %v832
        %v1025 = vmul.f32 %v753, %v833
        %v1026 = vmul.f32 %v753, %v834
        %v1027 = vmul.f32 %v753, %v835
        %v1028 = vmul.f32 %v753, %v836
        %v1029 = vmul.f32 %v753, %v837
        %v1030 = vmul.f32 %v753, %v838
        %v1031 = vmul.f32 %v753, %v839
        %v1032 = vmul.f32 %v753, %v840
        %v1033 = vmul.f32 %v753, %v841
        %v1034 = vmul.f32 %v753, %v842
        %v1035 = vmul.f32 %v753, %v843
        %v1036 = vmul.f32 %v753, %v844
        %v1037 = vmul.f32 %v753, %v845
        %v1038 = vmul.f32 %v753, %v846
        %v1039 = vmul.f32 %v753, %v847
        %v1040 = vmul.f32 %v753, %v848
        %v1041 = vmul.f32 %v753, %v849
        %v1042 = vmul.f32 %v753, %v850
        %v1043 = vmul.f32 %v753, %v851
        %v1044 = vmul.f32 %v753, %v852
        %v1045 = vmul.f32 %v753, %v853
        %v1046 = vmul.f32 %v753, %v854
        %v1047 = vmul.f32 %v753, %v855
        %v1048 = vmul.f32 %v753, %v856
        %v1049 = vmul.f32 %v753, %v857
        %v1050 = vmul.f32 %v753, %v858
        %v1051 = vmul.f32 %v757, %v827
        %v1052 = vmul.f32 %v757, %v828
        %v1053 = vmul.f32 %v757, %v829
        %v1054 = vmul.f32 %v757, %v830
        %v1055 = vmul.f32 %v757, %v831
        %v1056 = vmul.f32 %v757, %v832
        %v1057 = vmul.f32 %v757, %v833
        %v1058 = vmul.f32 %v757, %v834
        %v1059 = vmul.f32 %v757, %v835
        %v1060 = vmul.f32 %v757, %v836
        %v1061 = vmul.f32 %v757, %v837
        %v1062 = vmul.f32 %v757, %v838
        %v1063 = vmul.f32 %v757, %v839
        %v1064 = vmul.f32 %v757, %v840
        %v1065 = vmul.f32 %v757, %v841
        %v1066 = vmul.f32 %v757, %v842
        %v1067 = vmul.f32 %v757, %v843
        %v1068 = vmul.f32 %v757, %v844
        %v1069 = vmul.f32 %v757, %v845
        %v1070 = vmul.f32 %v757, %v846
        %v1071 = vmul.f32 %v757, %v847
        %v1072 = vmul.f32 %v757, %v848
        %v1073 = vmul.f32 %v757, %v849
        %v1074 = vmul.f32 %v757, %v850
        %v1075 = vmul.f32 %v757, %v851
        %v1076 = vmul.f32 %v757, %v852
        %v1077 = vmul.f32 %v757, %v853
        %v1078 = vmul.f32 %v757, %v854
        %v1079 = vmul.f32 %v757, %v855
        %v1080 = vmul.f32 %v757, %v856
        %v1081 = vmul.f32 %v757, %v857
        %v1082 = vmul.f32 %v757, %v858
        %v1083 = vmul.f32 %v761, %v827
        %v1084 = vmul.f32 %v761, %v828
        %v1085 = vmul.f32 %v761, %v829
        %v1086 = vmul.f32 %v761, %v830
        %v1087 = vmul.f32 %v761, %v831
        %v1088 = vmul.f32 %v761, %v832
        %v1089 = vmul.f32 %v761, %v833
        %v1090 = vmul.f32 %v761, %v834
        %v1091 = vmul.f32 %v761, %v835
        %v1092 = vmul.f32 %v761, %v836
        %v1093 = vmul.f32 %v761, %v837
        %v1094 = vmul.f32 %v761, %v838
        %v1095 = vmul.f32 %v761, %v839
        %v1096 = vmul.f32 %v761, %v840
        %v1097 = vmul.f32 %v761, %v841
        %v1098 = vmul.f32 %v761, %v842
        %v1099 = vmul.f32 %v761, %v843
        %v1100 = vmul.f32 %v761, %v844
        %v1101 = vmul.f32 %v761, %v845
        %v1102 = vmul.f32 %v761, %v846
        %v1103 = vmul.f32 %v761, %v847
        %v1104 = vmul.f32 %v761, %v848
        %v1105 = vmul.f32 %v761, %v849
        %v1106 = vmul.f32 %v761, %v850
        %v1107 = vmul.f32 %v761, %v851
        %v1108 = vmul.f32 %v761, %v852
        %v1109 = vmul.f32 %v761, %v853
        %v1110 = vmul.f32 %v761, %v854
        %v1111 = vmul.f32 %v761, %v855
        %v1112 = vmul.f32 %v761, %v856
        %v1113 = vmul.f32 %v761, %v857
        %v1114 = vmul.f32 %v761, %v858
        %v1115 = vadd.f32 %v475, %v859
        %v1116 = vadd.f32 %v476, %v860
        %v1117 = vadd.f32 %v477, %v861
        %v1118 = vadd.f32 %v478, %v862
        %v1119 = vadd.f32 %v479, %v863
        %v1120 = vadd.f32 %v480, %v864
        %v1121 = vadd.f32 %v481, %v865
        %v1122 = vadd.f32 %v482, %v866
        %v1123 = vadd.f32 %v483, %v867
        %v1124 = vadd.f32 %v484, %v868
        %v1125 = vadd.f32 %v485, %v869
        %v1126 = vadd.f32 %v486, %v870
        %v1127 = vadd.f32 %v487, %v871
        %v1128 = vadd.f32 %v488, %v872
        %v1129 = vadd.f32 %v489, %v873
        %v1130 = vadd.f32 %v490, %v874
        %v1131 = vadd.f32 %v491, %v875
        %v1132 = vadd.f32 %v492, %v876
        %v1133 = vadd.f32 %v493, %v877
        %v1134 = vadd.f32 %v494, %v878
        %v1135 = vadd.f32 %v495, %v879
        %v1136 = vadd.f32 %v496, %v880
        %v1137 = vadd.f32 %v497, %v881
        %v1138 = vadd.f32 %v498, %v882
        %v1139 = vadd.f32 %v499, %v883
        %v1140 = vadd.f32 %v500, %v884
        %v1141 = vadd.f32 %v501, %v885
        %v1142 = vadd.f32 %v502, %v886
        %v1143 = vadd.f32 %v503, %v887
        %v1144 = vadd.f32 %v504, %v888
        %v1145 = vadd.f32 %v505, %v889
        %v1146 = vadd.f32 %v506, %v890
        %v1147 = vadd.f32 %v507, %v891
        %v1148 = vadd.f32 %v508, %v892
        %v1149 = vadd.f32 %v509, %v893
        %v1150 = vadd.f32 %v510, %v894
        %v1151 = vadd.f32 %v511, %v895
        %v1152 = vadd.f32 %v512, %v896
        %v1153 = vadd.f32 %v513, %v897
        %v1154 = vadd.f32 %v514, %v898
        %v1155 = vadd.f32 %v515, %v899
        %v1156 = vadd.f32 %v516, %v900
        %v1157 = vadd.f32 %v517, %v901
        %v1158 = vadd.f32 %v518, %v902
        %v1159 = vadd.f32 %v519, %v903
        %v1160 = vadd.f32 %v520, %v904
        %v1161 = vadd.f32 %v521, %v905
        %v1162 = vadd.f32 %v522, %v906
        %v1163 = vadd.f32 %v523, %v907
        %v1164 = vadd.f32 %v524, %v908
        %v1165 = vadd.f32 %v525, %v909
        %v1166 = vadd.f32 %v526, %v910
        %v1167 = vadd.f32 %v527, %v911
        %v1168 = vadd.f32 %v528, %v912
        %v1169 = vadd.f32 %v529, %v913
        %v1170 = vadd.f32 %v530, %v914
        %v1171 = vadd.f32 %v531, %v915
        %v1172 = vadd.f32 %v532, %v916
        %v1173 = vadd.f32 %v533, %v917
        %v1174 = vadd.f32 %v534, %v918
        %v1175 = vadd.f32 %v535, %v919
        %v1176 = vadd.f32 %v536, %v920
        %v1177 = vadd.f32 %v537, %v921
        %v1178 = vadd.f32 %v538, %v922
        %v1179 = vadd.f32 %v539, %v923
        %v1180 = vadd.f32 %v540, %v924
        %v1181 = vadd.f32 %v541, %v925
        %v1182 = vadd.f32 %v542, %v926
        %v1183 = vadd.f32 %v543, %v927
        %v1184 = vadd.f32 %v544, %v928
        %v1185 = vadd.f32 %v545, %v929
        %v1186 = vadd.f32 %v546, %v930
        %v1187 = vadd.f32 %v547, %v931
        %v1188 = vadd.f32 %v548, %v932
        %v1189 = vadd.f32 %v549, %v933
        %v1190 = vadd.f32 %v550, %v934
        %v1191 = vadd.f32 %v551, %v935
        %v1192 = vadd.f32 %v552, %v936
        %v1193 = vadd.f32 %v553, %v937
        %v1194 = vadd.f32 %v554, %v938
        %v1195 = vadd.f32 %v555, %v939
        %v1196 = vadd.f32 %v556, %v940
        %v1197 = vadd.f32 %v557, %v941
        %v1198 = vadd.f32 %v558, %v942
        %v1199 = vadd.f32 %v559, %v943
        %v1200 = vadd.f32 %v560, %v944
        %v1201 = vadd.f32 %v561, %v945
        %v1202 = vadd.f32 %v562, %v946
        %v1203 = vadd.f32 %v563, %v947
        %v1204 = vadd.f32 %v564, %v948
        %v1205 = vadd.f32 %v565, %v949
        %v1206 = vadd.f32 %v566, %v950
        %v1207 = vadd.f32 %v567, %v951
        %v1208 = vadd.f32 %v568, %v952
        %v1209 = vadd.f32 %v569, %v953
        %v1210 = vadd.f32 %v570, %v954
        %v1211 = vadd.f32 %v571, %v955
        %v1212 = vadd.f32 %v572, %v956
        %v1213 = vadd.f32 %v573, %v957
        %v1214 = vadd.f32 %v574, %v958
        %v1215 = vadd.f32 %v575, %v959
        %v1216 = vadd.f32 %v576, %v960
        %v1217 = vadd.f32 %v577, %v961
        %v1218 = vadd.f32 %v578, %v962
        %v1219 = vadd.f32 %v579, %v963
        %v1220 = vadd.f32 %v580, %v964
        %v1221 = vadd.f32 %v581, %v965
        %v1222 = vadd.f32 %v582, %v966
        %v1223 = vadd.f32 %v583, %v967
        %v1224 = vadd.f32 %v584, %v968
        %v1225 = vadd.f32 %v585, %v969
        %v1226 = vadd.f32 %v586, %v970
        %v1227 = vadd.f32 %v587, %v971
        %v1228 = vadd.f32 %v588, %v972
        %v1229 = vadd.f32 %v589, %v973
        %v1230 = vadd.f32 %v590, %v974
        %v1231 = vadd.f32 %v591, %v975
        %v1232 = vadd.f32 %v592, %v976
        %v1233 = vadd.f32 %v593, %v977
        %v1234 = vadd.f32 %v594, %v978
        %v1235 = vadd.f32 %v595, %v979
        %v1236 = vadd.f32 %v596, %v980
        %v1237 = vadd.f32 %v597, %v981
        %v1238 = vadd.f32 %v598, %v982
        %v1239 = vadd.f32 %v599, %v983
        %v1240 = vadd.f32 %v600, %v984
        %v1241 = vadd.f32 %v601, %v985
        %v1242 = vadd.f32 %v602, %v986
        %v1243 = vadd.f32 %v603, %v987
        %v1244 = vadd.f32 %v604, %v988
        %v1245 = vadd.f32 %v605, %v989
        %v1246 = vadd.f32 %v606, %v990
        %v1247 = vadd.f32 %v607, %v991
        %v1248 = vadd.f32 %v608, %v992
        %v1249 = vadd.f32 %v609, %v993
        %v1250 = vadd.f32 %v610, %v994
        %v1251 = vadd.f32 %v611, %v995
        %v1252 = vadd.f32 %v612, %v996
        %v1253 = vadd.f32 %v613, %v997
        %v1254 = vadd.f32 %v614, %v998
        %v1255 = vadd.f32 %v615, %v999
        %v1256 = vadd.f32 %v616, %v1000
        %v1257 = vadd.f32 %v617, %v1001
        %v1258 = vadd.f32 %v618, %v1002
        %v1259 = vadd.f32 %v619, %v1003
        %v1260 = vadd.f32 %v620, %v1004
        %v1261 = vadd.f32 %v621, %v1005
        %v1262 = vadd.f32 %v622, %v1006
        %v1263 = vadd.f32 %v623, %v1007
        %v1264 = vadd.f32 %v624, %v1008
        %v1265 = vadd.f32 %v625, %v1009
        %v1266 = vadd.f32 %v626, %v1010
        %v1267 = vadd.f32 %v627, %v1011
        %v1268 = vadd.f32 %v628, %v1012
        %v1269 = vadd.f32 %v629, %v1013
        %v1270 = vadd.f32 %v630, %v1014
        %v1271 = vadd.f32 %v631, %v1015
        %v1272 = vadd.f32 %v632, %v1016
        %v1273 = vadd.f32 %v633, %v1017
        %v1274 = vadd.f32 %v634, %v1018
        %v1275 = vadd.f32 %v635, %v1019
        %v1276 = vadd.f32 %v636, %v1020
        %v1277 = vadd.f32 %v637, %v1021
        %v1278 = vadd.f32 %v638, %v1022
        %v1279 = vadd.f32 %v639, %v1023
        %v1280 = vadd.f32 %v640, %v1024
        %v1281 = vadd.f32 %v641, %v1025
        %v1282 = vadd.f32 %v642, %v1026
        %v1283 = vadd.f32 %v643, %v1027
        %v1284 = vadd.f32 %v644, %v1028
        %v1285 = vadd.f32 %v645, %v1029
        %v1286 = vadd.f32 %v646, %v1030
        %v1287 = vadd.f32 %v647, %v1031
        %v1288 = vadd.f32 %v648, %v1032
        %v1289 = vadd.f32 %v649, %v1033
        %v1290 = vadd.f32 %v650, %v1034
        %v1291 = vadd.f32 %v651, %v1035
        %v1292 = vadd.f32 %v652, %v1036
        %v1293 = vadd.f32 %v653, %v1037
        %v1294 = vadd.f32 %v654, %v1038
        %v1295 = vadd.f32 %v655, %v1039
        %v1296 = vadd.f32 %v656, %v1040
        %v1297 = vadd.f32 %v657, %v1041
        %v1298 = vadd.f32 %v658, %v1042
        %v1299 = vadd.f32 %v659, %v1043
        %v1300 = vadd.f32 %v660, %v1044
        %v1301 = vadd.f32 %v661, %v1045
        %v1302 = vadd.f32 %v662, %v1046
        %v1303 = vadd.f32 %v663, %v1047
        %v1304 = vadd.f32 %v664, %v1048
        %v1305 = vadd.f32 %v665, %v1049
        %v1306 = vadd.f32 %v666, %v1050
        %v1307 = vadd.f32 %v667, %v1051
        %v1308 = vadd.f32 %v668, %v1052
        %v1309 = vadd.f32 %v669, %v1053
        %v1310 = vadd.f32 %v670, %v1054
        %v1311 = vadd.f32 %v671, %v1055
        %v1312 = vadd.f32 %v672, %v1056
        %v1313 = vadd.f32 %v673, %v1057
        %v1314 = vadd.f32 %v674, %v1058
        %v1315 = vadd.f32 %v675, %v1059
        %v1316 = vadd.f32 %v676, %v1060
        %v1317 = vadd.f32 %v677, %v1061
        %v1318 = vadd.f32 %v678, %v1062
        %v1319 = vadd.f32 %v679, %v1063
        %v1320 = vadd.f32 %v680, %v1064
        %v1321 = vadd.f32 %v681, %v1065
        %v1322 = vadd.f32 %v682, %v1066
        %v1323 = vadd.f32 %v683, %v1067
        %v1324 = vadd.f32 %v684, %v1068
        %v1325 = vadd.f32 %v685, %v1069
        %v1326 = vadd.f32 %v686, %v1070
        %v1327 = vadd.f32 %v687, %v1071
        %v1328 = vadd.f32 %v688, %v1072
        %v1329 = vadd.f32 %v689, %v1073
        %v1330 = vadd.f32 %v690, %v1074
        %v1331 = vadd.f32 %v691, %v1075
        %v1332 = vadd.f32 %v692, %v1076
        %v1333 = vadd.f32 %v693, %v1077
        %v1334 = vadd.f32 %v694, %v1078
        %v1335 = vadd.f32 %v695, %v1079
        %v1336 = vadd.f32 %v696, %v1080
        %v1337 = vadd.f32 %v697, %v1081
        %v1338 = vadd.f32 %v698, %v1082
        %v1339 = vadd.f32 %v699, %v1083
        %v1340 = vadd.f32 %v700, %v1084
        %v1341 = vadd.f32 %v701, %v1085
        %v1342 = vadd.f32 %v702, %v1086
        %v1343 = vadd.f32 %v703, %v1087
        %v1344 = vadd.f32 %v704, %v1088
        %v1345 = vadd.f32 %v705, %v1089
        %v1346 = vadd.f32 %v706, %v1090
        %v1347 = vadd.f32 %v707, %v1091
        %v1348 = vadd.f32 %v708, %v1092
        %v1349 = vadd.f32 %v709, %v1093
        %v1350 = vadd.f32 %v710, %v1094
        %v1351 = vadd.f32 %v711, %v1095
        %v1352 = vadd.f32 %v712, %v1096
        %v1353 = vadd.f32 %v713, %v1097
        %v1354 = vadd.f32 %v714, %v1098
        %v1355 = vadd.f32 %v715, %v1099
        %v1356 = vadd.f32 %v716, %v1100
        %v1357 = vadd.f32 %v717, %v1101
        %v1358 = vadd.f32 %v718, %v1102
        %v1359 = vadd.f32 %v719, %v1103
        %v1360 = vadd.f32 %v720, %v1104
        %v1361 = vadd.f32 %v721, %v1105
        %v1362 = vadd.f32 %v722, %v1106
        %v1363 = vadd.f32 %v723, %v1107
        %v1364 = vadd.f32 %v724, %v1108
        %v1365 = vadd.f32 %v725, %v1109
        %v1366 = vadd.f32 %v726, %v1110
        %v1367 = vadd.f32 %v727, %v1111
        %v1368 = vadd.f32 %v728, %v1112
        %v1369 = vadd.f32 %v729, %v1113
        %v1370 = vadd.f32 %v730, %v1114
        %1371 = vset.pattern.permute.xlu0 2
        %1372 = vperm.xlu0 %1371, %v315
        %v1373 = vpop.permute.xlu0 %1372
        %1375 = vset.pattern.permute.xlu0 2
        %1376 = vperm.xlu0 %1375, %v316
        %v1377 = vpop.permute.xlu0 %1376
        %1379 = vset.pattern.permute.xlu0 2
        %1380 = vperm.xlu0 %1379, %v317
        %v1381 = vpop.permute.xlu0 %1380
        %1383 = vset.pattern.permute.xlu0 2
        %1384 = vperm.xlu0 %1383, %v318
        %v1385 = vpop.permute.xlu0 %1384
        %1387 = vset.pattern.permute.xlu0 2
        %1388 = vperm.xlu0 %1387, %v319
        %v1389 = vpop.permute.xlu0 %1388
        %1391 = vset.pattern.permute.xlu0 2
        %1392 = vperm.xlu0 %1391, %v320
        %v1393 = vpop.permute.xlu0 %1392
        %1395 = vset.pattern.permute.xlu0 2
        %1396 = vperm.xlu0 %1395, %v321
        %v1397 = vpop.permute.xlu0 %1396
        %1399 = vset.pattern.permute.xlu0 2
        %1400 = vperm.xlu0 %1399, %v322
        %v1401 = vpop.permute.xlu0 %1400
        %v1403 = vperm.slane %v299, 2
        %v1404 = vperm.slane %v299, 6
        %v1405 = vperm.slane %v300, 2
        %v1406 = vperm.slane %v300, 6
        %v1407 = vperm.slane %v301, 2
        %v1408 = vperm.slane %v301, 6
        %v1409 = vperm.slane %v302, 2
        %v1410 = vperm.slane %v302, 6
        %v1411 = vperm.slane %v303, 2
        %v1412 = vperm.slane %v303, 6
        %v1413 = vperm.slane %v304, 2
        %v1414 = vperm.slane %v304, 6
        %v1415 = vperm.slane %v305, 2
        %v1416 = vperm.slane %v305, 6
        %v1417 = vperm.slane %v306, 2
        %v1418 = vperm.slane %v306, 6
        %v1419 = vperm.slane %v307, 2
        %v1420 = vperm.slane %v307, 6
        %v1421 = vperm.slane %v308, 2
        %v1422 = vperm.slane %v308, 6
        %v1423 = vperm.slane %v309, 2
        %v1424 = vperm.slane %v309, 6
        %v1425 = vperm.slane %v310, 2
        %v1426 = vperm.slane %v310, 6
        %v1427 = vperm.slane %v311, 2
        %v1428 = vperm.slane %v311, 6
        %v1429 = vperm.slane %v312, 2
        %v1430 = vperm.slane %v312, 6
        %v1431 = vperm.slane %v313, 2
        %v1432 = vperm.slane %v313, 6
        %v1433 = vperm.slane %v314, 2
        %v1434 = vperm.slane %v314, 6
        %v1467 = vperm.slane %v1403, 2
        %v1468 = vperm.slane %v1404, 2
        %v1469 = vperm.slane %v1405, 2
        %v1470 = vperm.slane %v1406, 2
        %v1471 = vperm.slane %v1407, 2
        %v1472 = vperm.slane %v1408, 2
        %v1473 = vperm.slane %v1409, 2
        %v1474 = vperm.slane %v1410, 2
        %v1475 = vperm.slane %v1411, 2
        %v1476 = vperm.slane %v1412, 2
        %v1477 = vperm.slane %v1413, 2
        %v1478 = vperm.slane %v1414, 2
        %v1479 = vperm.slane %v1415, 2
        %v1480 = vperm.slane %v1416, 2
        %v1481 = vperm.slane %v1417, 2
        %v1482 = vperm.slane %v1418, 2
        %v1483 = vperm.slane %v1419, 2
        %v1484 = vperm.slane %v1420, 2
        %v1485 = vperm.slane %v1421, 2
        %v1486 = vperm.slane %v1422, 2
        %v1487 = vperm.slane %v1423, 2
        %v1488 = vperm.slane %v1424, 2
        %v1489 = vperm.slane %v1425, 2
        %v1490 = vperm.slane %v1426, 2
        %v1491 = vperm.slane %v1427, 2
        %v1492 = vperm.slane %v1428, 2
        %v1493 = vperm.slane %v1429, 2
        %v1494 = vperm.slane %v1430, 2
        %v1495 = vperm.slane %v1431, 2
        %v1496 = vperm.slane %v1432, 2
        %v1497 = vperm.slane %v1433, 2
        %v1498 = vperm.slane %v1434, 2
        %v1499 = vmul.f32 %v1373, %v1467
        %v1500 = vmul.f32 %v1373, %v1468
        %v1501 = vmul.f32 %v1373, %v1469
        %v1502 = vmul.f32 %v1373, %v1470
        %v1503 = vmul.f32 %v1373, %v1471
        %v1504 = vmul.f32 %v1373, %v1472
        %v1505 = vmul.f32 %v1373, %v1473
        %v1506 = vmul.f32 %v1373, %v1474
        %v1507 = vmul.f32 %v1373, %v1475
        %v1508 = vmul.f32 %v1373, %v1476
        %v1509 = vmul.f32 %v1373, %v1477
        %v1510 = vmul.f32 %v1373, %v1478
        %v1511 = vmul.f32 %v1373, %v1479
        %v1512 = vmul.f32 %v1373, %v1480
        %v1513 = vmul.f32 %v1373, %v1481
        %v1514 = vmul.f32 %v1373, %v1482
        %v1515 = vmul.f32 %v1373, %v1483
        %v1516 = vmul.f32 %v1373, %v1484
        %v1517 = vmul.f32 %v1373, %v1485
        %v1518 = vmul.f32 %v1373, %v1486
        %v1519 = vmul.f32 %v1373, %v1487
        %v1520 = vmul.f32 %v1373, %v1488
        %v1521 = vmul.f32 %v1373, %v1489
        %v1522 = vmul.f32 %v1373, %v1490
        %v1523 = vmul.f32 %v1373, %v1491
        %v1524 = vmul.f32 %v1373, %v1492
        %v1525 = vmul.f32 %v1373, %v1493
        %v1526 = vmul.f32 %v1373, %v1494
        %v1527 = vmul.f32 %v1373, %v1495
        %v1528 = vmul.f32 %v1373, %v1496
        %v1529 = vmul.f32 %v1373, %v1497
        %v1530 = vmul.f32 %v1373, %v1498
        %v1531 = vmul.f32 %v1377, %v1467
        %v1532 = vmul.f32 %v1377, %v1468
        %v1533 = vmul.f32 %v1377, %v1469
        %v1534 = vmul.f32 %v1377, %v1470
        %v1535 = vmul.f32 %v1377, %v1471
        %v1536 = vmul.f32 %v1377, %v1472
        %v1537 = vmul.f32 %v1377, %v1473
        %v1538 = vmul.f32 %v1377, %v1474
        %v1539 = vmul.f32 %v1377, %v1475
        %v1540 = vmul.f32 %v1377, %v1476
        %v1541 = vmul.f32 %v1377, %v1477
        %v1542 = vmul.f32 %v1377, %v1478
        %v1543 = vmul.f32 %v1377, %v1479
        %v1544 = vmul.f32 %v1377, %v1480
        %v1545 = vmul.f32 %v1377, %v1481
        %v1546 = vmul.f32 %v1377, %v1482
        %v1547 = vmul.f32 %v1377, %v1483
        %v1548 = vmul.f32 %v1377, %v1484
        %v1549 = vmul.f32 %v1377, %v1485
        %v1550 = vmul.f32 %v1377, %v1486
        %v1551 = vmul.f32 %v1377, %v1487
        %v1552 = vmul.f32 %v1377, %v1488
        %v1553 = vmul.f32 %v1377, %v1489
        %v1554 = vmul.f32 %v1377, %v1490
        %v1555 = vmul.f32 %v1377, %v1491
        %v1556 = vmul.f32 %v1377, %v1492
        %v1557 = vmul.f32 %v1377, %v1493
        %v1558 = vmul.f32 %v1377, %v1494
        %v1559 = vmul.f32 %v1377, %v1495
        %v1560 = vmul.f32 %v1377, %v1496
        %v1561 = vmul.f32 %v1377, %v1497
        %v1562 = vmul.f32 %v1377, %v1498
        %v1563 = vmul.f32 %v1381, %v1467
        %v1564 = vmul.f32 %v1381, %v1468
        %v1565 = vmul.f32 %v1381, %v1469
        %v1566 = vmul.f32 %v1381, %v1470
        %v1567 = vmul.f32 %v1381, %v1471
        %v1568 = vmul.f32 %v1381, %v1472
        %v1569 = vmul.f32 %v1381, %v1473
        %v1570 = vmul.f32 %v1381, %v1474
        %v1571 = vmul.f32 %v1381, %v1475
        %v1572 = vmul.f32 %v1381, %v1476
        %v1573 = vmul.f32 %v1381, %v1477
        %v1574 = vmul.f32 %v1381, %v1478
        %v1575 = vmul.f32 %v1381, %v1479
        %v1576 = vmul.f32 %v1381, %v1480
        %v1577 = vmul.f32 %v1381, %v1481
        %v1578 = vmul.f32 %v1381, %v1482
        %v1579 = vmul.f32 %v1381, %v1483
        %v1580 = vmul.f32 %v1381, %v1484
        %v1581 = vmul.f32 %v1381, %v1485
        %v1582 = vmul.f32 %v1381, %v1486
        %v1583 = vmul.f32 %v1381, %v1487
        %v1584 = vmul.f32 %v1381, %v1488
        %v1585 = vmul.f32 %v1381, %v1489
        %v1586 = vmul.f32 %v1381, %v1490
        %v1587 = vmul.f32 %v1381, %v1491
        %v1588 = vmul.f32 %v1381, %v1492
        %v1589 = vmul.f32 %v1381, %v1493
        %v1590 = vmul.f32 %v1381, %v1494
        %v1591 = vmul.f32 %v1381, %v1495
        %v1592 = vmul.f32 %v1381, %v1496
        %v1593 = vmul.f32 %v1381, %v1497
        %v1594 = vmul.f32 %v1381, %v1498
        %v1595 = vmul.f32 %v1385, %v1467
        %v1596 = vmul.f32 %v1385, %v1468
        %v1597 = vmul.f32 %v1385, %v1469
        %v1598 = vmul.f32 %v1385, %v1470
        %v1599 = vmul.f32 %v1385, %v1471
        %v1600 = vmul.f32 %v1385, %v1472
        %v1601 = vmul.f32 %v1385, %v1473
        %v1602 = vmul.f32 %v1385, %v1474
        %v1603 = vmul.f32 %v1385, %v1475
        %v1604 = vmul.f32 %v1385, %v1476
        %v1605 = vmul.f32 %v1385, %v1477
        %v1606 = vmul.f32 %v1385, %v1478
        %v1607 = vmul.f32 %v1385, %v1479
        %v1608 = vmul.f32 %v1385, %v1480
        %v1609 = vmul.f32 %v1385, %v1481
        %v1610 = vmul.f32 %v1385, %v1482
        %v1611 = vmul.f32 %v1385, %v1483
        %v1612 = vmul.f32 %v1385, %v1484
        %v1613 = vmul.f32 %v1385, %v1485
        %v1614 = vmul.f32 %v1385, %v1486
        %v1615 = vmul.f32 %v1385, %v1487
        %v1616 = vmul.f32 %v1385, %v1488
        %v1617 = vmul.f32 %v1385, %v1489
        %v1618 = vmul.f32 %v1385, %v1490
        %v1619 = vmul.f32 %v1385, %v1491
        %v1620 = vmul.f32 %v1385, %v1492
        %v1621 = vmul.f32 %v1385, %v1493
        %v1622 = vmul.f32 %v1385, %v1494
        %v1623 = vmul.f32 %v1385, %v1495
        %v1624 = vmul.f32 %v1385, %v1496
        %v1625 = vmul.f32 %v1385, %v1497
        %v1626 = vmul.f32 %v1385, %v1498
        %v1627 = vmul.f32 %v1389, %v1467
        %v1628 = vmul.f32 %v1389, %v1468
        %v1629 = vmul.f32 %v1389, %v1469
        %v1630 = vmul.f32 %v1389, %v1470
        %v1631 = vmul.f32 %v1389, %v1471
        %v1632 = vmul.f32 %v1389, %v1472
        %v1633 = vmul.f32 %v1389, %v1473
        %v1634 = vmul.f32 %v1389, %v1474
        %v1635 = vmul.f32 %v1389, %v1475
        %v1636 = vmul.f32 %v1389, %v1476
        %v1637 = vmul.f32 %v1389, %v1477
        %v1638 = vmul.f32 %v1389, %v1478
        %v1639 = vmul.f32 %v1389, %v1479
        %v1640 = vmul.f32 %v1389, %v1480
        %v1641 = vmul.f32 %v1389, %v1481
        %v1642 = vmul.f32 %v1389, %v1482
        %v1643 = vmul.f32 %v1389, %v1483
        %v1644 = vmul.f32 %v1389, %v1484
        %v1645 = vmul.f32 %v1389, %v1485
        %v1646 = vmul.f32 %v1389, %v1486
        %v1647 = vmul.f32 %v1389, %v1487
        %v1648 = vmul.f32 %v1389, %v1488
        %v1649 = vmul.f32 %v1389, %v1489
        %v1650 = vmul.f32 %v1389, %v1490
        %v1651 = vmul.f32 %v1389, %v1491
        %v1652 = vmul.f32 %v1389, %v1492
        %v1653 = vmul.f32 %v1389, %v1493
        %v1654 = vmul.f32 %v1389, %v1494
        %v1655 = vmul.f32 %v1389, %v1495
        %v1656 = vmul.f32 %v1389, %v1496
        %v1657 = vmul.f32 %v1389, %v1497
        %v1658 = vmul.f32 %v1389, %v1498
        %v1659 = vmul.f32 %v1393, %v1467
        %v1660 = vmul.f32 %v1393, %v1468
        %v1661 = vmul.f32 %v1393, %v1469
        %v1662 = vmul.f32 %v1393, %v1470
        %v1663 = vmul.f32 %v1393, %v1471
        %v1664 = vmul.f32 %v1393, %v1472
        %v1665 = vmul.f32 %v1393, %v1473
        %v1666 = vmul.f32 %v1393, %v1474
        %v1667 = vmul.f32 %v1393, %v1475
        %v1668 = vmul.f32 %v1393, %v1476
        %v1669 = vmul.f32 %v1393, %v1477
        %v1670 = vmul.f32 %v1393, %v1478
        %v1671 = vmul.f32 %v1393, %v1479
        %v1672 = vmul.f32 %v1393, %v1480
        %v1673 = vmul.f32 %v1393, %v1481
        %v1674 = vmul.f32 %v1393, %v1482
        %v1675 = vmul.f32 %v1393, %v1483
        %v1676 = vmul.f32 %v1393, %v1484
        %v1677 = vmul.f32 %v1393, %v1485
        %v1678 = vmul.f32 %v1393, %v1486
        %v1679 = vmul.f32 %v1393, %v1487
        %v1680 = vmul.f32 %v1393, %v1488
        %v1681 = vmul.f32 %v1393, %v1489
        %v1682 = vmul.f32 %v1393, %v1490
        %v1683 = vmul.f32 %v1393, %v1491
        %v1684 = vmul.f32 %v1393, %v1492
        %v1685 = vmul.f32 %v1393, %v1493
        %v1686 = vmul.f32 %v1393, %v1494
        %v1687 = vmul.f32 %v1393, %v1495
        %v1688 = vmul.f32 %v1393, %v1496
        %v1689 = vmul.f32 %v1393, %v1497
        %v1690 = vmul.f32 %v1393, %v1498
        %v1691 = vmul.f32 %v1397, %v1467
        %v1692 = vmul.f32 %v1397, %v1468
        %v1693 = vmul.f32 %v1397, %v1469
        %v1694 = vmul.f32 %v1397, %v1470
        %v1695 = vmul.f32 %v1397, %v1471
        %v1696 = vmul.f32 %v1397, %v1472
        %v1697 = vmul.f32 %v1397, %v1473
        %v1698 = vmul.f32 %v1397, %v1474
        %v1699 = vmul.f32 %v1397, %v1475
        %v1700 = vmul.f32 %v1397, %v1476
        %v1701 = vmul.f32 %v1397, %v1477
        %v1702 = vmul.f32 %v1397, %v1478
        %v1703 = vmul.f32 %v1397, %v1479
        %v1704 = vmul.f32 %v1397, %v1480
        %v1705 = vmul.f32 %v1397, %v1481
        %v1706 = vmul.f32 %v1397, %v1482
        %v1707 = vmul.f32 %v1397, %v1483
        %v1708 = vmul.f32 %v1397, %v1484
        %v1709 = vmul.f32 %v1397, %v1485
        %v1710 = vmul.f32 %v1397, %v1486
        %v1711 = vmul.f32 %v1397, %v1487
        %v1712 = vmul.f32 %v1397, %v1488
        %v1713 = vmul.f32 %v1397, %v1489
        %v1714 = vmul.f32 %v1397, %v1490
        %v1715 = vmul.f32 %v1397, %v1491
        %v1716 = vmul.f32 %v1397, %v1492
        %v1717 = vmul.f32 %v1397, %v1493
        %v1718 = vmul.f32 %v1397, %v1494
        %v1719 = vmul.f32 %v1397, %v1495
        %v1720 = vmul.f32 %v1397, %v1496
        %v1721 = vmul.f32 %v1397, %v1497
        %v1722 = vmul.f32 %v1397, %v1498
        %v1723 = vmul.f32 %v1401, %v1467
        %v1724 = vmul.f32 %v1401, %v1468
        %v1725 = vmul.f32 %v1401, %v1469
        %v1726 = vmul.f32 %v1401, %v1470
        %v1727 = vmul.f32 %v1401, %v1471
        %v1728 = vmul.f32 %v1401, %v1472
        %v1729 = vmul.f32 %v1401, %v1473
        %v1730 = vmul.f32 %v1401, %v1474
        %v1731 = vmul.f32 %v1401, %v1475
        %v1732 = vmul.f32 %v1401, %v1476
        %v1733 = vmul.f32 %v1401, %v1477
        %v1734 = vmul.f32 %v1401, %v1478
        %v1735 = vmul.f32 %v1401, %v1479
        %v1736 = vmul.f32 %v1401, %v1480
        %v1737 = vmul.f32 %v1401, %v1481
        %v1738 = vmul.f32 %v1401, %v1482
        %v1739 = vmul.f32 %v1401, %v1483
        %v1740 = vmul.f32 %v1401, %v1484
        %v1741 = vmul.f32 %v1401, %v1485
        %v1742 = vmul.f32 %v1401, %v1486
        %v1743 = vmul.f32 %v1401, %v1487
        %v1744 = vmul.f32 %v1401, %v1488
        %v1745 = vmul.f32 %v1401, %v1489
        %v1746 = vmul.f32 %v1401, %v1490
        %v1747 = vmul.f32 %v1401, %v1491
        %v1748 = vmul.f32 %v1401, %v1492
        %v1749 = vmul.f32 %v1401, %v1493
        %v1750 = vmul.f32 %v1401, %v1494
        %v1751 = vmul.f32 %v1401, %v1495
        %v1752 = vmul.f32 %v1401, %v1496
        %v1753 = vmul.f32 %v1401, %v1497
        %v1754 = vmul.f32 %v1401, %v1498
        %v1755 = vadd.f32 %v1115, %v1499
        %v1756 = vadd.f32 %v1116, %v1500
        %v1757 = vadd.f32 %v1117, %v1501
        %v1758 = vadd.f32 %v1118, %v1502
        %v1759 = vadd.f32 %v1119, %v1503
        %v1760 = vadd.f32 %v1120, %v1504
        %v1761 = vadd.f32 %v1121, %v1505
        %v1762 = vadd.f32 %v1122, %v1506
        %v1763 = vadd.f32 %v1123, %v1507
        %v1764 = vadd.f32 %v1124, %v1508
        %v1765 = vadd.f32 %v1125, %v1509
        %v1766 = vadd.f32 %v1126, %v1510
        %v1767 = vadd.f32 %v1127, %v1511
        %v1768 = vadd.f32 %v1128, %v1512
        %v1769 = vadd.f32 %v1129, %v1513
        %v1770 = vadd.f32 %v1130, %v1514
        %v1771 = vadd.f32 %v1131, %v1515
        %v1772 = vadd.f32 %v1132, %v1516
        %v1773 = vadd.f32 %v1133, %v1517
        %v1774 = vadd.f32 %v1134, %v1518
        %v1775 = vadd.f32 %v1135, %v1519
        %v1776 = vadd.f32 %v1136, %v1520
        %v1777 = vadd.f32 %v1137, %v1521
        %v1778 = vadd.f32 %v1138, %v1522
        %v1779 = vadd.f32 %v1139, %v1523
        %v1780 = vadd.f32 %v1140, %v1524
        %v1781 = vadd.f32 %v1141, %v1525
        %v1782 = vadd.f32 %v1142, %v1526
        %v1783 = vadd.f32 %v1143, %v1527
        %v1784 = vadd.f32 %v1144, %v1528
        %v1785 = vadd.f32 %v1145, %v1529
        %v1786 = vadd.f32 %v1146, %v1530
        %v1787 = vadd.f32 %v1147, %v1531
        %v1788 = vadd.f32 %v1148, %v1532
        %v1789 = vadd.f32 %v1149, %v1533
        %v1790 = vadd.f32 %v1150, %v1534
        %v1791 = vadd.f32 %v1151, %v1535
        %v1792 = vadd.f32 %v1152, %v1536
        %v1793 = vadd.f32 %v1153, %v1537
        %v1794 = vadd.f32 %v1154, %v1538
        %v1795 = vadd.f32 %v1155, %v1539
        %v1796 = vadd.f32 %v1156, %v1540
        %v1797 = vadd.f32 %v1157, %v1541
        %v1798 = vadd.f32 %v1158, %v1542
        %v1799 = vadd.f32 %v1159, %v1543
        %v1800 = vadd.f32 %v1160, %v1544
        %v1801 = vadd.f32 %v1161, %v1545
        %v1802 = vadd.f32 %v1162, %v1546
        %v1803 = vadd.f32 %v1163, %v1547
        %v1804 = vadd.f32 %v1164, %v1548
        %v1805 = vadd.f32 %v1165, %v1549
        %v1806 = vadd.f32 %v1166, %v1550
        %v1807 = vadd.f32 %v1167, %v1551
        %v1808 = vadd.f32 %v1168, %v1552
        %v1809 = vadd.f32 %v1169, %v1553
        %v1810 = vadd.f32 %v1170, %v1554
        %v1811 = vadd.f32 %v1171, %v1555
        %v1812 = vadd.f32 %v1172, %v1556
        %v1813 = vadd.f32 %v1173, %v1557
        %v1814 = vadd.f32 %v1174, %v1558
        %v1815 = vadd.f32 %v1175, %v1559
        %v1816 = vadd.f32 %v1176, %v1560
        %v1817 = vadd.f32 %v1177, %v1561
        %v1818 = vadd.f32 %v1178, %v1562
        %v1819 = vadd.f32 %v1179, %v1563
        %v1820 = vadd.f32 %v1180, %v1564
        %v1821 = vadd.f32 %v1181, %v1565
        %v1822 = vadd.f32 %v1182, %v1566
        %v1823 = vadd.f32 %v1183, %v1567
        %v1824 = vadd.f32 %v1184, %v1568
        %v1825 = vadd.f32 %v1185, %v1569
        %v1826 = vadd.f32 %v1186, %v1570
        %v1827 = vadd.f32 %v1187, %v1571
        %v1828 = vadd.f32 %v1188, %v1572
        %v1829 = vadd.f32 %v1189, %v1573
        %v1830 = vadd.f32 %v1190, %v1574
        %v1831 = vadd.f32 %v1191, %v1575
        %v1832 = vadd.f32 %v1192, %v1576
        %v1833 = vadd.f32 %v1193, %v1577
        %v1834 = vadd.f32 %v1194, %v1578
        %v1835 = vadd.f32 %v1195, %v1579
        %v1836 = vadd.f32 %v1196, %v1580
        %v1837 = vadd.f32 %v1197, %v1581
        %v1838 = vadd.f32 %v1198, %v1582
        %v1839 = vadd.f32 %v1199, %v1583
        %v1840 = vadd.f32 %v1200, %v1584
        %v1841 = vadd.f32 %v1201, %v1585
        %v1842 = vadd.f32 %v1202, %v1586
        %v1843 = vadd.f32 %v1203, %v1587
        %v1844 = vadd.f32 %v1204, %v1588
        %v1845 = vadd.f32 %v1205, %v1589
        %v1846 = vadd.f32 %v1206, %v1590
        %v1847 = vadd.f32 %v1207, %v1591
        %v1848 = vadd.f32 %v1208, %v1592
        %v1849 = vadd.f32 %v1209, %v1593
        %v1850 = vadd.f32 %v1210, %v1594
        %v1851 = vadd.f32 %v1211, %v1595
        %v1852 = vadd.f32 %v1212, %v1596
        %v1853 = vadd.f32 %v1213, %v1597
        %v1854 = vadd.f32 %v1214, %v1598
        %v1855 = vadd.f32 %v1215, %v1599
        %v1856 = vadd.f32 %v1216, %v1600
        %v1857 = vadd.f32 %v1217, %v1601
        %v1858 = vadd.f32 %v1218, %v1602
        %v1859 = vadd.f32 %v1219, %v1603
        %v1860 = vadd.f32 %v1220, %v1604
        %v1861 = vadd.f32 %v1221, %v1605
        %v1862 = vadd.f32 %v1222, %v1606
        %v1863 = vadd.f32 %v1223, %v1607
        %v1864 = vadd.f32 %v1224, %v1608
        %v1865 = vadd.f32 %v1225, %v1609
        %v1866 = vadd.f32 %v1226, %v1610
        %v1867 = vadd.f32 %v1227, %v1611
        %v1868 = vadd.f32 %v1228, %v1612
        %v1869 = vadd.f32 %v1229, %v1613
        %v1870 = vadd.f32 %v1230, %v1614
        %v1871 = vadd.f32 %v1231, %v1615
        %v1872 = vadd.f32 %v1232, %v1616
        %v1873 = vadd.f32 %v1233, %v1617
        %v1874 = vadd.f32 %v1234, %v1618
        %v1875 = vadd.f32 %v1235, %v1619
        %v1876 = vadd.f32 %v1236, %v1620
        %v1877 = vadd.f32 %v1237, %v1621
        %v1878 = vadd.f32 %v1238, %v1622
        %v1879 = vadd.f32 %v1239, %v1623
        %v1880 = vadd.f32 %v1240, %v1624
        %v1881 = vadd.f32 %v1241, %v1625
        %v1882 = vadd.f32 %v1242, %v1626
        %v1883 = vadd.f32 %v1243, %v1627
        %v1884 = vadd.f32 %v1244, %v1628
        %v1885 = vadd.f32 %v1245, %v1629
        %v1886 = vadd.f32 %v1246, %v1630
        %v1887 = vadd.f32 %v1247, %v1631
        %v1888 = vadd.f32 %v1248, %v1632
        %v1889 = vadd.f32 %v1249, %v1633
        %v1890 = vadd.f32 %v1250, %v1634
        %v1891 = vadd.f32 %v1251, %v1635
        %v1892 = vadd.f32 %v1252, %v1636
        %v1893 = vadd.f32 %v1253, %v1637
        %v1894 = vadd.f32 %v1254, %v1638
        %v1895 = vadd.f32 %v1255, %v1639
        %v1896 = vadd.f32 %v1256, %v1640
        %v1897 = vadd.f32 %v1257, %v1641
        %v1898 = vadd.f32 %v1258, %v1642
        %v1899 = vadd.f32 %v1259, %v1643
        %v1900 = vadd.f32 %v1260, %v1644
        %v1901 = vadd.f32 %v1261, %v1645
        %v1902 = vadd.f32 %v1262, %v1646
        %v1903 = vadd.f32 %v1263, %v1647
        %v1904 = vadd.f32 %v1264, %v1648
        %v1905 = vadd.f32 %v1265, %v1649
        %v1906 = vadd.f32 %v1266, %v1650
        %v1907 = vadd.f32 %v1267, %v1651
        %v1908 = vadd.f32 %v1268, %v1652
        %v1909 = vadd.f32 %v1269, %v1653
        %v1910 = vadd.f32 %v1270, %v1654
        %v1911 = vadd.f32 %v1271, %v1655
        %v1912 = vadd.f32 %v1272, %v1656
        %v1913 = vadd.f32 %v1273, %v1657
        %v1914 = vadd.f32 %v1274, %v1658
        %v1915 = vadd.f32 %v1275, %v1659
        %v1916 = vadd.f32 %v1276, %v1660
        %v1917 = vadd.f32 %v1277, %v1661
        %v1918 = vadd.f32 %v1278, %v1662
        %v1919 = vadd.f32 %v1279, %v1663
        %v1920 = vadd.f32 %v1280, %v1664
        %v1921 = vadd.f32 %v1281, %v1665
        %v1922 = vadd.f32 %v1282, %v1666
        %v1923 = vadd.f32 %v1283, %v1667
        %v1924 = vadd.f32 %v1284, %v1668
        %v1925 = vadd.f32 %v1285, %v1669
        %v1926 = vadd.f32 %v1286, %v1670
        %v1927 = vadd.f32 %v1287, %v1671
        %v1928 = vadd.f32 %v1288, %v1672
        %v1929 = vadd.f32 %v1289, %v1673
        %v1930 = vadd.f32 %v1290, %v1674
        %v1931 = vadd.f32 %v1291, %v1675
        %v1932 = vadd.f32 %v1292, %v1676
        %v1933 = vadd.f32 %v1293, %v1677
        %v1934 = vadd.f32 %v1294, %v1678
        %v1935 = vadd.f32 %v1295, %v1679
        %v1936 = vadd.f32 %v1296, %v1680
        %v1937 = vadd.f32 %v1297, %v1681
        %v1938 = vadd.f32 %v1298, %v1682
        %v1939 = vadd.f32 %v1299, %v1683
        %v1940 = vadd.f32 %v1300, %v1684
        %v1941 = vadd.f32 %v1301, %v1685
        %v1942 = vadd.f32 %v1302, %v1686
        %v1943 = vadd.f32 %v1303, %v1687
        %v1944 = vadd.f32 %v1304, %v1688
        %v1945 = vadd.f32 %v1305, %v1689
        %v1946 = vadd.f32 %v1306, %v1690
        %v1947 = vadd.f32 %v1307, %v1691
        %v1948 = vadd.f32 %v1308, %v1692
        %v1949 = vadd.f32 %v1309, %v1693
        %v1950 = vadd.f32 %v1310, %v1694
        %v1951 = vadd.f32 %v1311, %v1695
        %v1952 = vadd.f32 %v1312, %v1696
        %v1953 = vadd.f32 %v1313, %v1697
        %v1954 = vadd.f32 %v1314, %v1698
        %v1955 = vadd.f32 %v1315, %v1699
        %v1956 = vadd.f32 %v1316, %v1700
        %v1957 = vadd.f32 %v1317, %v1701
        %v1958 = vadd.f32 %v1318, %v1702
        %v1959 = vadd.f32 %v1319, %v1703
        %v1960 = vadd.f32 %v1320, %v1704
        %v1961 = vadd.f32 %v1321, %v1705
        %v1962 = vadd.f32 %v1322, %v1706
        %v1963 = vadd.f32 %v1323, %v1707
        %v1964 = vadd.f32 %v1324, %v1708
        %v1965 = vadd.f32 %v1325, %v1709
        %v1966 = vadd.f32 %v1326, %v1710
        %v1967 = vadd.f32 %v1327, %v1711
        %v1968 = vadd.f32 %v1328, %v1712
        %v1969 = vadd.f32 %v1329, %v1713
        %v1970 = vadd.f32 %v1330, %v1714
        %v1971 = vadd.f32 %v1331, %v1715
        %v1972 = vadd.f32 %v1332, %v1716
        %v1973 = vadd.f32 %v1333, %v1717
        %v1974 = vadd.f32 %v1334, %v1718
        %v1975 = vadd.f32 %v1335, %v1719
        %v1976 = vadd.f32 %v1336, %v1720
        %v1977 = vadd.f32 %v1337, %v1721
        %v1978 = vadd.f32 %v1338, %v1722
        %v1979 = vadd.f32 %v1339, %v1723
        %v1980 = vadd.f32 %v1340, %v1724
        %v1981 = vadd.f32 %v1341, %v1725
        %v1982 = vadd.f32 %v1342, %v1726
        %v1983 = vadd.f32 %v1343, %v1727
        %v1984 = vadd.f32 %v1344, %v1728
        %v1985 = vadd.f32 %v1345, %v1729
        %v1986 = vadd.f32 %v1346, %v1730
        %v1987 = vadd.f32 %v1347, %v1731
        %v1988 = vadd.f32 %v1348, %v1732
        %v1989 = vadd.f32 %v1349, %v1733
        %v1990 = vadd.f32 %v1350, %v1734
        %v1991 = vadd.f32 %v1351, %v1735
        %v1992 = vadd.f32 %v1352, %v1736
        %v1993 = vadd.f32 %v1353, %v1737
        %v1994 = vadd.f32 %v1354, %v1738
        %v1995 = vadd.f32 %v1355, %v1739
        %v1996 = vadd.f32 %v1356, %v1740
        %v1997 = vadd.f32 %v1357, %v1741
        %v1998 = vadd.f32 %v1358, %v1742
        %v1999 = vadd.f32 %v1359, %v1743
        %v2000 = vadd.f32 %v1360, %v1744
        %v2001 = vadd.f32 %v1361, %v1745
        %v2002 = vadd.f32 %v1362, %v1746
        %v2003 = vadd.f32 %v1363, %v1747
        %v2004 = vadd.f32 %v1364, %v1748
        %v2005 = vadd.f32 %v1365, %v1749
        %v2006 = vadd.f32 %v1366, %v1750
        %v2007 = vadd.f32 %v1367, %v1751
        %v2008 = vadd.f32 %v1368, %v1752
        %v2009 = vadd.f32 %v1369, %v1753
        %v2010 = vadd.f32 %v1370, %v1754
        %v2011 = vld [vmem:[%s2] sm:$0xff]
        %v2012 = vld [vmem:[%s2 + $0x8] sm:$0xff]
        %v2013 = vld [vmem:[%s2 + $0x10] sm:$0xff]
        %v2014 = vld [vmem:[%s2 + $0x18] sm:$0xff]
        %v2015 = vld [vmem:[%s2 + $0x20] sm:$0xff]
        %v2016 = vld [vmem:[%s2 + $0x28] sm:$0xff]
        %v2017 = vld [vmem:[%s2 + $0x30] sm:$0xff]
        %v2018 = vld [vmem:[%s2 + $0x38] sm:$0xff]
        %2020 = vset.pattern.permute.xlu0 0
        %2021 = vperm.xlu0 %2020, %v2011
        %v2022 = vpop.permute.xlu0 %2021
        %2025 = vset.pattern.permute.xlu0 0
        %2026 = vperm.xlu0 %2025, %v2012
        %v2027 = vpop.permute.xlu0 %2026
        %2030 = vset.pattern.permute.xlu0 0
        %2031 = vperm.xlu0 %2030, %v2013
        %v2032 = vpop.permute.xlu0 %2031
        %2035 = vset.pattern.permute.xlu0 0
        %2036 = vperm.xlu0 %2035, %v2014
        %v2037 = vpop.permute.xlu0 %2036
        %2040 = vset.pattern.permute.xlu0 0
        %2041 = vperm.xlu0 %2040, %v2015
        %v2042 = vpop.permute.xlu0 %2041
        %2045 = vset.pattern.permute.xlu0 0
        %2046 = vperm.xlu0 %2045, %v2016
        %v2047 = vpop.permute.xlu0 %2046
        %2050 = vset.pattern.permute.xlu0 0
        %2051 = vperm.xlu0 %2050, %v2017
        %v2052 = vpop.permute.xlu0 %2051
        %2055 = vset.pattern.permute.xlu0 0
        %2056 = vperm.xlu0 %2055, %v2018
        %v2057 = vpop.permute.xlu0 %2056
        %v2059 = vadd.f32 %v1755, %v2022
        %v2060 = vadd.f32 %v1756, %v2022
        %v2061 = vadd.f32 %v1757, %v2022
        %v2062 = vadd.f32 %v1758, %v2022
        %v2063 = vadd.f32 %v1759, %v2022
        %v2064 = vadd.f32 %v1760, %v2022
        %v2065 = vadd.f32 %v1761, %v2022
        %v2066 = vadd.f32 %v1762, %v2022
        %v2067 = vadd.f32 %v1763, %v2022
        %v2068 = vadd.f32 %v1764, %v2022
        %v2069 = vadd.f32 %v1765, %v2022
        %v2070 = vadd.f32 %v1766, %v2022
        %v2071 = vadd.f32 %v1767, %v2022
        %v2072 = vadd.f32 %v1768, %v2022
        %v2073 = vadd.f32 %v1769, %v2022
        %v2074 = vadd.f32 %v1770, %v2022
        %v2075 = vadd.f32 %v1771, %v2022
        %v2076 = vadd.f32 %v1772, %v2022
        %v2077 = vadd.f32 %v1773, %v2022
        %v2078 = vadd.f32 %v1774, %v2022
        %v2079 = vadd.f32 %v1775, %v2022
        %v2080 = vadd.f32 %v1776, %v2022
        %v2081 = vadd.f32 %v1777, %v2022
        %v2082 = vadd.f32 %v1778, %v2022
        %v2083 = vadd.f32 %v1779, %v2022
        %v2084 = vadd.f32 %v1780, %v2022
        %v2085 = vadd.f32 %v1781, %v2022
        %v2086 = vadd.f32 %v1782, %v2022
        %v2087 = vadd.f32 %v1783, %v2022
        %v2088 = vadd.f32 %v1784, %v2022
        %v2089 = vadd.f32 %v1785, %v2022
        %v2090 = vadd.f32 %v1786, %v2022
        %v2091 = vadd.f32 %v1787, %v2027
        %v2092 = vadd.f32 %v1788, %v2027
        %v2093 = vadd.f32 %v1789, %v2027
        %v2094 = vadd.f32 %v1790, %v2027
        %v2095 = vadd.f32 %v1791, %v2027
        %v2096 = vadd.f32 %v1792, %v2027
        %v2097 = vadd.f32 %v1793, %v2027
        %v2098 = vadd.f32 %v1794, %v2027
        %v2099 = vadd.f32 %v1795, %v2027
        %v2100 = vadd.f32 %v1796, %v2027
        %v2101 = vadd.f32 %v1797, %v2027
        %v2102 = vadd.f32 %v1798, %v2027
        %v2103 = vadd.f32 %v1799, %v2027
        %v2104 = vadd.f32 %v1800, %v2027
        %v2105 = vadd.f32 %v1801, %v2027
        %v2106 = vadd.f32 %v1802, %v2027
        %v2107 = vadd.f32 %v1803, %v2027
        %v2108 = vadd.f32 %v1804, %v2027
        %v2109 = vadd.f32 %v1805, %v2027
        %v2110 = vadd.f32 %v1806, %v2027
        %v2111 = vadd.f32 %v1807, %v2027
        %v2112 = vadd.f32 %v1808, %v2027
        %v2113 = vadd.f32 %v1809, %v2027
        %v2114 = vadd.f32 %v1810, %v2027
        %v2115 = vadd.f32 %v1811, %v2027
        %v2116 = vadd.f32 %v1812, %v2027
        %v2117 = vadd.f32 %v1813, %v2027
        %v2118 = vadd.f32 %v1814, %v2027
        %v2119 = vadd.f32 %v1815, %v2027
        %v2120 = vadd.f32 %v1816, %v2027
        %v2121 = vadd.f32 %v1817, %v2027
        %v2122 = vadd.f32 %v1818, %v2027
        %v2123 = vadd.f32 %v1819, %v2032
        %v2124 = vadd.f32 %v1820, %v2032
        %v2125 = vadd.f32 %v1821, %v2032
        %v2126 = vadd.f32 %v1822, %v2032
        %v2127 = vadd.f32 %v1823, %v2032
        %v2128 = vadd.f32 %v1824, %v2032
        %v2129 = vadd.f32 %v1825, %v2032
        %v2130 = vadd.f32 %v1826, %v2032
        %v2131 = vadd.f32 %v1827, %v2032
        %v2132 = vadd.f32 %v1828, %v2032
        %v2133 = vadd.f32 %v1829, %v2032
        %v2134 = vadd.f32 %v1830, %v2032
        %v2135 = vadd.f32 %v1831, %v2032
        %v2136 = vadd.f32 %v1832, %v2032
        %v2137 = vadd.f32 %v1833, %v2032
        %v2138 = vadd.f32 %v1834, %v2032
        %v2139 = vadd.f32 %v1835, %v2032
        %v2140 = vadd.f32 %v1836, %v2032
        %v2141 = vadd.f32 %v1837, %v2032
        %v2142 = vadd.f32 %v1838, %v2032
        %v2143 = vadd.f32 %v1839, %v2032
        %v2144 = vadd.f32 %v1840, %v2032
        %v2145 = vadd.f32 %v1841, %v2032
        %v2146 = vadd.f32 %v1842, %v2032
        %v2147 = vadd.f32 %v1843, %v2032
        %v2148 = vadd.f32 %v1844, %v2032
        %v2149 = vadd.f32 %v1845, %v2032
        %v2150 = vadd.f32 %v1846, %v2032
        %v2151 = vadd.f32 %v1847, %v2032
        %v2152 = vadd.f32 %v1848, %v2032
        %v2153 = vadd.f32 %v1849, %v2032
        %v2154 = vadd.f32 %v1850, %v2032
        %v2155 = vadd.f32 %v1851, %v2037
        %v2156 = vadd.f32 %v1852, %v2037
        %v2157 = vadd.f32 %v1853, %v2037
        %v2158 = vadd.f32 %v1854, %v2037
        %v2159 = vadd.f32 %v1855, %v2037
        %v2160 = vadd.f32 %v1856, %v2037
        %v2161 = vadd.f32 %v1857, %v2037
        %v2162 = vadd.f32 %v1858, %v2037
        %v2163 = vadd.f32 %v1859, %v2037
        %v2164 = vadd.f32 %v1860, %v2037
        %v2165 = vadd.f32 %v1861, %v2037
        %v2166 = vadd.f32 %v1862, %v2037
        %v2167 = vadd.f32 %v1863, %v2037
        %v2168 = vadd.f32 %v1864, %v2037
        %v2169 = vadd.f32 %v1865, %v2037
        %v2170 = vadd.f32 %v1866, %v2037
        %v2171 = vadd.f32 %v1867, %v2037
        %v2172 = vadd.f32 %v1868, %v2037
        %v2173 = vadd.f32 %v1869, %v2037
        %v2174 = vadd.f32 %v1870, %v2037
        %v2175 = vadd.f32 %v1871, %v2037
        %v2176 = vadd.f32 %v1872, %v2037
        %v2177 = vadd.f32 %v1873, %v2037
        %v2178 = vadd.f32 %v1874, %v2037
        %v2179 = vadd.f32 %v1875, %v2037
        %v2180 = vadd.f32 %v1876, %v2037
        %v2181 = vadd.f32 %v1877, %v2037
        %v2182 = vadd.f32 %v1878, %v2037
        %v2183 = vadd.f32 %v1879, %v2037
        %v2184 = vadd.f32 %v1880, %v2037
        %v2185 = vadd.f32 %v1881, %v2037
        %v2186 = vadd.f32 %v1882, %v2037
        %v2187 = vadd.f32 %v1883, %v2042
        %v2188 = vadd.f32 %v1884, %v2042
        %v2189 = vadd.f32 %v1885, %v2042
        %v2190 = vadd.f32 %v1886, %v2042
        %v2191 = vadd.f32 %v1887, %v2042
        %v2192 = vadd.f32 %v1888, %v2042
        %v2193 = vadd.f32 %v1889, %v2042
        %v2194 = vadd.f32 %v1890, %v2042
        %v2195 = vadd.f32 %v1891, %v2042
        %v2196 = vadd.f32 %v1892, %v2042
        %v2197 = vadd.f32 %v1893, %v2042
        %v2198 = vadd.f32 %v1894, %v2042
        %v2199 = vadd.f32 %v1895, %v2042
        %v2200 = vadd.f32 %v1896, %v2042
        %v2201 = vadd.f32 %v1897, %v2042
        %v2202 = vadd.f32 %v1898, %v2042
        %v2203 = vadd.f32 %v1899, %v2042
        %v2204 = vadd.f32 %v1900, %v2042
        %v2205 = vadd.f32 %v1901, %v2042
        %v2206 = vadd.f32 %v1902, %v2042
        %v2207 = vadd.f32 %v1903, %v2042
        %v2208 = vadd.f32 %v1904, %v2042
        %v2209 = vadd.f32 %v1905, %v2042
        %v2210 = vadd.f32 %v1906, %v2042
        %v2211 = vadd.f32 %v1907, %v2042
        %v2212 = vadd.f32 %v1908, %v2042
        %v2213 = vadd.f32 %v1909, %v2042
        %v2214 = vadd.f32 %v1910, %v2042
        %v2215 = vadd.f32 %v1911, %v2042
        %v2216 = vadd.f32 %v1912, %v2042
        %v2217 = vadd.f32 %v1913, %v2042
        %v2218 = vadd.f32 %v1914, %v2042
        %v2219 = vadd.f32 %v1915, %v2047
        %v2220 = vadd.f32 %v1916, %v2047
        %v2221 = vadd.f32 %v1917, %v2047
        %v2222 = vadd.f32 %v1918, %v2047
        %v2223 = vadd.f32 %v1919, %v2047
        %v2224 = vadd.f32 %v1920, %v2047
        %v2225 = vadd.f32 %v1921, %v2047
        %v2226 = vadd.f32 %v1922, %v2047
        %v2227 = vadd.f32 %v1923, %v2047
        %v2228 = vadd.f32 %v1924, %v2047
        %v2229 = vadd.f32 %v1925, %v2047
        %v2230 = vadd.f32 %v1926, %v2047
        %v2231 = vadd.f32 %v1927, %v2047
        %v2232 = vadd.f32 %v1928, %v2047
        %v2233 = vadd.f32 %v1929, %v2047
        %v2234 = vadd.f32 %v1930, %v2047
        %v2235 = vadd.f32 %v1931, %v2047
        %v2236 = vadd.f32 %v1932, %v2047
        %v2237 = vadd.f32 %v1933, %v2047
        %v2238 = vadd.f32 %v1934, %v2047
        %v2239 = vadd.f32 %v1935, %v2047
        %v2240 = vadd.f32 %v1936, %v2047
        %v2241 = vadd.f32 %v1937, %v2047
        %v2242 = vadd.f32 %v1938, %v2047
        %v2243 = vadd.f32 %v1939, %v2047
        %v2244 = vadd.f32 %v1940, %v2047
        %v2245 = vadd.f32 %v1941, %v2047
        %v2246 = vadd.f32 %v1942, %v2047
        %v2247 = vadd.f32 %v1943, %v2047
        %v2248 = vadd.f32 %v1944, %v2047
        %v2249 = vadd.f32 %v1945, %v2047
        %v2250 = vadd.f32 %v1946, %v2047
        %v2251 = vadd.f32 %v1947, %v2052
        %v2252 = vadd.f32 %v1948, %v2052
        %v2253 = vadd.f32 %v1949, %v2052
        %v2254 = vadd.f32 %v1950, %v2052
        %v2255 = vadd.f32 %v1951, %v2052
        %v2256 = vadd.f32 %v1952, %v2052
        %v2257 = vadd.f32 %v1953, %v2052
        %v2258 = vadd.f32 %v1954, %v2052
        %v2259 = vadd.f32 %v1955, %v2052
        %v2260 = vadd.f32 %v1956, %v2052
        %v2261 = vadd.f32 %v1957, %v2052
        %v2262 = vadd.f32 %v1958, %v2052
        %v2263 = vadd.f32 %v1959, %v2052
        %v2264 = vadd.f32 %v1960, %v2052
        %v2265 = vadd.f32 %v1961, %v2052
        %v2266 = vadd.f32 %v1962, %v2052
        %v2267 = vadd.f32 %v1963, %v2052
        %v2268 = vadd.f32 %v1964, %v2052
        %v2269 = vadd.f32 %v1965, %v2052
        %v2270 = vadd.f32 %v1966, %v2052
        %v2271 = vadd.f32 %v1967, %v2052
        %v2272 = vadd.f32 %v1968, %v2052
        %v2273 = vadd.f32 %v1969, %v2052
        %v2274 = vadd.f32 %v1970, %v2052
        %v2275 = vadd.f32 %v1971, %v2052
        %v2276 = vadd.f32 %v1972, %v2052
        %v2277 = vadd.f32 %v1973, %v2052
        %v2278 = vadd.f32 %v1974, %v2052
        %v2279 = vadd.f32 %v1975, %v2052
        %v2280 = vadd.f32 %v1976, %v2052
        %v2281 = vadd.f32 %v1977, %v2052
        %v2282 = vadd.f32 %v1978, %v2052
        %v2283 = vadd.f32 %v1979, %v2057
        %v2284 = vadd.f32 %v1980, %v2057
        %v2285 = vadd.f32 %v1981, %v2057
        %v2286 = vadd.f32 %v1982, %v2057
        %v2287 = vadd.f32 %v1983, %v2057
        %v2288 = vadd.f32 %v1984, %v2057
        %v2289 = vadd.f32 %v1985, %v2057
        %v2290 = vadd.f32 %v1986, %v2057
        %v2291 = vadd.f32 %v1987, %v2057
        %v2292 = vadd.f32 %v1988, %v2057
        %v2293 = vadd.f32 %v1989, %v2057
        %v2294 = vadd.f32 %v1990, %v2057
        %v2295 = vadd.f32 %v1991, %v2057
        %v2296 = vadd.f32 %v1992, %v2057
        %v2297 = vadd.f32 %v1993, %v2057
        %v2298 = vadd.f32 %v1994, %v2057
        %v2299 = vadd.f32 %v1995, %v2057
        %v2300 = vadd.f32 %v1996, %v2057
        %v2301 = vadd.f32 %v1997, %v2057
        %v2302 = vadd.f32 %v1998, %v2057
        %v2303 = vadd.f32 %v1999, %v2057
        %v2304 = vadd.f32 %v2000, %v2057
        %v2305 = vadd.f32 %v2001, %v2057
        %v2306 = vadd.f32 %v2002, %v2057
        %v2307 = vadd.f32 %v2003, %v2057
        %v2308 = vadd.f32 %v2004, %v2057
        %v2309 = vadd.f32 %v2005, %v2057
        %v2310 = vadd.f32 %v2006, %v2057
        %v2311 = vadd.f32 %v2007, %v2057
        %v2312 = vadd.f32 %v2008, %v2057
        %v2313 = vadd.f32 %v2009, %v2057
        %v2314 = vadd.f32 %v2010, %v2057
        %v2315 = vmax.f32 %v2059, 0.0
        %v2316 = vmax.f32 %v2060, 0.0
        %v2317 = vmax.f32 %v2061, 0.0
        %v2318 = vmax.f32 %v2062, 0.0
        %v2319 = vmax.f32 %v2063, 0.0
        %v2320 = vmax.f32 %v2064, 0.0
        %v2321 = vmax.f32 %v2065, 0.0
        %v2322 = vmax.f32 %v2066, 0.0
        %v2323 = vmax.f32 %v2067, 0.0
        %v2324 = vmax.f32 %v2068, 0.0
        %v2325 = vmax.f32 %v2069, 0.0
        %v2326 = vmax.f32 %v2070, 0.0
        %v2327 = vmax.f32 %v2071, 0.0
        %v2328 = vmax.f32 %v2072, 0.0
        %v2329 = vmax.f32 %v2073, 0.0
        %v2330 = vmax.f32 %v2074, 0.0
        %v2331 = vmax.f32 %v2075, 0.0
        %v2332 = vmax.f32 %v2076, 0.0
        %v2333 = vmax.f32 %v2077, 0.0
        %v2334 = vmax.f32 %v2078, 0.0
        %v2335 = vmax.f32 %v2079, 0.0
        %v2336 = vmax.f32 %v2080, 0.0
        %v2337 = vmax.f32 %v2081, 0.0
        %v2338 = vmax.f32 %v2082, 0.0
        %v2339 = vmax.f32 %v2083, 0.0
        %v2340 = vmax.f32 %v2084, 0.0
        %v2341 = vmax.f32 %v2085, 0.0
        %v2342 = vmax.f32 %v2086, 0.0
        %v2343 = vmax.f32 %v2087, 0.0
        %v2344 = vmax.f32 %v2088, 0.0
        %v2345 = vmax.f32 %v2089, 0.0
        %v2346 = vmax.f32 %v2090, 0.0
        %v2347 = vmax.f32 %v2091, 0.0
        %v2348 = vmax.f32 %v2092, 0.0
        %v2349 = vmax.f32 %v2093, 0.0
        %v2350 = vmax.f32 %v2094, 0.0
        %v2351 = vmax.f32 %v2095, 0.0
        %v2352 = vmax.f32 %v2096, 0.0
        %v2353 = vmax.f32 %v2097, 0.0
        %v2354 = vmax.f32 %v2098, 0.0
        %v2355 = vmax.f32 %v2099, 0.0
        %v2356 = vmax.f32 %v2100, 0.0
        %v2357 = vmax.f32 %v2101, 0.0
        %v2358 = vmax.f32 %v2102, 0.0
        %v2359 = vmax.f32 %v2103, 0.0
        %v2360 = vmax.f32 %v2104, 0.0
        %v2361 = vmax.f32 %v2105, 0.0
        %v2362 = vmax.f32 %v2106, 0.0
        %v2363 = vmax.f32 %v2107, 0.0
        %v2364 = vmax.f32 %v2108, 0.0
        %v2365 = vmax.f32 %v2109, 0.0
        %v2366 = vmax.f32 %v2110, 0.0
        %v2367 = vmax.f32 %v2111, 0.0
        %v2368 = vmax.f32 %v2112, 0.0
        %v2369 = vmax.f32 %v2113, 0.0
        %v2370 = vmax.f32 %v2114, 0.0
        %v2371 = vmax.f32 %v2115, 0.0
        %v2372 = vmax.f32 %v2116, 0.0
        %v2373 = vmax.f32 %v2117, 0.0
        %v2374 = vmax.f32 %v2118, 0.0
        %v2375 = vmax.f32 %v2119, 0.0
        %v2376 = vmax.f32 %v2120, 0.0
        %v2377 = vmax.f32 %v2121, 0.0
        %v2378 = vmax.f32 %v2122, 0.0
        %v2379 = vmax.f32 %v2123, 0.0
        %v2380 = vmax.f32 %v2124, 0.0
        %v2381 = vmax.f32 %v2125, 0.0
        %v2382 = vmax.f32 %v2126, 0.0
        %v2383 = vmax.f32 %v2127, 0.0
        %v2384 = vmax.f32 %v2128, 0.0
        %v2385 = vmax.f32 %v2129, 0.0
        %v2386 = vmax.f32 %v2130, 0.0
        %v2387 = vmax.f32 %v2131, 0.0
        %v2388 = vmax.f32 %v2132, 0.0
        %v2389 = vmax.f32 %v2133, 0.0
        %v2390 = vmax.f32 %v2134, 0.0
        %v2391 = vmax.f32 %v2135, 0.0
        %v2392 = vmax.f32 %v2136, 0.0
        %v2393 = vmax.f32 %v2137, 0.0
        %v2394 = vmax.f32 %v2138, 0.0
        %v2395 = vmax.f32 %v2139, 0.0
        %v2396 = vmax.f32 %v2140, 0.0
        %v2397 = vmax.f32 %v2141, 0.0
        %v2398 = vmax.f32 %v2142, 0.0
        %v2399 = vmax.f32 %v2143, 0.0
        %v2400 = vmax.f32 %v2144, 0.0
        %v2401 = vmax.f32 %v2145, 0.0
        %v2402 = vmax.f32 %v2146, 0.0
        %v2403 = vmax.f32 %v2147, 0.0
        %v2404 = vmax.f32 %v2148, 0.0
        %v2405 = vmax.f32 %v2149, 0.0
        %v2406 = vmax.f32 %v2150, 0.0
        %v2407 = vmax.f32 %v2151, 0.0
        %v2408 = vmax.f32 %v2152, 0.0
        %v2409 = vmax.f32 %v2153, 0.0
        %v2410 = vmax.f32 %v2154, 0.0
        %v2411 = vmax.f32 %v2155, 0.0
        %v2412 = vmax.f32 %v2156, 0.0
        %v2413 = vmax.f32 %v2157, 0.0
        %v2414 = vmax.f32 %v2158, 0.0
        %v2415 = vmax.f32 %v2159, 0.0
        %v2416 = vmax.f32 %v2160, 0.0
        %v2417 = vmax.f32 %v2161, 0.0
        %v2418 = vmax.f32 %v2162, 0.0
        %v2419 = vmax.f32 %v2163, 0.0
        %v2420 = vmax.f32 %v2164, 0.0
        %v2421 = vmax.f32 %v2165, 0.0
        %v2422 = vmax.f32 %v2166, 0.0
        %v2423 = vmax.f32 %v2167, 0.0
        %v2424 = vmax.f32 %v2168, 0.0
        %v2425 = vmax.f32 %v2169, 0.0
        %v2426 = vmax.f32 %v2170, 0.0
        %v2427 = vmax.f32 %v2171, 0.0
        %v2428 = vmax.f32 %v2172, 0.0
        %v2429 = vmax.f32 %v2173, 0.0
        %v2430 = vmax.f32 %v2174, 0.0
        %v2431 = vmax.f32 %v2175, 0.0
        %v2432 = vmax.f32 %v2176, 0.0
        %v2433 = vmax.f32 %v2177, 0.0
        %v2434 = vmax.f32 %v2178, 0.0
        %v2435 = vmax.f32 %v2179, 0.0
        %v2436 = vmax.f32 %v2180, 0.0
        %v2437 = vmax.f32 %v2181, 0.0
        %v2438 = vmax.f32 %v2182, 0.0
        %v2439 = vmax.f32 %v2183, 0.0
        %v2440 = vmax.f32 %v2184, 0.0
        %v2441 = vmax.f32 %v2185, 0.0
        %v2442 = vmax.f32 %v2186, 0.0
        %v2443 = vmax.f32 %v2187, 0.0
        %v2444 = vmax.f32 %v2188, 0.0
        %v2445 = vmax.f32 %v2189, 0.0
        %v2446 = vmax.f32 %v2190, 0.0
        %v2447 = vmax.f32 %v2191, 0.0
        %v2448 = vmax.f32 %v2192, 0.0
        %v2449 = vmax.f32 %v2193, 0.0
        %v2450 = vmax.f32 %v2194, 0.0
        %v2451 = vmax.f32 %v2195, 0.0
        %v2452 = vmax.f32 %v2196, 0.0
        %v2453 = vmax.f32 %v2197, 0.0
        %v2454 = vmax.f32 %v2198, 0.0
        %v2455 = vmax.f32 %v2199, 0.0
        %v2456 = vmax.f32 %v2200, 0.0
        %v2457 = vmax.f32 %v2201, 0.0
        %v2458 = vmax.f32 %v2202, 0.0
        %v2459 = vmax.f32 %v2203, 0.0
        %v2460 = vmax.f32 %v2204, 0.0
        %v2461 = vmax.f32 %v2205, 0.0
        %v2462 = vmax.f32 %v2206, 0.0
        %v2463 = vmax.f32 %v2207, 0.0
        %v2464 = vmax.f32 %v2208, 0.0
        %v2465 = vmax.f32 %v2209, 0.0
        %v2466 = vmax.f32 %v2210, 0.0
        %v2467 = vmax.f32 %v2211, 0.0
        %v2468 = vmax.f32 %v2212, 0.0
        %v2469 = vmax.f32 %v2213, 0.0
        %v2470 = vmax.f32 %v2214, 0.0
        %v2471 = vmax.f32 %v2215, 0.0
        %v2472 = vmax.f32 %v2216, 0.0
        %v2473 = vmax.f32 %v2217, 0.0
        %v2474 = vmax.f32 %v2218, 0.0
        %v2475 = vmax.f32 %v2219, 0.0
        %v2476 = vmax.f32 %v2220, 0.0
        %v2477 = vmax.f32 %v2221, 0.0
        %v2478 = vmax.f32 %v2222, 0.0
        %v2479 = vmax.f32 %v2223, 0.0
        %v2480 = vmax.f32 %v2224, 0.0
        %v2481 = vmax.f32 %v2225, 0.0
        %v2482 = vmax.f32 %v2226, 0.0
        %v2483 = vmax.f32 %v2227, 0.0
        %v2484 = vmax.f32 %v2228, 0.0
        %v2485 = vmax.f32 %v2229, 0.0
        %v2486 = vmax.f32 %v2230, 0.0
        %v2487 = vmax.f32 %v2231, 0.0
        %v2488 = vmax.f32 %v2232, 0.0
        %v2489 = vmax.f32 %v2233, 0.0
        %v2490 = vmax.f32 %v2234, 0.0
        %v2491 = vmax.f32 %v2235, 0.0
        %v2492 = vmax.f32 %v2236, 0.0
        %v2493 = vmax.f32 %v2237, 0.0
        %v2494 = vmax.f32 %v2238, 0.0
        %v2495 = vmax.f32 %v2239, 0.0
        %v2496 = vmax.f32 %v2240, 0.0
        %v2497 = vmax.f32 %v2241, 0.0
        %v2498 = vmax.f32 %v2242, 0.0
        %v2499 = vmax.f32 %v2243, 0.0
        %v2500 = vmax.f32 %v2244, 0.0
        %v2501 = vmax.f32 %v2245, 0.0
        %v2502 = vmax.f32 %v2246, 0.0
        %v2503 = vmax.f32 %v2247, 0.0
        %v2504 = vmax.f32 %v2248, 0.0
        %v2505 = vmax.f32 %v2249, 0.0
        %v2506 = vmax.f32 %v2250, 0.0
        %v2507 = vmax.f32 %v2251, 0.0
        %v2508 = vmax.f32 %v2252, 0.0
        %v2509 = vmax.f32 %v2253, 0.0
        %v2510 = vmax.f32 %v2254, 0.0
        %v2511 = vmax.f32 %v2255, 0.0
        %v2512 = vmax.f32 %v2256, 0.0
        %v2513 = vmax.f32 %v2257, 0.0
        %v2514 = vmax.f32 %v2258, 0.0
        %v2515 = vmax.f32 %v2259, 0.0
        %v2516 = vmax.f32 %v2260, 0.0
        %v2517 = vmax.f32 %v2261, 0.0
        %v2518 = vmax.f32 %v2262, 0.0
        %v2519 = vmax.f32 %v2263, 0.0
        %v2520 = vmax.f32 %v2264, 0.0
        %v2521 = vmax.f32 %v2265, 0.0
        %v2522 = vmax.f32 %v2266, 0.0
        %v2523 = vmax.f32 %v2267, 0.0
        %v2524 = vmax.f32 %v2268, 0.0
        %v2525 = vmax.f32 %v2269, 0.0
        %v2526 = vmax.f32 %v2270, 0.0
        %v2527 = vmax.f32 %v2271, 0.0
        %v2528 = vmax.f32 %v2272, 0.0
        %v2529 = vmax.f32 %v2273, 0.0
        %v2530 = vmax.f32 %v2274, 0.0
        %v2531 = vmax.f32 %v2275, 0.0
        %v2532 = vmax.f32 %v2276, 0.0
        %v2533 = vmax.f32 %v2277, 0.0
        %v2534 = vmax.f32 %v2278, 0.0
        %v2535 = vmax.f32 %v2279, 0.0
        %v2536 = vmax.f32 %v2280, 0.0
        %v2537 = vmax.f32 %v2281, 0.0
        %v2538 = vmax.f32 %v2282, 0.0
        %v2539 = vmax.f32 %v2283, 0.0
        %v2540 = vmax.f32 %v2284, 0.0
        %v2541 = vmax.f32 %v2285, 0.0
        %v2542 = vmax.f32 %v2286, 0.0
        %v2543 = vmax.f32 %v2287, 0.0
        %v2544 = vmax.f32 %v2288, 0.0
        %v2545 = vmax.f32 %v2289, 0.0
        %v2546 = vmax.f32 %v2290, 0.0
        %v2547 = vmax.f32 %v2291, 0.0
        %v2548 = vmax.f32 %v2292, 0.0
        %v2549 = vmax.f32 %v2293, 0.0
        %v2550 = vmax.f32 %v2294, 0.0
        %v2551 = vmax.f32 %v2295, 0.0
        %v2552 = vmax.f32 %v2296, 0.0
        %v2553 = vmax.f32 %v2297, 0.0
        %v2554 = vmax.f32 %v2298, 0.0
        %v2555 = vmax.f32 %v2299, 0.0
        %v2556 = vmax.f32 %v2300, 0.0
        %v2557 = vmax.f32 %v2301, 0.0
        %v2558 = vmax.f32 %v2302, 0.0
        %v2559 = vmax.f32 %v2303, 0.0
        %v2560 = vmax.f32 %v2304, 0.0
        %v2561 = vmax.f32 %v2305, 0.0
        %v2562 = vmax.f32 %v2306, 0.0
        %v2563 = vmax.f32 %v2307, 0.0
        %v2564 = vmax.f32 %v2308, 0.0
        %v2565 = vmax.f32 %v2309, 0.0
        %v2566 = vmax.f32 %v2310, 0.0
        %v2567 = vmax.f32 %v2311, 0.0
        %v2568 = vmax.f32 %v2312, 0.0
        %v2569 = vmax.f32 %v2313, 0.0
        %v2570 = vmax.f32 %v2314, 0.0
        %v2571 = vpack.c.bf16 %v2347, %v2315
        %v2572 = vpack.c.bf16 %v2348, %v2316
        %v2573 = vpack.c.bf16 %v2349, %v2317
        %v2574 = vpack.c.bf16 %v2350, %v2318
        %v2575 = vpack.c.bf16 %v2351, %v2319
        %v2576 = vpack.c.bf16 %v2352, %v2320
        %v2577 = vpack.c.bf16 %v2353, %v2321
        %v2578 = vpack.c.bf16 %v2354, %v2322
        %v2579 = vpack.c.bf16 %v2355, %v2323
        %v2580 = vpack.c.bf16 %v2356, %v2324
        %v2581 = vpack.c.bf16 %v2357, %v2325
        %v2582 = vpack.c.bf16 %v2358, %v2326
        %v2583 = vpack.c.bf16 %v2359, %v2327
        %v2584 = vpack.c.bf16 %v2360, %v2328
        %v2585 = vpack.c.bf16 %v2361, %v2329
        %v2586 = vpack.c.bf16 %v2362, %v2330
        %v2587 = vpack.c.bf16 %v2363, %v2331
        %v2588 = vpack.c.bf16 %v2364, %v2332
        %v2589 = vpack.c.bf16 %v2365, %v2333
        %v2590 = vpack.c.bf16 %v2366, %v2334
        %v2591 = vpack.c.bf16 %v2367, %v2335
        %v2592 = vpack.c.bf16 %v2368, %v2336
        %v2593 = vpack.c.bf16 %v2369, %v2337
        %v2594 = vpack.c.bf16 %v2370, %v2338
        %v2595 = vpack.c.bf16 %v2371, %v2339
        %v2596 = vpack.c.bf16 %v2372, %v2340
        %v2597 = vpack.c.bf16 %v2373, %v2341
        %v2598 = vpack.c.bf16 %v2374, %v2342
        %v2599 = vpack.c.bf16 %v2375, %v2343
        %v2600 = vpack.c.bf16 %v2376, %v2344
        %v2601 = vpack.c.bf16 %v2377, %v2345
        %v2602 = vpack.c.bf16 %v2378, %v2346
        %v2603 = vpack.c.bf16 %v2411, %v2379
        %v2604 = vpack.c.bf16 %v2412, %v2380
        %v2605 = vpack.c.bf16 %v2413, %v2381
        %v2606 = vpack.c.bf16 %v2414, %v2382
        %v2607 = vpack.c.bf16 %v2415, %v2383
        %v2608 = vpack.c.bf16 %v2416, %v2384
        %v2609 = vpack.c.bf16 %v2417, %v2385
        %v2610 = vpack.c.bf16 %v2418, %v2386
        %v2611 = vpack.c.bf16 %v2419, %v2387
        %v2612 = vpack.c.bf16 %v2420, %v2388
        %v2613 = vpack.c.bf16 %v2421, %v2389
        %v2614 = vpack.c.bf16 %v2422, %v2390
        %v2615 = vpack.c.bf16 %v2423, %v2391
        %v2616 = vpack.c.bf16 %v2424, %v2392
        %v2617 = vpack.c.bf16 %v2425, %v2393
        %v2618 = vpack.c.bf16 %v2426, %v2394
        %v2619 = vpack.c.bf16 %v2427, %v2395
        %v2620 = vpack.c.bf16 %v2428, %v2396
        %v2621 = vpack.c.bf16 %v2429, %v2397
        %v2622 = vpack.c.bf16 %v2430, %v2398
        %v2623 = vpack.c.bf16 %v2431, %v2399
        %v2624 = vpack.c.bf16 %v2432, %v2400
        %v2625 = vpack.c.bf16 %v2433, %v2401
        %v2626 = vpack.c.bf16 %v2434, %v2402
        %v2627 = vpack.c.bf16 %v2435, %v2403
        %v2628 = vpack.c.bf16 %v2436, %v2404
        %v2629 = vpack.c.bf16 %v2437, %v2405
        %v2630 = vpack.c.bf16 %v2438, %v2406
        %v2631 = vpack.c.bf16 %v2439, %v2407
        %v2632 = vpack.c.bf16 %v2440, %v2408
        %v2633 = vpack.c.bf16 %v2441, %v2409
        %v2634 = vpack.c.bf16 %v2442, %v2410
        %v2635 = vpack.c.bf16 %v2475, %v2443
        %v2636 = vpack.c.bf16 %v2476, %v2444
        %v2637 = vpack.c.bf16 %v2477, %v2445
        %v2638 = vpack.c.bf16 %v2478, %v2446
        %v2639 = vpack.c.bf16 %v2479, %v2447
        %v2640 = vpack.c.bf16 %v2480, %v2448
        %v2641 = vpack.c.bf16 %v2481, %v2449
        %v2642 = vpack.c.bf16 %v2482, %v2450
        %v2643 = vpack.c.bf16 %v2483, %v2451
        %v2644 = vpack.c.bf16 %v2484, %v2452
        %v2645 = vpack.c.bf16 %v2485, %v2453
        %v2646 = vpack.c.bf16 %v2486, %v2454
        %v2647 = vpack.c.bf16 %v2487, %v2455
        %v2648 = vpack.c.bf16 %v2488, %v2456
        %v2649 = vpack.c.bf16 %v2489, %v2457
        %v2650 = vpack.c.bf16 %v2490, %v2458
        %v2651 = vpack.c.bf16 %v2491, %v2459
        %v2652 = vpack.c.bf16 %v2492, %v2460
        %v2653 = vpack.c.bf16 %v2493, %v2461
        %v2654 = vpack.c.bf16 %v2494, %v2462
        %v2655 = vpack.c.bf16 %v2495, %v2463
        %v2656 = vpack.c.bf16 %v2496, %v2464
        %v2657 = vpack.c.bf16 %v2497, %v2465
        %v2658 = vpack.c.bf16 %v2498, %v2466
        %v2659 = vpack.c.bf16 %v2499, %v2467
        %v2660 = vpack.c.bf16 %v2500, %v2468
        %v2661 = vpack.c.bf16 %v2501, %v2469
        %v2662 = vpack.c.bf16 %v2502, %v2470
        %v2663 = vpack.c.bf16 %v2503, %v2471
        %v2664 = vpack.c.bf16 %v2504, %v2472
        %v2665 = vpack.c.bf16 %v2505, %v2473
        %v2666 = vpack.c.bf16 %v2506, %v2474
        %v2667 = vpack.c.bf16 %v2539, %v2507
        %v2668 = vpack.c.bf16 %v2540, %v2508
        %v2669 = vpack.c.bf16 %v2541, %v2509
        %v2670 = vpack.c.bf16 %v2542, %v2510
        %v2671 = vpack.c.bf16 %v2543, %v2511
        %v2672 = vpack.c.bf16 %v2544, %v2512
        %v2673 = vpack.c.bf16 %v2545, %v2513
        %v2674 = vpack.c.bf16 %v2546, %v2514
        %v2675 = vpack.c.bf16 %v2547, %v2515
        %v2676 = vpack.c.bf16 %v2548, %v2516
        %v2677 = vpack.c.bf16 %v2549, %v2517
        %v2678 = vpack.c.bf16 %v2550, %v2518
        %v2679 = vpack.c.bf16 %v2551, %v2519
        %v2680 = vpack.c.bf16 %v2552, %v2520
        %v2681 = vpack.c.bf16 %v2553, %v2521
        %v2682 = vpack.c.bf16 %v2554, %v2522
        %v2683 = vpack.c.bf16 %v2555, %v2523
        %v2684 = vpack.c.bf16 %v2556, %v2524
        %v2685 = vpack.c.bf16 %v2557, %v2525
        %v2686 = vpack.c.bf16 %v2558, %v2526
        %v2687 = vpack.c.bf16 %v2559, %v2527
        %v2688 = vpack.c.bf16 %v2560, %v2528
        %v2689 = vpack.c.bf16 %v2561, %v2529
        %v2690 = vpack.c.bf16 %v2562, %v2530
        %v2691 = vpack.c.bf16 %v2563, %v2531
        %v2692 = vpack.c.bf16 %v2564, %v2532
        %v2693 = vpack.c.bf16 %v2565, %v2533
        %v2694 = vpack.c.bf16 %v2566, %v2534
        %v2695 = vpack.c.bf16 %v2567, %v2535
        %v2696 = vpack.c.bf16 %v2568, %v2536
        %v2697 = vpack.c.bf16 %v2569, %v2537
        %v2698 = vpack.c.bf16 %v2570, %v2538
        %v2699 = vld [vmem:[%s3] sm:$0xf]
        %v2700 = vld [vmem:[%s3 + $0x4] sm:$0xf]
        %v2701 = vld [vmem:[%s3 + $0x8] sm:$0xf]
        %v2702 = vld [vmem:[%s3 + $0xc] sm:$0xf]
        %v2703 = vld [vmem:[%s3 + $0x10] sm:$0xf]
        %v2704 = vld [vmem:[%s3 + $0x14] sm:$0xf]
        %v2705 = vld [vmem:[%s3 + $0x18] sm:$0xf]
        %v2706 = vld [vmem:[%s3 + $0x1c] sm:$0xf]
        %v2707 = vld [vmem:[%s3 + $0x20] sm:$0xf]
        %v2708 = vld [vmem:[%s3 + $0x24] sm:$0xf]
        %v2709 = vld [vmem:[%s3 + $0x28] sm:$0xf]
        %v2710 = vld [vmem:[%s3 + $0x2c] sm:$0xf]
        %v2711 = vld [vmem:[%s3 + $0x30] sm:$0xf]
        %v2712 = vld [vmem:[%s3 + $0x34] sm:$0xf]
        %v2713 = vld [vmem:[%s3 + $0x38] sm:$0xf]
        %v2714 = vld [vmem:[%s3 + $0x3c] sm:$0xf]
        %v2715 = vld [vmem:[%s4] sm:$0xff]
        %v2716 = vld [vmem:[%s4 + $0x8] sm:$0xff]
        %v2717 = vld [vmem:[%s4 + $0x10] sm:$0xff]
        %v2718 = vld [vmem:[%s4 + $0x18] sm:$0xff]
        %v2719 = vld [vmem:[%s4 + $0x20] sm:$0xff]
        %v2720 = vld [vmem:[%s4 + $0x28] sm:$0xff]
        %v2721 = vld [vmem:[%s4 + $0x30] sm:$0xff]
        %v2722 = vld [vmem:[%s4 + $0x38] sm:$0xff]
        %v2723 = vld [vmem:[%s4 + $0x40] sm:$0xff]
        %v2724 = vld [vmem:[%s4 + $0x48] sm:$0xff]
        %v2725 = vld [vmem:[%s4 + $0x50] sm:$0xff]
        %v2726 = vld [vmem:[%s4 + $0x58] sm:$0xff]
        %v2727 = vld [vmem:[%s4 + $0x60] sm:$0xff]
        %v2728 = vld [vmem:[%s4 + $0x68] sm:$0xff]
        %v2729 = vld [vmem:[%s4 + $0x70] sm:$0xff]
        %v2730 = vld [vmem:[%s4 + $0x78] sm:$0xff]
        %2732 = vset.pattern.permute.xlu0 0
        %2733 = vperm.xlu0 %2732, %v2715
        %v2734 = vpop.permute.xlu0 %2733
        %2737 = vset.pattern.permute.xlu0 0
        %2738 = vperm.xlu0 %2737, %v2716
        %v2739 = vpop.permute.xlu0 %2738
        %2742 = vset.pattern.permute.xlu0 0
        %2743 = vperm.xlu0 %2742, %v2717
        %v2744 = vpop.permute.xlu0 %2743
        %2747 = vset.pattern.permute.xlu0 0
        %2748 = vperm.xlu0 %2747, %v2718
        %v2749 = vpop.permute.xlu0 %2748
        %2752 = vset.pattern.permute.xlu0 0
        %2753 = vperm.xlu0 %2752, %v2719
        %v2754 = vpop.permute.xlu0 %2753
        %2757 = vset.pattern.permute.xlu0 0
        %2758 = vperm.xlu0 %2757, %v2720
        %v2759 = vpop.permute.xlu0 %2758
        %2762 = vset.pattern.permute.xlu0 0
        %2763 = vperm.xlu0 %2762, %v2721
        %v2764 = vpop.permute.xlu0 %2763
        %2767 = vset.pattern.permute.xlu0 0
        %2768 = vperm.xlu0 %2767, %v2722
        %v2769 = vpop.permute.xlu0 %2768
        %2772 = vset.pattern.permute.xlu0 0
        %2773 = vperm.xlu0 %2772, %v2723
        %v2774 = vpop.permute.xlu0 %2773
        %2777 = vset.pattern.permute.xlu0 0
        %2778 = vperm.xlu0 %2777, %v2724
        %v2779 = vpop.permute.xlu0 %2778
        %2782 = vset.pattern.permute.xlu0 0
        %2783 = vperm.xlu0 %2782, %v2725
        %v2784 = vpop.permute.xlu0 %2783
        %2787 = vset.pattern.permute.xlu0 0
        %2788 = vperm.xlu0 %2787, %v2726
        %v2789 = vpop.permute.xlu0 %2788
        %2792 = vset.pattern.permute.xlu0 0
        %2793 = vperm.xlu0 %2792, %v2727
        %v2794 = vpop.permute.xlu0 %2793
        %2797 = vset.pattern.permute.xlu0 0
        %2798 = vperm.xlu0 %2797, %v2728
        %v2799 = vpop.permute.xlu0 %2798
        %2802 = vset.pattern.permute.xlu0 0
        %2803 = vperm.xlu0 %2802, %v2729
        %v2804 = vpop.permute.xlu0 %2803
        %2807 = vset.pattern.permute.xlu0 0
        %2808 = vperm.xlu0 %2807, %v2730
        %v2809 = vpop.permute.xlu0 %2808
        %v2827 = vunpack.c.l.b16 %v2699
        %v2828 = vunpack.c.l.b16 %v2700
        %v2829 = vunpack.c.l.b16 %v2701
        %v2830 = vunpack.c.l.b16 %v2702
        %v2831 = vunpack.c.l.b16 %v2703
        %v2832 = vunpack.c.l.b16 %v2704
        %v2833 = vunpack.c.l.b16 %v2705
        %v2834 = vunpack.c.l.b16 %v2706
        %v2835 = vunpack.c.l.b16 %v2707
        %v2836 = vunpack.c.l.b16 %v2708
        %v2837 = vunpack.c.l.b16 %v2709
        %v2838 = vunpack.c.l.b16 %v2710
        %v2839 = vunpack.c.l.b16 %v2711
        %v2840 = vunpack.c.l.b16 %v2712
        %v2841 = vunpack.c.l.b16 %v2713
        %v2842 = vunpack.c.l.b16 %v2714
        %v2843 = vpack.c.b16 %v2828, %v2827
        %v2844 = vpack.c.b16 %v2830, %v2829
        %v2845 = vpack.c.b16 %v2832, %v2831
        %v2846 = vpack.c.b16 %v2834, %v2833
        %v2847 = vpack.c.b16 %v2836, %v2835
        %v2848 = vpack.c.b16 %v2838, %v2837
        %v2849 = vpack.c.b16 %v2840, %v2839
        %v2850 = vpack.c.b16 %v2842, %v2841
        %vm2851 = vcmask 523264
        %v2853 = vsel %vm2851, %v2843, 0
        %v2856 = vsel %vm2851, %v2844, 0
        %v2859 = vsel %vm2851, %v2845, 0
        %v2862 = vsel %vm2851, %v2846, 0
        %v2865 = vsel %vm2851, %v2847, 0
        %v2868 = vsel %vm2851, %v2848, 0
        %v2871 = vsel %vm2851, %v2849, 0
        %v2874 = vsel %vm2851, %v2850, 0
        %2876 = vmatpush.bf16.msra.mxu0 0
        %2877 = vmatpush.bf16.msra.mxu0 0
        %2878 = vmatpush.bf16.msra.mxu0 0
        %2879 = vmatpush.bf16.msra.mxu0 0
        %2880 = vmatpush.bf16.msra.mxu0 %v2667
        %2881 = vmatpush.bf16.msra.mxu0 %v2635
        %2882 = vmatpush.bf16.msra.mxu0 %v2603
        %2883 = vmatpush.bf16.msra.mxu0 %v2571
        %2884 = vmatmul.bf16.gmra.mxu0 %v2853
        %v2885 = vpop.f32.mrf.mxu0
        %v2886 = vadd.f32 %v2734, %v2885
        %v2887 = vpop.f32.mrf.mxu0
        %v2888 = vadd.f32 %v2739, %v2887
        %2889 = vmatmul.bf16.gmra.mxu0 %v2856
        %v2890 = vpop.f32.mrf.mxu0
        %v2891 = vadd.f32 %v2744, %v2890
        %v2892 = vpop.f32.mrf.mxu0
        %v2893 = vadd.f32 %v2749, %v2892
        %2894 = vmatmul.bf16.gmra.mxu0 %v2859
        %v2895 = vpop.f32.mrf.mxu0
        %v2896 = vadd.f32 %v2754, %v2895
        %v2897 = vpop.f32.mrf.mxu0
        %v2898 = vadd.f32 %v2759, %v2897
        %2899 = vmatmul.bf16.gmra.mxu0 %v2862
        %v2900 = vpop.f32.mrf.mxu0
        %v2901 = vadd.f32 %v2764, %v2900
        %v2902 = vpop.f32.mrf.mxu0
        %v2903 = vadd.f32 %v2769, %v2902
        %2904 = vmatmul.bf16.gmra.mxu0 %v2865
        %v2905 = vpop.f32.mrf.mxu0
        %v2906 = vadd.f32 %v2774, %v2905
        %v2907 = vpop.f32.mrf.mxu0
        %v2908 = vadd.f32 %v2779, %v2907
        %2909 = vmatmul.bf16.gmra.mxu0 %v2868
        %v2910 = vpop.f32.mrf.mxu0
        %v2911 = vadd.f32 %v2784, %v2910
        %v2912 = vpop.f32.mrf.mxu0
        %v2913 = vadd.f32 %v2789, %v2912
        %2914 = vmatmul.bf16.gmra.mxu0 %v2871
        %v2915 = vpop.f32.mrf.mxu0
        %v2916 = vadd.f32 %v2794, %v2915
        %v2917 = vpop.f32.mrf.mxu0
        %v2918 = vadd.f32 %v2799, %v2917
        %2919 = vmatmul.bf16.gmra.mxu0 %v2874
        %v2920 = vpop.f32.mrf.mxu0
        %v2921 = vadd.f32 %v2804, %v2920
        %v2922 = vpop.f32.mrf.mxu0
        %v2923 = vadd.f32 %v2809, %v2922
        %2924 = vdwg.mxu0
        %2925 = vmatpush.bf16.msra.mxu0 0
        %2926 = vmatpush.bf16.msra.mxu0 0
        %2927 = vmatpush.bf16.msra.mxu0 0
        %2928 = vmatpush.bf16.msra.mxu0 0
        %2929 = vmatpush.bf16.msra.mxu0 %v2668
        %2930 = vmatpush.bf16.msra.mxu0 %v2636
        %2931 = vmatpush.bf16.msra.mxu0 %v2604
        %2932 = vmatpush.bf16.msra.mxu0 %v2572
        %2933 = vmatmul.bf16.gmra.mxu0 %v2853
        %v2934 = vpop.f32.mrf.mxu0
        %v2935 = vadd.f32 %v2734, %v2934
        %v2936 = vpop.f32.mrf.mxu0
        %v2937 = vadd.f32 %v2739, %v2936
        %2938 = vmatmul.bf16.gmra.mxu0 %v2856
        %v2939 = vpop.f32.mrf.mxu0
        %v2940 = vadd.f32 %v2744, %v2939
        %v2941 = vpop.f32.mrf.mxu0
        %v2942 = vadd.f32 %v2749, %v2941
        %2943 = vmatmul.bf16.gmra.mxu0 %v2859
        %v2944 = vpop.f32.mrf.mxu0
        %v2945 = vadd.f32 %v2754, %v2944
        %v2946 = vpop.f32.mrf.mxu0
        %v2947 = vadd.f32 %v2759, %v2946
        %2948 = vmatmul.bf16.gmra.mxu0 %v2862
        %v2949 = vpop.f32.mrf.mxu0
        %v2950 = vadd.f32 %v2764, %v2949
        %v2951 = vpop.f32.mrf.mxu0
        %v2952 = vadd.f32 %v2769, %v2951
        %2953 = vmatmul.bf16.gmra.mxu0 %v2865
        %v2954 = vpop.f32.mrf.mxu0
        %v2955 = vadd.f32 %v2774, %v2954
        %v2956 = vpop.f32.mrf.mxu0
        %v2957 = vadd.f32 %v2779, %v2956
        %2958 = vmatmul.bf16.gmra.mxu0 %v2868
        %v2959 = vpop.f32.mrf.mxu0
        %v2960 = vadd.f32 %v2784, %v2959
        %v2961 = vpop.f32.mrf.mxu0
        %v2962 = vadd.f32 %v2789, %v2961
        %2963 = vmatmul.bf16.gmra.mxu0 %v2871
        %v2964 = vpop.f32.mrf.mxu0
        %v2965 = vadd.f32 %v2794, %v2964
        %v2966 = vpop.f32.mrf.mxu0
        %v2967 = vadd.f32 %v2799, %v2966
        %2968 = vmatmul.bf16.gmra.mxu0 %v2874
        %v2969 = vpop.f32.mrf.mxu0
        %v2970 = vadd.f32 %v2804, %v2969
        %v2971 = vpop.f32.mrf.mxu0
        %v2972 = vadd.f32 %v2809, %v2971
        %2973 = vdwg.mxu0
        %2974 = vmatpush.bf16.msra.mxu0 0
        %2975 = vmatpush.bf16.msra.mxu0 0
        %2976 = vmatpush.bf16.msra.mxu0 0
        %2977 = vmatpush.bf16.msra.mxu0 0
        %2978 = vmatpush.bf16.msra.mxu0 %v2669
        %2979 = vmatpush.bf16.msra.mxu0 %v2637
        %2980 = vmatpush.bf16.msra.mxu0 %v2605
        %2981 = vmatpush.bf16.msra.mxu0 %v2573
        %2982 = vmatmul.bf16.gmra.mxu0 %v2853
        %v2983 = vpop.f32.mrf.mxu0
        %v2984 = vadd.f32 %v2734, %v2983
        %v2985 = vpop.f32.mrf.mxu0
        %v2986 = vadd.f32 %v2739, %v2985
        %2987 = vmatmul.bf16.gmra.mxu0 %v2856
        %v2988 = vpop.f32.mrf.mxu0
        %v2989 = vadd.f32 %v2744, %v2988
        %v2990 = vpop.f32.mrf.mxu0
        %v2991 = vadd.f32 %v2749, %v2990
        %2992 = vmatmul.bf16.gmra.mxu0 %v2859
        %v2993 = vpop.f32.mrf.mxu0
        %v2994 = vadd.f32 %v2754, %v2993
        %v2995 = vpop.f32.mrf.mxu0
        %v2996 = vadd.f32 %v2759, %v2995
        %2997 = vmatmul.bf16.gmra.mxu0 %v2862
        %v2998 = vpop.f32.mrf.mxu0
        %v2999 = vadd.f32 %v2764, %v2998
        %v3000 = vpop.f32.mrf.mxu0
        %v3001 = vadd.f32 %v2769, %v3000
        %3002 = vmatmul.bf16.gmra.mxu0 %v2865
        %v3003 = vpop.f32.mrf.mxu0
        %v3004 = vadd.f32 %v2774, %v3003
        %v3005 = vpop.f32.mrf.mxu0
        %v3006 = vadd.f32 %v2779, %v3005
        %3007 = vmatmul.bf16.gmra.mxu0 %v2868
        %v3008 = vpop.f32.mrf.mxu0
        %v3009 = vadd.f32 %v2784, %v3008
        %v3010 = vpop.f32.mrf.mxu0
        %v3011 = vadd.f32 %v2789, %v3010
        %3012 = vmatmul.bf16.gmra.mxu0 %v2871
        %v3013 = vpop.f32.mrf.mxu0
        %v3014 = vadd.f32 %v2794, %v3013
        %v3015 = vpop.f32.mrf.mxu0
        %v3016 = vadd.f32 %v2799, %v3015
        %3017 = vmatmul.bf16.gmra.mxu0 %v2874
        %v3018 = vpop.f32.mrf.mxu0
        %v3019 = vadd.f32 %v2804, %v3018
        %v3020 = vpop.f32.mrf.mxu0
        %v3021 = vadd.f32 %v2809, %v3020
        %3022 = vdwg.mxu0
        %3023 = vmatpush.bf16.msra.mxu0 0
        %3024 = vmatpush.bf16.msra.mxu0 0
        %3025 = vmatpush.bf16.msra.mxu0 0
        %3026 = vmatpush.bf16.msra.mxu0 0
        %3027 = vmatpush.bf16.msra.mxu0 %v2670
        %3028 = vmatpush.bf16.msra.mxu0 %v2638
        %3029 = vmatpush.bf16.msra.mxu0 %v2606
        %3030 = vmatpush.bf16.msra.mxu0 %v2574
        %3031 = vmatmul.bf16.gmra.mxu0 %v2853
        %v3032 = vpop.f32.mrf.mxu0
        %v3033 = vadd.f32 %v2734, %v3032
        %v3034 = vpop.f32.mrf.mxu0
        %v3035 = vadd.f32 %v2739, %v3034
        %3036 = vmatmul.bf16.gmra.mxu0 %v2856
        %v3037 = vpop.f32.mrf.mxu0
        %v3038 = vadd.f32 %v2744, %v3037
        %v3039 = vpop.f32.mrf.mxu0
        %v3040 = vadd.f32 %v2749, %v3039
        %3041 = vmatmul.bf16.gmra.mxu0 %v2859
        %v3042 = vpop.f32.mrf.mxu0
        %v3043 = vadd.f32 %v2754, %v3042
        %v3044 = vpop.f32.mrf.mxu0
        %v3045 = vadd.f32 %v2759, %v3044
        %3046 = vmatmul.bf16.gmra.mxu0 %v2862
        %v3047 = vpop.f32.mrf.mxu0
        %v3048 = vadd.f32 %v2764, %v3047
        %v3049 = vpop.f32.mrf.mxu0
        %v3050 = vadd.f32 %v2769, %v3049
        %3051 = vmatmul.bf16.gmra.mxu0 %v2865
        %v3052 = vpop.f32.mrf.mxu0
        %v3053 = vadd.f32 %v2774, %v3052
        %v3054 = vpop.f32.mrf.mxu0
        %v3055 = vadd.f32 %v2779, %v3054
        %3056 = vmatmul.bf16.gmra.mxu0 %v2868
        %v3057 = vpop.f32.mrf.mxu0
        %v3058 = vadd.f32 %v2784, %v3057
        %v3059 = vpop.f32.mrf.mxu0
        %v3060 = vadd.f32 %v2789, %v3059
        %3061 = vmatmul.bf16.gmra.mxu0 %v2871
        %v3062 = vpop.f32.mrf.mxu0
        %v3063 = vadd.f32 %v2794, %v3062
        %v3064 = vpop.f32.mrf.mxu0
        %v3065 = vadd.f32 %v2799, %v3064
        %3066 = vmatmul.bf16.gmra.mxu0 %v2874
        %v3067 = vpop.f32.mrf.mxu0
        %v3068 = vadd.f32 %v2804, %v3067
        %v3069 = vpop.f32.mrf.mxu0
        %v3070 = vadd.f32 %v2809, %v3069
        %3071 = vdwg.mxu0
        %3072 = vmatpush.bf16.msra.mxu0 0
        %3073 = vmatpush.bf16.msra.mxu0 0
        %3074 = vmatpush.bf16.msra.mxu0 0
        %3075 = vmatpush.bf16.msra.mxu0 0
        %3076 = vmatpush.bf16.msra.mxu0 %v2671
        %3077 = vmatpush.bf16.msra.mxu0 %v2639
        %3078 = vmatpush.bf16.msra.mxu0 %v2607
        %3079 = vmatpush.bf16.msra.mxu0 %v2575
        %3080 = vmatmul.bf16.gmra.mxu0 %v2853
        %v3081 = vpop.f32.mrf.mxu0
        %v3082 = vadd.f32 %v2734, %v3081
        %v3083 = vpop.f32.mrf.mxu0
        %v3084 = vadd.f32 %v2739, %v3083
        %3085 = vmatmul.bf16.gmra.mxu0 %v2856
        %v3086 = vpop.f32.mrf.mxu0
        %v3087 = vadd.f32 %v2744, %v3086
        %v3088 = vpop.f32.mrf.mxu0
        %v3089 = vadd.f32 %v2749, %v3088
        %3090 = vmatmul.bf16.gmra.mxu0 %v2859
        %v3091 = vpop.f32.mrf.mxu0
        %v3092 = vadd.f32 %v2754, %v3091
        %v3093 = vpop.f32.mrf.mxu0
        %v3094 = vadd.f32 %v2759, %v3093
        %3095 = vmatmul.bf16.gmra.mxu0 %v2862
        %v3096 = vpop.f32.mrf.mxu0
        %v3097 = vadd.f32 %v2764, %v3096
        %v3098 = vpop.f32.mrf.mxu0
        %v3099 = vadd.f32 %v2769, %v3098
        %3100 = vmatmul.bf16.gmra.mxu0 %v2865
        %v3101 = vpop.f32.mrf.mxu0
        %v3102 = vadd.f32 %v2774, %v3101
        %v3103 = vpop.f32.mrf.mxu0
        %v3104 = vadd.f32 %v2779, %v3103
        %3105 = vmatmul.bf16.gmra.mxu0 %v2868
        %v3106 = vpop.f32.mrf.mxu0
        %v3107 = vadd.f32 %v2784, %v3106
        %v3108 = vpop.f32.mrf.mxu0
        %v3109 = vadd.f32 %v2789, %v3108
        %3110 = vmatmul.bf16.gmra.mxu0 %v2871
        %v3111 = vpop.f32.mrf.mxu0
        %v3112 = vadd.f32 %v2794, %v3111
        %v3113 = vpop.f32.mrf.mxu0
        %v3114 = vadd.f32 %v2799, %v3113
        %3115 = vmatmul.bf16.gmra.mxu0 %v2874
        %v3116 = vpop.f32.mrf.mxu0
        %v3117 = vadd.f32 %v2804, %v3116
        %v3118 = vpop.f32.mrf.mxu0
        %v3119 = vadd.f32 %v2809, %v3118
        %3120 = vdwg.mxu0
        %3121 = vmatpush.bf16.msra.mxu0 0
        %3122 = vmatpush.bf16.msra.mxu0 0
        %3123 = vmatpush.bf16.msra.mxu0 0
        %3124 = vmatpush.bf16.msra.mxu0 0
        %3125 = vmatpush.bf16.msra.mxu0 %v2672
        %3126 = vmatpush.bf16.msra.mxu0 %v2640
        %3127 = vmatpush.bf16.msra.mxu0 %v2608
        %3128 = vmatpush.bf16.msra.mxu0 %v2576
        %3129 = vmatmul.bf16.gmra.mxu0 %v2853
        %v3130 = vpop.f32.mrf.mxu0
        %v3131 = vadd.f32 %v2734, %v3130
        %v3132 = vpop.f32.mrf.mxu0
        %v3133 = vadd.f32 %v2739, %v3132
        %3134 = vmatmul.bf16.gmra.mxu0 %v2856
        %v3135 = vpop.f32.mrf.mxu0
        %v3136 = vadd.f32 %v2744, %v3135
        %v3137 = vpop.f32.mrf.mxu0
        %v3138 = vadd.f32 %v2749, %v3137
        %3139 = vmatmul.bf16.gmra.mxu0 %v2859
        %v3140 = vpop.f32.mrf.mxu0
        %v3141 = vadd.f32 %v2754, %v3140
        %v3142 = vpop.f32.mrf.mxu0
        %v3143 = vadd.f32 %v2759, %v3142
        %3144 = vmatmul.bf16.gmra.mxu0 %v2862
        %v3145 = vpop.f32.mrf.mxu0
        %v3146 = vadd.f32 %v2764, %v3145
        %v3147 = vpop.f32.mrf.mxu0
        %v3148 = vadd.f32 %v2769, %v3147
        %3149 = vmatmul.bf16.gmra.mxu0 %v2865
        %v3150 = vpop.f32.mrf.mxu0
        %v3151 = vadd.f32 %v2774, %v3150
        %v3152 = vpop.f32.mrf.mxu0
        %v3153 = vadd.f32 %v2779, %v3152
        %3154 = vmatmul.bf16.gmra.mxu0 %v2868
        %v3155 = vpop.f32.mrf.mxu0
        %v3156 = vadd.f32 %v2784, %v3155
        %v3157 = vpop.f32.mrf.mxu0
        %v3158 = vadd.f32 %v2789, %v3157
        %3159 = vmatmul.bf16.gmra.mxu0 %v2871
        %v3160 = vpop.f32.mrf.mxu0
        %v3161 = vadd.f32 %v2794, %v3160
        %v3162 = vpop.f32.mrf.mxu0
        %v3163 = vadd.f32 %v2799, %v3162
        %3164 = vmatmul.bf16.gmra.mxu0 %v2874
        %v3165 = vpop.f32.mrf.mxu0
        %v3166 = vadd.f32 %v2804, %v3165
        %v3167 = vpop.f32.mrf.mxu0
        %v3168 = vadd.f32 %v2809, %v3167
        %3169 = vdwg.mxu0
        %3170 = vmatpush.bf16.msra.mxu0 0
        %3171 = vmatpush.bf16.msra.mxu0 0
        %3172 = vmatpush.bf16.msra.mxu0 0
        %3173 = vmatpush.bf16.msra.mxu0 0
        %3174 = vmatpush.bf16.msra.mxu0 %v2673
        %3175 = vmatpush.bf16.msra.mxu0 %v2641
        %3176 = vmatpush.bf16.msra.mxu0 %v2609
        %3177 = vmatpush.bf16.msra.mxu0 %v2577
        %3178 = vmatmul.bf16.gmra.mxu0 %v2853
        %v3179 = vpop.f32.mrf.mxu0
        %v3180 = vadd.f32 %v2734, %v3179
        %v3181 = vpop.f32.mrf.mxu0
        %v3182 = vadd.f32 %v2739, %v3181
        %3183 = vmatmul.bf16.gmra.mxu0 %v2856
        %v3184 = vpop.f32.mrf.mxu0
        %v3185 = vadd.f32 %v2744, %v3184
        %v3186 = vpop.f32.mrf.mxu0
        %v3187 = vadd.f32 %v2749, %v3186
        %3188 = vmatmul.bf16.gmra.mxu0 %v2859
        %v3189 = vpop.f32.mrf.mxu0
        %v3190 = vadd.f32 %v2754, %v3189
        %v3191 = vpop.f32.mrf.mxu0
        %v3192 = vadd.f32 %v2759, %v3191
        %3193 = vmatmul.bf16.gmra.mxu0 %v2862
        %v3194 = vpop.f32.mrf.mxu0
        %v3195 = vadd.f32 %v2764, %v3194
        %v3196 = vpop.f32.mrf.mxu0
        %v3197 = vadd.f32 %v2769, %v3196
        %3198 = vmatmul.bf16.gmra.mxu0 %v2865
        %v3199 = vpop.f32.mrf.mxu0
        %v3200 = vadd.f32 %v2774, %v3199
        %v3201 = vpop.f32.mrf.mxu0
        %v3202 = vadd.f32 %v2779, %v3201
        %3203 = vmatmul.bf16.gmra.mxu0 %v2868
        %v3204 = vpop.f32.mrf.mxu0
        %v3205 = vadd.f32 %v2784, %v3204
        %v3206 = vpop.f32.mrf.mxu0
        %v3207 = vadd.f32 %v2789, %v3206
        %3208 = vmatmul.bf16.gmra.mxu0 %v2871
        %v3209 = vpop.f32.mrf.mxu0
        %v3210 = vadd.f32 %v2794, %v3209
        %v3211 = vpop.f32.mrf.mxu0
        %v3212 = vadd.f32 %v2799, %v3211
        %3213 = vmatmul.bf16.gmra.mxu0 %v2874
        %v3214 = vpop.f32.mrf.mxu0
        %v3215 = vadd.f32 %v2804, %v3214
        %v3216 = vpop.f32.mrf.mxu0
        %v3217 = vadd.f32 %v2809, %v3216
        %3218 = vdwg.mxu0
        %3219 = vmatpush.bf16.msra.mxu0 0
        %3220 = vmatpush.bf16.msra.mxu0 0
        %3221 = vmatpush.bf16.msra.mxu0 0
        %3222 = vmatpush.bf16.msra.mxu0 0
        %3223 = vmatpush.bf16.msra.mxu0 %v2674
        %3224 = vmatpush.bf16.msra.mxu0 %v2642
        %3225 = vmatpush.bf16.msra.mxu0 %v2610
        %3226 = vmatpush.bf16.msra.mxu0 %v2578
        %3227 = vmatmul.bf16.gmra.mxu0 %v2853
        %v3228 = vpop.f32.mrf.mxu0
        %v3229 = vadd.f32 %v2734, %v3228
        %v3230 = vpop.f32.mrf.mxu0
        %v3231 = vadd.f32 %v2739, %v3230
        %3232 = vmatmul.bf16.gmra.mxu0 %v2856
        %v3233 = vpop.f32.mrf.mxu0
        %v3234 = vadd.f32 %v2744, %v3233
        %v3235 = vpop.f32.mrf.mxu0
        %v3236 = vadd.f32 %v2749, %v3235
        %3237 = vmatmul.bf16.gmra.mxu0 %v2859
        %v3238 = vpop.f32.mrf.mxu0
        %v3239 = vadd.f32 %v2754, %v3238
        %v3240 = vpop.f32.mrf.mxu0
        %v3241 = vadd.f32 %v2759, %v3240
        %3242 = vmatmul.bf16.gmra.mxu0 %v2862
        %v3243 = vpop.f32.mrf.mxu0
        %v3244 = vadd.f32 %v2764, %v3243
        %v3245 = vpop.f32.mrf.mxu0
        %v3246 = vadd.f32 %v2769, %v3245
        %3247 = vmatmul.bf16.gmra.mxu0 %v2865
        %v3248 = vpop.f32.mrf.mxu0
        %v3249 = vadd.f32 %v2774, %v3248
        %v3250 = vpop.f32.mrf.mxu0
        %v3251 = vadd.f32 %v2779, %v3250
        %3252 = vmatmul.bf16.gmra.mxu0 %v2868
        %v3253 = vpop.f32.mrf.mxu0
        %v3254 = vadd.f32 %v2784, %v3253
        %v3255 = vpop.f32.mrf.mxu0
        %v3256 = vadd.f32 %v2789, %v3255
        %3257 = vmatmul.bf16.gmra.mxu0 %v2871
        %v3258 = vpop.f32.mrf.mxu0
        %v3259 = vadd.f32 %v2794, %v3258
        %v3260 = vpop.f32.mrf.mxu0
        %v3261 = vadd.f32 %v2799, %v3260
        %3262 = vmatmul.bf16.gmra.mxu0 %v2874
        %v3263 = vpop.f32.mrf.mxu0
        %v3264 = vadd.f32 %v2804, %v3263
        %v3265 = vpop.f32.mrf.mxu0
        %v3266 = vadd.f32 %v2809, %v3265
        %3267 = vdwg.mxu0
        %3268 = vmatpush.bf16.msra.mxu0 0
        %3269 = vmatpush.bf16.msra.mxu0 0
        %3270 = vmatpush.bf16.msra.mxu0 0
        %3271 = vmatpush.bf16.msra.mxu0 0
        %3272 = vmatpush.bf16.msra.mxu0 %v2675
        %3273 = vmatpush.bf16.msra.mxu0 %v2643
        %3274 = vmatpush.bf16.msra.mxu0 %v2611
        %3275 = vmatpush.bf16.msra.mxu0 %v2579
        %3276 = vmatmul.bf16.gmra.mxu0 %v2853
        %v3277 = vpop.f32.mrf.mxu0
        %v3278 = vadd.f32 %v2734, %v3277
        %v3279 = vpop.f32.mrf.mxu0
        %v3280 = vadd.f32 %v2739, %v3279
        %3281 = vmatmul.bf16.gmra.mxu0 %v2856
        %v3282 = vpop.f32.mrf.mxu0
        %v3283 = vadd.f32 %v2744, %v3282
        %v3284 = vpop.f32.mrf.mxu0
        %v3285 = vadd.f32 %v2749, %v3284
        %3286 = vmatmul.bf16.gmra.mxu0 %v2859
        %v3287 = vpop.f32.mrf.mxu0
        %v3288 = vadd.f32 %v2754, %v3287
        %v3289 = vpop.f32.mrf.mxu0
        %v3290 = vadd.f32 %v2759, %v3289
        %3291 = vmatmul.bf16.gmra.mxu0 %v2862
        %v3292 = vpop.f32.mrf.mxu0
        %v3293 = vadd.f32 %v2764, %v3292
        %v3294 = vpop.f32.mrf.mxu0
        %v3295 = vadd.f32 %v2769, %v3294
        %3296 = vmatmul.bf16.gmra.mxu0 %v2865
        %v3297 = vpop.f32.mrf.mxu0
        %v3298 = vadd.f32 %v2774, %v3297
        %v3299 = vpop.f32.mrf.mxu0
        %v3300 = vadd.f32 %v2779, %v3299
        %3301 = vmatmul.bf16.gmra.mxu0 %v2868
        %v3302 = vpop.f32.mrf.mxu0
        %v3303 = vadd.f32 %v2784, %v3302
        %v3304 = vpop.f32.mrf.mxu0
        %v3305 = vadd.f32 %v2789, %v3304
        %3306 = vmatmul.bf16.gmra.mxu0 %v2871
        %v3307 = vpop.f32.mrf.mxu0
        %v3308 = vadd.f32 %v2794, %v3307
        %v3309 = vpop.f32.mrf.mxu0
        %v3310 = vadd.f32 %v2799, %v3309
        %3311 = vmatmul.bf16.gmra.mxu0 %v2874
        %v3312 = vpop.f32.mrf.mxu0
        %v3313 = vadd.f32 %v2804, %v3312
        %v3314 = vpop.f32.mrf.mxu0
        %v3315 = vadd.f32 %v2809, %v3314
        %3316 = vdwg.mxu0
        %3317 = vmatpush.bf16.msra.mxu0 0
        %3318 = vmatpush.bf16.msra.mxu0 0
        %3319 = vmatpush.bf16.msra.mxu0 0
        %3320 = vmatpush.bf16.msra.mxu0 0
        %3321 = vmatpush.bf16.msra.mxu0 %v2676
        %3322 = vmatpush.bf16.msra.mxu0 %v2644
        %3323 = vmatpush.bf16.msra.mxu0 %v2612
        %3324 = vmatpush.bf16.msra.mxu0 %v2580
        %3325 = vmatmul.bf16.gmra.mxu0 %v2853
        %v3326 = vpop.f32.mrf.mxu0
        %v3327 = vadd.f32 %v2734, %v3326
        %v3328 = vpop.f32.mrf.mxu0
        %v3329 = vadd.f32 %v2739, %v3328
        %3330 = vmatmul.bf16.gmra.mxu0 %v2856
        %v3331 = vpop.f32.mrf.mxu0
        %v3332 = vadd.f32 %v2744, %v3331
        %v3333 = vpop.f32.mrf.mxu0
        %v3334 = vadd.f32 %v2749, %v3333
        %3335 = vmatmul.bf16.gmra.mxu0 %v2859
        %v3336 = vpop.f32.mrf.mxu0
        %v3337 = vadd.f32 %v2754, %v3336
        %v3338 = vpop.f32.mrf.mxu0
        %v3339 = vadd.f32 %v2759, %v3338
        %3340 = vmatmul.bf16.gmra.mxu0 %v2862
        %v3341 = vpop.f32.mrf.mxu0
        %v3342 = vadd.f32 %v2764, %v3341
        %v3343 = vpop.f32.mrf.mxu0
        %v3344 = vadd.f32 %v2769, %v3343
        %3345 = vmatmul.bf16.gmra.mxu0 %v2865
        %v3346 = vpop.f32.mrf.mxu0
        %v3347 = vadd.f32 %v2774, %v3346
        %v3348 = vpop.f32.mrf.mxu0
        %v3349 = vadd.f32 %v2779, %v3348
        %3350 = vmatmul.bf16.gmra.mxu0 %v2868
        %v3351 = vpop.f32.mrf.mxu0
        %v3352 = vadd.f32 %v2784, %v3351
        %v3353 = vpop.f32.mrf.mxu0
        %v3354 = vadd.f32 %v2789, %v3353
        %3355 = vmatmul.bf16.gmra.mxu0 %v2871
        %v3356 = vpop.f32.mrf.mxu0
        %v3357 = vadd.f32 %v2794, %v3356
        %v3358 = vpop.f32.mrf.mxu0
        %v3359 = vadd.f32 %v2799, %v3358
        %3360 = vmatmul.bf16.gmra.mxu0 %v2874
        %v3361 = vpop.f32.mrf.mxu0
        %v3362 = vadd.f32 %v2804, %v3361
        %v3363 = vpop.f32.mrf.mxu0
        %v3364 = vadd.f32 %v2809, %v3363
        %3365 = vdwg.mxu0
        %3366 = vmatpush.bf16.msra.mxu0 0
        %3367 = vmatpush.bf16.msra.mxu0 0
        %3368 = vmatpush.bf16.msra.mxu0 0
        %3369 = vmatpush.bf16.msra.mxu0 0
        %3370 = vmatpush.bf16.msra.mxu0 %v2677
        %3371 = vmatpush.bf16.msra.mxu0 %v2645
        %3372 = vmatpush.bf16.msra.mxu0 %v2613
        %3373 = vmatpush.bf16.msra.mxu0 %v2581
        %3374 = vmatmul.bf16.gmra.mxu0 %v2853
        %v3375 = vpop.f32.mrf.mxu0
        %v3376 = vadd.f32 %v2734, %v3375
        %v3377 = vpop.f32.mrf.mxu0
        %v3378 = vadd.f32 %v2739, %v3377
        %3379 = vmatmul.bf16.gmra.mxu0 %v2856
        %v3380 = vpop.f32.mrf.mxu0
        %v3381 = vadd.f32 %v2744, %v3380
        %v3382 = vpop.f32.mrf.mxu0
        %v3383 = vadd.f32 %v2749, %v3382
        %3384 = vmatmul.bf16.gmra.mxu0 %v2859
        %v3385 = vpop.f32.mrf.mxu0
        %v3386 = vadd.f32 %v2754, %v3385
        %v3387 = vpop.f32.mrf.mxu0
        %v3388 = vadd.f32 %v2759, %v3387
        %3389 = vmatmul.bf16.gmra.mxu0 %v2862
        %v3390 = vpop.f32.mrf.mxu0
        %v3391 = vadd.f32 %v2764, %v3390
        %v3392 = vpop.f32.mrf.mxu0
        %v3393 = vadd.f32 %v2769, %v3392
        %3394 = vmatmul.bf16.gmra.mxu0 %v2865
        %v3395 = vpop.f32.mrf.mxu0
        %v3396 = vadd.f32 %v2774, %v3395
        %v3397 = vpop.f32.mrf.mxu0
        %v3398 = vadd.f32 %v2779, %v3397
        %3399 = vmatmul.bf16.gmra.mxu0 %v2868
        %v3400 = vpop.f32.mrf.mxu0
        %v3401 = vadd.f32 %v2784, %v3400
        %v3402 = vpop.f32.mrf.mxu0
        %v3403 = vadd.f32 %v2789, %v3402
        %3404 = vmatmul.bf16.gmra.mxu0 %v2871
        %v3405 = vpop.f32.mrf.mxu0
        %v3406 = vadd.f32 %v2794, %v3405
        %v3407 = vpop.f32.mrf.mxu0
        %v3408 = vadd.f32 %v2799, %v3407
        %3409 = vmatmul.bf16.gmra.mxu0 %v2874
        %v3410 = vpop.f32.mrf.mxu0
        %v3411 = vadd.f32 %v2804, %v3410
        %v3412 = vpop.f32.mrf.mxu0
        %v3413 = vadd.f32 %v2809, %v3412
        %3414 = vdwg.mxu0
        %3415 = vmatpush.bf16.msra.mxu0 0
        %3416 = vmatpush.bf16.msra.mxu0 0
        %3417 = vmatpush.bf16.msra.mxu0 0
        %3418 = vmatpush.bf16.msra.mxu0 0
        %3419 = vmatpush.bf16.msra.mxu0 %v2678
        %3420 = vmatpush.bf16.msra.mxu0 %v2646
        %3421 = vmatpush.bf16.msra.mxu0 %v2614
        %3422 = vmatpush.bf16.msra.mxu0 %v2582
        %3423 = vmatmul.bf16.gmra.mxu0 %v2853
        %v3424 = vpop.f32.mrf.mxu0
        %v3425 = vadd.f32 %v2734, %v3424
        %v3426 = vpop.f32.mrf.mxu0
        %v3427 = vadd.f32 %v2739, %v3426
        %3428 = vmatmul.bf16.gmra.mxu0 %v2856
        %v3429 = vpop.f32.mrf.mxu0
        %v3430 = vadd.f32 %v2744, %v3429
        %v3431 = vpop.f32.mrf.mxu0
        %v3432 = vadd.f32 %v2749, %v3431
        %3433 = vmatmul.bf16.gmra.mxu0 %v2859
        %v3434 = vpop.f32.mrf.mxu0
        %v3435 = vadd.f32 %v2754, %v3434
        %v3436 = vpop.f32.mrf.mxu0
        %v3437 = vadd.f32 %v2759, %v3436
        %3438 = vmatmul.bf16.gmra.mxu0 %v2862
        %v3439 = vpop.f32.mrf.mxu0
        %v3440 = vadd.f32 %v2764, %v3439
        %v3441 = vpop.f32.mrf.mxu0
        %v3442 = vadd.f32 %v2769, %v3441
        %3443 = vmatmul.bf16.gmra.mxu0 %v2865
        %v3444 = vpop.f32.mrf.mxu0
        %v3445 = vadd.f32 %v2774, %v3444
        %v3446 = vpop.f32.mrf.mxu0
        %v3447 = vadd.f32 %v2779, %v3446
        %3448 = vmatmul.bf16.gmra.mxu0 %v2868
        %v3449 = vpop.f32.mrf.mxu0
        %v3450 = vadd.f32 %v2784, %v3449
        %v3451 = vpop.f32.mrf.mxu0
        %v3452 = vadd.f32 %v2789, %v3451
        %3453 = vmatmul.bf16.gmra.mxu0 %v2871
        %v3454 = vpop.f32.mrf.mxu0
        %v3455 = vadd.f32 %v2794, %v3454
        %v3456 = vpop.f32.mrf.mxu0
        %v3457 = vadd.f32 %v2799, %v3456
        %3458 = vmatmul.bf16.gmra.mxu0 %v2874
        %v3459 = vpop.f32.mrf.mxu0
        %v3460 = vadd.f32 %v2804, %v3459
        %v3461 = vpop.f32.mrf.mxu0
        %v3462 = vadd.f32 %v2809, %v3461
        %3463 = vdwg.mxu0
        %3464 = vmatpush.bf16.msra.mxu0 0
        %3465 = vmatpush.bf16.msra.mxu0 0
        %3466 = vmatpush.bf16.msra.mxu0 0
        %3467 = vmatpush.bf16.msra.mxu0 0
        %3468 = vmatpush.bf16.msra.mxu0 %v2679
        %3469 = vmatpush.bf16.msra.mxu0 %v2647
        %3470 = vmatpush.bf16.msra.mxu0 %v2615
        %3471 = vmatpush.bf16.msra.mxu0 %v2583
        %3472 = vmatmul.bf16.gmra.mxu0 %v2853
        %v3473 = vpop.f32.mrf.mxu0
        %v3474 = vadd.f32 %v2734, %v3473
        %v3475 = vpop.f32.mrf.mxu0
        %v3476 = vadd.f32 %v2739, %v3475
        %3477 = vmatmul.bf16.gmra.mxu0 %v2856
        %v3478 = vpop.f32.mrf.mxu0
        %v3479 = vadd.f32 %v2744, %v3478
        %v3480 = vpop.f32.mrf.mxu0
        %v3481 = vadd.f32 %v2749, %v3480
        %3482 = vmatmul.bf16.gmra.mxu0 %v2859
        %v3483 = vpop.f32.mrf.mxu0
        %v3484 = vadd.f32 %v2754, %v3483
        %v3485 = vpop.f32.mrf.mxu0
        %v3486 = vadd.f32 %v2759, %v3485
        %3487 = vmatmul.bf16.gmra.mxu0 %v2862
        %v3488 = vpop.f32.mrf.mxu0
        %v3489 = vadd.f32 %v2764, %v3488
        %v3490 = vpop.f32.mrf.mxu0
        %v3491 = vadd.f32 %v2769, %v3490
        %3492 = vmatmul.bf16.gmra.mxu0 %v2865
        %v3493 = vpop.f32.mrf.mxu0
        %v3494 = vadd.f32 %v2774, %v3493
        %v3495 = vpop.f32.mrf.mxu0
        %v3496 = vadd.f32 %v2779, %v3495
        %3497 = vmatmul.bf16.gmra.mxu0 %v2868
        %v3498 = vpop.f32.mrf.mxu0
        %v3499 = vadd.f32 %v2784, %v3498
        %v3500 = vpop.f32.mrf.mxu0
        %v3501 = vadd.f32 %v2789, %v3500
        %3502 = vmatmul.bf16.gmra.mxu0 %v2871
        %v3503 = vpop.f32.mrf.mxu0
        %v3504 = vadd.f32 %v2794, %v3503
        %v3505 = vpop.f32.mrf.mxu0
        %v3506 = vadd.f32 %v2799, %v3505
        %3507 = vmatmul.bf16.gmra.mxu0 %v2874
        %v3508 = vpop.f32.mrf.mxu0
        %v3509 = vadd.f32 %v2804, %v3508
        %v3510 = vpop.f32.mrf.mxu0
        %v3511 = vadd.f32 %v2809, %v3510
        %3512 = vdwg.mxu0
        %3513 = vmatpush.bf16.msra.mxu0 0
        %3514 = vmatpush.bf16.msra.mxu0 0
        %3515 = vmatpush.bf16.msra.mxu0 0
        %3516 = vmatpush.bf16.msra.mxu0 0
        %3517 = vmatpush.bf16.msra.mxu0 %v2680
        %3518 = vmatpush.bf16.msra.mxu0 %v2648
        %3519 = vmatpush.bf16.msra.mxu0 %v2616
        %3520 = vmatpush.bf16.msra.mxu0 %v2584
        %3521 = vmatmul.bf16.gmra.mxu0 %v2853
        %v3522 = vpop.f32.mrf.mxu0
        %v3523 = vadd.f32 %v2734, %v3522
        %v3524 = vpop.f32.mrf.mxu0
        %v3525 = vadd.f32 %v2739, %v3524
        %3526 = vmatmul.bf16.gmra.mxu0 %v2856
        %v3527 = vpop.f32.mrf.mxu0
        %v3528 = vadd.f32 %v2744, %v3527
        %v3529 = vpop.f32.mrf.mxu0
        %v3530 = vadd.f32 %v2749, %v3529
        %3531 = vmatmul.bf16.gmra.mxu0 %v2859
        %v3532 = vpop.f32.mrf.mxu0
        %v3533 = vadd.f32 %v2754, %v3532
        %v3534 = vpop.f32.mrf.mxu0
        %v3535 = vadd.f32 %v2759, %v3534
        %3536 = vmatmul.bf16.gmra.mxu0 %v2862
        %v3537 = vpop.f32.mrf.mxu0
        %v3538 = vadd.f32 %v2764, %v3537
        %v3539 = vpop.f32.mrf.mxu0
        %v3540 = vadd.f32 %v2769, %v3539
        %3541 = vmatmul.bf16.gmra.mxu0 %v2865
        %v3542 = vpop.f32.mrf.mxu0
        %v3543 = vadd.f32 %v2774, %v3542
        %v3544 = vpop.f32.mrf.mxu0
        %v3545 = vadd.f32 %v2779, %v3544
        %3546 = vmatmul.bf16.gmra.mxu0 %v2868
        %v3547 = vpop.f32.mrf.mxu0
        %v3548 = vadd.f32 %v2784, %v3547
        %v3549 = vpop.f32.mrf.mxu0
        %v3550 = vadd.f32 %v2789, %v3549
        %3551 = vmatmul.bf16.gmra.mxu0 %v2871
        %v3552 = vpop.f32.mrf.mxu0
        %v3553 = vadd.f32 %v2794, %v3552
        %v3554 = vpop.f32.mrf.mxu0
        %v3555 = vadd.f32 %v2799, %v3554
        %3556 = vmatmul.bf16.gmra.mxu0 %v2874
        %v3557 = vpop.f32.mrf.mxu0
        %v3558 = vadd.f32 %v2804, %v3557
        %v3559 = vpop.f32.mrf.mxu0
        %v3560 = vadd.f32 %v2809, %v3559
        %3561 = vdwg.mxu0
        %3562 = vmatpush.bf16.msra.mxu0 0
        %3563 = vmatpush.bf16.msra.mxu0 0
        %3564 = vmatpush.bf16.msra.mxu0 0
        %3565 = vmatpush.bf16.msra.mxu0 0
        %3566 = vmatpush.bf16.msra.mxu0 %v2681
        %3567 = vmatpush.bf16.msra.mxu0 %v2649
        %3568 = vmatpush.bf16.msra.mxu0 %v2617
        %3569 = vmatpush.bf16.msra.mxu0 %v2585
        %3570 = vmatmul.bf16.gmra.mxu0 %v2853
        %v3571 = vpop.f32.mrf.mxu0
        %v3572 = vadd.f32 %v2734, %v3571
        %v3573 = vpop.f32.mrf.mxu0
        %v3574 = vadd.f32 %v2739, %v3573
        %3575 = vmatmul.bf16.gmra.mxu0 %v2856
        %v3576 = vpop.f32.mrf.mxu0
        %v3577 = vadd.f32 %v2744, %v3576
        %v3578 = vpop.f32.mrf.mxu0
        %v3579 = vadd.f32 %v2749, %v3578
        %3580 = vmatmul.bf16.gmra.mxu0 %v2859
        %v3581 = vpop.f32.mrf.mxu0
        %v3582 = vadd.f32 %v2754, %v3581
        %v3583 = vpop.f32.mrf.mxu0
        %v3584 = vadd.f32 %v2759, %v3583
        %3585 = vmatmul.bf16.gmra.mxu0 %v2862
        %v3586 = vpop.f32.mrf.mxu0
        %v3587 = vadd.f32 %v2764, %v3586
        %v3588 = vpop.f32.mrf.mxu0
        %v3589 = vadd.f32 %v2769, %v3588
        %3590 = vmatmul.bf16.gmra.mxu0 %v2865
        %v3591 = vpop.f32.mrf.mxu0
        %v3592 = vadd.f32 %v2774, %v3591
        %v3593 = vpop.f32.mrf.mxu0
        %v3594 = vadd.f32 %v2779, %v3593
        %3595 = vmatmul.bf16.gmra.mxu0 %v2868
        %v3596 = vpop.f32.mrf.mxu0
        %v3597 = vadd.f32 %v2784, %v3596
        %v3598 = vpop.f32.mrf.mxu0
        %v3599 = vadd.f32 %v2789, %v3598
        %3600 = vmatmul.bf16.gmra.mxu0 %v2871
        %v3601 = vpop.f32.mrf.mxu0
        %v3602 = vadd.f32 %v2794, %v3601
        %v3603 = vpop.f32.mrf.mxu0
        %v3604 = vadd.f32 %v2799, %v3603
        %3605 = vmatmul.bf16.gmra.mxu0 %v2874
        %v3606 = vpop.f32.mrf.mxu0
        %v3607 = vadd.f32 %v2804, %v3606
        %v3608 = vpop.f32.mrf.mxu0
        %v3609 = vadd.f32 %v2809, %v3608
        %3610 = vdwg.mxu0
        %3611 = vmatpush.bf16.msra.mxu0 0
        %3612 = vmatpush.bf16.msra.mxu0 0
        %3613 = vmatpush.bf16.msra.mxu0 0
        %3614 = vmatpush.bf16.msra.mxu0 0
        %3615 = vmatpush.bf16.msra.mxu0 %v2682
        %3616 = vmatpush.bf16.msra.mxu0 %v2650
        %3617 = vmatpush.bf16.msra.mxu0 %v2618
        %3618 = vmatpush.bf16.msra.mxu0 %v2586
        %3619 = vmatmul.bf16.gmra.mxu0 %v2853
        %v3620 = vpop.f32.mrf.mxu0
        %v3621 = vadd.f32 %v2734, %v3620
        %v3622 = vpop.f32.mrf.mxu0
        %v3623 = vadd.f32 %v2739, %v3622
        %3624 = vmatmul.bf16.gmra.mxu0 %v2856
        %v3625 = vpop.f32.mrf.mxu0
        %v3626 = vadd.f32 %v2744, %v3625
        %v3627 = vpop.f32.mrf.mxu0
        %v3628 = vadd.f32 %v2749, %v3627
        %3629 = vmatmul.bf16.gmra.mxu0 %v2859
        %v3630 = vpop.f32.mrf.mxu0
        %v3631 = vadd.f32 %v2754, %v3630
        %v3632 = vpop.f32.mrf.mxu0
        %v3633 = vadd.f32 %v2759, %v3632
        %3634 = vmatmul.bf16.gmra.mxu0 %v2862
        %v3635 = vpop.f32.mrf.mxu0
        %v3636 = vadd.f32 %v2764, %v3635
        %v3637 = vpop.f32.mrf.mxu0
        %v3638 = vadd.f32 %v2769, %v3637
        %3639 = vmatmul.bf16.gmra.mxu0 %v2865
        %v3640 = vpop.f32.mrf.mxu0
        %v3641 = vadd.f32 %v2774, %v3640
        %v3642 = vpop.f32.mrf.mxu0
        %v3643 = vadd.f32 %v2779, %v3642
        %3644 = vmatmul.bf16.gmra.mxu0 %v2868
        %v3645 = vpop.f32.mrf.mxu0
        %v3646 = vadd.f32 %v2784, %v3645
        %v3647 = vpop.f32.mrf.mxu0
        %v3648 = vadd.f32 %v2789, %v3647
        %3649 = vmatmul.bf16.gmra.mxu0 %v2871
        %v3650 = vpop.f32.mrf.mxu0
        %v3651 = vadd.f32 %v2794, %v3650
        %v3652 = vpop.f32.mrf.mxu0
        %v3653 = vadd.f32 %v2799, %v3652
        %3654 = vmatmul.bf16.gmra.mxu0 %v2874
        %v3655 = vpop.f32.mrf.mxu0
        %v3656 = vadd.f32 %v2804, %v3655
        %v3657 = vpop.f32.mrf.mxu0
        %v3658 = vadd.f32 %v2809, %v3657
        %3659 = vdwg.mxu0
        %3660 = vmatpush.bf16.msra.mxu0 0
        %3661 = vmatpush.bf16.msra.mxu0 0
        %3662 = vmatpush.bf16.msra.mxu0 0
        %3663 = vmatpush.bf16.msra.mxu0 0
        %3664 = vmatpush.bf16.msra.mxu0 %v2683
        %3665 = vmatpush.bf16.msra.mxu0 %v2651
        %3666 = vmatpush.bf16.msra.mxu0 %v2619
        %3667 = vmatpush.bf16.msra.mxu0 %v2587
        %3668 = vmatmul.bf16.gmra.mxu0 %v2853
        %v3669 = vpop.f32.mrf.mxu0
        %v3670 = vadd.f32 %v2734, %v3669
        %v3671 = vpop.f32.mrf.mxu0
        %v3672 = vadd.f32 %v2739, %v3671
        %3673 = vmatmul.bf16.gmra.mxu0 %v2856
        %v3674 = vpop.f32.mrf.mxu0
        %v3675 = vadd.f32 %v2744, %v3674
        %v3676 = vpop.f32.mrf.mxu0
        %v3677 = vadd.f32 %v2749, %v3676
        %3678 = vmatmul.bf16.gmra.mxu0 %v2859
        %v3679 = vpop.f32.mrf.mxu0
        %v3680 = vadd.f32 %v2754, %v3679
        %v3681 = vpop.f32.mrf.mxu0
        %v3682 = vadd.f32 %v2759, %v3681
        %3683 = vmatmul.bf16.gmra.mxu0 %v2862
        %v3684 = vpop.f32.mrf.mxu0
        %v3685 = vadd.f32 %v2764, %v3684
        %v3686 = vpop.f32.mrf.mxu0
        %v3687 = vadd.f32 %v2769, %v3686
        %3688 = vmatmul.bf16.gmra.mxu0 %v2865
        %v3689 = vpop.f32.mrf.mxu0
        %v3690 = vadd.f32 %v2774, %v3689
        %v3691 = vpop.f32.mrf.mxu0
        %v3692 = vadd.f32 %v2779, %v3691
        %3693 = vmatmul.bf16.gmra.mxu0 %v2868
        %v3694 = vpop.f32.mrf.mxu0
        %v3695 = vadd.f32 %v2784, %v3694
        %v3696 = vpop.f32.mrf.mxu0
        %v3697 = vadd.f32 %v2789, %v3696
        %3698 = vmatmul.bf16.gmra.mxu0 %v2871
        %v3699 = vpop.f32.mrf.mxu0
        %v3700 = vadd.f32 %v2794, %v3699
        %v3701 = vpop.f32.mrf.mxu0
        %v3702 = vadd.f32 %v2799, %v3701
        %3703 = vmatmul.bf16.gmra.mxu0 %v2874
        %v3704 = vpop.f32.mrf.mxu0
        %v3705 = vadd.f32 %v2804, %v3704
        %v3706 = vpop.f32.mrf.mxu0
        %v3707 = vadd.f32 %v2809, %v3706
        %3708 = vdwg.mxu0
        %3709 = vmatpush.bf16.msra.mxu0 0
        %3710 = vmatpush.bf16.msra.mxu0 0
        %3711 = vmatpush.bf16.msra.mxu0 0
        %3712 = vmatpush.bf16.msra.mxu0 0
        %3713 = vmatpush.bf16.msra.mxu0 %v2684
        %3714 = vmatpush.bf16.msra.mxu0 %v2652
        %3715 = vmatpush.bf16.msra.mxu0 %v2620
        %3716 = vmatpush.bf16.msra.mxu0 %v2588
        %3717 = vmatmul.bf16.gmra.mxu0 %v2853
        %v3718 = vpop.f32.mrf.mxu0
        %v3719 = vadd.f32 %v2734, %v3718
        %v3720 = vpop.f32.mrf.mxu0
        %v3721 = vadd.f32 %v2739, %v3720
        %3722 = vmatmul.bf16.gmra.mxu0 %v2856
        %v3723 = vpop.f32.mrf.mxu0
        %v3724 = vadd.f32 %v2744, %v3723
        %v3725 = vpop.f32.mrf.mxu0
        %v3726 = vadd.f32 %v2749, %v3725
        %3727 = vmatmul.bf16.gmra.mxu0 %v2859
        %v3728 = vpop.f32.mrf.mxu0
        %v3729 = vadd.f32 %v2754, %v3728
        %v3730 = vpop.f32.mrf.mxu0
        %v3731 = vadd.f32 %v2759, %v3730
        %3732 = vmatmul.bf16.gmra.mxu0 %v2862
        %v3733 = vpop.f32.mrf.mxu0
        %v3734 = vadd.f32 %v2764, %v3733
        %v3735 = vpop.f32.mrf.mxu0
        %v3736 = vadd.f32 %v2769, %v3735
        %3737 = vmatmul.bf16.gmra.mxu0 %v2865
        %v3738 = vpop.f32.mrf.mxu0
        %v3739 = vadd.f32 %v2774, %v3738
        %v3740 = vpop.f32.mrf.mxu0
        %v3741 = vadd.f32 %v2779, %v3740
        %3742 = vmatmul.bf16.gmra.mxu0 %v2868
        %v3743 = vpop.f32.mrf.mxu0
        %v3744 = vadd.f32 %v2784, %v3743
        %v3745 = vpop.f32.mrf.mxu0
        %v3746 = vadd.f32 %v2789, %v3745
        %3747 = vmatmul.bf16.gmra.mxu0 %v2871
        %v3748 = vpop.f32.mrf.mxu0
        %v3749 = vadd.f32 %v2794, %v3748
        %v3750 = vpop.f32.mrf.mxu0
        %v3751 = vadd.f32 %v2799, %v3750
        %3752 = vmatmul.bf16.gmra.mxu0 %v2874
        %v3753 = vpop.f32.mrf.mxu0
        %v3754 = vadd.f32 %v2804, %v3753
        %v3755 = vpop.f32.mrf.mxu0
        %v3756 = vadd.f32 %v2809, %v3755
        %3757 = vdwg.mxu0
        %3758 = vmatpush.bf16.msra.mxu0 0
        %3759 = vmatpush.bf16.msra.mxu0 0
        %3760 = vmatpush.bf16.msra.mxu0 0
        %3761 = vmatpush.bf16.msra.mxu0 0
        %3762 = vmatpush.bf16.msra.mxu0 %v2685
        %3763 = vmatpush.bf16.msra.mxu0 %v2653
        %3764 = vmatpush.bf16.msra.mxu0 %v2621
        %3765 = vmatpush.bf16.msra.mxu0 %v2589
        %3766 = vmatmul.bf16.gmra.mxu0 %v2853
        %v3767 = vpop.f32.mrf.mxu0
        %v3768 = vadd.f32 %v2734, %v3767
        %v3769 = vpop.f32.mrf.mxu0
        %v3770 = vadd.f32 %v2739, %v3769
        %3771 = vmatmul.bf16.gmra.mxu0 %v2856
        %v3772 = vpop.f32.mrf.mxu0
        %v3773 = vadd.f32 %v2744, %v3772
        %v3774 = vpop.f32.mrf.mxu0
        %v3775 = vadd.f32 %v2749, %v3774
        %3776 = vmatmul.bf16.gmra.mxu0 %v2859
        %v3777 = vpop.f32.mrf.mxu0
        %v3778 = vadd.f32 %v2754, %v3777
        %v3779 = vpop.f32.mrf.mxu0
        %v3780 = vadd.f32 %v2759, %v3779
        %3781 = vmatmul.bf16.gmra.mxu0 %v2862
        %v3782 = vpop.f32.mrf.mxu0
        %v3783 = vadd.f32 %v2764, %v3782
        %v3784 = vpop.f32.mrf.mxu0
        %v3785 = vadd.f32 %v2769, %v3784
        %3786 = vmatmul.bf16.gmra.mxu0 %v2865
        %v3787 = vpop.f32.mrf.mxu0
        %v3788 = vadd.f32 %v2774, %v3787
        %v3789 = vpop.f32.mrf.mxu0
        %v3790 = vadd.f32 %v2779, %v3789
        %3791 = vmatmul.bf16.gmra.mxu0 %v2868
        %v3792 = vpop.f32.mrf.mxu0
        %v3793 = vadd.f32 %v2784, %v3792
        %v3794 = vpop.f32.mrf.mxu0
        %v3795 = vadd.f32 %v2789, %v3794
        %3796 = vmatmul.bf16.gmra.mxu0 %v2871
        %v3797 = vpop.f32.mrf.mxu0
        %v3798 = vadd.f32 %v2794, %v3797
        %v3799 = vpop.f32.mrf.mxu0
        %v3800 = vadd.f32 %v2799, %v3799
        %3801 = vmatmul.bf16.gmra.mxu0 %v2874
        %v3802 = vpop.f32.mrf.mxu0
        %v3803 = vadd.f32 %v2804, %v3802
        %v3804 = vpop.f32.mrf.mxu0
        %v3805 = vadd.f32 %v2809, %v3804
        %3806 = vdwg.mxu0
        %3807 = vmatpush.bf16.msra.mxu0 0
        %3808 = vmatpush.bf16.msra.mxu0 0
        %3809 = vmatpush.bf16.msra.mxu0 0
        %3810 = vmatpush.bf16.msra.mxu0 0
        %3811 = vmatpush.bf16.msra.mxu0 %v2686
        %3812 = vmatpush.bf16.msra.mxu0 %v2654
        %3813 = vmatpush.bf16.msra.mxu0 %v2622
        %3814 = vmatpush.bf16.msra.mxu0 %v2590
        %3815 = vmatmul.bf16.gmra.mxu0 %v2853
        %v3816 = vpop.f32.mrf.mxu0
        %v3817 = vadd.f32 %v2734, %v3816
        %v3818 = vpop.f32.mrf.mxu0
        %v3819 = vadd.f32 %v2739, %v3818
        %3820 = vmatmul.bf16.gmra.mxu0 %v2856
        %v3821 = vpop.f32.mrf.mxu0
        %v3822 = vadd.f32 %v2744, %v3821
        %v3823 = vpop.f32.mrf.mxu0
        %v3824 = vadd.f32 %v2749, %v3823
        %3825 = vmatmul.bf16.gmra.mxu0 %v2859
        %v3826 = vpop.f32.mrf.mxu0
        %v3827 = vadd.f32 %v2754, %v3826
        %v3828 = vpop.f32.mrf.mxu0
        %v3829 = vadd.f32 %v2759, %v3828
        %3830 = vmatmul.bf16.gmra.mxu0 %v2862
        %v3831 = vpop.f32.mrf.mxu0
        %v3832 = vadd.f32 %v2764, %v3831
        %v3833 = vpop.f32.mrf.mxu0
        %v3834 = vadd.f32 %v2769, %v3833
        %3835 = vmatmul.bf16.gmra.mxu0 %v2865
        %v3836 = vpop.f32.mrf.mxu0
        %v3837 = vadd.f32 %v2774, %v3836
        %v3838 = vpop.f32.mrf.mxu0
        %v3839 = vadd.f32 %v2779, %v3838
        %3840 = vmatmul.bf16.gmra.mxu0 %v2868
        %v3841 = vpop.f32.mrf.mxu0
        %v3842 = vadd.f32 %v2784, %v3841
        %v3843 = vpop.f32.mrf.mxu0
        %v3844 = vadd.f32 %v2789, %v3843
        %3845 = vmatmul.bf16.gmra.mxu0 %v2871
        %v3846 = vpop.f32.mrf.mxu0
        %v3847 = vadd.f32 %v2794, %v3846
        %v3848 = vpop.f32.mrf.mxu0
        %v3849 = vadd.f32 %v2799, %v3848
        %3850 = vmatmul.bf16.gmra.mxu0 %v2874
        %v3851 = vpop.f32.mrf.mxu0
        %v3852 = vadd.f32 %v2804, %v3851
        %v3853 = vpop.f32.mrf.mxu0
        %v3854 = vadd.f32 %v2809, %v3853
        %3855 = vdwg.mxu0
        %3856 = vmatpush.bf16.msra.mxu0 0
        %3857 = vmatpush.bf16.msra.mxu0 0
        %3858 = vmatpush.bf16.msra.mxu0 0
        %3859 = vmatpush.bf16.msra.mxu0 0
        %3860 = vmatpush.bf16.msra.mxu0 %v2687
        %3861 = vmatpush.bf16.msra.mxu0 %v2655
        %3862 = vmatpush.bf16.msra.mxu0 %v2623
        %3863 = vmatpush.bf16.msra.mxu0 %v2591
        %3864 = vmatmul.bf16.gmra.mxu0 %v2853
        %v3865 = vpop.f32.mrf.mxu0
        %v3866 = vadd.f32 %v2734, %v3865
        %v3867 = vpop.f32.mrf.mxu0
        %v3868 = vadd.f32 %v2739, %v3867
        %3869 = vmatmul.bf16.gmra.mxu0 %v2856
        %v3870 = vpop.f32.mrf.mxu0
        %v3871 = vadd.f32 %v2744, %v3870
        %v3872 = vpop.f32.mrf.mxu0
        %v3873 = vadd.f32 %v2749, %v3872
        %3874 = vmatmul.bf16.gmra.mxu0 %v2859
        %v3875 = vpop.f32.mrf.mxu0
        %v3876 = vadd.f32 %v2754, %v3875
        %v3877 = vpop.f32.mrf.mxu0
        %v3878 = vadd.f32 %v2759, %v3877
        %3879 = vmatmul.bf16.gmra.mxu0 %v2862
        %v3880 = vpop.f32.mrf.mxu0
        %v3881 = vadd.f32 %v2764, %v3880
        %v3882 = vpop.f32.mrf.mxu0
        %v3883 = vadd.f32 %v2769, %v3882
        %3884 = vmatmul.bf16.gmra.mxu0 %v2865
        %v3885 = vpop.f32.mrf.mxu0
        %v3886 = vadd.f32 %v2774, %v3885
        %v3887 = vpop.f32.mrf.mxu0
        %v3888 = vadd.f32 %v2779, %v3887
        %3889 = vmatmul.bf16.gmra.mxu0 %v2868
        %v3890 = vpop.f32.mrf.mxu0
        %v3891 = vadd.f32 %v2784, %v3890
        %v3892 = vpop.f32.mrf.mxu0
        %v3893 = vadd.f32 %v2789, %v3892
        %3894 = vmatmul.bf16.gmra.mxu0 %v2871
        %v3895 = vpop.f32.mrf.mxu0
        %v3896 = vadd.f32 %v2794, %v3895
        %v3897 = vpop.f32.mrf.mxu0
        %v3898 = vadd.f32 %v2799, %v3897
        %3899 = vmatmul.bf16.gmra.mxu0 %v2874
        %v3900 = vpop.f32.mrf.mxu0
        %v3901 = vadd.f32 %v2804, %v3900
        %v3902 = vpop.f32.mrf.mxu0
        %v3903 = vadd.f32 %v2809, %v3902
        %3904 = vdwg.mxu0
        %3905 = vmatpush.bf16.msra.mxu0 0
        %3906 = vmatpush.bf16.msra.mxu0 0
        %3907 = vmatpush.bf16.msra.mxu0 0
        %3908 = vmatpush.bf16.msra.mxu0 0
        %3909 = vmatpush.bf16.msra.mxu0 %v2688
        %3910 = vmatpush.bf16.msra.mxu0 %v2656
        %3911 = vmatpush.bf16.msra.mxu0 %v2624
        %3912 = vmatpush.bf16.msra.mxu0 %v2592
        %3913 = vmatmul.bf16.gmra.mxu0 %v2853
        %v3914 = vpop.f32.mrf.mxu0
        %v3915 = vadd.f32 %v2734, %v3914
        %v3916 = vpop.f32.mrf.mxu0
        %v3917 = vadd.f32 %v2739, %v3916
        %3918 = vmatmul.bf16.gmra.mxu0 %v2856
        %v3919 = vpop.f32.mrf.mxu0
        %v3920 = vadd.f32 %v2744, %v3919
        %v3921 = vpop.f32.mrf.mxu0
        %v3922 = vadd.f32 %v2749, %v3921
        %3923 = vmatmul.bf16.gmra.mxu0 %v2859
        %v3924 = vpop.f32.mrf.mxu0
        %v3925 = vadd.f32 %v2754, %v3924
        %v3926 = vpop.f32.mrf.mxu0
        %v3927 = vadd.f32 %v2759, %v3926
        %3928 = vmatmul.bf16.gmra.mxu0 %v2862
        %v3929 = vpop.f32.mrf.mxu0
        %v3930 = vadd.f32 %v2764, %v3929
        %v3931 = vpop.f32.mrf.mxu0
        %v3932 = vadd.f32 %v2769, %v3931
        %3933 = vmatmul.bf16.gmra.mxu0 %v2865
        %v3934 = vpop.f32.mrf.mxu0
        %v3935 = vadd.f32 %v2774, %v3934
        %v3936 = vpop.f32.mrf.mxu0
        %v3937 = vadd.f32 %v2779, %v3936
        %3938 = vmatmul.bf16.gmra.mxu0 %v2868
        %v3939 = vpop.f32.mrf.mxu0
        %v3940 = vadd.f32 %v2784, %v3939
        %v3941 = vpop.f32.mrf.mxu0
        %v3942 = vadd.f32 %v2789, %v3941
        %3943 = vmatmul.bf16.gmra.mxu0 %v2871
        %v3944 = vpop.f32.mrf.mxu0
        %v3945 = vadd.f32 %v2794, %v3944
        %v3946 = vpop.f32.mrf.mxu0
        %v3947 = vadd.f32 %v2799, %v3946
        %3948 = vmatmul.bf16.gmra.mxu0 %v2874
        %v3949 = vpop.f32.mrf.mxu0
        %v3950 = vadd.f32 %v2804, %v3949
        %v3951 = vpop.f32.mrf.mxu0
        %v3952 = vadd.f32 %v2809, %v3951
        %3953 = vdwg.mxu0
        %3954 = vmatpush.bf16.msra.mxu0 0
        %3955 = vmatpush.bf16.msra.mxu0 0
        %3956 = vmatpush.bf16.msra.mxu0 0
        %3957 = vmatpush.bf16.msra.mxu0 0
        %3958 = vmatpush.bf16.msra.mxu0 %v2689
        %3959 = vmatpush.bf16.msra.mxu0 %v2657
        %3960 = vmatpush.bf16.msra.mxu0 %v2625
        %3961 = vmatpush.bf16.msra.mxu0 %v2593
        %3962 = vmatmul.bf16.gmra.mxu0 %v2853
        %v3963 = vpop.f32.mrf.mxu0
        %v3964 = vadd.f32 %v2734, %v3963
        %v3965 = vpop.f32.mrf.mxu0
        %v3966 = vadd.f32 %v2739, %v3965
        %3967 = vmatmul.bf16.gmra.mxu0 %v2856
        %v3968 = vpop.f32.mrf.mxu0
        %v3969 = vadd.f32 %v2744, %v3968
        %v3970 = vpop.f32.mrf.mxu0
        %v3971 = vadd.f32 %v2749, %v3970
        %3972 = vmatmul.bf16.gmra.mxu0 %v2859
        %v3973 = vpop.f32.mrf.mxu0
        %v3974 = vadd.f32 %v2754, %v3973
        %v3975 = vpop.f32.mrf.mxu0
        %v3976 = vadd.f32 %v2759, %v3975
        %3977 = vmatmul.bf16.gmra.mxu0 %v2862
        %v3978 = vpop.f32.mrf.mxu0
        %v3979 = vadd.f32 %v2764, %v3978
        %v3980 = vpop.f32.mrf.mxu0
        %v3981 = vadd.f32 %v2769, %v3980
        %3982 = vmatmul.bf16.gmra.mxu0 %v2865
        %v3983 = vpop.f32.mrf.mxu0
        %v3984 = vadd.f32 %v2774, %v3983
        %v3985 = vpop.f32.mrf.mxu0
        %v3986 = vadd.f32 %v2779, %v3985
        %3987 = vmatmul.bf16.gmra.mxu0 %v2868
        %v3988 = vpop.f32.mrf.mxu0
        %v3989 = vadd.f32 %v2784, %v3988
        %v3990 = vpop.f32.mrf.mxu0
        %v3991 = vadd.f32 %v2789, %v3990
        %3992 = vmatmul.bf16.gmra.mxu0 %v2871
        %v3993 = vpop.f32.mrf.mxu0
        %v3994 = vadd.f32 %v2794, %v3993
        %v3995 = vpop.f32.mrf.mxu0
        %v3996 = vadd.f32 %v2799, %v3995
        %3997 = vmatmul.bf16.gmra.mxu0 %v2874
        %v3998 = vpop.f32.mrf.mxu0
        %v3999 = vadd.f32 %v2804, %v3998
        %v4000 = vpop.f32.mrf.mxu0
        %v4001 = vadd.f32 %v2809, %v4000
        %4002 = vdwg.mxu0
        %4003 = vmatpush.bf16.msra.mxu0 0
        %4004 = vmatpush.bf16.msra.mxu0 0
        %4005 = vmatpush.bf16.msra.mxu0 0
        %4006 = vmatpush.bf16.msra.mxu0 0
        %4007 = vmatpush.bf16.msra.mxu0 %v2690
        %4008 = vmatpush.bf16.msra.mxu0 %v2658
        %4009 = vmatpush.bf16.msra.mxu0 %v2626
        %4010 = vmatpush.bf16.msra.mxu0 %v2594
        %4011 = vmatmul.bf16.gmra.mxu0 %v2853
        %v4012 = vpop.f32.mrf.mxu0
        %v4013 = vadd.f32 %v2734, %v4012
        %v4014 = vpop.f32.mrf.mxu0
        %v4015 = vadd.f32 %v2739, %v4014
        %4016 = vmatmul.bf16.gmra.mxu0 %v2856
        %v4017 = vpop.f32.mrf.mxu0
        %v4018 = vadd.f32 %v2744, %v4017
        %v4019 = vpop.f32.mrf.mxu0
        %v4020 = vadd.f32 %v2749, %v4019
        %4021 = vmatmul.bf16.gmra.mxu0 %v2859
        %v4022 = vpop.f32.mrf.mxu0
        %v4023 = vadd.f32 %v2754, %v4022
        %v4024 = vpop.f32.mrf.mxu0
        %v4025 = vadd.f32 %v2759, %v4024
        %4026 = vmatmul.bf16.gmra.mxu0 %v2862
        %v4027 = vpop.f32.mrf.mxu0
        %v4028 = vadd.f32 %v2764, %v4027
        %v4029 = vpop.f32.mrf.mxu0
        %v4030 = vadd.f32 %v2769, %v4029
        %4031 = vmatmul.bf16.gmra.mxu0 %v2865
        %v4032 = vpop.f32.mrf.mxu0
        %v4033 = vadd.f32 %v2774, %v4032
        %v4034 = vpop.f32.mrf.mxu0
        %v4035 = vadd.f32 %v2779, %v4034
        %4036 = vmatmul.bf16.gmra.mxu0 %v2868
        %v4037 = vpop.f32.mrf.mxu0
        %v4038 = vadd.f32 %v2784, %v4037
        %v4039 = vpop.f32.mrf.mxu0
        %v4040 = vadd.f32 %v2789, %v4039
        %4041 = vmatmul.bf16.gmra.mxu0 %v2871
        %v4042 = vpop.f32.mrf.mxu0
        %v4043 = vadd.f32 %v2794, %v4042
        %v4044 = vpop.f32.mrf.mxu0
        %v4045 = vadd.f32 %v2799, %v4044
        %4046 = vmatmul.bf16.gmra.mxu0 %v2874
        %v4047 = vpop.f32.mrf.mxu0
        %v4048 = vadd.f32 %v2804, %v4047
        %v4049 = vpop.f32.mrf.mxu0
        %v4050 = vadd.f32 %v2809, %v4049
        %4051 = vdwg.mxu0
        %4052 = vmatpush.bf16.msra.mxu0 0
        %4053 = vmatpush.bf16.msra.mxu0 0
        %4054 = vmatpush.bf16.msra.mxu0 0
        %4055 = vmatpush.bf16.msra.mxu0 0
        %4056 = vmatpush.bf16.msra.mxu0 %v2691
        %4057 = vmatpush.bf16.msra.mxu0 %v2659
        %4058 = vmatpush.bf16.msra.mxu0 %v2627
        %4059 = vmatpush.bf16.msra.mxu0 %v2595
        %4060 = vmatmul.bf16.gmra.mxu0 %v2853
        %v4061 = vpop.f32.mrf.mxu0
        %v4062 = vadd.f32 %v2734, %v4061
        %v4063 = vpop.f32.mrf.mxu0
        %v4064 = vadd.f32 %v2739, %v4063
        %4065 = vmatmul.bf16.gmra.mxu0 %v2856
        %v4066 = vpop.f32.mrf.mxu0
        %v4067 = vadd.f32 %v2744, %v4066
        %v4068 = vpop.f32.mrf.mxu0
        %v4069 = vadd.f32 %v2749, %v4068
        %4070 = vmatmul.bf16.gmra.mxu0 %v2859
        %v4071 = vpop.f32.mrf.mxu0
        %v4072 = vadd.f32 %v2754, %v4071
        %v4073 = vpop.f32.mrf.mxu0
        %v4074 = vadd.f32 %v2759, %v4073
        %4075 = vmatmul.bf16.gmra.mxu0 %v2862
        %v4076 = vpop.f32.mrf.mxu0
        %v4077 = vadd.f32 %v2764, %v4076
        %v4078 = vpop.f32.mrf.mxu0
        %v4079 = vadd.f32 %v2769, %v4078
        %4080 = vmatmul.bf16.gmra.mxu0 %v2865
        %v4081 = vpop.f32.mrf.mxu0
        %v4082 = vadd.f32 %v2774, %v4081
        %v4083 = vpop.f32.mrf.mxu0
        %v4084 = vadd.f32 %v2779, %v4083
        %4085 = vmatmul.bf16.gmra.mxu0 %v2868
        %v4086 = vpop.f32.mrf.mxu0
        %v4087 = vadd.f32 %v2784, %v4086
        %v4088 = vpop.f32.mrf.mxu0
        %v4089 = vadd.f32 %v2789, %v4088
        %4090 = vmatmul.bf16.gmra.mxu0 %v2871
        %v4091 = vpop.f32.mrf.mxu0
        %v4092 = vadd.f32 %v2794, %v4091
        %v4093 = vpop.f32.mrf.mxu0
        %v4094 = vadd.f32 %v2799, %v4093
        %4095 = vmatmul.bf16.gmra.mxu0 %v2874
        %v4096 = vpop.f32.mrf.mxu0
        %v4097 = vadd.f32 %v2804, %v4096
        %v4098 = vpop.f32.mrf.mxu0
        %v4099 = vadd.f32 %v2809, %v4098
        %4100 = vdwg.mxu0
        %4101 = vmatpush.bf16.msra.mxu0 0
        %4102 = vmatpush.bf16.msra.mxu0 0
        %4103 = vmatpush.bf16.msra.mxu0 0
        %4104 = vmatpush.bf16.msra.mxu0 0
        %4105 = vmatpush.bf16.msra.mxu0 %v2692
        %4106 = vmatpush.bf16.msra.mxu0 %v2660
        %4107 = vmatpush.bf16.msra.mxu0 %v2628
        %4108 = vmatpush.bf16.msra.mxu0 %v2596
        %4109 = vmatmul.bf16.gmra.mxu0 %v2853
        %v4110 = vpop.f32.mrf.mxu0
        %v4111 = vadd.f32 %v2734, %v4110
        %v4112 = vpop.f32.mrf.mxu0
        %v4113 = vadd.f32 %v2739, %v4112
        %4114 = vmatmul.bf16.gmra.mxu0 %v2856
        %v4115 = vpop.f32.mrf.mxu0
        %v4116 = vadd.f32 %v2744, %v4115
        %v4117 = vpop.f32.mrf.mxu0
        %v4118 = vadd.f32 %v2749, %v4117
        %4119 = vmatmul.bf16.gmra.mxu0 %v2859
        %v4120 = vpop.f32.mrf.mxu0
        %v4121 = vadd.f32 %v2754, %v4120
        %v4122 = vpop.f32.mrf.mxu0
        %v4123 = vadd.f32 %v2759, %v4122
        %4124 = vmatmul.bf16.gmra.mxu0 %v2862
        %v4125 = vpop.f32.mrf.mxu0
        %v4126 = vadd.f32 %v2764, %v4125
        %v4127 = vpop.f32.mrf.mxu0
        %v4128 = vadd.f32 %v2769, %v4127
        %4129 = vmatmul.bf16.gmra.mxu0 %v2865
        %v4130 = vpop.f32.mrf.mxu0
        %v4131 = vadd.f32 %v2774, %v4130
        %v4132 = vpop.f32.mrf.mxu0
        %v4133 = vadd.f32 %v2779, %v4132
        %4134 = vmatmul.bf16.gmra.mxu0 %v2868
        %v4135 = vpop.f32.mrf.mxu0
        %v4136 = vadd.f32 %v2784, %v4135
        %v4137 = vpop.f32.mrf.mxu0
        %v4138 = vadd.f32 %v2789, %v4137
        %4139 = vmatmul.bf16.gmra.mxu0 %v2871
        %v4140 = vpop.f32.mrf.mxu0
        %v4141 = vadd.f32 %v2794, %v4140
        %v4142 = vpop.f32.mrf.mxu0
        %v4143 = vadd.f32 %v2799, %v4142
        %4144 = vmatmul.bf16.gmra.mxu0 %v2874
        %v4145 = vpop.f32.mrf.mxu0
        %v4146 = vadd.f32 %v2804, %v4145
        %v4147 = vpop.f32.mrf.mxu0
        %v4148 = vadd.f32 %v2809, %v4147
        %4149 = vdwg.mxu0
        %4150 = vmatpush.bf16.msra.mxu0 0
        %4151 = vmatpush.bf16.msra.mxu0 0
        %4152 = vmatpush.bf16.msra.mxu0 0
        %4153 = vmatpush.bf16.msra.mxu0 0
        %4154 = vmatpush.bf16.msra.mxu0 %v2693
        %4155 = vmatpush.bf16.msra.mxu0 %v2661
        %4156 = vmatpush.bf16.msra.mxu0 %v2629
        %4157 = vmatpush.bf16.msra.mxu0 %v2597
        %4158 = vmatmul.bf16.gmra.mxu0 %v2853
        %v4159 = vpop.f32.mrf.mxu0
        %v4160 = vadd.f32 %v2734, %v4159
        %v4161 = vpop.f32.mrf.mxu0
        %v4162 = vadd.f32 %v2739, %v4161
        %4163 = vmatmul.bf16.gmra.mxu0 %v2856
        %v4164 = vpop.f32.mrf.mxu0
        %v4165 = vadd.f32 %v2744, %v4164
        %v4166 = vpop.f32.mrf.mxu0
        %v4167 = vadd.f32 %v2749, %v4166
        %4168 = vmatmul.bf16.gmra.mxu0 %v2859
        %v4169 = vpop.f32.mrf.mxu0
        %v4170 = vadd.f32 %v2754, %v4169
        %v4171 = vpop.f32.mrf.mxu0
        %v4172 = vadd.f32 %v2759, %v4171
        %4173 = vmatmul.bf16.gmra.mxu0 %v2862
        %v4174 = vpop.f32.mrf.mxu0
        %v4175 = vadd.f32 %v2764, %v4174
        %v4176 = vpop.f32.mrf.mxu0
        %v4177 = vadd.f32 %v2769, %v4176
        %4178 = vmatmul.bf16.gmra.mxu0 %v2865
        %v4179 = vpop.f32.mrf.mxu0
        %v4180 = vadd.f32 %v2774, %v4179
        %v4181 = vpop.f32.mrf.mxu0
        %v4182 = vadd.f32 %v2779, %v4181
        %4183 = vmatmul.bf16.gmra.mxu0 %v2868
        %v4184 = vpop.f32.mrf.mxu0
        %v4185 = vadd.f32 %v2784, %v4184
        %v4186 = vpop.f32.mrf.mxu0
        %v4187 = vadd.f32 %v2789, %v4186
        %4188 = vmatmul.bf16.gmra.mxu0 %v2871
        %v4189 = vpop.f32.mrf.mxu0
        %v4190 = vadd.f32 %v2794, %v4189
        %v4191 = vpop.f32.mrf.mxu0
        %v4192 = vadd.f32 %v2799, %v4191
        %4193 = vmatmul.bf16.gmra.mxu0 %v2874
        %v4194 = vpop.f32.mrf.mxu0
        %v4195 = vadd.f32 %v2804, %v4194
        %v4196 = vpop.f32.mrf.mxu0
        %v4197 = vadd.f32 %v2809, %v4196
        %4198 = vdwg.mxu0
        %4199 = vmatpush.bf16.msra.mxu0 0
        %4200 = vmatpush.bf16.msra.mxu0 0
        %4201 = vmatpush.bf16.msra.mxu0 0
        %4202 = vmatpush.bf16.msra.mxu0 0
        %4203 = vmatpush.bf16.msra.mxu0 %v2694
        %4204 = vmatpush.bf16.msra.mxu0 %v2662
        %4205 = vmatpush.bf16.msra.mxu0 %v2630
        %4206 = vmatpush.bf16.msra.mxu0 %v2598
        %4207 = vmatmul.bf16.gmra.mxu0 %v2853
        %v4208 = vpop.f32.mrf.mxu0
        %v4209 = vadd.f32 %v2734, %v4208
        %v4210 = vpop.f32.mrf.mxu0
        %v4211 = vadd.f32 %v2739, %v4210
        %4212 = vmatmul.bf16.gmra.mxu0 %v2856
        %v4213 = vpop.f32.mrf.mxu0
        %v4214 = vadd.f32 %v2744, %v4213
        %v4215 = vpop.f32.mrf.mxu0
        %v4216 = vadd.f32 %v2749, %v4215
        %4217 = vmatmul.bf16.gmra.mxu0 %v2859
        %v4218 = vpop.f32.mrf.mxu0
        %v4219 = vadd.f32 %v2754, %v4218
        %v4220 = vpop.f32.mrf.mxu0
        %v4221 = vadd.f32 %v2759, %v4220
        %4222 = vmatmul.bf16.gmra.mxu0 %v2862
        %v4223 = vpop.f32.mrf.mxu0
        %v4224 = vadd.f32 %v2764, %v4223
        %v4225 = vpop.f32.mrf.mxu0
        %v4226 = vadd.f32 %v2769, %v4225
        %4227 = vmatmul.bf16.gmra.mxu0 %v2865
        %v4228 = vpop.f32.mrf.mxu0
        %v4229 = vadd.f32 %v2774, %v4228
        %v4230 = vpop.f32.mrf.mxu0
        %v4231 = vadd.f32 %v2779, %v4230
        %4232 = vmatmul.bf16.gmra.mxu0 %v2868
        %v4233 = vpop.f32.mrf.mxu0
        %v4234 = vadd.f32 %v2784, %v4233
        %v4235 = vpop.f32.mrf.mxu0
        %v4236 = vadd.f32 %v2789, %v4235
        %4237 = vmatmul.bf16.gmra.mxu0 %v2871
        %v4238 = vpop.f32.mrf.mxu0
        %v4239 = vadd.f32 %v2794, %v4238
        %v4240 = vpop.f32.mrf.mxu0
        %v4241 = vadd.f32 %v2799, %v4240
        %4242 = vmatmul.bf16.gmra.mxu0 %v2874
        %v4243 = vpop.f32.mrf.mxu0
        %v4244 = vadd.f32 %v2804, %v4243
        %v4245 = vpop.f32.mrf.mxu0
        %v4246 = vadd.f32 %v2809, %v4245
        %4247 = vdwg.mxu0
        %4248 = vmatpush.bf16.msra.mxu0 0
        %4249 = vmatpush.bf16.msra.mxu0 0
        %4250 = vmatpush.bf16.msra.mxu0 0
        %4251 = vmatpush.bf16.msra.mxu0 0
        %4252 = vmatpush.bf16.msra.mxu0 %v2695
        %4253 = vmatpush.bf16.msra.mxu0 %v2663
        %4254 = vmatpush.bf16.msra.mxu0 %v2631
        %4255 = vmatpush.bf16.msra.mxu0 %v2599
        %4256 = vmatmul.bf16.gmra.mxu0 %v2853
        %v4257 = vpop.f32.mrf.mxu0
        %v4258 = vadd.f32 %v2734, %v4257
        %v4259 = vpop.f32.mrf.mxu0
        %v4260 = vadd.f32 %v2739, %v4259
        %4261 = vmatmul.bf16.gmra.mxu0 %v2856
        %v4262 = vpop.f32.mrf.mxu0
        %v4263 = vadd.f32 %v2744, %v4262
        %v4264 = vpop.f32.mrf.mxu0
        %v4265 = vadd.f32 %v2749, %v4264
        %4266 = vmatmul.bf16.gmra.mxu0 %v2859
        %v4267 = vpop.f32.mrf.mxu0
        %v4268 = vadd.f32 %v2754, %v4267
        %v4269 = vpop.f32.mrf.mxu0
        %v4270 = vadd.f32 %v2759, %v4269
        %4271 = vmatmul.bf16.gmra.mxu0 %v2862
        %v4272 = vpop.f32.mrf.mxu0
        %v4273 = vadd.f32 %v2764, %v4272
        %v4274 = vpop.f32.mrf.mxu0
        %v4275 = vadd.f32 %v2769, %v4274
        %4276 = vmatmul.bf16.gmra.mxu0 %v2865
        %v4277 = vpop.f32.mrf.mxu0
        %v4278 = vadd.f32 %v2774, %v4277
        %v4279 = vpop.f32.mrf.mxu0
        %v4280 = vadd.f32 %v2779, %v4279
        %4281 = vmatmul.bf16.gmra.mxu0 %v2868
        %v4282 = vpop.f32.mrf.mxu0
        %v4283 = vadd.f32 %v2784, %v4282
        %v4284 = vpop.f32.mrf.mxu0
        %v4285 = vadd.f32 %v2789, %v4284
        %4286 = vmatmul.bf16.gmra.mxu0 %v2871
        %v4287 = vpop.f32.mrf.mxu0
        %v4288 = vadd.f32 %v2794, %v4287
        %v4289 = vpop.f32.mrf.mxu0
        %v4290 = vadd.f32 %v2799, %v4289
        %4291 = vmatmul.bf16.gmra.mxu0 %v2874
        %v4292 = vpop.f32.mrf.mxu0
        %v4293 = vadd.f32 %v2804, %v4292
        %v4294 = vpop.f32.mrf.mxu0
        %v4295 = vadd.f32 %v2809, %v4294
        %4296 = vdwg.mxu0
        %4297 = vmatpush.bf16.msra.mxu0 0
        %4298 = vmatpush.bf16.msra.mxu0 0
        %4299 = vmatpush.bf16.msra.mxu0 0
        %4300 = vmatpush.bf16.msra.mxu0 0
        %4301 = vmatpush.bf16.msra.mxu0 %v2696
        %4302 = vmatpush.bf16.msra.mxu0 %v2664
        %4303 = vmatpush.bf16.msra.mxu0 %v2632
        %4304 = vmatpush.bf16.msra.mxu0 %v2600
        %4305 = vmatmul.bf16.gmra.mxu0 %v2853
        %v4306 = vpop.f32.mrf.mxu0
        %v4307 = vadd.f32 %v2734, %v4306
        %v4308 = vpop.f32.mrf.mxu0
        %v4309 = vadd.f32 %v2739, %v4308
        %4310 = vmatmul.bf16.gmra.mxu0 %v2856
        %v4311 = vpop.f32.mrf.mxu0
        %v4312 = vadd.f32 %v2744, %v4311
        %v4313 = vpop.f32.mrf.mxu0
        %v4314 = vadd.f32 %v2749, %v4313
        %4315 = vmatmul.bf16.gmra.mxu0 %v2859
        %v4316 = vpop.f32.mrf.mxu0
        %v4317 = vadd.f32 %v2754, %v4316
        %v4318 = vpop.f32.mrf.mxu0
        %v4319 = vadd.f32 %v2759, %v4318
        %4320 = vmatmul.bf16.gmra.mxu0 %v2862
        %v4321 = vpop.f32.mrf.mxu0
        %v4322 = vadd.f32 %v2764, %v4321
        %v4323 = vpop.f32.mrf.mxu0
        %v4324 = vadd.f32 %v2769, %v4323
        %4325 = vmatmul.bf16.gmra.mxu0 %v2865
        %v4326 = vpop.f32.mrf.mxu0
        %v4327 = vadd.f32 %v2774, %v4326
        %v4328 = vpop.f32.mrf.mxu0
        %v4329 = vadd.f32 %v2779, %v4328
        %4330 = vmatmul.bf16.gmra.mxu0 %v2868
        %v4331 = vpop.f32.mrf.mxu0
        %v4332 = vadd.f32 %v2784, %v4331
        %v4333 = vpop.f32.mrf.mxu0
        %v4334 = vadd.f32 %v2789, %v4333
        %4335 = vmatmul.bf16.gmra.mxu0 %v2871
        %v4336 = vpop.f32.mrf.mxu0
        %v4337 = vadd.f32 %v2794, %v4336
        %v4338 = vpop.f32.mrf.mxu0
        %v4339 = vadd.f32 %v2799, %v4338
        %4340 = vmatmul.bf16.gmra.mxu0 %v2874
        %v4341 = vpop.f32.mrf.mxu0
        %v4342 = vadd.f32 %v2804, %v4341
        %v4343 = vpop.f32.mrf.mxu0
        %v4344 = vadd.f32 %v2809, %v4343
        %4345 = vdwg.mxu0
        %4346 = vmatpush.bf16.msra.mxu0 0
        %4347 = vmatpush.bf16.msra.mxu0 0
        %4348 = vmatpush.bf16.msra.mxu0 0
        %4349 = vmatpush.bf16.msra.mxu0 0
        %4350 = vmatpush.bf16.msra.mxu0 %v2697
        %4351 = vmatpush.bf16.msra.mxu0 %v2665
        %4352 = vmatpush.bf16.msra.mxu0 %v2633
        %4353 = vmatpush.bf16.msra.mxu0 %v2601
        %4354 = vmatmul.bf16.gmra.mxu0 %v2853
        %v4355 = vpop.f32.mrf.mxu0
        %v4356 = vadd.f32 %v2734, %v4355
        %v4357 = vpop.f32.mrf.mxu0
        %v4358 = vadd.f32 %v2739, %v4357
        %4359 = vmatmul.bf16.gmra.mxu0 %v2856
        %v4360 = vpop.f32.mrf.mxu0
        %v4361 = vadd.f32 %v2744, %v4360
        %v4362 = vpop.f32.mrf.mxu0
        %v4363 = vadd.f32 %v2749, %v4362
        %4364 = vmatmul.bf16.gmra.mxu0 %v2859
        %v4365 = vpop.f32.mrf.mxu0
        %v4366 = vadd.f32 %v2754, %v4365
        %v4367 = vpop.f32.mrf.mxu0
        %v4368 = vadd.f32 %v2759, %v4367
        %4369 = vmatmul.bf16.gmra.mxu0 %v2862
        %v4370 = vpop.f32.mrf.mxu0
        %v4371 = vadd.f32 %v2764, %v4370
        %v4372 = vpop.f32.mrf.mxu0
        %v4373 = vadd.f32 %v2769, %v4372
        %4374 = vmatmul.bf16.gmra.mxu0 %v2865
        %v4375 = vpop.f32.mrf.mxu0
        %v4376 = vadd.f32 %v2774, %v4375
        %v4377 = vpop.f32.mrf.mxu0
        %v4378 = vadd.f32 %v2779, %v4377
        %4379 = vmatmul.bf16.gmra.mxu0 %v2868
        %v4380 = vpop.f32.mrf.mxu0
        %v4381 = vadd.f32 %v2784, %v4380
        %v4382 = vpop.f32.mrf.mxu0
        %v4383 = vadd.f32 %v2789, %v4382
        %4384 = vmatmul.bf16.gmra.mxu0 %v2871
        %v4385 = vpop.f32.mrf.mxu0
        %v4386 = vadd.f32 %v2794, %v4385
        %v4387 = vpop.f32.mrf.mxu0
        %v4388 = vadd.f32 %v2799, %v4387
        %4389 = vmatmul.bf16.gmra.mxu0 %v2874
        %v4390 = vpop.f32.mrf.mxu0
        %v4391 = vadd.f32 %v2804, %v4390
        %v4392 = vpop.f32.mrf.mxu0
        %v4393 = vadd.f32 %v2809, %v4392
        %4394 = vdwg.mxu0
        %4395 = vmatpush.bf16.msra.mxu0 0
        %4396 = vmatpush.bf16.msra.mxu0 0
        %4397 = vmatpush.bf16.msra.mxu0 0
        %4398 = vmatpush.bf16.msra.mxu0 0
        %4399 = vmatpush.bf16.msra.mxu0 %v2698
        %4400 = vmatpush.bf16.msra.mxu0 %v2666
        %4401 = vmatpush.bf16.msra.mxu0 %v2634
        %4402 = vmatpush.bf16.msra.mxu0 %v2602
        %4403 = vmatmul.bf16.gmra.mxu0 %v2853
        %v4404 = vpop.f32.mrf.mxu0
        %v4405 = vadd.f32 %v2734, %v4404
        %v4406 = vpop.f32.mrf.mxu0
        %v4407 = vadd.f32 %v2739, %v4406
        %4408 = vmatmul.bf16.gmra.mxu0 %v2856
        %v4409 = vpop.f32.mrf.mxu0
        %v4410 = vadd.f32 %v2744, %v4409
        %v4411 = vpop.f32.mrf.mxu0
        %v4412 = vadd.f32 %v2749, %v4411
        %4413 = vmatmul.bf16.gmra.mxu0 %v2859
        %v4414 = vpop.f32.mrf.mxu0
        %v4415 = vadd.f32 %v2754, %v4414
        %v4416 = vpop.f32.mrf.mxu0
        %v4417 = vadd.f32 %v2759, %v4416
        %4418 = vmatmul.bf16.gmra.mxu0 %v2862
        %v4419 = vpop.f32.mrf.mxu0
        %v4420 = vadd.f32 %v2764, %v4419
        %v4421 = vpop.f32.mrf.mxu0
        %v4422 = vadd.f32 %v2769, %v4421
        %4423 = vmatmul.bf16.gmra.mxu0 %v2865
        %v4424 = vpop.f32.mrf.mxu0
        %v4425 = vadd.f32 %v2774, %v4424
        %v4426 = vpop.f32.mrf.mxu0
        %v4427 = vadd.f32 %v2779, %v4426
        %4428 = vmatmul.bf16.gmra.mxu0 %v2868
        %v4429 = vpop.f32.mrf.mxu0
        %v4430 = vadd.f32 %v2784, %v4429
        %v4431 = vpop.f32.mrf.mxu0
        %v4432 = vadd.f32 %v2789, %v4431
        %4433 = vmatmul.bf16.gmra.mxu0 %v2871
        %v4434 = vpop.f32.mrf.mxu0
        %v4435 = vadd.f32 %v2794, %v4434
        %v4436 = vpop.f32.mrf.mxu0
        %v4437 = vadd.f32 %v2799, %v4436
        %4438 = vmatmul.bf16.gmra.mxu0 %v2874
        %v4439 = vpop.f32.mrf.mxu0
        %v4440 = vadd.f32 %v2804, %v4439
        %v4441 = vpop.f32.mrf.mxu0
        %v4442 = vadd.f32 %v2809, %v4441
        %4443 = vdwg.mxu0
        %v4444 = vmax.f32 %v2886, 0.0
        %v4445 = vmax.f32 %v2935, 0.0
        %v4446 = vmax.f32 %v2984, 0.0
        %v4447 = vmax.f32 %v3033, 0.0
        %v4448 = vmax.f32 %v3082, 0.0
        %v4449 = vmax.f32 %v3131, 0.0
        %v4450 = vmax.f32 %v3180, 0.0
        %v4451 = vmax.f32 %v3229, 0.0
        %v4452 = vmax.f32 %v3278, 0.0
        %v4453 = vmax.f32 %v3327, 0.0
        %v4454 = vmax.f32 %v3376, 0.0
        %v4455 = vmax.f32 %v3425, 0.0
        %v4456 = vmax.f32 %v3474, 0.0
        %v4457 = vmax.f32 %v3523, 0.0
        %v4458 = vmax.f32 %v3572, 0.0
        %v4459 = vmax.f32 %v3621, 0.0
        %v4460 = vmax.f32 %v3670, 0.0
        %v4461 = vmax.f32 %v3719, 0.0
        %v4462 = vmax.f32 %v3768, 0.0
        %v4463 = vmax.f32 %v3817, 0.0
        %v4464 = vmax.f32 %v3866, 0.0
        %v4465 = vmax.f32 %v3915, 0.0
        %v4466 = vmax.f32 %v3964, 0.0
        %v4467 = vmax.f32 %v4013, 0.0
        %v4468 = vmax.f32 %v4062, 0.0
        %v4469 = vmax.f32 %v4111, 0.0
        %v4470 = vmax.f32 %v4160, 0.0
        %v4471 = vmax.f32 %v4209, 0.0
        %v4472 = vmax.f32 %v4258, 0.0
        %v4473 = vmax.f32 %v4307, 0.0
        %v4474 = vmax.f32 %v4356, 0.0
        %v4475 = vmax.f32 %v4405, 0.0
        %v4476 = vmax.f32 %v2888, 0.0
        %v4477 = vmax.f32 %v2937, 0.0
        %v4478 = vmax.f32 %v2986, 0.0
        %v4479 = vmax.f32 %v3035, 0.0
        %v4480 = vmax.f32 %v3084, 0.0
        %v4481 = vmax.f32 %v3133, 0.0
        %v4482 = vmax.f32 %v3182, 0.0
        %v4483 = vmax.f32 %v3231, 0.0
        %v4484 = vmax.f32 %v3280, 0.0
        %v4485 = vmax.f32 %v3329, 0.0
        %v4486 = vmax.f32 %v3378, 0.0
        %v4487 = vmax.f32 %v3427, 0.0
        %v4488 = vmax.f32 %v3476, 0.0
        %v4489 = vmax.f32 %v3525, 0.0
        %v4490 = vmax.f32 %v3574, 0.0
        %v4491 = vmax.f32 %v3623, 0.0
        %v4492 = vmax.f32 %v3672, 0.0
        %v4493 = vmax.f32 %v3721, 0.0
        %v4494 = vmax.f32 %v3770, 0.0
        %v4495 = vmax.f32 %v3819, 0.0
        %v4496 = vmax.f32 %v3868, 0.0
        %v4497 = vmax.f32 %v3917, 0.0
        %v4498 = vmax.f32 %v3966, 0.0
        %v4499 = vmax.f32 %v4015, 0.0
        %v4500 = vmax.f32 %v4064, 0.0
        %v4501 = vmax.f32 %v4113, 0.0
        %v4502 = vmax.f32 %v4162, 0.0
        %v4503 = vmax.f32 %v4211, 0.0
        %v4504 = vmax.f32 %v4260, 0.0
        %v4505 = vmax.f32 %v4309, 0.0
        %v4506 = vmax.f32 %v4358, 0.0
        %v4507 = vmax.f32 %v4407, 0.0
        %v4508 = vmax.f32 %v2891, 0.0
        %v4509 = vmax.f32 %v2940, 0.0
        %v4510 = vmax.f32 %v2989, 0.0
        %v4511 = vmax.f32 %v3038, 0.0
        %v4512 = vmax.f32 %v3087, 0.0
        %v4513 = vmax.f32 %v3136, 0.0
        %v4514 = vmax.f32 %v3185, 0.0
        %v4515 = vmax.f32 %v3234, 0.0
        %v4516 = vmax.f32 %v3283, 0.0
        %v4517 = vmax.f32 %v3332, 0.0
        %v4518 = vmax.f32 %v3381, 0.0
        %v4519 = vmax.f32 %v3430, 0.0
        %v4520 = vmax.f32 %v3479, 0.0
        %v4521 = vmax.f32 %v3528, 0.0
        %v4522 = vmax.f32 %v3577, 0.0
        %v4523 = vmax.f32 %v3626, 0.0
        %v4524 = vmax.f32 %v3675, 0.0
        %v4525 = vmax.f32 %v3724, 0.0
        %v4526 = vmax.f32 %v3773, 0.0
        %v4527 = vmax.f32 %v3822, 0.0
        %v4528 = vmax.f32 %v3871, 0.0
        %v4529 = vmax.f32 %v3920, 0.0
        %v4530 = vmax.f32 %v3969, 0.0
        %v4531 = vmax.f32 %v4018, 0.0
        %v4532 = vmax.f32 %v4067, 0.0
        %v4533 = vmax.f32 %v4116, 0.0
        %v4534 = vmax.f32 %v4165, 0.0
        %v4535 = vmax.f32 %v4214, 0.0
        %v4536 = vmax.f32 %v4263, 0.0
        %v4537 = vmax.f32 %v4312, 0.0
        %v4538 = vmax.f32 %v4361, 0.0
        %v4539 = vmax.f32 %v4410, 0.0
        %v4540 = vmax.f32 %v2893, 0.0
        %v4541 = vmax.f32 %v2942, 0.0
        %v4542 = vmax.f32 %v2991, 0.0
        %v4543 = vmax.f32 %v3040, 0.0
        %v4544 = vmax.f32 %v3089, 0.0
        %v4545 = vmax.f32 %v3138, 0.0
        %v4546 = vmax.f32 %v3187, 0.0
        %v4547 = vmax.f32 %v3236, 0.0
        %v4548 = vmax.f32 %v3285, 0.0
        %v4549 = vmax.f32 %v3334, 0.0
        %v4550 = vmax.f32 %v3383, 0.0
        %v4551 = vmax.f32 %v3432, 0.0
        %v4552 = vmax.f32 %v3481, 0.0
        %v4553 = vmax.f32 %v3530, 0.0
        %v4554 = vmax.f32 %v3579, 0.0
        %v4555 = vmax.f32 %v3628, 0.0
        %v4556 = vmax.f32 %v3677, 0.0
        %v4557 = vmax.f32 %v3726, 0.0
        %v4558 = vmax.f32 %v3775, 0.0
        %v4559 = vmax.f32 %v3824, 0.0
        %v4560 = vmax.f32 %v3873, 0.0
        %v4561 = vmax.f32 %v3922, 0.0
        %v4562 = vmax.f32 %v3971, 0.0
        %v4563 = vmax.f32 %v4020, 0.0
        %v4564 = vmax.f32 %v4069, 0.0
        %v4565 = vmax.f32 %v4118, 0.0
        %v4566 = vmax.f32 %v4167, 0.0
        %v4567 = vmax.f32 %v4216, 0.0
        %v4568 = vmax.f32 %v4265, 0.0
        %v4569 = vmax.f32 %v4314, 0.0
        %v4570 = vmax.f32 %v4363, 0.0
        %v4571 = vmax.f32 %v4412, 0.0
        %v4572 = vmax.f32 %v2896, 0.0
        %v4573 = vmax.f32 %v2945, 0.0
        %v4574 = vmax.f32 %v2994, 0.0
        %v4575 = vmax.f32 %v3043, 0.0
        %v4576 = vmax.f32 %v3092, 0.0
        %v4577 = vmax.f32 %v3141, 0.0
        %v4578 = vmax.f32 %v3190, 0.0
        %v4579 = vmax.f32 %v3239, 0.0
        %v4580 = vmax.f32 %v3288, 0.0
        %v4581 = vmax.f32 %v3337, 0.0
        %v4582 = vmax.f32 %v3386, 0.0
        %v4583 = vmax.f32 %v3435, 0.0
        %v4584 = vmax.f32 %v3484, 0.0
        %v4585 = vmax.f32 %v3533, 0.0
        %v4586 = vmax.f32 %v3582, 0.0
        %v4587 = vmax.f32 %v3631, 0.0
        %v4588 = vmax.f32 %v3680, 0.0
        %v4589 = vmax.f32 %v3729, 0.0
        %v4590 = vmax.f32 %v3778, 0.0
        %v4591 = vmax.f32 %v3827, 0.0
        %v4592 = vmax.f32 %v3876, 0.0
        %v4593 = vmax.f32 %v3925, 0.0
        %v4594 = vmax.f32 %v3974, 0.0
        %v4595 = vmax.f32 %v4023, 0.0
        %v4596 = vmax.f32 %v4072, 0.0
        %v4597 = vmax.f32 %v4121, 0.0
        %v4598 = vmax.f32 %v4170, 0.0
        %v4599 = vmax.f32 %v4219, 0.0
        %v4600 = vmax.f32 %v4268, 0.0
        %v4601 = vmax.f32 %v4317, 0.0
        %v4602 = vmax.f32 %v4366, 0.0
        %v4603 = vmax.f32 %v4415, 0.0
        %v4604 = vmax.f32 %v2898, 0.0
        %v4605 = vmax.f32 %v2947, 0.0
        %v4606 = vmax.f32 %v2996, 0.0
        %v4607 = vmax.f32 %v3045, 0.0
        %v4608 = vmax.f32 %v3094, 0.0
        %v4609 = vmax.f32 %v3143, 0.0
        %v4610 = vmax.f32 %v3192, 0.0
        %v4611 = vmax.f32 %v3241, 0.0
        %v4612 = vmax.f32 %v3290, 0.0
        %v4613 = vmax.f32 %v3339, 0.0
        %v4614 = vmax.f32 %v3388, 0.0
        %v4615 = vmax.f32 %v3437, 0.0
        %v4616 = vmax.f32 %v3486, 0.0
        %v4617 = vmax.f32 %v3535, 0.0
        %v4618 = vmax.f32 %v3584, 0.0
        %v4619 = vmax.f32 %v3633, 0.0
        %v4620 = vmax.f32 %v3682, 0.0
        %v4621 = vmax.f32 %v3731, 0.0
        %v4622 = vmax.f32 %v3780, 0.0
        %v4623 = vmax.f32 %v3829, 0.0
        %v4624 = vmax.f32 %v3878, 0.0
        %v4625 = vmax.f32 %v3927, 0.0
        %v4626 = vmax.f32 %v3976, 0.0
        %v4627 = vmax.f32 %v4025, 0.0
        %v4628 = vmax.f32 %v4074, 0.0
        %v4629 = vmax.f32 %v4123, 0.0
        %v4630 = vmax.f32 %v4172, 0.0
        %v4631 = vmax.f32 %v4221, 0.0
        %v4632 = vmax.f32 %v4270, 0.0
        %v4633 = vmax.f32 %v4319, 0.0
        %v4634 = vmax.f32 %v4368, 0.0
        %v4635 = vmax.f32 %v4417, 0.0
        %v4636 = vmax.f32 %v2901, 0.0
        %v4637 = vmax.f32 %v2950, 0.0
        %v4638 = vmax.f32 %v2999, 0.0
        %v4639 = vmax.f32 %v3048, 0.0
        %v4640 = vmax.f32 %v3097, 0.0
        %v4641 = vmax.f32 %v3146, 0.0
        %v4642 = vmax.f32 %v3195, 0.0
        %v4643 = vmax.f32 %v3244, 0.0
        %v4644 = vmax.f32 %v3293, 0.0
        %v4645 = vmax.f32 %v3342, 0.0
        %v4646 = vmax.f32 %v3391, 0.0
        %v4647 = vmax.f32 %v3440, 0.0
        %v4648 = vmax.f32 %v3489, 0.0
        %v4649 = vmax.f32 %v3538, 0.0
        %v4650 = vmax.f32 %v3587, 0.0
        %v4651 = vmax.f32 %v3636, 0.0
        %v4652 = vmax.f32 %v3685, 0.0
        %v4653 = vmax.f32 %v3734, 0.0
        %v4654 = vmax.f32 %v3783, 0.0
        %v4655 = vmax.f32 %v3832, 0.0
        %v4656 = vmax.f32 %v3881, 0.0
        %v4657 = vmax.f32 %v3930, 0.0
        %v4658 = vmax.f32 %v3979, 0.0
        %v4659 = vmax.f32 %v4028, 0.0
        %v4660 = vmax.f32 %v4077, 0.0
        %v4661 = vmax.f32 %v4126, 0.0
        %v4662 = vmax.f32 %v4175, 0.0
        %v4663 = vmax.f32 %v4224, 0.0
        %v4664 = vmax.f32 %v4273, 0.0
        %v4665 = vmax.f32 %v4322, 0.0
        %v4666 = vmax.f32 %v4371, 0.0
        %v4667 = vmax.f32 %v4420, 0.0
        %v4668 = vmax.f32 %v2903, 0.0
        %v4669 = vmax.f32 %v2952, 0.0
        %v4670 = vmax.f32 %v3001, 0.0
        %v4671 = vmax.f32 %v3050, 0.0
        %v4672 = vmax.f32 %v3099, 0.0
        %v4673 = vmax.f32 %v3148, 0.0
        %v4674 = vmax.f32 %v3197, 0.0
        %v4675 = vmax.f32 %v3246, 0.0
        %v4676 = vmax.f32 %v3295, 0.0
        %v4677 = vmax.f32 %v3344, 0.0
        %v4678 = vmax.f32 %v3393, 0.0
        %v4679 = vmax.f32 %v3442, 0.0
        %v4680 = vmax.f32 %v3491, 0.0
        %v4681 = vmax.f32 %v3540, 0.0
        %v4682 = vmax.f32 %v3589, 0.0
        %v4683 = vmax.f32 %v3638, 0.0
        %v4684 = vmax.f32 %v3687, 0.0
        %v4685 = vmax.f32 %v3736, 0.0
        %v4686 = vmax.f32 %v3785, 0.0
        %v4687 = vmax.f32 %v3834, 0.0
        %v4688 = vmax.f32 %v3883, 0.0
        %v4689 = vmax.f32 %v3932, 0.0
        %v4690 = vmax.f32 %v3981, 0.0
        %v4691 = vmax.f32 %v4030, 0.0
        %v4692 = vmax.f32 %v4079, 0.0
        %v4693 = vmax.f32 %v4128, 0.0
        %v4694 = vmax.f32 %v4177, 0.0
        %v4695 = vmax.f32 %v4226, 0.0
        %v4696 = vmax.f32 %v4275, 0.0
        %v4697 = vmax.f32 %v4324, 0.0
        %v4698 = vmax.f32 %v4373, 0.0
        %v4699 = vmax.f32 %v4422, 0.0
        %v4700 = vmax.f32 %v2906, 0.0
        %v4701 = vmax.f32 %v2955, 0.0
        %v4702 = vmax.f32 %v3004, 0.0
        %v4703 = vmax.f32 %v3053, 0.0
        %v4704 = vmax.f32 %v3102, 0.0
        %v4705 = vmax.f32 %v3151, 0.0
        %v4706 = vmax.f32 %v3200, 0.0
        %v4707 = vmax.f32 %v3249, 0.0
        %v4708 = vmax.f32 %v3298, 0.0
        %v4709 = vmax.f32 %v3347, 0.0
        %v4710 = vmax.f32 %v3396, 0.0
        %v4711 = vmax.f32 %v3445, 0.0
        %v4712 = vmax.f32 %v3494, 0.0
        %v4713 = vmax.f32 %v3543, 0.0
        %v4714 = vmax.f32 %v3592, 0.0
        %v4715 = vmax.f32 %v3641, 0.0
        %v4716 = vmax.f32 %v3690, 0.0
        %v4717 = vmax.f32 %v3739, 0.0
        %v4718 = vmax.f32 %v3788, 0.0
        %v4719 = vmax.f32 %v3837, 0.0
        %v4720 = vmax.f32 %v3886, 0.0
        %v4721 = vmax.f32 %v3935, 0.0
        %v4722 = vmax.f32 %v3984, 0.0
        %v4723 = vmax.f32 %v4033, 0.0
        %v4724 = vmax.f32 %v4082, 0.0
        %v4725 = vmax.f32 %v4131, 0.0
        %v4726 = vmax.f32 %v4180, 0.0
        %v4727 = vmax.f32 %v4229, 0.0
        %v4728 = vmax.f32 %v4278, 0.0
        %v4729 = vmax.f32 %v4327, 0.0
        %v4730 = vmax.f32 %v4376, 0.0
        %v4731 = vmax.f32 %v4425, 0.0
        %v4732 = vmax.f32 %v2908, 0.0
        %v4733 = vmax.f32 %v2957, 0.0
        %v4734 = vmax.f32 %v3006, 0.0
        %v4735 = vmax.f32 %v3055, 0.0
        %v4736 = vmax.f32 %v3104, 0.0
        %v4737 = vmax.f32 %v3153, 0.0
        %v4738 = vmax.f32 %v3202, 0.0
        %v4739 = vmax.f32 %v3251, 0.0
        %v4740 = vmax.f32 %v3300, 0.0
        %v4741 = vmax.f32 %v3349, 0.0
        %v4742 = vmax.f32 %v3398, 0.0
        %v4743 = vmax.f32 %v3447, 0.0
        %v4744 = vmax.f32 %v3496, 0.0
        %v4745 = vmax.f32 %v3545, 0.0
        %v4746 = vmax.f32 %v3594, 0.0
        %v4747 = vmax.f32 %v3643, 0.0
        %v4748 = vmax.f32 %v3692, 0.0
        %v4749 = vmax.f32 %v3741, 0.0
        %v4750 = vmax.f32 %v3790, 0.0
        %v4751 = vmax.f32 %v3839, 0.0
        %v4752 = vmax.f32 %v3888, 0.0
        %v4753 = vmax.f32 %v3937, 0.0
        %v4754 = vmax.f32 %v3986, 0.0
        %v4755 = vmax.f32 %v4035, 0.0
        %v4756 = vmax.f32 %v4084, 0.0
        %v4757 = vmax.f32 %v4133, 0.0
        %v4758 = vmax.f32 %v4182, 0.0
        %v4759 = vmax.f32 %v4231, 0.0
        %v4760 = vmax.f32 %v4280, 0.0
        %v4761 = vmax.f32 %v4329, 0.0
        %v4762 = vmax.f32 %v4378, 0.0
        %v4763 = vmax.f32 %v4427, 0.0
        %v4764 = vmax.f32 %v2911, 0.0
        %v4765 = vmax.f32 %v2960, 0.0
        %v4766 = vmax.f32 %v3009, 0.0
        %v4767 = vmax.f32 %v3058, 0.0
        %v4768 = vmax.f32 %v3107, 0.0
        %v4769 = vmax.f32 %v3156, 0.0
        %v4770 = vmax.f32 %v3205, 0.0
        %v4771 = vmax.f32 %v3254, 0.0
        %v4772 = vmax.f32 %v3303, 0.0
        %v4773 = vmax.f32 %v3352, 0.0
        %v4774 = vmax.f32 %v3401, 0.0
        %v4775 = vmax.f32 %v3450, 0.0
        %v4776 = vmax.f32 %v3499, 0.0
        %v4777 = vmax.f32 %v3548, 0.0
        %v4778 = vmax.f32 %v3597, 0.0
        %v4779 = vmax.f32 %v3646, 0.0
        %v4780 = vmax.f32 %v3695, 0.0
        %v4781 = vmax.f32 %v3744, 0.0
        %v4782 = vmax.f32 %v3793, 0.0
        %v4783 = vmax.f32 %v3842, 0.0
        %v4784 = vmax.f32 %v3891, 0.0
        %v4785 = vmax.f32 %v3940, 0.0
        %v4786 = vmax.f32 %v3989, 0.0
        %v4787 = vmax.f32 %v4038, 0.0
        %v4788 = vmax.f32 %v4087, 0.0
        %v4789 = vmax.f32 %v4136, 0.0
        %v4790 = vmax.f32 %v4185, 0.0
        %v4791 = vmax.f32 %v4234, 0.0
        %v4792 = vmax.f32 %v4283, 0.0
        %v4793 = vmax.f32 %v4332, 0.0
        %v4794 = vmax.f32 %v4381, 0.0
        %v4795 = vmax.f32 %v4430, 0.0
        %v4796 = vmax.f32 %v2913, 0.0
        %v4797 = vmax.f32 %v2962, 0.0
        %v4798 = vmax.f32 %v3011, 0.0
        %v4799 = vmax.f32 %v3060, 0.0
        %v4800 = vmax.f32 %v3109, 0.0
        %v4801 = vmax.f32 %v3158, 0.0
        %v4802 = vmax.f32 %v3207, 0.0
        %v4803 = vmax.f32 %v3256, 0.0
        %v4804 = vmax.f32 %v3305, 0.0
        %v4805 = vmax.f32 %v3354, 0.0
        %v4806 = vmax.f32 %v3403, 0.0
        %v4807 = vmax.f32 %v3452, 0.0
        %v4808 = vmax.f32 %v3501, 0.0
        %v4809 = vmax.f32 %v3550, 0.0
        %v4810 = vmax.f32 %v3599, 0.0
        %v4811 = vmax.f32 %v3648, 0.0
        %v4812 = vmax.f32 %v3697, 0.0
        %v4813 = vmax.f32 %v3746, 0.0
        %v4814 = vmax.f32 %v3795, 0.0
        %v4815 = vmax.f32 %v3844, 0.0
        %v4816 = vmax.f32 %v3893, 0.0
        %v4817 = vmax.f32 %v3942, 0.0
        %v4818 = vmax.f32 %v3991, 0.0
        %v4819 = vmax.f32 %v4040, 0.0
        %v4820 = vmax.f32 %v4089, 0.0
        %v4821 = vmax.f32 %v4138, 0.0
        %v4822 = vmax.f32 %v4187, 0.0
        %v4823 = vmax.f32 %v4236, 0.0
        %v4824 = vmax.f32 %v4285, 0.0
        %v4825 = vmax.f32 %v4334, 0.0
        %v4826 = vmax.f32 %v4383, 0.0
        %v4827 = vmax.f32 %v4432, 0.0
        %v4828 = vmax.f32 %v2916, 0.0
        %v4829 = vmax.f32 %v2965, 0.0
        %v4830 = vmax.f32 %v3014, 0.0
        %v4831 = vmax.f32 %v3063, 0.0
        %v4832 = vmax.f32 %v3112, 0.0
        %v4833 = vmax.f32 %v3161, 0.0
        %v4834 = vmax.f32 %v3210, 0.0
        %v4835 = vmax.f32 %v3259, 0.0
        %v4836 = vmax.f32 %v3308, 0.0
        %v4837 = vmax.f32 %v3357, 0.0
        %v4838 = vmax.f32 %v3406, 0.0
        %v4839 = vmax.f32 %v3455, 0.0
        %v4840 = vmax.f32 %v3504, 0.0
        %v4841 = vmax.f32 %v3553, 0.0
        %v4842 = vmax.f32 %v3602, 0.0
        %v4843 = vmax.f32 %v3651, 0.0
        %v4844 = vmax.f32 %v3700, 0.0
        %v4845 = vmax.f32 %v3749, 0.0
        %v4846 = vmax.f32 %v3798, 0.0
        %v4847 = vmax.f32 %v3847, 0.0
        %v4848 = vmax.f32 %v3896, 0.0
        %v4849 = vmax.f32 %v3945, 0.0
        %v4850 = vmax.f32 %v3994, 0.0
        %v4851 = vmax.f32 %v4043, 0.0
        %v4852 = vmax.f32 %v4092, 0.0
        %v4853 = vmax.f32 %v4141, 0.0
        %v4854 = vmax.f32 %v4190, 0.0
        %v4855 = vmax.f32 %v4239, 0.0
        %v4856 = vmax.f32 %v4288, 0.0
        %v4857 = vmax.f32 %v4337, 0.0
        %v4858 = vmax.f32 %v4386, 0.0
        %v4859 = vmax.f32 %v4435, 0.0
        %v4860 = vmax.f32 %v2918, 0.0
        %v4861 = vmax.f32 %v2967, 0.0
        %v4862 = vmax.f32 %v3016, 0.0
        %v4863 = vmax.f32 %v3065, 0.0
        %v4864 = vmax.f32 %v3114, 0.0
        %v4865 = vmax.f32 %v3163, 0.0
        %v4866 = vmax.f32 %v3212, 0.0
        %v4867 = vmax.f32 %v3261, 0.0
        %v4868 = vmax.f32 %v3310, 0.0
        %v4869 = vmax.f32 %v3359, 0.0
        %v4870 = vmax.f32 %v3408, 0.0
        %v4871 = vmax.f32 %v3457, 0.0
        %v4872 = vmax.f32 %v3506, 0.0
        %v4873 = vmax.f32 %v3555, 0.0
        %v4874 = vmax.f32 %v3604, 0.0
        %v4875 = vmax.f32 %v3653, 0.0
        %v4876 = vmax.f32 %v3702, 0.0
        %v4877 = vmax.f32 %v3751, 0.0
        %v4878 = vmax.f32 %v3800, 0.0
        %v4879 = vmax.f32 %v3849, 0.0
        %v4880 = vmax.f32 %v3898, 0.0
        %v4881 = vmax.f32 %v3947, 0.0
        %v4882 = vmax.f32 %v3996, 0.0
        %v4883 = vmax.f32 %v4045, 0.0
        %v4884 = vmax.f32 %v4094, 0.0
        %v4885 = vmax.f32 %v4143, 0.0
        %v4886 = vmax.f32 %v4192, 0.0
        %v4887 = vmax.f32 %v4241, 0.0
        %v4888 = vmax.f32 %v4290, 0.0
        %v4889 = vmax.f32 %v4339, 0.0
        %v4890 = vmax.f32 %v4388, 0.0
        %v4891 = vmax.f32 %v4437, 0.0
        %v4892 = vmax.f32 %v2921, 0.0
        %v4893 = vmax.f32 %v2970, 0.0
        %v4894 = vmax.f32 %v3019, 0.0
        %v4895 = vmax.f32 %v3068, 0.0
        %v4896 = vmax.f32 %v3117, 0.0
        %v4897 = vmax.f32 %v3166, 0.0
        %v4898 = vmax.f32 %v3215, 0.0
        %v4899 = vmax.f32 %v3264, 0.0
        %v4900 = vmax.f32 %v3313, 0.0
        %v4901 = vmax.f32 %v3362, 0.0
        %v4902 = vmax.f32 %v3411, 0.0
        %v4903 = vmax.f32 %v3460, 0.0
        %v4904 = vmax.f32 %v3509, 0.0
        %v4905 = vmax.f32 %v3558, 0.0
        %v4906 = vmax.f32 %v3607, 0.0
        %v4907 = vmax.f32 %v3656, 0.0
        %v4908 = vmax.f32 %v3705, 0.0
        %v4909 = vmax.f32 %v3754, 0.0
        %v4910 = vmax.f32 %v3803, 0.0
        %v4911 = vmax.f32 %v3852, 0.0
        %v4912 = vmax.f32 %v3901, 0.0
        %v4913 = vmax.f32 %v3950, 0.0
        %v4914 = vmax.f32 %v3999, 0.0
        %v4915 = vmax.f32 %v4048, 0.0
        %v4916 = vmax.f32 %v4097, 0.0
        %v4917 = vmax.f32 %v4146, 0.0
        %v4918 = vmax.f32 %v4195, 0.0
        %v4919 = vmax.f32 %v4244, 0.0
        %v4920 = vmax.f32 %v4293, 0.0
        %v4921 = vmax.f32 %v4342, 0.0
        %v4922 = vmax.f32 %v4391, 0.0
        %v4923 = vmax.f32 %v4440, 0.0
        %v4924 = vmax.f32 %v2923, 0.0
        %v4925 = vmax.f32 %v2972, 0.0
        %v4926 = vmax.f32 %v3021, 0.0
        %v4927 = vmax.f32 %v3070, 0.0
        %v4928 = vmax.f32 %v3119, 0.0
        %v4929 = vmax.f32 %v3168, 0.0
        %v4930 = vmax.f32 %v3217, 0.0
        %v4931 = vmax.f32 %v3266, 0.0
        %v4932 = vmax.f32 %v3315, 0.0
        %v4933 = vmax.f32 %v3364, 0.0
        %v4934 = vmax.f32 %v3413, 0.0
        %v4935 = vmax.f32 %v3462, 0.0
        %v4936 = vmax.f32 %v3511, 0.0
        %v4937 = vmax.f32 %v3560, 0.0
        %v4938 = vmax.f32 %v3609, 0.0
        %v4939 = vmax.f32 %v3658, 0.0
        %v4940 = vmax.f32 %v3707, 0.0
        %v4941 = vmax.f32 %v3756, 0.0
        %v4942 = vmax.f32 %v3805, 0.0
        %v4943 = vmax.f32 %v3854, 0.0
        %v4944 = vmax.f32 %v3903, 0.0
        %v4945 = vmax.f32 %v3952, 0.0
        %v4946 = vmax.f32 %v4001, 0.0
        %v4947 = vmax.f32 %v4050, 0.0
        %v4948 = vmax.f32 %v4099, 0.0
        %v4949 = vmax.f32 %v4148, 0.0
        %v4950 = vmax.f32 %v4197, 0.0
        %v4951 = vmax.f32 %v4246, 0.0
        %v4952 = vmax.f32 %v4295, 0.0
        %v4953 = vmax.f32 %v4344, 0.0
        %v4954 = vmax.f32 %v4393, 0.0
        %v4955 = vmax.f32 %v4442, 0.0
        %v4956 = vpack.c.bf16 %v4476, %v4444
        %v4957 = vpack.c.bf16 %v4477, %v4445
        %v4958 = vpack.c.bf16 %v4478, %v4446
        %v4959 = vpack.c.bf16 %v4479, %v4447
        %v4960 = vpack.c.bf16 %v4480, %v4448
        %v4961 = vpack.c.bf16 %v4481, %v4449
        %v4962 = vpack.c.bf16 %v4482, %v4450
        %v4963 = vpack.c.bf16 %v4483, %v4451
        %v4964 = vpack.c.bf16 %v4484, %v4452
        %v4965 = vpack.c.bf16 %v4485, %v4453
        %v4966 = vpack.c.bf16 %v4486, %v4454
        %v4967 = vpack.c.bf16 %v4487, %v4455
        %v4968 = vpack.c.bf16 %v4488, %v4456
        %v4969 = vpack.c.bf16 %v4489, %v4457
        %v4970 = vpack.c.bf16 %v4490, %v4458
        %v4971 = vpack.c.bf16 %v4491, %v4459
        %v4972 = vpack.c.bf16 %v4492, %v4460
        %v4973 = vpack.c.bf16 %v4493, %v4461
        %v4974 = vpack.c.bf16 %v4494, %v4462
        %v4975 = vpack.c.bf16 %v4495, %v4463
        %v4976 = vpack.c.bf16 %v4496, %v4464
        %v4977 = vpack.c.bf16 %v4497, %v4465
        %v4978 = vpack.c.bf16 %v4498, %v4466
        %v4979 = vpack.c.bf16 %v4499, %v4467
        %v4980 = vpack.c.bf16 %v4500, %v4468
        %v4981 = vpack.c.bf16 %v4501, %v4469
        %v4982 = vpack.c.bf16 %v4502, %v4470
        %v4983 = vpack.c.bf16 %v4503, %v4471
        %v4984 = vpack.c.bf16 %v4504, %v4472
        %v4985 = vpack.c.bf16 %v4505, %v4473
        %v4986 = vpack.c.bf16 %v4506, %v4474
        %v4987 = vpack.c.bf16 %v4507, %v4475
        %v4988 = vpack.c.bf16 %v4540, %v4508
        %v4989 = vpack.c.bf16 %v4541, %v4509
        %v4990 = vpack.c.bf16 %v4542, %v4510
        %v4991 = vpack.c.bf16 %v4543, %v4511
        %v4992 = vpack.c.bf16 %v4544, %v4512
        %v4993 = vpack.c.bf16 %v4545, %v4513
        %v4994 = vpack.c.bf16 %v4546, %v4514
        %v4995 = vpack.c.bf16 %v4547, %v4515
        %v4996 = vpack.c.bf16 %v4548, %v4516
        %v4997 = vpack.c.bf16 %v4549, %v4517
        %v4998 = vpack.c.bf16 %v4550, %v4518
        %v4999 = vpack.c.bf16 %v4551, %v4519
        %v5000 = vpack.c.bf16 %v4552, %v4520
        %v5001 = vpack.c.bf16 %v4553, %v4521
        %v5002 = vpack.c.bf16 %v4554, %v4522
        %v5003 = vpack.c.bf16 %v4555, %v4523
        %v5004 = vpack.c.bf16 %v4556, %v4524
        %v5005 = vpack.c.bf16 %v4557, %v4525
        %v5006 = vpack.c.bf16 %v4558, %v4526
        %v5007 = vpack.c.bf16 %v4559, %v4527
        %v5008 = vpack.c.bf16 %v4560, %v4528
        %v5009 = vpack.c.bf16 %v4561, %v4529
        %v5010 = vpack.c.bf16 %v4562, %v4530
        %v5011 = vpack.c.bf16 %v4563, %v4531
        %v5012 = vpack.c.bf16 %v4564, %v4532
        %v5013 = vpack.c.bf16 %v4565, %v4533
        %v5014 = vpack.c.bf16 %v4566, %v4534
        %v5015 = vpack.c.bf16 %v4567, %v4535
        %v5016 = vpack.c.bf16 %v4568, %v4536
        %v5017 = vpack.c.bf16 %v4569, %v4537
        %v5018 = vpack.c.bf16 %v4570, %v4538
        %v5019 = vpack.c.bf16 %v4571, %v4539
        %v5020 = vpack.c.bf16 %v4604, %v4572
        %v5021 = vpack.c.bf16 %v4605, %v4573
        %v5022 = vpack.c.bf16 %v4606, %v4574
        %v5023 = vpack.c.bf16 %v4607, %v4575
        %v5024 = vpack.c.bf16 %v4608, %v4576
        %v5025 = vpack.c.bf16 %v4609, %v4577
        %v5026 = vpack.c.bf16 %v4610, %v4578
        %v5027 = vpack.c.bf16 %v4611, %v4579
        %v5028 = vpack.c.bf16 %v4612, %v4580
        %v5029 = vpack.c.bf16 %v4613, %v4581
        %v5030 = vpack.c.bf16 %v4614, %v4582
        %v5031 = vpack.c.bf16 %v4615, %v4583
        %v5032 = vpack.c.bf16 %v4616, %v4584
        %v5033 = vpack.c.bf16 %v4617, %v4585
        %v5034 = vpack.c.bf16 %v4618, %v4586
        %v5035 = vpack.c.bf16 %v4619, %v4587
        %v5036 = vpack.c.bf16 %v4620, %v4588
        %v5037 = vpack.c.bf16 %v4621, %v4589
        %v5038 = vpack.c.bf16 %v4622, %v4590
        %v5039 = vpack.c.bf16 %v4623, %v4591
        %v5040 = vpack.c.bf16 %v4624, %v4592
        %v5041 = vpack.c.bf16 %v4625, %v4593
        %v5042 = vpack.c.bf16 %v4626, %v4594
        %v5043 = vpack.c.bf16 %v4627, %v4595
        %v5044 = vpack.c.bf16 %v4628, %v4596
        %v5045 = vpack.c.bf16 %v4629, %v4597
        %v5046 = vpack.c.bf16 %v4630, %v4598
        %v5047 = vpack.c.bf16 %v4631, %v4599
        %v5048 = vpack.c.bf16 %v4632, %v4600
        %v5049 = vpack.c.bf16 %v4633, %v4601
        %v5050 = vpack.c.bf16 %v4634, %v4602
        %v5051 = vpack.c.bf16 %v4635, %v4603
        %v5052 = vpack.c.bf16 %v4668, %v4636
        %v5053 = vpack.c.bf16 %v4669, %v4637
        %v5054 = vpack.c.bf16 %v4670, %v4638
        %v5055 = vpack.c.bf16 %v4671, %v4639
        %v5056 = vpack.c.bf16 %v4672, %v4640
        %v5057 = vpack.c.bf16 %v4673, %v4641
        %v5058 = vpack.c.bf16 %v4674, %v4642
        %v5059 = vpack.c.bf16 %v4675, %v4643
        %v5060 = vpack.c.bf16 %v4676, %v4644
        %v5061 = vpack.c.bf16 %v4677, %v4645
        %v5062 = vpack.c.bf16 %v4678, %v4646
        %v5063 = vpack.c.bf16 %v4679, %v4647
        %v5064 = vpack.c.bf16 %v4680, %v4648
        %v5065 = vpack.c.bf16 %v4681, %v4649
        %v5066 = vpack.c.bf16 %v4682, %v4650
        %v5067 = vpack.c.bf16 %v4683, %v4651
        %v5068 = vpack.c.bf16 %v4684, %v4652
        %v5069 = vpack.c.bf16 %v4685, %v4653
        %v5070 = vpack.c.bf16 %v4686, %v4654
        %v5071 = vpack.c.bf16 %v4687, %v4655
        %v5072 = vpack.c.bf16 %v4688, %v4656
        %v5073 = vpack.c.bf16 %v4689, %v4657
        %v5074 = vpack.c.bf16 %v4690, %v4658
        %v5075 = vpack.c.bf16 %v4691, %v4659
        %v5076 = vpack.c.bf16 %v4692, %v4660
        %v5077 = vpack.c.bf16 %v4693, %v4661
        %v5078 = vpack.c.bf16 %v4694, %v4662
        %v5079 = vpack.c.bf16 %v4695, %v4663
        %v5080 = vpack.c.bf16 %v4696, %v4664
        %v5081 = vpack.c.bf16 %v4697, %v4665
        %v5082 = vpack.c.bf16 %v4698, %v4666
        %v5083 = vpack.c.bf16 %v4699, %v4667
        %v5084 = vpack.c.bf16 %v4732, %v4700
        %v5085 = vpack.c.bf16 %v4733, %v4701
        %v5086 = vpack.c.bf16 %v4734, %v4702
        %v5087 = vpack.c.bf16 %v4735, %v4703
        %v5088 = vpack.c.bf16 %v4736, %v4704
        %v5089 = vpack.c.bf16 %v4737, %v4705
        %v5090 = vpack.c.bf16 %v4738, %v4706
        %v5091 = vpack.c.bf16 %v4739, %v4707
        %v5092 = vpack.c.bf16 %v4740, %v4708
        %v5093 = vpack.c.bf16 %v4741, %v4709
        %v5094 = vpack.c.bf16 %v4742, %v4710
        %v5095 = vpack.c.bf16 %v4743, %v4711
        %v5096 = vpack.c.bf16 %v4744, %v4712
        %v5097 = vpack.c.bf16 %v4745, %v4713
        %v5098 = vpack.c.bf16 %v4746, %v4714
        %v5099 = vpack.c.bf16 %v4747, %v4715
        %v5100 = vpack.c.bf16 %v4748, %v4716
        %v5101 = vpack.c.bf16 %v4749, %v4717
        %v5102 = vpack.c.bf16 %v4750, %v4718
        %v5103 = vpack.c.bf16 %v4751, %v4719
        %v5104 = vpack.c.bf16 %v4752, %v4720
        %v5105 = vpack.c.bf16 %v4753, %v4721
        %v5106 = vpack.c.bf16 %v4754, %v4722
        %v5107 = vpack.c.bf16 %v4755, %v4723
        %v5108 = vpack.c.bf16 %v4756, %v4724
        %v5109 = vpack.c.bf16 %v4757, %v4725
        %v5110 = vpack.c.bf16 %v4758, %v4726
        %v5111 = vpack.c.bf16 %v4759, %v4727
        %v5112 = vpack.c.bf16 %v4760, %v4728
        %v5113 = vpack.c.bf16 %v4761, %v4729
        %v5114 = vpack.c.bf16 %v4762, %v4730
        %v5115 = vpack.c.bf16 %v4763, %v4731
        %v5116 = vpack.c.bf16 %v4796, %v4764
        %v5117 = vpack.c.bf16 %v4797, %v4765
        %v5118 = vpack.c.bf16 %v4798, %v4766
        %v5119 = vpack.c.bf16 %v4799, %v4767
        %v5120 = vpack.c.bf16 %v4800, %v4768
        %v5121 = vpack.c.bf16 %v4801, %v4769
        %v5122 = vpack.c.bf16 %v4802, %v4770
        %v5123 = vpack.c.bf16 %v4803, %v4771
        %v5124 = vpack.c.bf16 %v4804, %v4772
        %v5125 = vpack.c.bf16 %v4805, %v4773
        %v5126 = vpack.c.bf16 %v4806, %v4774
        %v5127 = vpack.c.bf16 %v4807, %v4775
        %v5128 = vpack.c.bf16 %v4808, %v4776
        %v5129 = vpack.c.bf16 %v4809, %v4777
        %v5130 = vpack.c.bf16 %v4810, %v4778
        %v5131 = vpack.c.bf16 %v4811, %v4779
        %v5132 = vpack.c.bf16 %v4812, %v4780
        %v5133 = vpack.c.bf16 %v4813, %v4781
        %v5134 = vpack.c.bf16 %v4814, %v4782
        %v5135 = vpack.c.bf16 %v4815, %v4783
        %v5136 = vpack.c.bf16 %v4816, %v4784
        %v5137 = vpack.c.bf16 %v4817, %v4785
        %v5138 = vpack.c.bf16 %v4818, %v4786
        %v5139 = vpack.c.bf16 %v4819, %v4787
        %v5140 = vpack.c.bf16 %v4820, %v4788
        %v5141 = vpack.c.bf16 %v4821, %v4789
        %v5142 = vpack.c.bf16 %v4822, %v4790
        %v5143 = vpack.c.bf16 %v4823, %v4791
        %v5144 = vpack.c.bf16 %v4824, %v4792
        %v5145 = vpack.c.bf16 %v4825, %v4793
        %v5146 = vpack.c.bf16 %v4826, %v4794
        %v5147 = vpack.c.bf16 %v4827, %v4795
        %v5148 = vpack.c.bf16 %v4860, %v4828
        %v5149 = vpack.c.bf16 %v4861, %v4829
        %v5150 = vpack.c.bf16 %v4862, %v4830
        %v5151 = vpack.c.bf16 %v4863, %v4831
        %v5152 = vpack.c.bf16 %v4864, %v4832
        %v5153 = vpack.c.bf16 %v4865, %v4833
        %v5154 = vpack.c.bf16 %v4866, %v4834
        %v5155 = vpack.c.bf16 %v4867, %v4835
        %v5156 = vpack.c.bf16 %v4868, %v4836
        %v5157 = vpack.c.bf16 %v4869, %v4837
        %v5158 = vpack.c.bf16 %v4870, %v4838
        %v5159 = vpack.c.bf16 %v4871, %v4839
        %v5160 = vpack.c.bf16 %v4872, %v4840
        %v5161 = vpack.c.bf16 %v4873, %v4841
        %v5162 = vpack.c.bf16 %v4874, %v4842
        %v5163 = vpack.c.bf16 %v4875, %v4843
        %v5164 = vpack.c.bf16 %v4876, %v4844
        %v5165 = vpack.c.bf16 %v4877, %v4845
        %v5166 = vpack.c.bf16 %v4878, %v4846
        %v5167 = vpack.c.bf16 %v4879, %v4847
        %v5168 = vpack.c.bf16 %v4880, %v4848
        %v5169 = vpack.c.bf16 %v4881, %v4849
        %v5170 = vpack.c.bf16 %v4882, %v4850
        %v5171 = vpack.c.bf16 %v4883, %v4851
        %v5172 = vpack.c.bf16 %v4884, %v4852
        %v5173 = vpack.c.bf16 %v4885, %v4853
        %v5174 = vpack.c.bf16 %v4886, %v4854
        %v5175 = vpack.c.bf16 %v4887, %v4855
        %v5176 = vpack.c.bf16 %v4888, %v4856
        %v5177 = vpack.c.bf16 %v4889, %v4857
        %v5178 = vpack.c.bf16 %v4890, %v4858
        %v5179 = vpack.c.bf16 %v4891, %v4859
        %v5180 = vpack.c.bf16 %v4924, %v4892
        %v5181 = vpack.c.bf16 %v4925, %v4893
        %v5182 = vpack.c.bf16 %v4926, %v4894
        %v5183 = vpack.c.bf16 %v4927, %v4895
        %v5184 = vpack.c.bf16 %v4928, %v4896
        %v5185 = vpack.c.bf16 %v4929, %v4897
        %v5186 = vpack.c.bf16 %v4930, %v4898
        %v5187 = vpack.c.bf16 %v4931, %v4899
        %v5188 = vpack.c.bf16 %v4932, %v4900
        %v5189 = vpack.c.bf16 %v4933, %v4901
        %v5190 = vpack.c.bf16 %v4934, %v4902
        %v5191 = vpack.c.bf16 %v4935, %v4903
        %v5192 = vpack.c.bf16 %v4936, %v4904
        %v5193 = vpack.c.bf16 %v4937, %v4905
        %v5194 = vpack.c.bf16 %v4938, %v4906
        %v5195 = vpack.c.bf16 %v4939, %v4907
        %v5196 = vpack.c.bf16 %v4940, %v4908
        %v5197 = vpack.c.bf16 %v4941, %v4909
        %v5198 = vpack.c.bf16 %v4942, %v4910
        %v5199 = vpack.c.bf16 %v4943, %v4911
        %v5200 = vpack.c.bf16 %v4944, %v4912
        %v5201 = vpack.c.bf16 %v4945, %v4913
        %v5202 = vpack.c.bf16 %v4946, %v4914
        %v5203 = vpack.c.bf16 %v4947, %v4915
        %v5204 = vpack.c.bf16 %v4948, %v4916
        %v5205 = vpack.c.bf16 %v4949, %v4917
        %v5206 = vpack.c.bf16 %v4950, %v4918
        %v5207 = vpack.c.bf16 %v4951, %v4919
        %v5208 = vpack.c.bf16 %v4952, %v4920
        %v5209 = vpack.c.bf16 %v4953, %v4921
        %v5210 = vpack.c.bf16 %v4954, %v4922
        %v5211 = vpack.c.bf16 %v4955, %v4923
        %v5212 = vld [vmem:[%s5] sm:$0xf]
        %v5213 = vld [vmem:[%s5 + $0x4] sm:$0xf]
        %v5214 = vld [vmem:[%s5 + $0x8] sm:$0xf]
        %v5215 = vld [vmem:[%s5 + $0xc] sm:$0xf]
        %v5216 = vld [vmem:[%s5 + $0x10] sm:$0xf]
        %v5217 = vld [vmem:[%s5 + $0x14] sm:$0xf]
        %v5218 = vld [vmem:[%s5 + $0x18] sm:$0xf]
        %v5219 = vld [vmem:[%s5 + $0x1c] sm:$0xf]
        %v5220 = vld [vmem:[%s5 + $0x20] sm:$0xf]
        %v5221 = vld [vmem:[%s5 + $0x24] sm:$0xf]
        %v5222 = vld [vmem:[%s5 + $0x28] sm:$0xf]
        %v5223 = vld [vmem:[%s5 + $0x2c] sm:$0xf]
        %v5224 = vld [vmem:[%s5 + $0x30] sm:$0xf]
        %v5225 = vld [vmem:[%s5 + $0x34] sm:$0xf]
        %v5226 = vld [vmem:[%s5 + $0x38] sm:$0xf]
        %v5227 = vld [vmem:[%s5 + $0x3c] sm:$0xf]
        %v5228 = vld [vmem:[%s6] sm:$0xff]
        %v5229 = vld [vmem:[%s6 + $0x8] sm:$0xff]
        %v5230 = vld [vmem:[%s6 + $0x10] sm:$0xff]
        %v5231 = vld [vmem:[%s6 + $0x18] sm:$0xff]
        %v5232 = vld [vmem:[%s6 + $0x20] sm:$0xff]
        %v5233 = vld [vmem:[%s6 + $0x28] sm:$0xff]
        %v5234 = vld [vmem:[%s6 + $0x30] sm:$0xff]
        %v5235 = vld [vmem:[%s6 + $0x38] sm:$0xff]
        %v5236 = vld [vmem:[%s6 + $0x40] sm:$0xff]
        %v5237 = vld [vmem:[%s6 + $0x48] sm:$0xff]
        %v5238 = vld [vmem:[%s6 + $0x50] sm:$0xff]
        %v5239 = vld [vmem:[%s6 + $0x58] sm:$0xff]
        %v5240 = vld [vmem:[%s6 + $0x60] sm:$0xff]
        %v5241 = vld [vmem:[%s6 + $0x68] sm:$0xff]
        %v5242 = vld [vmem:[%s6 + $0x70] sm:$0xff]
        %v5243 = vld [vmem:[%s6 + $0x78] sm:$0xff]
        %5245 = vset.pattern.permute.xlu0 0
        %5246 = vperm.xlu0 %5245, %v5228
        %v5247 = vpop.permute.xlu0 %5246
        %5250 = vset.pattern.permute.xlu0 0
        %5251 = vperm.xlu0 %5250, %v5229
        %v5252 = vpop.permute.xlu0 %5251
        %5255 = vset.pattern.permute.xlu0 0
        %5256 = vperm.xlu0 %5255, %v5230
        %v5257 = vpop.permute.xlu0 %5256
        %5260 = vset.pattern.permute.xlu0 0
        %5261 = vperm.xlu0 %5260, %v5231
        %v5262 = vpop.permute.xlu0 %5261
        %5265 = vset.pattern.permute.xlu0 0
        %5266 = vperm.xlu0 %5265, %v5232
        %v5267 = vpop.permute.xlu0 %5266
        %5270 = vset.pattern.permute.xlu0 0
        %5271 = vperm.xlu0 %5270, %v5233
        %v5272 = vpop.permute.xlu0 %5271
        %5275 = vset.pattern.permute.xlu0 0
        %5276 = vperm.xlu0 %5275, %v5234
        %v5277 = vpop.permute.xlu0 %5276
        %5280 = vset.pattern.permute.xlu0 0
        %5281 = vperm.xlu0 %5280, %v5235
        %v5282 = vpop.permute.xlu0 %5281
        %5285 = vset.pattern.permute.xlu0 0
        %5286 = vperm.xlu0 %5285, %v5236
        %v5287 = vpop.permute.xlu0 %5286
        %5290 = vset.pattern.permute.xlu0 0
        %5291 = vperm.xlu0 %5290, %v5237
        %v5292 = vpop.permute.xlu0 %5291
        %5295 = vset.pattern.permute.xlu0 0
        %5296 = vperm.xlu0 %5295, %v5238
        %v5297 = vpop.permute.xlu0 %5296
        %5300 = vset.pattern.permute.xlu0 0
        %5301 = vperm.xlu0 %5300, %v5239
        %v5302 = vpop.permute.xlu0 %5301
        %5305 = vset.pattern.permute.xlu0 0
        %5306 = vperm.xlu0 %5305, %v5240
        %v5307 = vpop.permute.xlu0 %5306
        %5310 = vset.pattern.permute.xlu0 0
        %5311 = vperm.xlu0 %5310, %v5241
        %v5312 = vpop.permute.xlu0 %5311
        %5315 = vset.pattern.permute.xlu0 0
        %5316 = vperm.xlu0 %5315, %v5242
        %v5317 = vpop.permute.xlu0 %5316
        %5320 = vset.pattern.permute.xlu0 0
        %5321 = vperm.xlu0 %5320, %v5243
        %v5322 = vpop.permute.xlu0 %5321
        %v5340 = vunpack.c.l.b16 %v5212
        %v5341 = vunpack.c.l.b16 %v5213
        %v5342 = vunpack.c.l.b16 %v5214
        %v5343 = vunpack.c.l.b16 %v5215
        %v5344 = vunpack.c.l.b16 %v5216
        %v5345 = vunpack.c.l.b16 %v5217
        %v5346 = vunpack.c.l.b16 %v5218
        %v5347 = vunpack.c.l.b16 %v5219
        %v5348 = vunpack.c.l.b16 %v5220
        %v5349 = vunpack.c.l.b16 %v5221
        %v5350 = vunpack.c.l.b16 %v5222
        %v5351 = vunpack.c.l.b16 %v5223
        %v5352 = vunpack.c.l.b16 %v5224
        %v5353 = vunpack.c.l.b16 %v5225
        %v5354 = vunpack.c.l.b16 %v5226
        %v5355 = vunpack.c.l.b16 %v5227
        %v5356 = vpack.c.b16 %v5341, %v5340
        %v5357 = vpack.c.b16 %v5343, %v5342
        %v5358 = vpack.c.b16 %v5345, %v5344
        %v5359 = vpack.c.b16 %v5347, %v5346
        %v5360 = vpack.c.b16 %v5349, %v5348
        %v5361 = vpack.c.b16 %v5351, %v5350
        %v5362 = vpack.c.b16 %v5353, %v5352
        %v5363 = vpack.c.b16 %v5355, %v5354
        %5372 = vmatpush.bf16.msra.mxu0 %v5180
        %5373 = vmatpush.bf16.msra.mxu0 %v5148
        %5374 = vmatpush.bf16.msra.mxu0 %v5116
        %5375 = vmatpush.bf16.msra.mxu0 %v5084
        %5376 = vmatpush.bf16.msra.mxu0 %v5052
        %5377 = vmatpush.bf16.msra.mxu0 %v5020
        %5378 = vmatpush.bf16.msra.mxu0 %v4988
        %5379 = vmatpush.bf16.msra.mxu0 %v4956
        %5380 = vmatmul.bf16.gmra.mxu0 %v5356
        %v5381 = vpop.f32.mrf.mxu0
        %v5382 = vadd.f32 %v5247, %v5381
        %v5383 = vpop.f32.mrf.mxu0
        %v5384 = vadd.f32 %v5252, %v5383
        %5385 = vmatmul.bf16.gmra.mxu0 %v5357
        %v5386 = vpop.f32.mrf.mxu0
        %v5387 = vadd.f32 %v5257, %v5386
        %v5388 = vpop.f32.mrf.mxu0
        %v5389 = vadd.f32 %v5262, %v5388
        %5390 = vmatmul.bf16.gmra.mxu0 %v5358
        %v5391 = vpop.f32.mrf.mxu0
        %v5392 = vadd.f32 %v5267, %v5391
        %v5393 = vpop.f32.mrf.mxu0
        %v5394 = vadd.f32 %v5272, %v5393
        %5395 = vmatmul.bf16.gmra.mxu0 %v5359
        %v5396 = vpop.f32.mrf.mxu0
        %v5397 = vadd.f32 %v5277, %v5396
        %v5398 = vpop.f32.mrf.mxu0
        %v5399 = vadd.f32 %v5282, %v5398
        %5400 = vmatmul.bf16.gmra.mxu0 %v5360
        %v5401 = vpop.f32.mrf.mxu0
        %v5402 = vadd.f32 %v5287, %v5401
        %v5403 = vpop.f32.mrf.mxu0
        %v5404 = vadd.f32 %v5292, %v5403
        %5405 = vmatmul.bf16.gmra.mxu0 %v5361
        %v5406 = vpop.f32.mrf.mxu0
        %v5407 = vadd.f32 %v5297, %v5406
        %v5408 = vpop.f32.mrf.mxu0
        %v5409 = vadd.f32 %v5302, %v5408
        %5410 = vmatmul.bf16.gmra.mxu0 %v5362
        %v5411 = vpop.f32.mrf.mxu0
        %v5412 = vadd.f32 %v5307, %v5411
        %v5413 = vpop.f32.mrf.mxu0
        %v5414 = vadd.f32 %v5312, %v5413
        %5415 = vmatmul.bf16.gmra.mxu0 %v5363
        %v5416 = vpop.f32.mrf.mxu0
        %v5417 = vadd.f32 %v5317, %v5416
        %v5418 = vpop.f32.mrf.mxu0
        %v5419 = vadd.f32 %v5322, %v5418
        %5420 = vdwg.mxu0
        %5421 = vmatpush.bf16.msra.mxu0 %v5181
        %5422 = vmatpush.bf16.msra.mxu0 %v5149
        %5423 = vmatpush.bf16.msra.mxu0 %v5117
        %5424 = vmatpush.bf16.msra.mxu0 %v5085
        %5425 = vmatpush.bf16.msra.mxu0 %v5053
        %5426 = vmatpush.bf16.msra.mxu0 %v5021
        %5427 = vmatpush.bf16.msra.mxu0 %v4989
        %5428 = vmatpush.bf16.msra.mxu0 %v4957
        %5429 = vmatmul.bf16.gmra.mxu0 %v5356
        %v5430 = vpop.f32.mrf.mxu0
        %v5431 = vadd.f32 %v5247, %v5430
        %v5432 = vpop.f32.mrf.mxu0
        %v5433 = vadd.f32 %v5252, %v5432
        %5434 = vmatmul.bf16.gmra.mxu0 %v5357
        %v5435 = vpop.f32.mrf.mxu0
        %v5436 = vadd.f32 %v5257, %v5435
        %v5437 = vpop.f32.mrf.mxu0
        %v5438 = vadd.f32 %v5262, %v5437
        %5439 = vmatmul.bf16.gmra.mxu0 %v5358
        %v5440 = vpop.f32.mrf.mxu0
        %v5441 = vadd.f32 %v5267, %v5440
        %v5442 = vpop.f32.mrf.mxu0
        %v5443 = vadd.f32 %v5272, %v5442
        %5444 = vmatmul.bf16.gmra.mxu0 %v5359
        %v5445 = vpop.f32.mrf.mxu0
        %v5446 = vadd.f32 %v5277, %v5445
        %v5447 = vpop.f32.mrf.mxu0
        %v5448 = vadd.f32 %v5282, %v5447
        %5449 = vmatmul.bf16.gmra.mxu0 %v5360
        %v5450 = vpop.f32.mrf.mxu0
        %v5451 = vadd.f32 %v5287, %v5450
        %v5452 = vpop.f32.mrf.mxu0
        %v5453 = vadd.f32 %v5292, %v5452
        %5454 = vmatmul.bf16.gmra.mxu0 %v5361
        %v5455 = vpop.f32.mrf.mxu0
        %v5456 = vadd.f32 %v5297, %v5455
        %v5457 = vpop.f32.mrf.mxu0
        %v5458 = vadd.f32 %v5302, %v5457
        %5459 = vmatmul.bf16.gmra.mxu0 %v5362
        %v5460 = vpop.f32.mrf.mxu0
        %v5461 = vadd.f32 %v5307, %v5460
        %v5462 = vpop.f32.mrf.mxu0
        %v5463 = vadd.f32 %v5312, %v5462
        %5464 = vmatmul.bf16.gmra.mxu0 %v5363
        %v5465 = vpop.f32.mrf.mxu0
        %v5466 = vadd.f32 %v5317, %v5465
        %v5467 = vpop.f32.mrf.mxu0
        %v5468 = vadd.f32 %v5322, %v5467
        %5469 = vdwg.mxu0
        %5470 = vmatpush.bf16.msra.mxu0 %v5182
        %5471 = vmatpush.bf16.msra.mxu0 %v5150
        %5472 = vmatpush.bf16.msra.mxu0 %v5118
        %5473 = vmatpush.bf16.msra.mxu0 %v5086
        %5474 = vmatpush.bf16.msra.mxu0 %v5054
        %5475 = vmatpush.bf16.msra.mxu0 %v5022
        %5476 = vmatpush.bf16.msra.mxu0 %v4990
        %5477 = vmatpush.bf16.msra.mxu0 %v4958
        %5478 = vmatmul.bf16.gmra.mxu0 %v5356
        %v5479 = vpop.f32.mrf.mxu0
        %v5480 = vadd.f32 %v5247, %v5479
        %v5481 = vpop.f32.mrf.mxu0
        %v5482 = vadd.f32 %v5252, %v5481
        %5483 = vmatmul.bf16.gmra.mxu0 %v5357
        %v5484 = vpop.f32.mrf.mxu0
        %v5485 = vadd.f32 %v5257, %v5484
        %v5486 = vpop.f32.mrf.mxu0
        %v5487 = vadd.f32 %v5262, %v5486
        %5488 = vmatmul.bf16.gmra.mxu0 %v5358
        %v5489 = vpop.f32.mrf.mxu0
        %v5490 = vadd.f32 %v5267, %v5489
        %v5491 = vpop.f32.mrf.mxu0
        %v5492 = vadd.f32 %v5272, %v5491
        %5493 = vmatmul.bf16.gmra.mxu0 %v5359
        %v5494 = vpop.f32.mrf.mxu0
        %v5495 = vadd.f32 %v5277, %v5494
        %v5496 = vpop.f32.mrf.mxu0
        %v5497 = vadd.f32 %v5282, %v5496
        %5498 = vmatmul.bf16.gmra.mxu0 %v5360
        %v5499 = vpop.f32.mrf.mxu0
        %v5500 = vadd.f32 %v5287, %v5499
        %v5501 = vpop.f32.mrf.mxu0
        %v5502 = vadd.f32 %v5292, %v5501
        %5503 = vmatmul.bf16.gmra.mxu0 %v5361
        %v5504 = vpop.f32.mrf.mxu0
        %v5505 = vadd.f32 %v5297, %v5504
        %v5506 = vpop.f32.mrf.mxu0
        %v5507 = vadd.f32 %v5302, %v5506
        %5508 = vmatmul.bf16.gmra.mxu0 %v5362
        %v5509 = vpop.f32.mrf.mxu0
        %v5510 = vadd.f32 %v5307, %v5509
        %v5511 = vpop.f32.mrf.mxu0
        %v5512 = vadd.f32 %v5312, %v5511
        %5513 = vmatmul.bf16.gmra.mxu0 %v5363
        %v5514 = vpop.f32.mrf.mxu0
        %v5515 = vadd.f32 %v5317, %v5514
        %v5516 = vpop.f32.mrf.mxu0
        %v5517 = vadd.f32 %v5322, %v5516
        %5518 = vdwg.mxu0
        %5519 = vmatpush.bf16.msra.mxu0 %v5183
        %5520 = vmatpush.bf16.msra.mxu0 %v5151
        %5521 = vmatpush.bf16.msra.mxu0 %v5119
        %5522 = vmatpush.bf16.msra.mxu0 %v5087
        %5523 = vmatpush.bf16.msra.mxu0 %v5055
        %5524 = vmatpush.bf16.msra.mxu0 %v5023
        %5525 = vmatpush.bf16.msra.mxu0 %v4991
        %5526 = vmatpush.bf16.msra.mxu0 %v4959
        %5527 = vmatmul.bf16.gmra.mxu0 %v5356
        %v5528 = vpop.f32.mrf.mxu0
        %v5529 = vadd.f32 %v5247, %v5528
        %v5530 = vpop.f32.mrf.mxu0
        %v5531 = vadd.f32 %v5252, %v5530
        %5532 = vmatmul.bf16.gmra.mxu0 %v5357
        %v5533 = vpop.f32.mrf.mxu0
        %v5534 = vadd.f32 %v5257, %v5533
        %v5535 = vpop.f32.mrf.mxu0
        %v5536 = vadd.f32 %v5262, %v5535
        %5537 = vmatmul.bf16.gmra.mxu0 %v5358
        %v5538 = vpop.f32.mrf.mxu0
        %v5539 = vadd.f32 %v5267, %v5538
        %v5540 = vpop.f32.mrf.mxu0
        %v5541 = vadd.f32 %v5272, %v5540
        %5542 = vmatmul.bf16.gmra.mxu0 %v5359
        %v5543 = vpop.f32.mrf.mxu0
        %v5544 = vadd.f32 %v5277, %v5543
        %v5545 = vpop.f32.mrf.mxu0
        %v5546 = vadd.f32 %v5282, %v5545
        %5547 = vmatmul.bf16.gmra.mxu0 %v5360
        %v5548 = vpop.f32.mrf.mxu0
        %v5549 = vadd.f32 %v5287, %v5548
        %v5550 = vpop.f32.mrf.mxu0
        %v5551 = vadd.f32 %v5292, %v5550
        %5552 = vmatmul.bf16.gmra.mxu0 %v5361
        %v5553 = vpop.f32.mrf.mxu0
        %v5554 = vadd.f32 %v5297, %v5553
        %v5555 = vpop.f32.mrf.mxu0
        %v5556 = vadd.f32 %v5302, %v5555
        %5557 = vmatmul.bf16.gmra.mxu0 %v5362
        %v5558 = vpop.f32.mrf.mxu0
        %v5559 = vadd.f32 %v5307, %v5558
        %v5560 = vpop.f32.mrf.mxu0
        %v5561 = vadd.f32 %v5312, %v5560
        %5562 = vmatmul.bf16.gmra.mxu0 %v5363
        %v5563 = vpop.f32.mrf.mxu0
        %v5564 = vadd.f32 %v5317, %v5563
        %v5565 = vpop.f32.mrf.mxu0
        %v5566 = vadd.f32 %v5322, %v5565
        %5567 = vdwg.mxu0
        %5568 = vmatpush.bf16.msra.mxu0 %v5184
        %5569 = vmatpush.bf16.msra.mxu0 %v5152
        %5570 = vmatpush.bf16.msra.mxu0 %v5120
        %5571 = vmatpush.bf16.msra.mxu0 %v5088
        %5572 = vmatpush.bf16.msra.mxu0 %v5056
        %5573 = vmatpush.bf16.msra.mxu0 %v5024
        %5574 = vmatpush.bf16.msra.mxu0 %v4992
        %5575 = vmatpush.bf16.msra.mxu0 %v4960
        %5576 = vmatmul.bf16.gmra.mxu0 %v5356
        %v5577 = vpop.f32.mrf.mxu0
        %v5578 = vadd.f32 %v5247, %v5577
        %v5579 = vpop.f32.mrf.mxu0
        %v5580 = vadd.f32 %v5252, %v5579
        %5581 = vmatmul.bf16.gmra.mxu0 %v5357
        %v5582 = vpop.f32.mrf.mxu0
        %v5583 = vadd.f32 %v5257, %v5582
        %v5584 = vpop.f32.mrf.mxu0
        %v5585 = vadd.f32 %v5262, %v5584
        %5586 = vmatmul.bf16.gmra.mxu0 %v5358
        %v5587 = vpop.f32.mrf.mxu0
        %v5588 = vadd.f32 %v5267, %v5587
        %v5589 = vpop.f32.mrf.mxu0
        %v5590 = vadd.f32 %v5272, %v5589
        %5591 = vmatmul.bf16.gmra.mxu0 %v5359
        %v5592 = vpop.f32.mrf.mxu0
        %v5593 = vadd.f32 %v5277, %v5592
        %v5594 = vpop.f32.mrf.mxu0
        %v5595 = vadd.f32 %v5282, %v5594
        %5596 = vmatmul.bf16.gmra.mxu0 %v5360
        %v5597 = vpop.f32.mrf.mxu0
        %v5598 = vadd.f32 %v5287, %v5597
        %v5599 = vpop.f32.mrf.mxu0
        %v5600 = vadd.f32 %v5292, %v5599
        %5601 = vmatmul.bf16.gmra.mxu0 %v5361
        %v5602 = vpop.f32.mrf.mxu0
        %v5603 = vadd.f32 %v5297, %v5602
        %v5604 = vpop.f32.mrf.mxu0
        %v5605 = vadd.f32 %v5302, %v5604
        %5606 = vmatmul.bf16.gmra.mxu0 %v5362
        %v5607 = vpop.f32.mrf.mxu0
        %v5608 = vadd.f32 %v5307, %v5607
        %v5609 = vpop.f32.mrf.mxu0
        %v5610 = vadd.f32 %v5312, %v5609
        %5611 = vmatmul.bf16.gmra.mxu0 %v5363
        %v5612 = vpop.f32.mrf.mxu0
        %v5613 = vadd.f32 %v5317, %v5612
        %v5614 = vpop.f32.mrf.mxu0
        %v5615 = vadd.f32 %v5322, %v5614
        %5616 = vdwg.mxu0
        %5617 = vmatpush.bf16.msra.mxu0 %v5185
        %5618 = vmatpush.bf16.msra.mxu0 %v5153
        %5619 = vmatpush.bf16.msra.mxu0 %v5121
        %5620 = vmatpush.bf16.msra.mxu0 %v5089
        %5621 = vmatpush.bf16.msra.mxu0 %v5057
        %5622 = vmatpush.bf16.msra.mxu0 %v5025
        %5623 = vmatpush.bf16.msra.mxu0 %v4993
        %5624 = vmatpush.bf16.msra.mxu0 %v4961
        %5625 = vmatmul.bf16.gmra.mxu0 %v5356
        %v5626 = vpop.f32.mrf.mxu0
        %v5627 = vadd.f32 %v5247, %v5626
        %v5628 = vpop.f32.mrf.mxu0
        %v5629 = vadd.f32 %v5252, %v5628
        %5630 = vmatmul.bf16.gmra.mxu0 %v5357
        %v5631 = vpop.f32.mrf.mxu0
        %v5632 = vadd.f32 %v5257, %v5631
        %v5633 = vpop.f32.mrf.mxu0
        %v5634 = vadd.f32 %v5262, %v5633
        %5635 = vmatmul.bf16.gmra.mxu0 %v5358
        %v5636 = vpop.f32.mrf.mxu0
        %v5637 = vadd.f32 %v5267, %v5636
        %v5638 = vpop.f32.mrf.mxu0
        %v5639 = vadd.f32 %v5272, %v5638
        %5640 = vmatmul.bf16.gmra.mxu0 %v5359
        %v5641 = vpop.f32.mrf.mxu0
        %v5642 = vadd.f32 %v5277, %v5641
        %v5643 = vpop.f32.mrf.mxu0
        %v5644 = vadd.f32 %v5282, %v5643
        %5645 = vmatmul.bf16.gmra.mxu0 %v5360
        %v5646 = vpop.f32.mrf.mxu0
        %v5647 = vadd.f32 %v5287, %v5646
        %v5648 = vpop.f32.mrf.mxu0
        %v5649 = vadd.f32 %v5292, %v5648
        %5650 = vmatmul.bf16.gmra.mxu0 %v5361
        %v5651 = vpop.f32.mrf.mxu0
        %v5652 = vadd.f32 %v5297, %v5651
        %v5653 = vpop.f32.mrf.mxu0
        %v5654 = vadd.f32 %v5302, %v5653
        %5655 = vmatmul.bf16.gmra.mxu0 %v5362
        %v5656 = vpop.f32.mrf.mxu0
        %v5657 = vadd.f32 %v5307, %v5656
        %v5658 = vpop.f32.mrf.mxu0
        %v5659 = vadd.f32 %v5312, %v5658
        %5660 = vmatmul.bf16.gmra.mxu0 %v5363
        %v5661 = vpop.f32.mrf.mxu0
        %v5662 = vadd.f32 %v5317, %v5661
        %v5663 = vpop.f32.mrf.mxu0
        %v5664 = vadd.f32 %v5322, %v5663
        %5665 = vdwg.mxu0
        %5666 = vmatpush.bf16.msra.mxu0 %v5186
        %5667 = vmatpush.bf16.msra.mxu0 %v5154
        %5668 = vmatpush.bf16.msra.mxu0 %v5122
        %5669 = vmatpush.bf16.msra.mxu0 %v5090
        %5670 = vmatpush.bf16.msra.mxu0 %v5058
        %5671 = vmatpush.bf16.msra.mxu0 %v5026
        %5672 = vmatpush.bf16.msra.mxu0 %v4994
        %5673 = vmatpush.bf16.msra.mxu0 %v4962
        %5674 = vmatmul.bf16.gmra.mxu0 %v5356
        %v5675 = vpop.f32.mrf.mxu0
        %v5676 = vadd.f32 %v5247, %v5675
        %v5677 = vpop.f32.mrf.mxu0
        %v5678 = vadd.f32 %v5252, %v5677
        %5679 = vmatmul.bf16.gmra.mxu0 %v5357
        %v5680 = vpop.f32.mrf.mxu0
        %v5681 = vadd.f32 %v5257, %v5680
        %v5682 = vpop.f32.mrf.mxu0
        %v5683 = vadd.f32 %v5262, %v5682
        %5684 = vmatmul.bf16.gmra.mxu0 %v5358
        %v5685 = vpop.f32.mrf.mxu0
        %v5686 = vadd.f32 %v5267, %v5685
        %v5687 = vpop.f32.mrf.mxu0
        %v5688 = vadd.f32 %v5272, %v5687
        %5689 = vmatmul.bf16.gmra.mxu0 %v5359
        %v5690 = vpop.f32.mrf.mxu0
        %v5691 = vadd.f32 %v5277, %v5690
        %v5692 = vpop.f32.mrf.mxu0
        %v5693 = vadd.f32 %v5282, %v5692
        %5694 = vmatmul.bf16.gmra.mxu0 %v5360
        %v5695 = vpop.f32.mrf.mxu0
        %v5696 = vadd.f32 %v5287, %v5695
        %v5697 = vpop.f32.mrf.mxu0
        %v5698 = vadd.f32 %v5292, %v5697
        %5699 = vmatmul.bf16.gmra.mxu0 %v5361
        %v5700 = vpop.f32.mrf.mxu0
        %v5701 = vadd.f32 %v5297, %v5700
        %v5702 = vpop.f32.mrf.mxu0
        %v5703 = vadd.f32 %v5302, %v5702
        %5704 = vmatmul.bf16.gmra.mxu0 %v5362
        %v5705 = vpop.f32.mrf.mxu0
        %v5706 = vadd.f32 %v5307, %v5705
        %v5707 = vpop.f32.mrf.mxu0
        %v5708 = vadd.f32 %v5312, %v5707
        %5709 = vmatmul.bf16.gmra.mxu0 %v5363
        %v5710 = vpop.f32.mrf.mxu0
        %v5711 = vadd.f32 %v5317, %v5710
        %v5712 = vpop.f32.mrf.mxu0
        %v5713 = vadd.f32 %v5322, %v5712
        %5714 = vdwg.mxu0
        %5715 = vmatpush.bf16.msra.mxu0 %v5187
        %5716 = vmatpush.bf16.msra.mxu0 %v5155
        %5717 = vmatpush.bf16.msra.mxu0 %v5123
        %5718 = vmatpush.bf16.msra.mxu0 %v5091
        %5719 = vmatpush.bf16.msra.mxu0 %v5059
        %5720 = vmatpush.bf16.msra.mxu0 %v5027
        %5721 = vmatpush.bf16.msra.mxu0 %v4995
        %5722 = vmatpush.bf16.msra.mxu0 %v4963
        %5723 = vmatmul.bf16.gmra.mxu0 %v5356
        %v5724 = vpop.f32.mrf.mxu0
        %v5725 = vadd.f32 %v5247, %v5724
        %v5726 = vpop.f32.mrf.mxu0
        %v5727 = vadd.f32 %v5252, %v5726
        %5728 = vmatmul.bf16.gmra.mxu0 %v5357
        %v5729 = vpop.f32.mrf.mxu0
        %v5730 = vadd.f32 %v5257, %v5729
        %v5731 = vpop.f32.mrf.mxu0
        %v5732 = vadd.f32 %v5262, %v5731
        %5733 = vmatmul.bf16.gmra.mxu0 %v5358
        %v5734 = vpop.f32.mrf.mxu0
        %v5735 = vadd.f32 %v5267, %v5734
        %v5736 = vpop.f32.mrf.mxu0
        %v5737 = vadd.f32 %v5272, %v5736
        %5738 = vmatmul.bf16.gmra.mxu0 %v5359
        %v5739 = vpop.f32.mrf.mxu0
        %v5740 = vadd.f32 %v5277, %v5739
        %v5741 = vpop.f32.mrf.mxu0
        %v5742 = vadd.f32 %v5282, %v5741
        %5743 = vmatmul.bf16.gmra.mxu0 %v5360
        %v5744 = vpop.f32.mrf.mxu0
        %v5745 = vadd.f32 %v5287, %v5744
        %v5746 = vpop.f32.mrf.mxu0
        %v5747 = vadd.f32 %v5292, %v5746
        %5748 = vmatmul.bf16.gmra.mxu0 %v5361
        %v5749 = vpop.f32.mrf.mxu0
        %v5750 = vadd.f32 %v5297, %v5749
        %v5751 = vpop.f32.mrf.mxu0
        %v5752 = vadd.f32 %v5302, %v5751
        %5753 = vmatmul.bf16.gmra.mxu0 %v5362
        %v5754 = vpop.f32.mrf.mxu0
        %v5755 = vadd.f32 %v5307, %v5754
        %v5756 = vpop.f32.mrf.mxu0
        %v5757 = vadd.f32 %v5312, %v5756
        %5758 = vmatmul.bf16.gmra.mxu0 %v5363
        %v5759 = vpop.f32.mrf.mxu0
        %v5760 = vadd.f32 %v5317, %v5759
        %v5761 = vpop.f32.mrf.mxu0
        %v5762 = vadd.f32 %v5322, %v5761
        %5763 = vdwg.mxu0
        %5764 = vmatpush.bf16.msra.mxu0 %v5188
        %5765 = vmatpush.bf16.msra.mxu0 %v5156
        %5766 = vmatpush.bf16.msra.mxu0 %v5124
        %5767 = vmatpush.bf16.msra.mxu0 %v5092
        %5768 = vmatpush.bf16.msra.mxu0 %v5060
        %5769 = vmatpush.bf16.msra.mxu0 %v5028
        %5770 = vmatpush.bf16.msra.mxu0 %v4996
        %5771 = vmatpush.bf16.msra.mxu0 %v4964
        %5772 = vmatmul.bf16.gmra.mxu0 %v5356
        %v5773 = vpop.f32.mrf.mxu0
        %v5774 = vadd.f32 %v5247, %v5773
        %v5775 = vpop.f32.mrf.mxu0
        %v5776 = vadd.f32 %v5252, %v5775
        %5777 = vmatmul.bf16.gmra.mxu0 %v5357
        %v5778 = vpop.f32.mrf.mxu0
        %v5779 = vadd.f32 %v5257, %v5778
        %v5780 = vpop.f32.mrf.mxu0
        %v5781 = vadd.f32 %v5262, %v5780
        %5782 = vmatmul.bf16.gmra.mxu0 %v5358
        %v5783 = vpop.f32.mrf.mxu0
        %v5784 = vadd.f32 %v5267, %v5783
        %v5785 = vpop.f32.mrf.mxu0
        %v5786 = vadd.f32 %v5272, %v5785
        %5787 = vmatmul.bf16.gmra.mxu0 %v5359
        %v5788 = vpop.f32.mrf.mxu0
        %v5789 = vadd.f32 %v5277, %v5788
        %v5790 = vpop.f32.mrf.mxu0
        %v5791 = vadd.f32 %v5282, %v5790
        %5792 = vmatmul.bf16.gmra.mxu0 %v5360
        %v5793 = vpop.f32.mrf.mxu0
        %v5794 = vadd.f32 %v5287, %v5793
        %v5795 = vpop.f32.mrf.mxu0
        %v5796 = vadd.f32 %v5292, %v5795
        %5797 = vmatmul.bf16.gmra.mxu0 %v5361
        %v5798 = vpop.f32.mrf.mxu0
        %v5799 = vadd.f32 %v5297, %v5798
        %v5800 = vpop.f32.mrf.mxu0
        %v5801 = vadd.f32 %v5302, %v5800
        %5802 = vmatmul.bf16.gmra.mxu0 %v5362
        %v5803 = vpop.f32.mrf.mxu0
        %v5804 = vadd.f32 %v5307, %v5803
        %v5805 = vpop.f32.mrf.mxu0
        %v5806 = vadd.f32 %v5312, %v5805
        %5807 = vmatmul.bf16.gmra.mxu0 %v5363
        %v5808 = vpop.f32.mrf.mxu0
        %v5809 = vadd.f32 %v5317, %v5808
        %v5810 = vpop.f32.mrf.mxu0
        %v5811 = vadd.f32 %v5322, %v5810
        %5812 = vdwg.mxu0
        %5813 = vmatpush.bf16.msra.mxu0 %v5189
        %5814 = vmatpush.bf16.msra.mxu0 %v5157
        %5815 = vmatpush.bf16.msra.mxu0 %v5125
        %5816 = vmatpush.bf16.msra.mxu0 %v5093
        %5817 = vmatpush.bf16.msra.mxu0 %v5061
        %5818 = vmatpush.bf16.msra.mxu0 %v5029
        %5819 = vmatpush.bf16.msra.mxu0 %v4997
        %5820 = vmatpush.bf16.msra.mxu0 %v4965
        %5821 = vmatmul.bf16.gmra.mxu0 %v5356
        %v5822 = vpop.f32.mrf.mxu0
        %v5823 = vadd.f32 %v5247, %v5822
        %v5824 = vpop.f32.mrf.mxu0
        %v5825 = vadd.f32 %v5252, %v5824
        %5826 = vmatmul.bf16.gmra.mxu0 %v5357
        %v5827 = vpop.f32.mrf.mxu0
        %v5828 = vadd.f32 %v5257, %v5827
        %v5829 = vpop.f32.mrf.mxu0
        %v5830 = vadd.f32 %v5262, %v5829
        %5831 = vmatmul.bf16.gmra.mxu0 %v5358
        %v5832 = vpop.f32.mrf.mxu0
        %v5833 = vadd.f32 %v5267, %v5832
        %v5834 = vpop.f32.mrf.mxu0
        %v5835 = vadd.f32 %v5272, %v5834
        %5836 = vmatmul.bf16.gmra.mxu0 %v5359
        %v5837 = vpop.f32.mrf.mxu0
        %v5838 = vadd.f32 %v5277, %v5837
        %v5839 = vpop.f32.mrf.mxu0
        %v5840 = vadd.f32 %v5282, %v5839
        %5841 = vmatmul.bf16.gmra.mxu0 %v5360
        %v5842 = vpop.f32.mrf.mxu0
        %v5843 = vadd.f32 %v5287, %v5842
        %v5844 = vpop.f32.mrf.mxu0
        %v5845 = vadd.f32 %v5292, %v5844
        %5846 = vmatmul.bf16.gmra.mxu0 %v5361
        %v5847 = vpop.f32.mrf.mxu0
        %v5848 = vadd.f32 %v5297, %v5847
        %v5849 = vpop.f32.mrf.mxu0
        %v5850 = vadd.f32 %v5302, %v5849
        %5851 = vmatmul.bf16.gmra.mxu0 %v5362
        %v5852 = vpop.f32.mrf.mxu0
        %v5853 = vadd.f32 %v5307, %v5852
        %v5854 = vpop.f32.mrf.mxu0
        %v5855 = vadd.f32 %v5312, %v5854
        %5856 = vmatmul.bf16.gmra.mxu0 %v5363
        %v5857 = vpop.f32.mrf.mxu0
        %v5858 = vadd.f32 %v5317, %v5857
        %v5859 = vpop.f32.mrf.mxu0
        %v5860 = vadd.f32 %v5322, %v5859
        %5861 = vdwg.mxu0
        %5862 = vmatpush.bf16.msra.mxu0 %v5190
        %5863 = vmatpush.bf16.msra.mxu0 %v5158
        %5864 = vmatpush.bf16.msra.mxu0 %v5126
        %5865 = vmatpush.bf16.msra.mxu0 %v5094
        %5866 = vmatpush.bf16.msra.mxu0 %v5062
        %5867 = vmatpush.bf16.msra.mxu0 %v5030
        %5868 = vmatpush.bf16.msra.mxu0 %v4998
        %5869 = vmatpush.bf16.msra.mxu0 %v4966
        %5870 = vmatmul.bf16.gmra.mxu0 %v5356
        %v5871 = vpop.f32.mrf.mxu0
        %v5872 = vadd.f32 %v5247, %v5871
        %v5873 = vpop.f32.mrf.mxu0
        %v5874 = vadd.f32 %v5252, %v5873
        %5875 = vmatmul.bf16.gmra.mxu0 %v5357
        %v5876 = vpop.f32.mrf.mxu0
        %v5877 = vadd.f32 %v5257, %v5876
        %v5878 = vpop.f32.mrf.mxu0
        %v5879 = vadd.f32 %v5262, %v5878
        %5880 = vmatmul.bf16.gmra.mxu0 %v5358
        %v5881 = vpop.f32.mrf.mxu0
        %v5882 = vadd.f32 %v5267, %v5881
        %v5883 = vpop.f32.mrf.mxu0
        %v5884 = vadd.f32 %v5272, %v5883
        %5885 = vmatmul.bf16.gmra.mxu0 %v5359
        %v5886 = vpop.f32.mrf.mxu0
        %v5887 = vadd.f32 %v5277, %v5886
        %v5888 = vpop.f32.mrf.mxu0
        %v5889 = vadd.f32 %v5282, %v5888
        %5890 = vmatmul.bf16.gmra.mxu0 %v5360
        %v5891 = vpop.f32.mrf.mxu0
        %v5892 = vadd.f32 %v5287, %v5891
        %v5893 = vpop.f32.mrf.mxu0
        %v5894 = vadd.f32 %v5292, %v5893
        %5895 = vmatmul.bf16.gmra.mxu0 %v5361
        %v5896 = vpop.f32.mrf.mxu0
        %v5897 = vadd.f32 %v5297, %v5896
        %v5898 = vpop.f32.mrf.mxu0
        %v5899 = vadd.f32 %v5302, %v5898
        %5900 = vmatmul.bf16.gmra.mxu0 %v5362
        %v5901 = vpop.f32.mrf.mxu0
        %v5902 = vadd.f32 %v5307, %v5901
        %v5903 = vpop.f32.mrf.mxu0
        %v5904 = vadd.f32 %v5312, %v5903
        %5905 = vmatmul.bf16.gmra.mxu0 %v5363
        %v5906 = vpop.f32.mrf.mxu0
        %v5907 = vadd.f32 %v5317, %v5906
        %v5908 = vpop.f32.mrf.mxu0
        %v5909 = vadd.f32 %v5322, %v5908
        %5910 = vdwg.mxu0
        %5911 = vmatpush.bf16.msra.mxu0 %v5191
        %5912 = vmatpush.bf16.msra.mxu0 %v5159
        %5913 = vmatpush.bf16.msra.mxu0 %v5127
        %5914 = vmatpush.bf16.msra.mxu0 %v5095
        %5915 = vmatpush.bf16.msra.mxu0 %v5063
        %5916 = vmatpush.bf16.msra.mxu0 %v5031
        %5917 = vmatpush.bf16.msra.mxu0 %v4999
        %5918 = vmatpush.bf16.msra.mxu0 %v4967
        %5919 = vmatmul.bf16.gmra.mxu0 %v5356
        %v5920 = vpop.f32.mrf.mxu0
        %v5921 = vadd.f32 %v5247, %v5920
        %v5922 = vpop.f32.mrf.mxu0
        %v5923 = vadd.f32 %v5252, %v5922
        %5924 = vmatmul.bf16.gmra.mxu0 %v5357
        %v5925 = vpop.f32.mrf.mxu0
        %v5926 = vadd.f32 %v5257, %v5925
        %v5927 = vpop.f32.mrf.mxu0
        %v5928 = vadd.f32 %v5262, %v5927
        %5929 = vmatmul.bf16.gmra.mxu0 %v5358
        %v5930 = vpop.f32.mrf.mxu0
        %v5931 = vadd.f32 %v5267, %v5930
        %v5932 = vpop.f32.mrf.mxu0
        %v5933 = vadd.f32 %v5272, %v5932
        %5934 = vmatmul.bf16.gmra.mxu0 %v5359
        %v5935 = vpop.f32.mrf.mxu0
        %v5936 = vadd.f32 %v5277, %v5935
        %v5937 = vpop.f32.mrf.mxu0
        %v5938 = vadd.f32 %v5282, %v5937
        %5939 = vmatmul.bf16.gmra.mxu0 %v5360
        %v5940 = vpop.f32.mrf.mxu0
        %v5941 = vadd.f32 %v5287, %v5940
        %v5942 = vpop.f32.mrf.mxu0
        %v5943 = vadd.f32 %v5292, %v5942
        %5944 = vmatmul.bf16.gmra.mxu0 %v5361
        %v5945 = vpop.f32.mrf.mxu0
        %v5946 = vadd.f32 %v5297, %v5945
        %v5947 = vpop.f32.mrf.mxu0
        %v5948 = vadd.f32 %v5302, %v5947
        %5949 = vmatmul.bf16.gmra.mxu0 %v5362
        %v5950 = vpop.f32.mrf.mxu0
        %v5951 = vadd.f32 %v5307, %v5950
        %v5952 = vpop.f32.mrf.mxu0
        %v5953 = vadd.f32 %v5312, %v5952
        %5954 = vmatmul.bf16.gmra.mxu0 %v5363
        %v5955 = vpop.f32.mrf.mxu0
        %v5956 = vadd.f32 %v5317, %v5955
        %v5957 = vpop.f32.mrf.mxu0
        %v5958 = vadd.f32 %v5322, %v5957
        %5959 = vdwg.mxu0
        %5960 = vmatpush.bf16.msra.mxu0 %v5192
        %5961 = vmatpush.bf16.msra.mxu0 %v5160
        %5962 = vmatpush.bf16.msra.mxu0 %v5128
        %5963 = vmatpush.bf16.msra.mxu0 %v5096
        %5964 = vmatpush.bf16.msra.mxu0 %v5064
        %5965 = vmatpush.bf16.msra.mxu0 %v5032
        %5966 = vmatpush.bf16.msra.mxu0 %v5000
        %5967 = vmatpush.bf16.msra.mxu0 %v4968
        %5968 = vmatmul.bf16.gmra.mxu0 %v5356
        %v5969 = vpop.f32.mrf.mxu0
        %v5970 = vadd.f32 %v5247, %v5969
        %v5971 = vpop.f32.mrf.mxu0
        %v5972 = vadd.f32 %v5252, %v5971
        %5973 = vmatmul.bf16.gmra.mxu0 %v5357
        %v5974 = vpop.f32.mrf.mxu0
        %v5975 = vadd.f32 %v5257, %v5974
        %v5976 = vpop.f32.mrf.mxu0
        %v5977 = vadd.f32 %v5262, %v5976
        %5978 = vmatmul.bf16.gmra.mxu0 %v5358
        %v5979 = vpop.f32.mrf.mxu0
        %v5980 = vadd.f32 %v5267, %v5979
        %v5981 = vpop.f32.mrf.mxu0
        %v5982 = vadd.f32 %v5272, %v5981
        %5983 = vmatmul.bf16.gmra.mxu0 %v5359
        %v5984 = vpop.f32.mrf.mxu0
        %v5985 = vadd.f32 %v5277, %v5984
        %v5986 = vpop.f32.mrf.mxu0
        %v5987 = vadd.f32 %v5282, %v5986
        %5988 = vmatmul.bf16.gmra.mxu0 %v5360
        %v5989 = vpop.f32.mrf.mxu0
        %v5990 = vadd.f32 %v5287, %v5989
        %v5991 = vpop.f32.mrf.mxu0
        %v5992 = vadd.f32 %v5292, %v5991
        %5993 = vmatmul.bf16.gmra.mxu0 %v5361
        %v5994 = vpop.f32.mrf.mxu0
        %v5995 = vadd.f32 %v5297, %v5994
        %v5996 = vpop.f32.mrf.mxu0
        %v5997 = vadd.f32 %v5302, %v5996
        %5998 = vmatmul.bf16.gmra.mxu0 %v5362
        %v5999 = vpop.f32.mrf.mxu0
        %v6000 = vadd.f32 %v5307, %v5999
        %v6001 = vpop.f32.mrf.mxu0
        %v6002 = vadd.f32 %v5312, %v6001
        %6003 = vmatmul.bf16.gmra.mxu0 %v5363
        %v6004 = vpop.f32.mrf.mxu0
        %v6005 = vadd.f32 %v5317, %v6004
        %v6006 = vpop.f32.mrf.mxu0
        %v6007 = vadd.f32 %v5322, %v6006
        %6008 = vdwg.mxu0
        %6009 = vmatpush.bf16.msra.mxu0 %v5193
        %6010 = vmatpush.bf16.msra.mxu0 %v5161
        %6011 = vmatpush.bf16.msra.mxu0 %v5129
        %6012 = vmatpush.bf16.msra.mxu0 %v5097
        %6013 = vmatpush.bf16.msra.mxu0 %v5065
        %6014 = vmatpush.bf16.msra.mxu0 %v5033
        %6015 = vmatpush.bf16.msra.mxu0 %v5001
        %6016 = vmatpush.bf16.msra.mxu0 %v4969
        %6017 = vmatmul.bf16.gmra.mxu0 %v5356
        %v6018 = vpop.f32.mrf.mxu0
        %v6019 = vadd.f32 %v5247, %v6018
        %v6020 = vpop.f32.mrf.mxu0
        %v6021 = vadd.f32 %v5252, %v6020
        %6022 = vmatmul.bf16.gmra.mxu0 %v5357
        %v6023 = vpop.f32.mrf.mxu0
        %v6024 = vadd.f32 %v5257, %v6023
        %v6025 = vpop.f32.mrf.mxu0
        %v6026 = vadd.f32 %v5262, %v6025
        %6027 = vmatmul.bf16.gmra.mxu0 %v5358
        %v6028 = vpop.f32.mrf.mxu0
        %v6029 = vadd.f32 %v5267, %v6028
        %v6030 = vpop.f32.mrf.mxu0
        %v6031 = vadd.f32 %v5272, %v6030
        %6032 = vmatmul.bf16.gmra.mxu0 %v5359
        %v6033 = vpop.f32.mrf.mxu0
        %v6034 = vadd.f32 %v5277, %v6033
        %v6035 = vpop.f32.mrf.mxu0
        %v6036 = vadd.f32 %v5282, %v6035
        %6037 = vmatmul.bf16.gmra.mxu0 %v5360
        %v6038 = vpop.f32.mrf.mxu0
        %v6039 = vadd.f32 %v5287, %v6038
        %v6040 = vpop.f32.mrf.mxu0
        %v6041 = vadd.f32 %v5292, %v6040
        %6042 = vmatmul.bf16.gmra.mxu0 %v5361
        %v6043 = vpop.f32.mrf.mxu0
        %v6044 = vadd.f32 %v5297, %v6043
        %v6045 = vpop.f32.mrf.mxu0
        %v6046 = vadd.f32 %v5302, %v6045
        %6047 = vmatmul.bf16.gmra.mxu0 %v5362
        %v6048 = vpop.f32.mrf.mxu0
        %v6049 = vadd.f32 %v5307, %v6048
        %v6050 = vpop.f32.mrf.mxu0
        %v6051 = vadd.f32 %v5312, %v6050
        %6052 = vmatmul.bf16.gmra.mxu0 %v5363
        %v6053 = vpop.f32.mrf.mxu0
        %v6054 = vadd.f32 %v5317, %v6053
        %v6055 = vpop.f32.mrf.mxu0
        %v6056 = vadd.f32 %v5322, %v6055
        %6057 = vdwg.mxu0
        %6058 = vmatpush.bf16.msra.mxu0 %v5194
        %6059 = vmatpush.bf16.msra.mxu0 %v5162
        %6060 = vmatpush.bf16.msra.mxu0 %v5130
        %6061 = vmatpush.bf16.msra.mxu0 %v5098
        %6062 = vmatpush.bf16.msra.mxu0 %v5066
        %6063 = vmatpush.bf16.msra.mxu0 %v5034
        %6064 = vmatpush.bf16.msra.mxu0 %v5002
        %6065 = vmatpush.bf16.msra.mxu0 %v4970
        %6066 = vmatmul.bf16.gmra.mxu0 %v5356
        %v6067 = vpop.f32.mrf.mxu0
        %v6068 = vadd.f32 %v5247, %v6067
        %v6069 = vpop.f32.mrf.mxu0
        %v6070 = vadd.f32 %v5252, %v6069
        %6071 = vmatmul.bf16.gmra.mxu0 %v5357
        %v6072 = vpop.f32.mrf.mxu0
        %v6073 = vadd.f32 %v5257, %v6072
        %v6074 = vpop.f32.mrf.mxu0
        %v6075 = vadd.f32 %v5262, %v6074
        %6076 = vmatmul.bf16.gmra.mxu0 %v5358
        %v6077 = vpop.f32.mrf.mxu0
        %v6078 = vadd.f32 %v5267, %v6077
        %v6079 = vpop.f32.mrf.mxu0
        %v6080 = vadd.f32 %v5272, %v6079
        %6081 = vmatmul.bf16.gmra.mxu0 %v5359
        %v6082 = vpop.f32.mrf.mxu0
        %v6083 = vadd.f32 %v5277, %v6082
        %v6084 = vpop.f32.mrf.mxu0
        %v6085 = vadd.f32 %v5282, %v6084
        %6086 = vmatmul.bf16.gmra.mxu0 %v5360
        %v6087 = vpop.f32.mrf.mxu0
        %v6088 = vadd.f32 %v5287, %v6087
        %v6089 = vpop.f32.mrf.mxu0
        %v6090 = vadd.f32 %v5292, %v6089
        %6091 = vmatmul.bf16.gmra.mxu0 %v5361
        %v6092 = vpop.f32.mrf.mxu0
        %v6093 = vadd.f32 %v5297, %v6092
        %v6094 = vpop.f32.mrf.mxu0
        %v6095 = vadd.f32 %v5302, %v6094
        %6096 = vmatmul.bf16.gmra.mxu0 %v5362
        %v6097 = vpop.f32.mrf.mxu0
        %v6098 = vadd.f32 %v5307, %v6097
        %v6099 = vpop.f32.mrf.mxu0
        %v6100 = vadd.f32 %v5312, %v6099
        %6101 = vmatmul.bf16.gmra.mxu0 %v5363
        %v6102 = vpop.f32.mrf.mxu0
        %v6103 = vadd.f32 %v5317, %v6102
        %v6104 = vpop.f32.mrf.mxu0
        %v6105 = vadd.f32 %v5322, %v6104
        %6106 = vdwg.mxu0
        %6107 = vmatpush.bf16.msra.mxu0 %v5195
        %6108 = vmatpush.bf16.msra.mxu0 %v5163
        %6109 = vmatpush.bf16.msra.mxu0 %v5131
        %6110 = vmatpush.bf16.msra.mxu0 %v5099
        %6111 = vmatpush.bf16.msra.mxu0 %v5067
        %6112 = vmatpush.bf16.msra.mxu0 %v5035
        %6113 = vmatpush.bf16.msra.mxu0 %v5003
        %6114 = vmatpush.bf16.msra.mxu0 %v4971
        %6115 = vmatmul.bf16.gmra.mxu0 %v5356
        %v6116 = vpop.f32.mrf.mxu0
        %v6117 = vadd.f32 %v5247, %v6116
        %v6118 = vpop.f32.mrf.mxu0
        %v6119 = vadd.f32 %v5252, %v6118
        %6120 = vmatmul.bf16.gmra.mxu0 %v5357
        %v6121 = vpop.f32.mrf.mxu0
        %v6122 = vadd.f32 %v5257, %v6121
        %v6123 = vpop.f32.mrf.mxu0
        %v6124 = vadd.f32 %v5262, %v6123
        %6125 = vmatmul.bf16.gmra.mxu0 %v5358
        %v6126 = vpop.f32.mrf.mxu0
        %v6127 = vadd.f32 %v5267, %v6126
        %v6128 = vpop.f32.mrf.mxu0
        %v6129 = vadd.f32 %v5272, %v6128
        %6130 = vmatmul.bf16.gmra.mxu0 %v5359
        %v6131 = vpop.f32.mrf.mxu0
        %v6132 = vadd.f32 %v5277, %v6131
        %v6133 = vpop.f32.mrf.mxu0
        %v6134 = vadd.f32 %v5282, %v6133
        %6135 = vmatmul.bf16.gmra.mxu0 %v5360
        %v6136 = vpop.f32.mrf.mxu0
        %v6137 = vadd.f32 %v5287, %v6136
        %v6138 = vpop.f32.mrf.mxu0
        %v6139 = vadd.f32 %v5292, %v6138
        %6140 = vmatmul.bf16.gmra.mxu0 %v5361
        %v6141 = vpop.f32.mrf.mxu0
        %v6142 = vadd.f32 %v5297, %v6141
        %v6143 = vpop.f32.mrf.mxu0
        %v6144 = vadd.f32 %v5302, %v6143
        %6145 = vmatmul.bf16.gmra.mxu0 %v5362
        %v6146 = vpop.f32.mrf.mxu0
        %v6147 = vadd.f32 %v5307, %v6146
        %v6148 = vpop.f32.mrf.mxu0
        %v6149 = vadd.f32 %v5312, %v6148
        %6150 = vmatmul.bf16.gmra.mxu0 %v5363
        %v6151 = vpop.f32.mrf.mxu0
        %v6152 = vadd.f32 %v5317, %v6151
        %v6153 = vpop.f32.mrf.mxu0
        %v6154 = vadd.f32 %v5322, %v6153
        %6155 = vdwg.mxu0
        %6156 = vmatpush.bf16.msra.mxu0 %v5196
        %6157 = vmatpush.bf16.msra.mxu0 %v5164
        %6158 = vmatpush.bf16.msra.mxu0 %v5132
        %6159 = vmatpush.bf16.msra.mxu0 %v5100
        %6160 = vmatpush.bf16.msra.mxu0 %v5068
        %6161 = vmatpush.bf16.msra.mxu0 %v5036
        %6162 = vmatpush.bf16.msra.mxu0 %v5004
        %6163 = vmatpush.bf16.msra.mxu0 %v4972
        %6164 = vmatmul.bf16.gmra.mxu0 %v5356
        %v6165 = vpop.f32.mrf.mxu0
        %v6166 = vadd.f32 %v5247, %v6165
        %v6167 = vpop.f32.mrf.mxu0
        %v6168 = vadd.f32 %v5252, %v6167
        %6169 = vmatmul.bf16.gmra.mxu0 %v5357
        %v6170 = vpop.f32.mrf.mxu0
        %v6171 = vadd.f32 %v5257, %v6170
        %v6172 = vpop.f32.mrf.mxu0
        %v6173 = vadd.f32 %v5262, %v6172
        %6174 = vmatmul.bf16.gmra.mxu0 %v5358
        %v6175 = vpop.f32.mrf.mxu0
        %v6176 = vadd.f32 %v5267, %v6175
        %v6177 = vpop.f32.mrf.mxu0
        %v6178 = vadd.f32 %v5272, %v6177
        %6179 = vmatmul.bf16.gmra.mxu0 %v5359
        %v6180 = vpop.f32.mrf.mxu0
        %v6181 = vadd.f32 %v5277, %v6180
        %v6182 = vpop.f32.mrf.mxu0
        %v6183 = vadd.f32 %v5282, %v6182
        %6184 = vmatmul.bf16.gmra.mxu0 %v5360
        %v6185 = vpop.f32.mrf.mxu0
        %v6186 = vadd.f32 %v5287, %v6185
        %v6187 = vpop.f32.mrf.mxu0
        %v6188 = vadd.f32 %v5292, %v6187
        %6189 = vmatmul.bf16.gmra.mxu0 %v5361
        %v6190 = vpop.f32.mrf.mxu0
        %v6191 = vadd.f32 %v5297, %v6190
        %v6192 = vpop.f32.mrf.mxu0
        %v6193 = vadd.f32 %v5302, %v6192
        %6194 = vmatmul.bf16.gmra.mxu0 %v5362
        %v6195 = vpop.f32.mrf.mxu0
        %v6196 = vadd.f32 %v5307, %v6195
        %v6197 = vpop.f32.mrf.mxu0
        %v6198 = vadd.f32 %v5312, %v6197
        %6199 = vmatmul.bf16.gmra.mxu0 %v5363
        %v6200 = vpop.f32.mrf.mxu0
        %v6201 = vadd.f32 %v5317, %v6200
        %v6202 = vpop.f32.mrf.mxu0
        %v6203 = vadd.f32 %v5322, %v6202
        %6204 = vdwg.mxu0
        %6205 = vmatpush.bf16.msra.mxu0 %v5197
        %6206 = vmatpush.bf16.msra.mxu0 %v5165
        %6207 = vmatpush.bf16.msra.mxu0 %v5133
        %6208 = vmatpush.bf16.msra.mxu0 %v5101
        %6209 = vmatpush.bf16.msra.mxu0 %v5069
        %6210 = vmatpush.bf16.msra.mxu0 %v5037
        %6211 = vmatpush.bf16.msra.mxu0 %v5005
        %6212 = vmatpush.bf16.msra.mxu0 %v4973
        %6213 = vmatmul.bf16.gmra.mxu0 %v5356
        %v6214 = vpop.f32.mrf.mxu0
        %v6215 = vadd.f32 %v5247, %v6214
        %v6216 = vpop.f32.mrf.mxu0
        %v6217 = vadd.f32 %v5252, %v6216
        %6218 = vmatmul.bf16.gmra.mxu0 %v5357
        %v6219 = vpop.f32.mrf.mxu0
        %v6220 = vadd.f32 %v5257, %v6219
        %v6221 = vpop.f32.mrf.mxu0
        %v6222 = vadd.f32 %v5262, %v6221
        %6223 = vmatmul.bf16.gmra.mxu0 %v5358
        %v6224 = vpop.f32.mrf.mxu0
        %v6225 = vadd.f32 %v5267, %v6224
        %v6226 = vpop.f32.mrf.mxu0
        %v6227 = vadd.f32 %v5272, %v6226
        %6228 = vmatmul.bf16.gmra.mxu0 %v5359
        %v6229 = vpop.f32.mrf.mxu0
        %v6230 = vadd.f32 %v5277, %v6229
        %v6231 = vpop.f32.mrf.mxu0
        %v6232 = vadd.f32 %v5282, %v6231
        %6233 = vmatmul.bf16.gmra.mxu0 %v5360
        %v6234 = vpop.f32.mrf.mxu0
        %v6235 = vadd.f32 %v5287, %v6234
        %v6236 = vpop.f32.mrf.mxu0
        %v6237 = vadd.f32 %v5292, %v6236
        %6238 = vmatmul.bf16.gmra.mxu0 %v5361
        %v6239 = vpop.f32.mrf.mxu0
        %v6240 = vadd.f32 %v5297, %v6239
        %v6241 = vpop.f32.mrf.mxu0
        %v6242 = vadd.f32 %v5302, %v6241
        %6243 = vmatmul.bf16.gmra.mxu0 %v5362
        %v6244 = vpop.f32.mrf.mxu0
        %v6245 = vadd.f32 %v5307, %v6244
        %v6246 = vpop.f32.mrf.mxu0
        %v6247 = vadd.f32 %v5312, %v6246
        %6248 = vmatmul.bf16.gmra.mxu0 %v5363
        %v6249 = vpop.f32.mrf.mxu0
        %v6250 = vadd.f32 %v5317, %v6249
        %v6251 = vpop.f32.mrf.mxu0
        %v6252 = vadd.f32 %v5322, %v6251
        %6253 = vdwg.mxu0
        %6254 = vmatpush.bf16.msra.mxu0 %v5198
        %6255 = vmatpush.bf16.msra.mxu0 %v5166
        %6256 = vmatpush.bf16.msra.mxu0 %v5134
        %6257 = vmatpush.bf16.msra.mxu0 %v5102
        %6258 = vmatpush.bf16.msra.mxu0 %v5070
        %6259 = vmatpush.bf16.msra.mxu0 %v5038
        %6260 = vmatpush.bf16.msra.mxu0 %v5006
        %6261 = vmatpush.bf16.msra.mxu0 %v4974
        %6262 = vmatmul.bf16.gmra.mxu0 %v5356
        %v6263 = vpop.f32.mrf.mxu0
        %v6264 = vadd.f32 %v5247, %v6263
        %v6265 = vpop.f32.mrf.mxu0
        %v6266 = vadd.f32 %v5252, %v6265
        %6267 = vmatmul.bf16.gmra.mxu0 %v5357
        %v6268 = vpop.f32.mrf.mxu0
        %v6269 = vadd.f32 %v5257, %v6268
        %v6270 = vpop.f32.mrf.mxu0
        %v6271 = vadd.f32 %v5262, %v6270
        %6272 = vmatmul.bf16.gmra.mxu0 %v5358
        %v6273 = vpop.f32.mrf.mxu0
        %v6274 = vadd.f32 %v5267, %v6273
        %v6275 = vpop.f32.mrf.mxu0
        %v6276 = vadd.f32 %v5272, %v6275
        %6277 = vmatmul.bf16.gmra.mxu0 %v5359
        %v6278 = vpop.f32.mrf.mxu0
        %v6279 = vadd.f32 %v5277, %v6278
        %v6280 = vpop.f32.mrf.mxu0
        %v6281 = vadd.f32 %v5282, %v6280
        %6282 = vmatmul.bf16.gmra.mxu0 %v5360
        %v6283 = vpop.f32.mrf.mxu0
        %v6284 = vadd.f32 %v5287, %v6283
        %v6285 = vpop.f32.mrf.mxu0
        %v6286 = vadd.f32 %v5292, %v6285
        %6287 = vmatmul.bf16.gmra.mxu0 %v5361
        %v6288 = vpop.f32.mrf.mxu0
        %v6289 = vadd.f32 %v5297, %v6288
        %v6290 = vpop.f32.mrf.mxu0
        %v6291 = vadd.f32 %v5302, %v6290
        %6292 = vmatmul.bf16.gmra.mxu0 %v5362
        %v6293 = vpop.f32.mrf.mxu0
        %v6294 = vadd.f32 %v5307, %v6293
        %v6295 = vpop.f32.mrf.mxu0
        %v6296 = vadd.f32 %v5312, %v6295
        %6297 = vmatmul.bf16.gmra.mxu0 %v5363
        %v6298 = vpop.f32.mrf.mxu0
        %v6299 = vadd.f32 %v5317, %v6298
        %v6300 = vpop.f32.mrf.mxu0
        %v6301 = vadd.f32 %v5322, %v6300
        %6302 = vdwg.mxu0
        %6303 = vmatpush.bf16.msra.mxu0 %v5199
        %6304 = vmatpush.bf16.msra.mxu0 %v5167
        %6305 = vmatpush.bf16.msra.mxu0 %v5135
        %6306 = vmatpush.bf16.msra.mxu0 %v5103
        %6307 = vmatpush.bf16.msra.mxu0 %v5071
        %6308 = vmatpush.bf16.msra.mxu0 %v5039
        %6309 = vmatpush.bf16.msra.mxu0 %v5007
        %6310 = vmatpush.bf16.msra.mxu0 %v4975
        %6311 = vmatmul.bf16.gmra.mxu0 %v5356
        %v6312 = vpop.f32.mrf.mxu0
        %v6313 = vadd.f32 %v5247, %v6312
        %v6314 = vpop.f32.mrf.mxu0
        %v6315 = vadd.f32 %v5252, %v6314
        %6316 = vmatmul.bf16.gmra.mxu0 %v5357
        %v6317 = vpop.f32.mrf.mxu0
        %v6318 = vadd.f32 %v5257, %v6317
        %v6319 = vpop.f32.mrf.mxu0
        %v6320 = vadd.f32 %v5262, %v6319
        %6321 = vmatmul.bf16.gmra.mxu0 %v5358
        %v6322 = vpop.f32.mrf.mxu0
        %v6323 = vadd.f32 %v5267, %v6322
        %v6324 = vpop.f32.mrf.mxu0
        %v6325 = vadd.f32 %v5272, %v6324
        %6326 = vmatmul.bf16.gmra.mxu0 %v5359
        %v6327 = vpop.f32.mrf.mxu0
        %v6328 = vadd.f32 %v5277, %v6327
        %v6329 = vpop.f32.mrf.mxu0
        %v6330 = vadd.f32 %v5282, %v6329
        %6331 = vmatmul.bf16.gmra.mxu0 %v5360
        %v6332 = vpop.f32.mrf.mxu0
        %v6333 = vadd.f32 %v5287, %v6332
        %v6334 = vpop.f32.mrf.mxu0
        %v6335 = vadd.f32 %v5292, %v6334
        %6336 = vmatmul.bf16.gmra.mxu0 %v5361
        %v6337 = vpop.f32.mrf.mxu0
        %v6338 = vadd.f32 %v5297, %v6337
        %v6339 = vpop.f32.mrf.mxu0
        %v6340 = vadd.f32 %v5302, %v6339
        %6341 = vmatmul.bf16.gmra.mxu0 %v5362
        %v6342 = vpop.f32.mrf.mxu0
        %v6343 = vadd.f32 %v5307, %v6342
        %v6344 = vpop.f32.mrf.mxu0
        %v6345 = vadd.f32 %v5312, %v6344
        %6346 = vmatmul.bf16.gmra.mxu0 %v5363
        %v6347 = vpop.f32.mrf.mxu0
        %v6348 = vadd.f32 %v5317, %v6347
        %v6349 = vpop.f32.mrf.mxu0
        %v6350 = vadd.f32 %v5322, %v6349
        %6351 = vdwg.mxu0
        %6352 = vmatpush.bf16.msra.mxu0 %v5200
        %6353 = vmatpush.bf16.msra.mxu0 %v5168
        %6354 = vmatpush.bf16.msra.mxu0 %v5136
        %6355 = vmatpush.bf16.msra.mxu0 %v5104
        %6356 = vmatpush.bf16.msra.mxu0 %v5072
        %6357 = vmatpush.bf16.msra.mxu0 %v5040
        %6358 = vmatpush.bf16.msra.mxu0 %v5008
        %6359 = vmatpush.bf16.msra.mxu0 %v4976
        %6360 = vmatmul.bf16.gmra.mxu0 %v5356
        %v6361 = vpop.f32.mrf.mxu0
        %v6362 = vadd.f32 %v5247, %v6361
        %v6363 = vpop.f32.mrf.mxu0
        %v6364 = vadd.f32 %v5252, %v6363
        %6365 = vmatmul.bf16.gmra.mxu0 %v5357
        %v6366 = vpop.f32.mrf.mxu0
        %v6367 = vadd.f32 %v5257, %v6366
        %v6368 = vpop.f32.mrf.mxu0
        %v6369 = vadd.f32 %v5262, %v6368
        %6370 = vmatmul.bf16.gmra.mxu0 %v5358
        %v6371 = vpop.f32.mrf.mxu0
        %v6372 = vadd.f32 %v5267, %v6371
        %v6373 = vpop.f32.mrf.mxu0
        %v6374 = vadd.f32 %v5272, %v6373
        %6375 = vmatmul.bf16.gmra.mxu0 %v5359
        %v6376 = vpop.f32.mrf.mxu0
        %v6377 = vadd.f32 %v5277, %v6376
        %v6378 = vpop.f32.mrf.mxu0
        %v6379 = vadd.f32 %v5282, %v6378
        %6380 = vmatmul.bf16.gmra.mxu0 %v5360
        %v6381 = vpop.f32.mrf.mxu0
        %v6382 = vadd.f32 %v5287, %v6381
        %v6383 = vpop.f32.mrf.mxu0
        %v6384 = vadd.f32 %v5292, %v6383
        %6385 = vmatmul.bf16.gmra.mxu0 %v5361
        %v6386 = vpop.f32.mrf.mxu0
        %v6387 = vadd.f32 %v5297, %v6386
        %v6388 = vpop.f32.mrf.mxu0
        %v6389 = vadd.f32 %v5302, %v6388
        %6390 = vmatmul.bf16.gmra.mxu0 %v5362
        %v6391 = vpop.f32.mrf.mxu0
        %v6392 = vadd.f32 %v5307, %v6391
        %v6393 = vpop.f32.mrf.mxu0
        %v6394 = vadd.f32 %v5312, %v6393
        %6395 = vmatmul.bf16.gmra.mxu0 %v5363
        %v6396 = vpop.f32.mrf.mxu0
        %v6397 = vadd.f32 %v5317, %v6396
        %v6398 = vpop.f32.mrf.mxu0
        %v6399 = vadd.f32 %v5322, %v6398
        %6400 = vdwg.mxu0
        %6401 = vmatpush.bf16.msra.mxu0 %v5201
        %6402 = vmatpush.bf16.msra.mxu0 %v5169
        %6403 = vmatpush.bf16.msra.mxu0 %v5137
        %6404 = vmatpush.bf16.msra.mxu0 %v5105
        %6405 = vmatpush.bf16.msra.mxu0 %v5073
        %6406 = vmatpush.bf16.msra.mxu0 %v5041
        %6407 = vmatpush.bf16.msra.mxu0 %v5009
        %6408 = vmatpush.bf16.msra.mxu0 %v4977
        %6409 = vmatmul.bf16.gmra.mxu0 %v5356
        %v6410 = vpop.f32.mrf.mxu0
        %v6411 = vadd.f32 %v5247, %v6410
        %v6412 = vpop.f32.mrf.mxu0
        %v6413 = vadd.f32 %v5252, %v6412
        %6414 = vmatmul.bf16.gmra.mxu0 %v5357
        %v6415 = vpop.f32.mrf.mxu0
        %v6416 = vadd.f32 %v5257, %v6415
        %v6417 = vpop.f32.mrf.mxu0
        %v6418 = vadd.f32 %v5262, %v6417
        %6419 = vmatmul.bf16.gmra.mxu0 %v5358
        %v6420 = vpop.f32.mrf.mxu0
        %v6421 = vadd.f32 %v5267, %v6420
        %v6422 = vpop.f32.mrf.mxu0
        %v6423 = vadd.f32 %v5272, %v6422
        %6424 = vmatmul.bf16.gmra.mxu0 %v5359
        %v6425 = vpop.f32.mrf.mxu0
        %v6426 = vadd.f32 %v5277, %v6425
        %v6427 = vpop.f32.mrf.mxu0
        %v6428 = vadd.f32 %v5282, %v6427
        %6429 = vmatmul.bf16.gmra.mxu0 %v5360
        %v6430 = vpop.f32.mrf.mxu0
        %v6431 = vadd.f32 %v5287, %v6430
        %v6432 = vpop.f32.mrf.mxu0
        %v6433 = vadd.f32 %v5292, %v6432
        %6434 = vmatmul.bf16.gmra.mxu0 %v5361
        %v6435 = vpop.f32.mrf.mxu0
        %v6436 = vadd.f32 %v5297, %v6435
        %v6437 = vpop.f32.mrf.mxu0
        %v6438 = vadd.f32 %v5302, %v6437
        %6439 = vmatmul.bf16.gmra.mxu0 %v5362
        %v6440 = vpop.f32.mrf.mxu0
        %v6441 = vadd.f32 %v5307, %v6440
        %v6442 = vpop.f32.mrf.mxu0
        %v6443 = vadd.f32 %v5312, %v6442
        %6444 = vmatmul.bf16.gmra.mxu0 %v5363
        %v6445 = vpop.f32.mrf.mxu0
        %v6446 = vadd.f32 %v5317, %v6445
        %v6447 = vpop.f32.mrf.mxu0
        %v6448 = vadd.f32 %v5322, %v6447
        %6449 = vdwg.mxu0
        %6450 = vmatpush.bf16.msra.mxu0 %v5202
        %6451 = vmatpush.bf16.msra.mxu0 %v5170
        %6452 = vmatpush.bf16.msra.mxu0 %v5138
        %6453 = vmatpush.bf16.msra.mxu0 %v5106
        %6454 = vmatpush.bf16.msra.mxu0 %v5074
        %6455 = vmatpush.bf16.msra.mxu0 %v5042
        %6456 = vmatpush.bf16.msra.mxu0 %v5010
        %6457 = vmatpush.bf16.msra.mxu0 %v4978
        %6458 = vmatmul.bf16.gmra.mxu0 %v5356
        %v6459 = vpop.f32.mrf.mxu0
        %v6460 = vadd.f32 %v5247, %v6459
        %v6461 = vpop.f32.mrf.mxu0
        %v6462 = vadd.f32 %v5252, %v6461
        %6463 = vmatmul.bf16.gmra.mxu0 %v5357
        %v6464 = vpop.f32.mrf.mxu0
        %v6465 = vadd.f32 %v5257, %v6464
        %v6466 = vpop.f32.mrf.mxu0
        %v6467 = vadd.f32 %v5262, %v6466
        %6468 = vmatmul.bf16.gmra.mxu0 %v5358
        %v6469 = vpop.f32.mrf.mxu0
        %v6470 = vadd.f32 %v5267, %v6469
        %v6471 = vpop.f32.mrf.mxu0
        %v6472 = vadd.f32 %v5272, %v6471
        %6473 = vmatmul.bf16.gmra.mxu0 %v5359
        %v6474 = vpop.f32.mrf.mxu0
        %v6475 = vadd.f32 %v5277, %v6474
        %v6476 = vpop.f32.mrf.mxu0
        %v6477 = vadd.f32 %v5282, %v6476
        %6478 = vmatmul.bf16.gmra.mxu0 %v5360
        %v6479 = vpop.f32.mrf.mxu0
        %v6480 = vadd.f32 %v5287, %v6479
        %v6481 = vpop.f32.mrf.mxu0
        %v6482 = vadd.f32 %v5292, %v6481
        %6483 = vmatmul.bf16.gmra.mxu0 %v5361
        %v6484 = vpop.f32.mrf.mxu0
        %v6485 = vadd.f32 %v5297, %v6484
        %v6486 = vpop.f32.mrf.mxu0
        %v6487 = vadd.f32 %v5302, %v6486
        %6488 = vmatmul.bf16.gmra.mxu0 %v5362
        %v6489 = vpop.f32.mrf.mxu0
        %v6490 = vadd.f32 %v5307, %v6489
        %v6491 = vpop.f32.mrf.mxu0
        %v6492 = vadd.f32 %v5312, %v6491
        %6493 = vmatmul.bf16.gmra.mxu0 %v5363
        %v6494 = vpop.f32.mrf.mxu0
        %v6495 = vadd.f32 %v5317, %v6494
        %v6496 = vpop.f32.mrf.mxu0
        %v6497 = vadd.f32 %v5322, %v6496
        %6498 = vdwg.mxu0
        %6499 = vmatpush.bf16.msra.mxu0 %v5203
        %6500 = vmatpush.bf16.msra.mxu0 %v5171
        %6501 = vmatpush.bf16.msra.mxu0 %v5139
        %6502 = vmatpush.bf16.msra.mxu0 %v5107
        %6503 = vmatpush.bf16.msra.mxu0 %v5075
        %6504 = vmatpush.bf16.msra.mxu0 %v5043
        %6505 = vmatpush.bf16.msra.mxu0 %v5011
        %6506 = vmatpush.bf16.msra.mxu0 %v4979
        %6507 = vmatmul.bf16.gmra.mxu0 %v5356
        %v6508 = vpop.f32.mrf.mxu0
        %v6509 = vadd.f32 %v5247, %v6508
        %v6510 = vpop.f32.mrf.mxu0
        %v6511 = vadd.f32 %v5252, %v6510
        %6512 = vmatmul.bf16.gmra.mxu0 %v5357
        %v6513 = vpop.f32.mrf.mxu0
        %v6514 = vadd.f32 %v5257, %v6513
        %v6515 = vpop.f32.mrf.mxu0
        %v6516 = vadd.f32 %v5262, %v6515
        %6517 = vmatmul.bf16.gmra.mxu0 %v5358
        %v6518 = vpop.f32.mrf.mxu0
        %v6519 = vadd.f32 %v5267, %v6518
        %v6520 = vpop.f32.mrf.mxu0
        %v6521 = vadd.f32 %v5272, %v6520
        %6522 = vmatmul.bf16.gmra.mxu0 %v5359
        %v6523 = vpop.f32.mrf.mxu0
        %v6524 = vadd.f32 %v5277, %v6523
        %v6525 = vpop.f32.mrf.mxu0
        %v6526 = vadd.f32 %v5282, %v6525
        %6527 = vmatmul.bf16.gmra.mxu0 %v5360
        %v6528 = vpop.f32.mrf.mxu0
        %v6529 = vadd.f32 %v5287, %v6528
        %v6530 = vpop.f32.mrf.mxu0
        %v6531 = vadd.f32 %v5292, %v6530
        %6532 = vmatmul.bf16.gmra.mxu0 %v5361
        %v6533 = vpop.f32.mrf.mxu0
        %v6534 = vadd.f32 %v5297, %v6533
        %v6535 = vpop.f32.mrf.mxu0
        %v6536 = vadd.f32 %v5302, %v6535
        %6537 = vmatmul.bf16.gmra.mxu0 %v5362
        %v6538 = vpop.f32.mrf.mxu0
        %v6539 = vadd.f32 %v5307, %v6538
        %v6540 = vpop.f32.mrf.mxu0
        %v6541 = vadd.f32 %v5312, %v6540
        %6542 = vmatmul.bf16.gmra.mxu0 %v5363
        %v6543 = vpop.f32.mrf.mxu0
        %v6544 = vadd.f32 %v5317, %v6543
        %v6545 = vpop.f32.mrf.mxu0
        %v6546 = vadd.f32 %v5322, %v6545
        %6547 = vdwg.mxu0
        %6548 = vmatpush.bf16.msra.mxu0 %v5204
        %6549 = vmatpush.bf16.msra.mxu0 %v5172
        %6550 = vmatpush.bf16.msra.mxu0 %v5140
        %6551 = vmatpush.bf16.msra.mxu0 %v5108
        %6552 = vmatpush.bf16.msra.mxu0 %v5076
        %6553 = vmatpush.bf16.msra.mxu0 %v5044
        %6554 = vmatpush.bf16.msra.mxu0 %v5012
        %6555 = vmatpush.bf16.msra.mxu0 %v4980
        %6556 = vmatmul.bf16.gmra.mxu0 %v5356
        %v6557 = vpop.f32.mrf.mxu0
        %v6558 = vadd.f32 %v5247, %v6557
        %v6559 = vpop.f32.mrf.mxu0
        %v6560 = vadd.f32 %v5252, %v6559
        %6561 = vmatmul.bf16.gmra.mxu0 %v5357
        %v6562 = vpop.f32.mrf.mxu0
        %v6563 = vadd.f32 %v5257, %v6562
        %v6564 = vpop.f32.mrf.mxu0
        %v6565 = vadd.f32 %v5262, %v6564
        %6566 = vmatmul.bf16.gmra.mxu0 %v5358
        %v6567 = vpop.f32.mrf.mxu0
        %v6568 = vadd.f32 %v5267, %v6567
        %v6569 = vpop.f32.mrf.mxu0
        %v6570 = vadd.f32 %v5272, %v6569
        %6571 = vmatmul.bf16.gmra.mxu0 %v5359
        %v6572 = vpop.f32.mrf.mxu0
        %v6573 = vadd.f32 %v5277, %v6572
        %v6574 = vpop.f32.mrf.mxu0
        %v6575 = vadd.f32 %v5282, %v6574
        %6576 = vmatmul.bf16.gmra.mxu0 %v5360
        %v6577 = vpop.f32.mrf.mxu0
        %v6578 = vadd.f32 %v5287, %v6577
        %v6579 = vpop.f32.mrf.mxu0
        %v6580 = vadd.f32 %v5292, %v6579
        %6581 = vmatmul.bf16.gmra.mxu0 %v5361
        %v6582 = vpop.f32.mrf.mxu0
        %v6583 = vadd.f32 %v5297, %v6582
        %v6584 = vpop.f32.mrf.mxu0
        %v6585 = vadd.f32 %v5302, %v6584
        %6586 = vmatmul.bf16.gmra.mxu0 %v5362
        %v6587 = vpop.f32.mrf.mxu0
        %v6588 = vadd.f32 %v5307, %v6587
        %v6589 = vpop.f32.mrf.mxu0
        %v6590 = vadd.f32 %v5312, %v6589
        %6591 = vmatmul.bf16.gmra.mxu0 %v5363
        %v6592 = vpop.f32.mrf.mxu0
        %v6593 = vadd.f32 %v5317, %v6592
        %v6594 = vpop.f32.mrf.mxu0
        %v6595 = vadd.f32 %v5322, %v6594
        %6596 = vdwg.mxu0
        %6597 = vmatpush.bf16.msra.mxu0 %v5205
        %6598 = vmatpush.bf16.msra.mxu0 %v5173
        %6599 = vmatpush.bf16.msra.mxu0 %v5141
        %6600 = vmatpush.bf16.msra.mxu0 %v5109
        %6601 = vmatpush.bf16.msra.mxu0 %v5077
        %6602 = vmatpush.bf16.msra.mxu0 %v5045
        %6603 = vmatpush.bf16.msra.mxu0 %v5013
        %6604 = vmatpush.bf16.msra.mxu0 %v4981
        %6605 = vmatmul.bf16.gmra.mxu0 %v5356
        %v6606 = vpop.f32.mrf.mxu0
        %v6607 = vadd.f32 %v5247, %v6606
        %v6608 = vpop.f32.mrf.mxu0
        %v6609 = vadd.f32 %v5252, %v6608
        %6610 = vmatmul.bf16.gmra.mxu0 %v5357
        %v6611 = vpop.f32.mrf.mxu0
        %v6612 = vadd.f32 %v5257, %v6611
        %v6613 = vpop.f32.mrf.mxu0
        %v6614 = vadd.f32 %v5262, %v6613
        %6615 = vmatmul.bf16.gmra.mxu0 %v5358
        %v6616 = vpop.f32.mrf.mxu0
        %v6617 = vadd.f32 %v5267, %v6616
        %v6618 = vpop.f32.mrf.mxu0
        %v6619 = vadd.f32 %v5272, %v6618
        %6620 = vmatmul.bf16.gmra.mxu0 %v5359
        %v6621 = vpop.f32.mrf.mxu0
        %v6622 = vadd.f32 %v5277, %v6621
        %v6623 = vpop.f32.mrf.mxu0
        %v6624 = vadd.f32 %v5282, %v6623
        %6625 = vmatmul.bf16.gmra.mxu0 %v5360
        %v6626 = vpop.f32.mrf.mxu0
        %v6627 = vadd.f32 %v5287, %v6626
        %v6628 = vpop.f32.mrf.mxu0
        %v6629 = vadd.f32 %v5292, %v6628
        %6630 = vmatmul.bf16.gmra.mxu0 %v5361
        %v6631 = vpop.f32.mrf.mxu0
        %v6632 = vadd.f32 %v5297, %v6631
        %v6633 = vpop.f32.mrf.mxu0
        %v6634 = vadd.f32 %v5302, %v6633
        %6635 = vmatmul.bf16.gmra.mxu0 %v5362
        %v6636 = vpop.f32.mrf.mxu0
        %v6637 = vadd.f32 %v5307, %v6636
        %v6638 = vpop.f32.mrf.mxu0
        %v6639 = vadd.f32 %v5312, %v6638
        %6640 = vmatmul.bf16.gmra.mxu0 %v5363
        %v6641 = vpop.f32.mrf.mxu0
        %v6642 = vadd.f32 %v5317, %v6641
        %v6643 = vpop.f32.mrf.mxu0
        %v6644 = vadd.f32 %v5322, %v6643
        %6645 = vdwg.mxu0
        %6646 = vmatpush.bf16.msra.mxu0 %v5206
        %6647 = vmatpush.bf16.msra.mxu0 %v5174
        %6648 = vmatpush.bf16.msra.mxu0 %v5142
        %6649 = vmatpush.bf16.msra.mxu0 %v5110
        %6650 = vmatpush.bf16.msra.mxu0 %v5078
        %6651 = vmatpush.bf16.msra.mxu0 %v5046
        %6652 = vmatpush.bf16.msra.mxu0 %v5014
        %6653 = vmatpush.bf16.msra.mxu0 %v4982
        %6654 = vmatmul.bf16.gmra.mxu0 %v5356
        %v6655 = vpop.f32.mrf.mxu0
        %v6656 = vadd.f32 %v5247, %v6655
        %v6657 = vpop.f32.mrf.mxu0
        %v6658 = vadd.f32 %v5252, %v6657
        %6659 = vmatmul.bf16.gmra.mxu0 %v5357
        %v6660 = vpop.f32.mrf.mxu0
        %v6661 = vadd.f32 %v5257, %v6660
        %v6662 = vpop.f32.mrf.mxu0
        %v6663 = vadd.f32 %v5262, %v6662
        %6664 = vmatmul.bf16.gmra.mxu0 %v5358
        %v6665 = vpop.f32.mrf.mxu0
        %v6666 = vadd.f32 %v5267, %v6665
        %v6667 = vpop.f32.mrf.mxu0
        %v6668 = vadd.f32 %v5272, %v6667
        %6669 = vmatmul.bf16.gmra.mxu0 %v5359
        %v6670 = vpop.f32.mrf.mxu0
        %v6671 = vadd.f32 %v5277, %v6670
        %v6672 = vpop.f32.mrf.mxu0
        %v6673 = vadd.f32 %v5282, %v6672
        %6674 = vmatmul.bf16.gmra.mxu0 %v5360
        %v6675 = vpop.f32.mrf.mxu0
        %v6676 = vadd.f32 %v5287, %v6675
        %v6677 = vpop.f32.mrf.mxu0
        %v6678 = vadd.f32 %v5292, %v6677
        %6679 = vmatmul.bf16.gmra.mxu0 %v5361
        %v6680 = vpop.f32.mrf.mxu0
        %v6681 = vadd.f32 %v5297, %v6680
        %v6682 = vpop.f32.mrf.mxu0
        %v6683 = vadd.f32 %v5302, %v6682
        %6684 = vmatmul.bf16.gmra.mxu0 %v5362
        %v6685 = vpop.f32.mrf.mxu0
        %v6686 = vadd.f32 %v5307, %v6685
        %v6687 = vpop.f32.mrf.mxu0
        %v6688 = vadd.f32 %v5312, %v6687
        %6689 = vmatmul.bf16.gmra.mxu0 %v5363
        %v6690 = vpop.f32.mrf.mxu0
        %v6691 = vadd.f32 %v5317, %v6690
        %v6692 = vpop.f32.mrf.mxu0
        %v6693 = vadd.f32 %v5322, %v6692
        %6694 = vdwg.mxu0
        %6695 = vmatpush.bf16.msra.mxu0 %v5207
        %6696 = vmatpush.bf16.msra.mxu0 %v5175
        %6697 = vmatpush.bf16.msra.mxu0 %v5143
        %6698 = vmatpush.bf16.msra.mxu0 %v5111
        %6699 = vmatpush.bf16.msra.mxu0 %v5079
        %6700 = vmatpush.bf16.msra.mxu0 %v5047
        %6701 = vmatpush.bf16.msra.mxu0 %v5015
        %6702 = vmatpush.bf16.msra.mxu0 %v4983
        %6703 = vmatmul.bf16.gmra.mxu0 %v5356
        %v6704 = vpop.f32.mrf.mxu0
        %v6705 = vadd.f32 %v5247, %v6704
        %v6706 = vpop.f32.mrf.mxu0
        %v6707 = vadd.f32 %v5252, %v6706
        %6708 = vmatmul.bf16.gmra.mxu0 %v5357
        %v6709 = vpop.f32.mrf.mxu0
        %v6710 = vadd.f32 %v5257, %v6709
        %v6711 = vpop.f32.mrf.mxu0
        %v6712 = vadd.f32 %v5262, %v6711
        %6713 = vmatmul.bf16.gmra.mxu0 %v5358
        %v6714 = vpop.f32.mrf.mxu0
        %v6715 = vadd.f32 %v5267, %v6714
        %v6716 = vpop.f32.mrf.mxu0
        %v6717 = vadd.f32 %v5272, %v6716
        %6718 = vmatmul.bf16.gmra.mxu0 %v5359
        %v6719 = vpop.f32.mrf.mxu0
        %v6720 = vadd.f32 %v5277, %v6719
        %v6721 = vpop.f32.mrf.mxu0
        %v6722 = vadd.f32 %v5282, %v6721
        %6723 = vmatmul.bf16.gmra.mxu0 %v5360
        %v6724 = vpop.f32.mrf.mxu0
        %v6725 = vadd.f32 %v5287, %v6724
        %v6726 = vpop.f32.mrf.mxu0
        %v6727 = vadd.f32 %v5292, %v6726
        %6728 = vmatmul.bf16.gmra.mxu0 %v5361
        %v6729 = vpop.f32.mrf.mxu0
        %v6730 = vadd.f32 %v5297, %v6729
        %v6731 = vpop.f32.mrf.mxu0
        %v6732 = vadd.f32 %v5302, %v6731
        %6733 = vmatmul.bf16.gmra.mxu0 %v5362
        %v6734 = vpop.f32.mrf.mxu0
        %v6735 = vadd.f32 %v5307, %v6734
        %v6736 = vpop.f32.mrf.mxu0
        %v6737 = vadd.f32 %v5312, %v6736
        %6738 = vmatmul.bf16.gmra.mxu0 %v5363
        %v6739 = vpop.f32.mrf.mxu0
        %v6740 = vadd.f32 %v5317, %v6739
        %v6741 = vpop.f32.mrf.mxu0
        %v6742 = vadd.f32 %v5322, %v6741
        %6743 = vdwg.mxu0
        %6744 = vmatpush.bf16.msra.mxu0 %v5208
        %6745 = vmatpush.bf16.msra.mxu0 %v5176
        %6746 = vmatpush.bf16.msra.mxu0 %v5144
        %6747 = vmatpush.bf16.msra.mxu0 %v5112
        %6748 = vmatpush.bf16.msra.mxu0 %v5080
        %6749 = vmatpush.bf16.msra.mxu0 %v5048
        %6750 = vmatpush.bf16.msra.mxu0 %v5016
        %6751 = vmatpush.bf16.msra.mxu0 %v4984
        %6752 = vmatmul.bf16.gmra.mxu0 %v5356
        %v6753 = vpop.f32.mrf.mxu0
        %v6754 = vadd.f32 %v5247, %v6753
        %v6755 = vpop.f32.mrf.mxu0
        %v6756 = vadd.f32 %v5252, %v6755
        %6757 = vmatmul.bf16.gmra.mxu0 %v5357
        %v6758 = vpop.f32.mrf.mxu0
        %v6759 = vadd.f32 %v5257, %v6758
        %v6760 = vpop.f32.mrf.mxu0
        %v6761 = vadd.f32 %v5262, %v6760
        %6762 = vmatmul.bf16.gmra.mxu0 %v5358
        %v6763 = vpop.f32.mrf.mxu0
        %v6764 = vadd.f32 %v5267, %v6763
        %v6765 = vpop.f32.mrf.mxu0
        %v6766 = vadd.f32 %v5272, %v6765
        %6767 = vmatmul.bf16.gmra.mxu0 %v5359
        %v6768 = vpop.f32.mrf.mxu0
        %v6769 = vadd.f32 %v5277, %v6768
        %v6770 = vpop.f32.mrf.mxu0
        %v6771 = vadd.f32 %v5282, %v6770
        %6772 = vmatmul.bf16.gmra.mxu0 %v5360
        %v6773 = vpop.f32.mrf.mxu0
        %v6774 = vadd.f32 %v5287, %v6773
        %v6775 = vpop.f32.mrf.mxu0
        %v6776 = vadd.f32 %v5292, %v6775
        %6777 = vmatmul.bf16.gmra.mxu0 %v5361
        %v6778 = vpop.f32.mrf.mxu0
        %v6779 = vadd.f32 %v5297, %v6778
        %v6780 = vpop.f32.mrf.mxu0
        %v6781 = vadd.f32 %v5302, %v6780
        %6782 = vmatmul.bf16.gmra.mxu0 %v5362
        %v6783 = vpop.f32.mrf.mxu0
        %v6784 = vadd.f32 %v5307, %v6783
        %v6785 = vpop.f32.mrf.mxu0
        %v6786 = vadd.f32 %v5312, %v6785
        %6787 = vmatmul.bf16.gmra.mxu0 %v5363
        %v6788 = vpop.f32.mrf.mxu0
        %v6789 = vadd.f32 %v5317, %v6788
        %v6790 = vpop.f32.mrf.mxu0
        %v6791 = vadd.f32 %v5322, %v6790
        %6792 = vdwg.mxu0
        %6793 = vmatpush.bf16.msra.mxu0 %v5209
        %6794 = vmatpush.bf16.msra.mxu0 %v5177
        %6795 = vmatpush.bf16.msra.mxu0 %v5145
        %6796 = vmatpush.bf16.msra.mxu0 %v5113
        %6797 = vmatpush.bf16.msra.mxu0 %v5081
        %6798 = vmatpush.bf16.msra.mxu0 %v5049
        %6799 = vmatpush.bf16.msra.mxu0 %v5017
        %6800 = vmatpush.bf16.msra.mxu0 %v4985
        %6801 = vmatmul.bf16.gmra.mxu0 %v5356
        %v6802 = vpop.f32.mrf.mxu0
        %v6803 = vadd.f32 %v5247, %v6802
        %v6804 = vpop.f32.mrf.mxu0
        %v6805 = vadd.f32 %v5252, %v6804
        %6806 = vmatmul.bf16.gmra.mxu0 %v5357
        %v6807 = vpop.f32.mrf.mxu0
        %v6808 = vadd.f32 %v5257, %v6807
        %v6809 = vpop.f32.mrf.mxu0
        %v6810 = vadd.f32 %v5262, %v6809
        %6811 = vmatmul.bf16.gmra.mxu0 %v5358
        %v6812 = vpop.f32.mrf.mxu0
        %v6813 = vadd.f32 %v5267, %v6812
        %v6814 = vpop.f32.mrf.mxu0
        %v6815 = vadd.f32 %v5272, %v6814
        %6816 = vmatmul.bf16.gmra.mxu0 %v5359
        %v6817 = vpop.f32.mrf.mxu0
        %v6818 = vadd.f32 %v5277, %v6817
        %v6819 = vpop.f32.mrf.mxu0
        %v6820 = vadd.f32 %v5282, %v6819
        %6821 = vmatmul.bf16.gmra.mxu0 %v5360
        %v6822 = vpop.f32.mrf.mxu0
        %v6823 = vadd.f32 %v5287, %v6822
        %v6824 = vpop.f32.mrf.mxu0
        %v6825 = vadd.f32 %v5292, %v6824
        %6826 = vmatmul.bf16.gmra.mxu0 %v5361
        %v6827 = vpop.f32.mrf.mxu0
        %v6828 = vadd.f32 %v5297, %v6827
        %v6829 = vpop.f32.mrf.mxu0
        %v6830 = vadd.f32 %v5302, %v6829
        %6831 = vmatmul.bf16.gmra.mxu0 %v5362
        %v6832 = vpop.f32.mrf.mxu0
        %v6833 = vadd.f32 %v5307, %v6832
        %v6834 = vpop.f32.mrf.mxu0
        %v6835 = vadd.f32 %v5312, %v6834
        %6836 = vmatmul.bf16.gmra.mxu0 %v5363
        %v6837 = vpop.f32.mrf.mxu0
        %v6838 = vadd.f32 %v5317, %v6837
        %v6839 = vpop.f32.mrf.mxu0
        %v6840 = vadd.f32 %v5322, %v6839
        %6841 = vdwg.mxu0
        %6842 = vmatpush.bf16.msra.mxu0 %v5210
        %6843 = vmatpush.bf16.msra.mxu0 %v5178
        %6844 = vmatpush.bf16.msra.mxu0 %v5146
        %6845 = vmatpush.bf16.msra.mxu0 %v5114
        %6846 = vmatpush.bf16.msra.mxu0 %v5082
        %6847 = vmatpush.bf16.msra.mxu0 %v5050
        %6848 = vmatpush.bf16.msra.mxu0 %v5018
        %6849 = vmatpush.bf16.msra.mxu0 %v4986
        %6850 = vmatmul.bf16.gmra.mxu0 %v5356
        %v6851 = vpop.f32.mrf.mxu0
        %v6852 = vadd.f32 %v5247, %v6851
        %v6853 = vpop.f32.mrf.mxu0
        %v6854 = vadd.f32 %v5252, %v6853
        %6855 = vmatmul.bf16.gmra.mxu0 %v5357
        %v6856 = vpop.f32.mrf.mxu0
        %v6857 = vadd.f32 %v5257, %v6856
        %v6858 = vpop.f32.mrf.mxu0
        %v6859 = vadd.f32 %v5262, %v6858
        %6860 = vmatmul.bf16.gmra.mxu0 %v5358
        %v6861 = vpop.f32.mrf.mxu0
        %v6862 = vadd.f32 %v5267, %v6861
        %v6863 = vpop.f32.mrf.mxu0
        %v6864 = vadd.f32 %v5272, %v6863
        %6865 = vmatmul.bf16.gmra.mxu0 %v5359
        %v6866 = vpop.f32.mrf.mxu0
        %v6867 = vadd.f32 %v5277, %v6866
        %v6868 = vpop.f32.mrf.mxu0
        %v6869 = vadd.f32 %v5282, %v6868
        %6870 = vmatmul.bf16.gmra.mxu0 %v5360
        %v6871 = vpop.f32.mrf.mxu0
        %v6872 = vadd.f32 %v5287, %v6871
        %v6873 = vpop.f32.mrf.mxu0
        %v6874 = vadd.f32 %v5292, %v6873
        %6875 = vmatmul.bf16.gmra.mxu0 %v5361
        %v6876 = vpop.f32.mrf.mxu0
        %v6877 = vadd.f32 %v5297, %v6876
        %v6878 = vpop.f32.mrf.mxu0
        %v6879 = vadd.f32 %v5302, %v6878
        %6880 = vmatmul.bf16.gmra.mxu0 %v5362
        %v6881 = vpop.f32.mrf.mxu0
        %v6882 = vadd.f32 %v5307, %v6881
        %v6883 = vpop.f32.mrf.mxu0
        %v6884 = vadd.f32 %v5312, %v6883
        %6885 = vmatmul.bf16.gmra.mxu0 %v5363
        %v6886 = vpop.f32.mrf.mxu0
        %v6887 = vadd.f32 %v5317, %v6886
        %v6888 = vpop.f32.mrf.mxu0
        %v6889 = vadd.f32 %v5322, %v6888
        %6890 = vdwg.mxu0
        %6891 = vmatpush.bf16.msra.mxu0 %v5211
        %6892 = vmatpush.bf16.msra.mxu0 %v5179
        %6893 = vmatpush.bf16.msra.mxu0 %v5147
        %6894 = vmatpush.bf16.msra.mxu0 %v5115
        %6895 = vmatpush.bf16.msra.mxu0 %v5083
        %6896 = vmatpush.bf16.msra.mxu0 %v5051
        %6897 = vmatpush.bf16.msra.mxu0 %v5019
        %6898 = vmatpush.bf16.msra.mxu0 %v4987
        %6899 = vmatmul.bf16.gmra.mxu0 %v5356
        %v6900 = vpop.f32.mrf.mxu0
        %v6901 = vadd.f32 %v5247, %v6900
        %v6902 = vpop.f32.mrf.mxu0
        %v6903 = vadd.f32 %v5252, %v6902
        %6904 = vmatmul.bf16.gmra.mxu0 %v5357
        %v6905 = vpop.f32.mrf.mxu0
        %v6906 = vadd.f32 %v5257, %v6905
        %v6907 = vpop.f32.mrf.mxu0
        %v6908 = vadd.f32 %v5262, %v6907
        %6909 = vmatmul.bf16.gmra.mxu0 %v5358
        %v6910 = vpop.f32.mrf.mxu0
        %v6911 = vadd.f32 %v5267, %v6910
        %v6912 = vpop.f32.mrf.mxu0
        %v6913 = vadd.f32 %v5272, %v6912
        %6914 = vmatmul.bf16.gmra.mxu0 %v5359
        %v6915 = vpop.f32.mrf.mxu0
        %v6916 = vadd.f32 %v5277, %v6915
        %v6917 = vpop.f32.mrf.mxu0
        %v6918 = vadd.f32 %v5282, %v6917
        %6919 = vmatmul.bf16.gmra.mxu0 %v5360
        %v6920 = vpop.f32.mrf.mxu0
        %v6921 = vadd.f32 %v5287, %v6920
        %v6922 = vpop.f32.mrf.mxu0
        %v6923 = vadd.f32 %v5292, %v6922
        %6924 = vmatmul.bf16.gmra.mxu0 %v5361
        %v6925 = vpop.f32.mrf.mxu0
        %v6926 = vadd.f32 %v5297, %v6925
        %v6927 = vpop.f32.mrf.mxu0
        %v6928 = vadd.f32 %v5302, %v6927
        %6929 = vmatmul.bf16.gmra.mxu0 %v5362
        %v6930 = vpop.f32.mrf.mxu0
        %v6931 = vadd.f32 %v5307, %v6930
        %v6932 = vpop.f32.mrf.mxu0
        %v6933 = vadd.f32 %v5312, %v6932
        %6934 = vmatmul.bf16.gmra.mxu0 %v5363
        %v6935 = vpop.f32.mrf.mxu0
        %v6936 = vadd.f32 %v5317, %v6935
        %v6937 = vpop.f32.mrf.mxu0
        %v6938 = vadd.f32 %v5322, %v6937
        %6939 = vdwg.mxu0
        %v6940 = vmax.f32 %v5382, %v5431
        %v6941 = vmax.f32 %v6940, %v5480
        %v6942 = vmax.f32 %v6941, %v5529
        %v6943 = vmax.f32 %v6942, %v5578
        %v6944 = vmax.f32 %v6943, %v5627
        %v6945 = vmax.f32 %v6944, %v5676
        %v6946 = vmax.f32 %v6945, %v5725
        %6947 = vmax.xlane.f32.xlu0 %v6946
        %v6948 = vpop.xlane.xlu0 %6947
        %v6949 = vmax.f32 %v5384, %v5433
        %v6950 = vmax.f32 %v6949, %v5482
        %v6951 = vmax.f32 %v6950, %v5531
        %v6952 = vmax.f32 %v6951, %v5580
        %v6953 = vmax.f32 %v6952, %v5629
        %v6954 = vmax.f32 %v6953, %v5678
        %v6955 = vmax.f32 %v6954, %v5727
        %6956 = vmax.xlane.f32.xlu0 %v6955
        %v6957 = vpop.xlane.xlu0 %6956
        %v6958 = vmax.f32 %v5387, %v5436
        %v6959 = vmax.f32 %v6958, %v5485
        %v6960 = vmax.f32 %v6959, %v5534
        %v6961 = vmax.f32 %v6960, %v5583
        %v6962 = vmax.f32 %v6961, %v5632
        %v6963 = vmax.f32 %v6962, %v5681
        %v6964 = vmax.f32 %v6963, %v5730
        %6965 = vmax.xlane.f32.xlu0 %v6964
        %v6966 = vpop.xlane.xlu0 %6965
        %v6967 = vmax.f32 %v5389, %v5438
        %v6968 = vmax.f32 %v6967, %v5487
        %v6969 = vmax.f32 %v6968, %v5536
        %v6970 = vmax.f32 %v6969, %v5585
        %v6971 = vmax.f32 %v6970, %v5634
        %v6972 = vmax.f32 %v6971, %v5683
        %v6973 = vmax.f32 %v6972, %v5732
        %6974 = vmax.xlane.f32.xlu0 %v6973
        %v6975 = vpop.xlane.xlu0 %6974
        %v6976 = vmax.f32 %v5392, %v5441
        %v6977 = vmax.f32 %v6976, %v5490
        %v6978 = vmax.f32 %v6977, %v5539
        %v6979 = vmax.f32 %v6978, %v5588
        %v6980 = vmax.f32 %v6979, %v5637
        %v6981 = vmax.f32 %v6980, %v5686
        %v6982 = vmax.f32 %v6981, %v5735
        %6983 = vmax.xlane.f32.xlu0 %v6982
        %v6984 = vpop.xlane.xlu0 %6983
        %v6985 = vmax.f32 %v5394, %v5443
        %v6986 = vmax.f32 %v6985, %v5492
        %v6987 = vmax.f32 %v6986, %v5541
        %v6988 = vmax.f32 %v6987, %v5590
        %v6989 = vmax.f32 %v6988, %v5639
        %v6990 = vmax.f32 %v6989, %v5688
        %v6991 = vmax.f32 %v6990, %v5737
        %6992 = vmax.xlane.f32.xlu0 %v6991
        %v6993 = vpop.xlane.xlu0 %6992
        %v6994 = vmax.f32 %v5397, %v5446
        %v6995 = vmax.f32 %v6994, %v5495
        %v6996 = vmax.f32 %v6995, %v5544
        %v6997 = vmax.f32 %v6996, %v5593
        %v6998 = vmax.f32 %v6997, %v5642
        %v6999 = vmax.f32 %v6998, %v5691
        %v7000 = vmax.f32 %v6999, %v5740
        %7001 = vmax.xlane.f32.xlu0 %v7000
        %v7002 = vpop.xlane.xlu0 %7001
        %v7003 = vmax.f32 %v5399, %v5448
        %v7004 = vmax.f32 %v7003, %v5497
        %v7005 = vmax.f32 %v7004, %v5546
        %v7006 = vmax.f32 %v7005, %v5595
        %v7007 = vmax.f32 %v7006, %v5644
        %v7008 = vmax.f32 %v7007, %v5693
        %v7009 = vmax.f32 %v7008, %v5742
        %7010 = vmax.xlane.f32.xlu0 %v7009
        %v7011 = vpop.xlane.xlu0 %7010
        %v7012 = vmax.f32 %v5402, %v5451
        %v7013 = vmax.f32 %v7012, %v5500
        %v7014 = vmax.f32 %v7013, %v5549
        %v7015 = vmax.f32 %v7014, %v5598
        %v7016 = vmax.f32 %v7015, %v5647
        %v7017 = vmax.f32 %v7016, %v5696
        %v7018 = vmax.f32 %v7017, %v5745
        %7019 = vmax.xlane.f32.xlu0 %v7018
        %v7020 = vpop.xlane.xlu0 %7019
        %v7021 = vmax.f32 %v5404, %v5453
        %v7022 = vmax.f32 %v7021, %v5502
        %v7023 = vmax.f32 %v7022, %v5551
        %v7024 = vmax.f32 %v7023, %v5600
        %v7025 = vmax.f32 %v7024, %v5649
        %v7026 = vmax.f32 %v7025, %v5698
        %v7027 = vmax.f32 %v7026, %v5747
        %7028 = vmax.xlane.f32.xlu0 %v7027
        %v7029 = vpop.xlane.xlu0 %7028
        %v7030 = vmax.f32 %v5407, %v5456
        %v7031 = vmax.f32 %v7030, %v5505
        %v7032 = vmax.f32 %v7031, %v5554
        %v7033 = vmax.f32 %v7032, %v5603
        %v7034 = vmax.f32 %v7033, %v5652
        %v7035 = vmax.f32 %v7034, %v5701
        %v7036 = vmax.f32 %v7035, %v5750
        %7037 = vmax.xlane.f32.xlu0 %v7036
        %v7038 = vpop.xlane.xlu0 %7037
        %v7039 = vmax.f32 %v5409, %v5458
        %v7040 = vmax.f32 %v7039, %v5507
        %v7041 = vmax.f32 %v7040, %v5556
        %v7042 = vmax.f32 %v7041, %v5605
        %v7043 = vmax.f32 %v7042, %v5654
        %v7044 = vmax.f32 %v7043, %v5703
        %v7045 = vmax.f32 %v7044, %v5752
        %7046 = vmax.xlane.f32.xlu0 %v7045
        %v7047 = vpop.xlane.xlu0 %7046
        %v7048 = vmax.f32 %v5412, %v5461
        %v7049 = vmax.f32 %v7048, %v5510
        %v7050 = vmax.f32 %v7049, %v5559
        %v7051 = vmax.f32 %v7050, %v5608
        %v7052 = vmax.f32 %v7051, %v5657
        %v7053 = vmax.f32 %v7052, %v5706
        %v7054 = vmax.f32 %v7053, %v5755
        %7055 = vmax.xlane.f32.xlu0 %v7054
        %v7056 = vpop.xlane.xlu0 %7055
        %v7057 = vmax.f32 %v5414, %v5463
        %v7058 = vmax.f32 %v7057, %v5512
        %v7059 = vmax.f32 %v7058, %v5561
        %v7060 = vmax.f32 %v7059, %v5610
        %v7061 = vmax.f32 %v7060, %v5659
        %v7062 = vmax.f32 %v7061, %v5708
        %v7063 = vmax.f32 %v7062, %v5757
        %7064 = vmax.xlane.f32.xlu0 %v7063
        %v7065 = vpop.xlane.xlu0 %7064
        %v7066 = vmax.f32 %v5417, %v5466
        %v7067 = vmax.f32 %v7066, %v5515
        %v7068 = vmax.f32 %v7067, %v5564
        %v7069 = vmax.f32 %v7068, %v5613
        %v7070 = vmax.f32 %v7069, %v5662
        %v7071 = vmax.f32 %v7070, %v5711
        %v7072 = vmax.f32 %v7071, %v5760
        %7073 = vmax.xlane.f32.xlu0 %v7072
        %v7074 = vpop.xlane.xlu0 %7073
        %v7075 = vmax.f32 %v5419, %v5468
        %v7076 = vmax.f32 %v7075, %v5517
        %v7077 = vmax.f32 %v7076, %v5566
        %v7078 = vmax.f32 %v7077, %v5615
        %v7079 = vmax.f32 %v7078, %v5664
        %v7080 = vmax.f32 %v7079, %v5713
        %v7081 = vmax.f32 %v7080, %v5762
        %7082 = vmax.xlane.f32.xlu0 %v7081
        %v7083 = vpop.xlane.xlu0 %7082
        %v7084 = vmax.f32 %v5774, %v5823
        %v7085 = vmax.f32 %v7084, %v5872
        %v7086 = vmax.f32 %v7085, %v5921
        %v7087 = vmax.f32 %v7086, %v5970
        %v7088 = vmax.f32 %v7087, %v6019
        %v7089 = vmax.f32 %v7088, %v6068
        %v7090 = vmax.f32 %v7089, %v6117
        %7091 = vmax.xlane.f32.xlu0 %v7090
        %v7092 = vpop.xlane.xlu0 %7091
        %v7093 = vmax.f32 %v5776, %v5825
        %v7094 = vmax.f32 %v7093, %v5874
        %v7095 = vmax.f32 %v7094, %v5923
        %v7096 = vmax.f32 %v7095, %v5972
        %v7097 = vmax.f32 %v7096, %v6021
        %v7098 = vmax.f32 %v7097, %v6070
        %v7099 = vmax.f32 %v7098, %v6119
        %7100 = vmax.xlane.f32.xlu0 %v7099
        %v7101 = vpop.xlane.xlu0 %7100
        %v7102 = vmax.f32 %v5779, %v5828
        %v7103 = vmax.f32 %v7102, %v5877
        %v7104 = vmax.f32 %v7103, %v5926
        %v7105 = vmax.f32 %v7104, %v5975
        %v7106 = vmax.f32 %v7105, %v6024
        %v7107 = vmax.f32 %v7106, %v6073
        %v7108 = vmax.f32 %v7107, %v6122
        %7109 = vmax.xlane.f32.xlu0 %v7108
        %v7110 = vpop.xlane.xlu0 %7109
        %v7111 = vmax.f32 %v5781, %v5830
        %v7112 = vmax.f32 %v7111, %v5879
        %v7113 = vmax.f32 %v7112, %v5928
        %v7114 = vmax.f32 %v7113, %v5977
        %v7115 = vmax.f32 %v7114, %v6026
        %v7116 = vmax.f32 %v7115, %v6075
        %v7117 = vmax.f32 %v7116, %v6124
        %7118 = vmax.xlane.f32.xlu0 %v7117
        %v7119 = vpop.xlane.xlu0 %7118
        %v7120 = vmax.f32 %v5784, %v5833
        %v7121 = vmax.f32 %v7120, %v5882
        %v7122 = vmax.f32 %v7121, %v5931
        %v7123 = vmax.f32 %v7122, %v5980
        %v7124 = vmax.f32 %v7123, %v6029
        %v7125 = vmax.f32 %v7124, %v6078
        %v7126 = vmax.f32 %v7125, %v6127
        %7127 = vmax.xlane.f32.xlu0 %v7126
        %v7128 = vpop.xlane.xlu0 %7127
        %v7129 = vmax.f32 %v5786, %v5835
        %v7130 = vmax.f32 %v7129, %v5884
        %v7131 = vmax.f32 %v7130, %v5933
        %v7132 = vmax.f32 %v7131, %v5982
        %v7133 = vmax.f32 %v7132, %v6031
        %v7134 = vmax.f32 %v7133, %v6080
        %v7135 = vmax.f32 %v7134, %v6129
        %7136 = vmax.xlane.f32.xlu0 %v7135
        %v7137 = vpop.xlane.xlu0 %7136
        %v7138 = vmax.f32 %v5789, %v5838
        %v7139 = vmax.f32 %v7138, %v5887
        %v7140 = vmax.f32 %v7139, %v5936
        %v7141 = vmax.f32 %v7140, %v5985
        %v7142 = vmax.f32 %v7141, %v6034
        %v7143 = vmax.f32 %v7142, %v6083
        %v7144 = vmax.f32 %v7143, %v6132
        %7145 = vmax.xlane.f32.xlu0 %v7144
        %v7146 = vpop.xlane.xlu0 %7145
        %v7147 = vmax.f32 %v5791, %v5840
        %v7148 = vmax.f32 %v7147, %v5889
        %v7149 = vmax.f32 %v7148, %v5938
        %v7150 = vmax.f32 %v7149, %v5987
        %v7151 = vmax.f32 %v7150, %v6036
        %v7152 = vmax.f32 %v7151, %v6085
        %v7153 = vmax.f32 %v7152, %v6134
        %7154 = vmax.xlane.f32.xlu0 %v7153
        %v7155 = vpop.xlane.xlu0 %7154
        %v7156 = vmax.f32 %v5794, %v5843
        %v7157 = vmax.f32 %v7156, %v5892
        %v7158 = vmax.f32 %v7157, %v5941
        %v7159 = vmax.f32 %v7158, %v5990
        %v7160 = vmax.f32 %v7159, %v6039
        %v7161 = vmax.f32 %v7160, %v6088
        %v7162 = vmax.f32 %v7161, %v6137
        %7163 = vmax.xlane.f32.xlu0 %v7162
        %v7164 = vpop.xlane.xlu0 %7163
        %v7165 = vmax.f32 %v5796, %v5845
        %v7166 = vmax.f32 %v7165, %v5894
        %v7167 = vmax.f32 %v7166, %v5943
        %v7168 = vmax.f32 %v7167, %v5992
        %v7169 = vmax.f32 %v7168, %v6041
        %v7170 = vmax.f32 %v7169, %v6090
        %v7171 = vmax.f32 %v7170, %v6139
        %7172 = vmax.xlane.f32.xlu0 %v7171
        %v7173 = vpop.xlane.xlu0 %7172
        %v7174 = vmax.f32 %v5799, %v5848
        %v7175 = vmax.f32 %v7174, %v5897
        %v7176 = vmax.f32 %v7175, %v5946
        %v7177 = vmax.f32 %v7176, %v5995
        %v7178 = vmax.f32 %v7177, %v6044
        %v7179 = vmax.f32 %v7178, %v6093
        %v7180 = vmax.f32 %v7179, %v6142
        %7181 = vmax.xlane.f32.xlu0 %v7180
        %v7182 = vpop.xlane.xlu0 %7181
        %v7183 = vmax.f32 %v5801, %v5850
        %v7184 = vmax.f32 %v7183, %v5899
        %v7185 = vmax.f32 %v7184, %v5948
        %v7186 = vmax.f32 %v7185, %v5997
        %v7187 = vmax.f32 %v7186, %v6046
        %v7188 = vmax.f32 %v7187, %v6095
        %v7189 = vmax.f32 %v7188, %v6144
        %7190 = vmax.xlane.f32.xlu0 %v7189
        %v7191 = vpop.xlane.xlu0 %7190
        %v7192 = vmax.f32 %v5804, %v5853
        %v7193 = vmax.f32 %v7192, %v5902
        %v7194 = vmax.f32 %v7193, %v5951
        %v7195 = vmax.f32 %v7194, %v6000
        %v7196 = vmax.f32 %v7195, %v6049
        %v7197 = vmax.f32 %v7196, %v6098
        %v7198 = vmax.f32 %v7197, %v6147
        %7199 = vmax.xlane.f32.xlu0 %v7198
        %v7200 = vpop.xlane.xlu0 %7199
        %v7201 = vmax.f32 %v5806, %v5855
        %v7202 = vmax.f32 %v7201, %v5904
        %v7203 = vmax.f32 %v7202, %v5953
        %v7204 = vmax.f32 %v7203, %v6002
        %v7205 = vmax.f32 %v7204, %v6051
        %v7206 = vmax.f32 %v7205, %v6100
        %v7207 = vmax.f32 %v7206, %v6149
        %7208 = vmax.xlane.f32.xlu0 %v7207
        %v7209 = vpop.xlane.xlu0 %7208
        %v7210 = vmax.f32 %v5809, %v5858
        %v7211 = vmax.f32 %v7210, %v5907
        %v7212 = vmax.f32 %v7211, %v5956
        %v7213 = vmax.f32 %v7212, %v6005
        %v7214 = vmax.f32 %v7213, %v6054
        %v7215 = vmax.f32 %v7214, %v6103
        %v7216 = vmax.f32 %v7215, %v6152
        %7217 = vmax.xlane.f32.xlu0 %v7216
        %v7218 = vpop.xlane.xlu0 %7217
        %v7219 = vmax.f32 %v5811, %v5860
        %v7220 = vmax.f32 %v7219, %v5909
        %v7221 = vmax.f32 %v7220, %v5958
        %v7222 = vmax.f32 %v7221, %v6007
        %v7223 = vmax.f32 %v7222, %v6056
        %v7224 = vmax.f32 %v7223, %v6105
        %v7225 = vmax.f32 %v7224, %v6154
        %7226 = vmax.xlane.f32.xlu0 %v7225
        %v7227 = vpop.xlane.xlu0 %7226
        %v7228 = vmax.f32 %v6166, %v6215
        %v7229 = vmax.f32 %v7228, %v6264
        %v7230 = vmax.f32 %v7229, %v6313
        %v7231 = vmax.f32 %v7230, %v6362
        %v7232 = vmax.f32 %v7231, %v6411
        %v7233 = vmax.f32 %v7232, %v6460
        %v7234 = vmax.f32 %v7233, %v6509
        %7235 = vmax.xlane.f32.xlu0 %v7234
        %v7236 = vpop.xlane.xlu0 %7235
        %v7237 = vmax.f32 %v6168, %v6217
        %v7238 = vmax.f32 %v7237, %v6266
        %v7239 = vmax.f32 %v7238, %v6315
        %v7240 = vmax.f32 %v7239, %v6364
        %v7241 = vmax.f32 %v7240, %v6413
        %v7242 = vmax.f32 %v7241, %v6462
        %v7243 = vmax.f32 %v7242, %v6511
        %7244 = vmax.xlane.f32.xlu0 %v7243
        %v7245 = vpop.xlane.xlu0 %7244
        %v7246 = vmax.f32 %v6171, %v6220
        %v7247 = vmax.f32 %v7246, %v6269
        %v7248 = vmax.f32 %v7247, %v6318
        %v7249 = vmax.f32 %v7248, %v6367
        %v7250 = vmax.f32 %v7249, %v6416
        %v7251 = vmax.f32 %v7250, %v6465
        %v7252 = vmax.f32 %v7251, %v6514
        %7253 = vmax.xlane.f32.xlu0 %v7252
        %v7254 = vpop.xlane.xlu0 %7253
        %v7255 = vmax.f32 %v6173, %v6222
        %v7256 = vmax.f32 %v7255, %v6271
        %v7257 = vmax.f32 %v7256, %v6320
        %v7258 = vmax.f32 %v7257, %v6369
        %v7259 = vmax.f32 %v7258, %v6418
        %v7260 = vmax.f32 %v7259, %v6467
        %v7261 = vmax.f32 %v7260, %v6516
        %7262 = vmax.xlane.f32.xlu0 %v7261
        %v7263 = vpop.xlane.xlu0 %7262
        %v7264 = vmax.f32 %v6176, %v6225
        %v7265 = vmax.f32 %v7264, %v6274
        %v7266 = vmax.f32 %v7265, %v6323
        %v7267 = vmax.f32 %v7266, %v6372
        %v7268 = vmax.f32 %v7267, %v6421
        %v7269 = vmax.f32 %v7268, %v6470
        %v7270 = vmax.f32 %v7269, %v6519
        %7271 = vmax.xlane.f32.xlu0 %v7270
        %v7272 = vpop.xlane.xlu0 %7271
        %v7273 = vmax.f32 %v6178, %v6227
        %v7274 = vmax.f32 %v7273, %v6276
        %v7275 = vmax.f32 %v7274, %v6325
        %v7276 = vmax.f32 %v7275, %v6374
        %v7277 = vmax.f32 %v7276, %v6423
        %v7278 = vmax.f32 %v7277, %v6472
        %v7279 = vmax.f32 %v7278, %v6521
        %7280 = vmax.xlane.f32.xlu0 %v7279
        %v7281 = vpop.xlane.xlu0 %7280
        %v7282 = vmax.f32 %v6181, %v6230
        %v7283 = vmax.f32 %v7282, %v6279
        %v7284 = vmax.f32 %v7283, %v6328
        %v7285 = vmax.f32 %v7284, %v6377
        %v7286 = vmax.f32 %v7285, %v6426
        %v7287 = vmax.f32 %v7286, %v6475
        %v7288 = vmax.f32 %v7287, %v6524
        %7289 = vmax.xlane.f32.xlu0 %v7288
        %v7290 = vpop.xlane.xlu0 %7289
        %v7291 = vmax.f32 %v6183, %v6232
        %v7292 = vmax.f32 %v7291, %v6281
        %v7293 = vmax.f32 %v7292, %v6330
        %v7294 = vmax.f32 %v7293, %v6379
        %v7295 = vmax.f32 %v7294, %v6428
        %v7296 = vmax.f32 %v7295, %v6477
        %v7297 = vmax.f32 %v7296, %v6526
        %7298 = vmax.xlane.f32.xlu0 %v7297
        %v7299 = vpop.xlane.xlu0 %7298
        %v7300 = vmax.f32 %v6186, %v6235
        %v7301 = vmax.f32 %v7300, %v6284
        %v7302 = vmax.f32 %v7301, %v6333
        %v7303 = vmax.f32 %v7302, %v6382
        %v7304 = vmax.f32 %v7303, %v6431
        %v7305 = vmax.f32 %v7304, %v6480
        %v7306 = vmax.f32 %v7305, %v6529
        %7307 = vmax.xlane.f32.xlu0 %v7306
        %v7308 = vpop.xlane.xlu0 %7307
        %v7309 = vmax.f32 %v6188, %v6237
        %v7310 = vmax.f32 %v7309, %v6286
        %v7311 = vmax.f32 %v7310, %v6335
        %v7312 = vmax.f32 %v7311, %v6384
        %v7313 = vmax.f32 %v7312, %v6433
        %v7314 = vmax.f32 %v7313, %v6482
        %v7315 = vmax.f32 %v7314, %v6531
        %7316 = vmax.xlane.f32.xlu0 %v7315
        %v7317 = vpop.xlane.xlu0 %7316
        %v7318 = vmax.f32 %v6191, %v6240
        %v7319 = vmax.f32 %v7318, %v6289
        %v7320 = vmax.f32 %v7319, %v6338
        %v7321 = vmax.f32 %v7320, %v6387
        %v7322 = vmax.f32 %v7321, %v6436
        %v7323 = vmax.f32 %v7322, %v6485
        %v7324 = vmax.f32 %v7323, %v6534
        %7325 = vmax.xlane.f32.xlu0 %v7324
        %v7326 = vpop.xlane.xlu0 %7325
        %v7327 = vmax.f32 %v6193, %v6242
        %v7328 = vmax.f32 %v7327, %v6291
        %v7329 = vmax.f32 %v7328, %v6340
        %v7330 = vmax.f32 %v7329, %v6389
        %v7331 = vmax.f32 %v7330, %v6438
        %v7332 = vmax.f32 %v7331, %v6487
        %v7333 = vmax.f32 %v7332, %v6536
        %7334 = vmax.xlane.f32.xlu0 %v7333
        %v7335 = vpop.xlane.xlu0 %7334
        %v7336 = vmax.f32 %v6196, %v6245
        %v7337 = vmax.f32 %v7336, %v6294
        %v7338 = vmax.f32 %v7337, %v6343
        %v7339 = vmax.f32 %v7338, %v6392
        %v7340 = vmax.f32 %v7339, %v6441
        %v7341 = vmax.f32 %v7340, %v6490
        %v7342 = vmax.f32 %v7341, %v6539
        %7343 = vmax.xlane.f32.xlu0 %v7342
        %v7344 = vpop.xlane.xlu0 %7343
        %v7345 = vmax.f32 %v6198, %v6247
        %v7346 = vmax.f32 %v7345, %v6296
        %v7347 = vmax.f32 %v7346, %v6345
        %v7348 = vmax.f32 %v7347, %v6394
        %v7349 = vmax.f32 %v7348, %v6443
        %v7350 = vmax.f32 %v7349, %v6492
        %v7351 = vmax.f32 %v7350, %v6541
        %7352 = vmax.xlane.f32.xlu0 %v7351
        %v7353 = vpop.xlane.xlu0 %7352
        %v7354 = vmax.f32 %v6201, %v6250
        %v7355 = vmax.f32 %v7354, %v6299
        %v7356 = vmax.f32 %v7355, %v6348
        %v7357 = vmax.f32 %v7356, %v6397
        %v7358 = vmax.f32 %v7357, %v6446
        %v7359 = vmax.f32 %v7358, %v6495
        %v7360 = vmax.f32 %v7359, %v6544
        %7361 = vmax.xlane.f32.xlu0 %v7360
        %v7362 = vpop.xlane.xlu0 %7361
        %v7363 = vmax.f32 %v6203, %v6252
        %v7364 = vmax.f32 %v7363, %v6301
        %v7365 = vmax.f32 %v7364, %v6350
        %v7366 = vmax.f32 %v7365, %v6399
        %v7367 = vmax.f32 %v7366, %v6448
        %v7368 = vmax.f32 %v7367, %v6497
        %v7369 = vmax.f32 %v7368, %v6546
        %7370 = vmax.xlane.f32.xlu0 %v7369
        %v7371 = vpop.xlane.xlu0 %7370
        %v7372 = vmax.f32 %v6558, %v6607
        %v7373 = vmax.f32 %v7372, %v6656
        %v7374 = vmax.f32 %v7373, %v6705
        %v7375 = vmax.f32 %v7374, %v6754
        %v7376 = vmax.f32 %v7375, %v6803
        %v7377 = vmax.f32 %v7376, %v6852
        %v7378 = vmax.f32 %v7377, %v6901
        %7379 = vmax.xlane.f32.xlu0 %v7378
        %v7380 = vpop.xlane.xlu0 %7379
        %v7381 = vmax.f32 %v6560, %v6609
        %v7382 = vmax.f32 %v7381, %v6658
        %v7383 = vmax.f32 %v7382, %v6707
        %v7384 = vmax.f32 %v7383, %v6756
        %v7385 = vmax.f32 %v7384, %v6805
        %v7386 = vmax.f32 %v7385, %v6854
        %v7387 = vmax.f32 %v7386, %v6903
        %7388 = vmax.xlane.f32.xlu0 %v7387
        %v7389 = vpop.xlane.xlu0 %7388
        %v7390 = vmax.f32 %v6563, %v6612
        %v7391 = vmax.f32 %v7390, %v6661
        %v7392 = vmax.f32 %v7391, %v6710
        %v7393 = vmax.f32 %v7392, %v6759
        %v7394 = vmax.f32 %v7393, %v6808
        %v7395 = vmax.f32 %v7394, %v6857
        %v7396 = vmax.f32 %v7395, %v6906
        %7397 = vmax.xlane.f32.xlu0 %v7396
        %v7398 = vpop.xlane.xlu0 %7397
        %v7399 = vmax.f32 %v6565, %v6614
        %v7400 = vmax.f32 %v7399, %v6663
        %v7401 = vmax.f32 %v7400, %v6712
        %v7402 = vmax.f32 %v7401, %v6761
        %v7403 = vmax.f32 %v7402, %v6810
        %v7404 = vmax.f32 %v7403, %v6859
        %v7405 = vmax.f32 %v7404, %v6908
        %7406 = vmax.xlane.f32.xlu0 %v7405
        %v7407 = vpop.xlane.xlu0 %7406
        %v7408 = vmax.f32 %v6568, %v6617
        %v7409 = vmax.f32 %v7408, %v6666
        %v7410 = vmax.f32 %v7409, %v6715
        %v7411 = vmax.f32 %v7410, %v6764
        %v7412 = vmax.f32 %v7411, %v6813
        %v7413 = vmax.f32 %v7412, %v6862
        %v7414 = vmax.f32 %v7413, %v6911
        %7415 = vmax.xlane.f32.xlu0 %v7414
        %v7416 = vpop.xlane.xlu0 %7415
        %v7417 = vmax.f32 %v6570, %v6619
        %v7418 = vmax.f32 %v7417, %v6668
        %v7419 = vmax.f32 %v7418, %v6717
        %v7420 = vmax.f32 %v7419, %v6766
        %v7421 = vmax.f32 %v7420, %v6815
        %v7422 = vmax.f32 %v7421, %v6864
        %v7423 = vmax.f32 %v7422, %v6913
        %7424 = vmax.xlane.f32.xlu0 %v7423
        %v7425 = vpop.xlane.xlu0 %7424
        %v7426 = vmax.f32 %v6573, %v6622
        %v7427 = vmax.f32 %v7426, %v6671
        %v7428 = vmax.f32 %v7427, %v6720
        %v7429 = vmax.f32 %v7428, %v6769
        %v7430 = vmax.f32 %v7429, %v6818
        %v7431 = vmax.f32 %v7430, %v6867
        %v7432 = vmax.f32 %v7431, %v6916
        %7433 = vmax.xlane.f32.xlu0 %v7432
        %v7434 = vpop.xlane.xlu0 %7433
        %v7435 = vmax.f32 %v6575, %v6624
        %v7436 = vmax.f32 %v7435, %v6673
        %v7437 = vmax.f32 %v7436, %v6722
        %v7438 = vmax.f32 %v7437, %v6771
        %v7439 = vmax.f32 %v7438, %v6820
        %v7440 = vmax.f32 %v7439, %v6869
        %v7441 = vmax.f32 %v7440, %v6918
        %7442 = vmax.xlane.f32.xlu0 %v7441
        %v7443 = vpop.xlane.xlu0 %7442
        %v7444 = vmax.f32 %v6578, %v6627
        %v7445 = vmax.f32 %v7444, %v6676
        %v7446 = vmax.f32 %v7445, %v6725
        %v7447 = vmax.f32 %v7446, %v6774
        %v7448 = vmax.f32 %v7447, %v6823
        %v7449 = vmax.f32 %v7448, %v6872
        %v7450 = vmax.f32 %v7449, %v6921
        %7451 = vmax.xlane.f32.xlu0 %v7450
        %v7452 = vpop.xlane.xlu0 %7451
        %v7453 = vmax.f32 %v6580, %v6629
        %v7454 = vmax.f32 %v7453, %v6678
        %v7455 = vmax.f32 %v7454, %v6727
        %v7456 = vmax.f32 %v7455, %v6776
        %v7457 = vmax.f32 %v7456, %v6825
        %v7458 = vmax.f32 %v7457, %v6874
        %v7459 = vmax.f32 %v7458, %v6923
        %7460 = vmax.xlane.f32.xlu0 %v7459
        %v7461 = vpop.xlane.xlu0 %7460
        %v7462 = vmax.f32 %v6583, %v6632
        %v7463 = vmax.f32 %v7462, %v6681
        %v7464 = vmax.f32 %v7463, %v6730
        %v7465 = vmax.f32 %v7464, %v6779
        %v7466 = vmax.f32 %v7465, %v6828
        %v7467 = vmax.f32 %v7466, %v6877
        %v7468 = vmax.f32 %v7467, %v6926
        %7469 = vmax.xlane.f32.xlu0 %v7468
        %v7470 = vpop.xlane.xlu0 %7469
        %v7471 = vmax.f32 %v6585, %v6634
        %v7472 = vmax.f32 %v7471, %v6683
        %v7473 = vmax.f32 %v7472, %v6732
        %v7474 = vmax.f32 %v7473, %v6781
        %v7475 = vmax.f32 %v7474, %v6830
        %v7476 = vmax.f32 %v7475, %v6879
        %v7477 = vmax.f32 %v7476, %v6928
        %7478 = vmax.xlane.f32.xlu0 %v7477
        %v7479 = vpop.xlane.xlu0 %7478
        %v7480 = vmax.f32 %v6588, %v6637
        %v7481 = vmax.f32 %v7480, %v6686
        %v7482 = vmax.f32 %v7481, %v6735
        %v7483 = vmax.f32 %v7482, %v6784
        %v7484 = vmax.f32 %v7483, %v6833
        %v7485 = vmax.f32 %v7484, %v6882
        %v7486 = vmax.f32 %v7485, %v6931
        %7487 = vmax.xlane.f32.xlu0 %v7486
        %v7488 = vpop.xlane.xlu0 %7487
        %v7489 = vmax.f32 %v6590, %v6639
        %v7490 = vmax.f32 %v7489, %v6688
        %v7491 = vmax.f32 %v7490, %v6737
        %v7492 = vmax.f32 %v7491, %v6786
        %v7493 = vmax.f32 %v7492, %v6835
        %v7494 = vmax.f32 %v7493, %v6884
        %v7495 = vmax.f32 %v7494, %v6933
        %7496 = vmax.xlane.f32.xlu0 %v7495
        %v7497 = vpop.xlane.xlu0 %7496
        %v7498 = vmax.f32 %v6593, %v6642
        %v7499 = vmax.f32 %v7498, %v6691
        %v7500 = vmax.f32 %v7499, %v6740
        %v7501 = vmax.f32 %v7500, %v6789
        %v7502 = vmax.f32 %v7501, %v6838
        %v7503 = vmax.f32 %v7502, %v6887
        %v7504 = vmax.f32 %v7503, %v6936
        %7505 = vmax.xlane.f32.xlu0 %v7504
        %v7506 = vpop.xlane.xlu0 %7505
        %v7507 = vmax.f32 %v6595, %v6644
        %v7508 = vmax.f32 %v7507, %v6693
        %v7509 = vmax.f32 %v7508, %v6742
        %v7510 = vmax.f32 %v7509, %v6791
        %v7511 = vmax.f32 %v7510, %v6840
        %v7512 = vmax.f32 %v7511, %v6889
        %v7513 = vmax.f32 %v7512, %v6938
        %7514 = vmax.xlane.f32.xlu0 %v7513
        %v7515 = vpop.xlane.xlu0 %7514
        %v7532 = vlaneseq
        %v7533 = vand.u32 %v7532, 127
        %v7534 = vperm.slane %v6948, %v7533
        %v7535 = vadd.s32 %v7533, 4294967288
        %v7536 = vperm.slane %v6957, %v7535
        %vm7537 = vcmask 130112
        %v7538 = vsel %vm7537, %v7536, %v7534
        %v7539 = vadd.s32 %v7533, 4294967280
        %v7540 = vperm.slane %v6966, %v7539
        %vm7541 = vcmask 195712
        %v7542 = vsel %vm7541, %v7540, %v7538
        %v7543 = vadd.s32 %v7533, 4294967272
        %v7544 = vperm.slane %v6975, %v7543
        %vm7545 = vcmask 261312
        %v7546 = vsel %vm7545, %v7544, %v7542
        %v7547 = vadd.s32 %v7533, 4294967264
        %v7548 = vperm.slane %v6984, %v7547
        %vm7549 = vcmask 326912
        %v7550 = vsel %vm7549, %v7548, %v7546
        %v7551 = vadd.s32 %v7533, 4294967256
        %v7552 = vperm.slane %v6993, %v7551
        %vm7553 = vcmask 392512
        %v7554 = vsel %vm7553, %v7552, %v7550
        %v7555 = vadd.s32 %v7533, 4294967248
        %v7556 = vperm.slane %v7002, %v7555
        %vm7557 = vcmask 458112
        %v7558 = vsel %vm7557, %v7556, %v7554
        %v7559 = vadd.s32 %v7533, 4294967240
        %v7560 = vperm.slane %v7011, %v7559
        %vm7561 = vcmask 523712
        %v7562 = vsel %vm7561, %v7560, %v7558
        %v7563 = vadd.s32 %v7533, 4294967232
        %v7564 = vperm.slane %v7020, %v7563
        %vm7565 = vcmask 589312
        %v7566 = vsel %vm7565, %v7564, %v7562
        %v7567 = vadd.s32 %v7533, 4294967224
        %v7568 = vperm.slane %v7029, %v7567
        %vm7569 = vcmask 654912
        %v7570 = vsel %vm7569, %v7568, %v7566
        %v7571 = vadd.s32 %v7533, 4294967216
        %v7572 = vperm.slane %v7038, %v7571
        %vm7573 = vcmask 720512
        %v7574 = vsel %vm7573, %v7572, %v7570
        %v7575 = vadd.s32 %v7533, 4294967208
        %v7576 = vperm.slane %v7047, %v7575
        %vm7577 = vcmask 786112
        %v7578 = vsel %vm7577, %v7576, %v7574
        %v7579 = vadd.s32 %v7533, 4294967200
        %v7580 = vperm.slane %v7056, %v7579
        %vm7581 = vcmask 851712
        %v7582 = vsel %vm7581, %v7580, %v7578
        %v7583 = vadd.s32 %v7533, 4294967192
        %v7584 = vperm.slane %v7065, %v7583
        %vm7585 = vcmask 917312
        %v7586 = vsel %vm7585, %v7584, %v7582
        %v7587 = vadd.s32 %v7533, 4294967184
        %v7588 = vperm.slane %v7074, %v7587
        %vm7589 = vcmask 982912
        %v7590 = vsel %vm7589, %v7588, %v7586
        %v7591 = vadd.s32 %v7533, 4294967176
        %v7592 = vperm.slane %v7083, %v7591
        %vm7593 = vcmask 1048512
        %v7594 = vsel %vm7593, %v7592, %v7590
        %v7612 = vperm.slane %v7092, %v7533
        %v7613 = vperm.slane %v7101, %v7535
        %v7614 = vsel %vm7537, %v7613, %v7612
        %v7615 = vperm.slane %v7110, %v7539
        %v7616 = vsel %vm7541, %v7615, %v7614
        %v7617 = vperm.slane %v7119, %v7543
        %v7618 = vsel %vm7545, %v7617, %v7616
        %v7619 = vperm.slane %v7128, %v7547
        %v7620 = vsel %vm7549, %v7619, %v7618
        %v7621 = vperm.slane %v7137, %v7551
        %v7622 = vsel %vm7553, %v7621, %v7620
        %v7623 = vperm.slane %v7146, %v7555
        %v7624 = vsel %vm7557, %v7623, %v7622
        %v7625 = vperm.slane %v7155, %v7559
        %v7626 = vsel %vm7561, %v7625, %v7624
        %v7627 = vperm.slane %v7164, %v7563
        %v7628 = vsel %vm7565, %v7627, %v7626
        %v7629 = vperm.slane %v7173, %v7567
        %v7630 = vsel %vm7569, %v7629, %v7628
        %v7631 = vperm.slane %v7182, %v7571
        %v7632 = vsel %vm7573, %v7631, %v7630
        %v7633 = vperm.slane %v7191, %v7575
        %v7634 = vsel %vm7577, %v7633, %v7632
        %v7635 = vperm.slane %v7200, %v7579
        %v7636 = vsel %vm7581, %v7635, %v7634
        %v7637 = vperm.slane %v7209, %v7583
        %v7638 = vsel %vm7585, %v7637, %v7636
        %v7639 = vperm.slane %v7218, %v7587
        %v7640 = vsel %vm7589, %v7639, %v7638
        %v7641 = vperm.slane %v7227, %v7591
        %v7642 = vsel %vm7593, %v7641, %v7640
        %v7660 = vperm.slane %v7236, %v7533
        %v7661 = vperm.slane %v7245, %v7535
        %v7662 = vsel %vm7537, %v7661, %v7660
        %v7663 = vperm.slane %v7254, %v7539
        %v7664 = vsel %vm7541, %v7663, %v7662
        %v7665 = vperm.slane %v7263, %v7543
        %v7666 = vsel %vm7545, %v7665, %v7664
        %v7667 = vperm.slane %v7272, %v7547
        %v7668 = vsel %vm7549, %v7667, %v7666
        %v7669 = vperm.slane %v7281, %v7551
        %v7670 = vsel %vm7553, %v7669, %v7668
        %v7671 = vperm.slane %v7290, %v7555
        %v7672 = vsel %vm7557, %v7671, %v7670
        %v7673 = vperm.slane %v7299, %v7559
        %v7674 = vsel %vm7561, %v7673, %v7672
        %v7675 = vperm.slane %v7308, %v7563
        %v7676 = vsel %vm7565, %v7675, %v7674
        %v7677 = vperm.slane %v7317, %v7567
        %v7678 = vsel %vm7569, %v7677, %v7676
        %v7679 = vperm.slane %v7326, %v7571
        %v7680 = vsel %vm7573, %v7679, %v7678
        %v7681 = vperm.slane %v7335, %v7575
        %v7682 = vsel %vm7577, %v7681, %v7680
        %v7683 = vperm.slane %v7344, %v7579
        %v7684 = vsel %vm7581, %v7683, %v7682
        %v7685 = vperm.slane %v7353, %v7583
        %v7686 = vsel %vm7585, %v7685, %v7684
        %v7687 = vperm.slane %v7362, %v7587
        %v7688 = vsel %vm7589, %v7687, %v7686
        %v7689 = vperm.slane %v7371, %v7591
        %v7690 = vsel %vm7593, %v7689, %v7688
        %v7708 = vperm.slane %v7380, %v7533
        %v7709 = vperm.slane %v7389, %v7535
        %v7710 = vsel %vm7537, %v7709, %v7708
        %v7711 = vperm.slane %v7398, %v7539
        %v7712 = vsel %vm7541, %v7711, %v7710
        %v7713 = vperm.slane %v7407, %v7543
        %v7714 = vsel %vm7545, %v7713, %v7712
        %v7715 = vperm.slane %v7416, %v7547
        %v7716 = vsel %vm7549, %v7715, %v7714
        %v7717 = vperm.slane %v7425, %v7551
        %v7718 = vsel %vm7553, %v7717, %v7716
        %v7719 = vperm.slane %v7434, %v7555
        %v7720 = vsel %vm7557, %v7719, %v7718
        %v7721 = vperm.slane %v7443, %v7559
        %v7722 = vsel %vm7561, %v7721, %v7720
        %v7723 = vperm.slane %v7452, %v7563
        %v7724 = vsel %vm7565, %v7723, %v7722
        %v7725 = vperm.slane %v7461, %v7567
        %v7726 = vsel %vm7569, %v7725, %v7724
        %v7727 = vperm.slane %v7470, %v7571
        %v7728 = vsel %vm7573, %v7727, %v7726
        %v7729 = vperm.slane %v7479, %v7575
        %v7730 = vsel %vm7577, %v7729, %v7728
        %v7731 = vperm.slane %v7488, %v7579
        %v7732 = vsel %vm7581, %v7731, %v7730
        %v7733 = vperm.slane %v7497, %v7583
        %v7734 = vsel %vm7585, %v7733, %v7732
        %v7735 = vperm.slane %v7506, %v7587
        %v7736 = vsel %vm7589, %v7735, %v7734
        %v7737 = vperm.slane %v7515, %v7591
        %v7738 = vsel %vm7593, %v7737, %v7736
        %vm7740 = vcmask 1040384
        %v7741 = vsel %vm7740, %v7594, %v7642
        %vm7742 = vcmask 1041408
        %v7743 = vsel %vm7742, %v7741, %v7690
        %vm7744 = vcmask 1042432
        %v7745 = vsel %vm7744, %v7743, %v7738
        %p7746 = scmp.eq.s32.totalorder %s26, 0
        // Predicated region
        $region49: #{shape_encoder_pc.1} parent=47 // pred_check
          %p7747 = pneg %p7746
        $region50: #{shape_encoder_pc.1} parent=47 // pred_check_branch
          %7749 = sbr.rel (%p7747) target = $region52
        $region51: #{shape_encoder_pc.1} parent=47 // pred_region
          %7750 = vst [vmem:[%s289] sm:$0xf] %v7745
        $region52: #{shape_encoder_pc.1} parent=47 // pred_fallthru
          _
        %p7751 = scmp.gt.s32.totalorder %s26, 0
        // Predicated region
        $region53: #{shape_encoder_pc.1} parent=47 // pred_check
          %p7752 = pneg %p7751
        $region54: #{shape_encoder_pc.1} parent=47 // pred_check_branch
          %7754 = sbr.rel (%p7752) target = $region56
        $region55: #{shape_encoder_pc.1} parent=47 // pred_region
          %v7755 = vld [vmem:[%s289] sm:$0xf]
          %v7756 = vmax.f32 %v7755, %v7745
          %7757 = vst [vmem:[%s289] sm:$0xf] %v7756
        $region56: #{shape_encoder_pc.1} parent=47 // pred_fallthru
          _
        %s7758 = sand.u32 %s195, 1
        %s7759 = scalar_lea.sflag [#allocation3], %s7758
        %s7760 = sand.u32 %s195, 1
        %s7761 = smul.addr %s7760, 4
        %s7762 = scalar_lea.vmem [#allocation2], %s7761
        // Predicated region
        $region57: #{shape_encoder_pc.1} parent=47 // pred_check
          %p7763 = pneg %p205
        $region58: #{shape_encoder_pc.1} parent=47 // pred_check_branch
          %7765 = sbr.rel (%p7763) target = $region60
        $region59: #{shape_encoder_pc.1} parent=47 // pred_region
          %7767 = vsyncadd %s7759, 0
          %s7768 = smul.addr %s25, 4
          %s7769 = scalar_lea.hbm %s7, %s7768
          %s7771 = sshll.u32 %s7762, 4
          %s7772 = int_to_ptr.vmem [resolvable:$true] %s7771
          %s7773 = sshll.u32 %s7769, 4
          %s7774 = int_to_ptr.hbm [resolvable:$true] %s7773
          %7776 = dma.vmem_to_hbm [thread:$0]  %s7772, 64, %s7774, %s7759
        $region60: #{shape_encoder_pc.1} parent=47 // pred_fallthru
          _
      $region48: #{shape_encoder_pc.1} parent=5 // pred_fallthru
        _
      %p7777 = scmp.le.s32.totalorder 2, %s16
      // Predicated region
      $region61: #{shape_encoder_pc.1} parent=5 // pred_check
        %p7778 = pneg %p7777
      $region62: #{shape_encoder_pc.1} parent=5 // pred_check_branch
        %7780 = sbr.rel (%p7778) target = $region64
      $region63: #{shape_encoder_pc.1} parent=5 // pred_region
        %s7781 = ssub.s32 %s16, 2
        // Predicated region
        $region65: #{shape_encoder_pc.1} parent=63 // pred_check
          %p7782 = pneg %p211
        $region66: #{shape_encoder_pc.1} parent=63 // pred_check_branch
          %7784 = sbr.rel (%p7782) target = $region68
        $region67: #{shape_encoder_pc.1} parent=63 // pred_region
          %s7785 = sand.u32 %s196, 1
          %s7786 = scalar_lea.sflag [#allocation3], %s7785
          %s7787 = sand.u32 %s196, 1
          %s7788 = smul.addr %s7787, 4
          %s7789 = scalar_lea.vmem [#allocation2], %s7788
          %7791 = dma.done %s7786, 64
        $region68: #{shape_encoder_pc.1} parent=63 // pred_fallthru
          _
      $region64: #{shape_encoder_pc.1} parent=5 // pred_fallthru
        _
    $region6: #{shape_encoder_pc.1} parent=1 // loop_footer
      %s20 = sadd.s32 1, %s16
    $region7: #{shape_encoder_pc.1} parent=1 // loop_footer_branch
      %15 = sbr.rel target = $region3
    $region8: #{shape_encoder_pc.1} parent=1 // loop_exit
      _
    %7792 = vsyncpa [#allocation3], 1
    %s7793 = scalar_lea.sflag [#allocation3], 1
    %7794 = vsyncpa %s7793, 1

</llo_original>
